<compile_context>
chip_gen: v7x
topology: tpu7x:2x2x1
jax: 0.10.0
libtpu: 0.0.40
codegen_flags: <defaults>
</compile_context>

<pallas_src>
import math

import jax
import jax.numpy as jnp
from jax.experimental import pallas as pl
from jax.experimental.pallas import tpu as pltpu


def _flash_fwd_kernel(q_ref, k_ref, v_ref, o_ref, m_sc, l_sc, acc_sc):
    """One (head-group, q-tile, kv-tile) step of flash attention.

    q_ref: (G, tq, D) bf16, scale pre-folded   k_ref/v_ref: (G, tk, D) bf16
    o_ref: (tq, G*D)
    m_sc/l_sc: (G, tq, 1) f32   acc_sc: (G, tq, D) f32
    """
    kv = pl.program_id(2)

    @pl.when(kv == 0)
    def _():
        m_sc[...] = jnp.full_like(m_sc, -jnp.inf)
        l_sc[...] = jnp.zeros_like(l_sc)
        acc_sc[...] = jnp.zeros_like(acc_sc)

    q = q_ref[...]          # already bf16 and pre-scaled by the wrapper
    k = k_ref[...]
    v = v_ref[...]

    # Scores: contract over D with G as a batch dim (no explicit K transpose).
    s = jax.lax.dot_general(
        q, k,
        dimension_numbers=(((2,), (2,)), ((0,), (0,))),
        preferred_element_type=jnp.float32,
    )                                                    # (G, tq, tk) f32

    m_prev = m_sc[...]                                   # (G, tq, 1)
    m_new = jnp.maximum(m_prev, s.max(axis=-1, keepdims=True))
    alpha = jnp.exp(m_prev - m_new)                      # rescale factor (f32)

    # Produce p directly in bf16 (single pass over the big block); the row-sum
    # still accumulates in f32, and the MXU consumes the same bf16 p.
    p = jnp.exp(s - m_new).astype(jnp.bfloat16)          # (G, tq, tk)

    l_sc[...] = alpha * l_sc[...] + jnp.sum(
        p, axis=-1, keepdims=True, dtype=jnp.float32)
    pv = jax.lax.dot_general(
        p, v,
        dimension_numbers=(((2,), (1,)), ((0,), (0,))),
        preferred_element_type=jnp.float32,
    )                                                    # (G, tq, D) f32
    acc_sc[...] = alpha * acc_sc[...] + pv
    m_sc[...] = m_new

    @pl.when(kv == pl.num_programs(2) - 1)
    def _():
        # Exact reciprocal: runs once per q-tile, so approx buys nothing.
        inv_l = pl.reciprocal(l_sc[...], approx=False)   # (G, tq, 1)
        o = acc_sc[...] * inv_l                          # (G, tq, D) f32
        g = o.shape[0]
        # (G, tq, D) -> (tq, G*D): heads become contiguous lane groups so the
        # output-block store is lane-dense (G*D == 128 whenever D <= 128).
        o = jnp.concatenate([o[i] for i in range(g)], axis=-1)
        o_ref[...] = o.astype(o_ref.dtype)


def _pick_tile(dim, want):
    """Largest tile <= want that divides dim and keeps TPU tiling legal."""
    t = min(want, dim)
    if dim % t == 0:
        return t
    t -= t % 8
    while t >= 8:
        if dim % t == 0:
            return t
        t -= 8
    return dim  # fall back to the full (untiled) dimension


def _vmem_limit_bytes():
    """Generation-aware VMEM cap (v7x only has 64 MiB physical VMEM)."""
    try:
        cap = int(pltpu.get_tpu_info().vmem_capacity_bytes)
    except Exception:
        cap = 64 * 1024 * 1024
    # This kernel needs well under 16 MiB at the default tiles; a modest limit
    # leaves headroom for tile sweeps and for surrounding XLA fusions.
    return max(16 * 1024 * 1024, min(cap // 4, 32 * 1024 * 1024))


def flash_mha_forward(query, key, value, scale, *, tq=256, tk=256):
    """Flash attention forward. query/key/value: [B, H, S, D]."""
    B, H, Sq, D = query.shape
    Sk = key.shape[2]

    # Group G heads per grid step so the output block's last dim is G*D
    # (>= 128 lanes when possible => unmasked, lane-dense output stores).
    # Heads from different batch elements are independent, so group across
    # the flattened B*H axis (keeps G*D = 128 for far more shapes).
    G = max(1, 128 // D)
    while (B * H) % G:
        G -= 1
    NG = (B * H) // G

    # Fold `scale` into Q and cast operands to bf16 before the kernel:
    # halves the K/V HBM->VMEM stream (re-read Sq/tq times), removes per-step
    # casts, and supports traced `scale` (no recompile per scalar value).
    q = (query * scale).astype(jnp.bfloat16).reshape(NG, G, Sq, D)
    k = key.astype(jnp.bfloat16).reshape(NG, G, Sk, D)
    v = value.astype(jnp.bfloat16).reshape(NG, G, Sk, D)

    tq = _pick_tile(Sq, tq)
    tk = _pick_tile(Sk, tk)

    out = pl.pallas_call(
        _flash_fwd_kernel,
        out_shape=jax.ShapeDtypeStruct((NG, Sq, G * D), query.dtype),
        grid_spec=pltpu.PrefetchScalarGridSpec(
            num_scalar_prefetch=0,
            grid=(NG, Sq // tq, Sk // tk),
            in_specs=[
                pl.BlockSpec((pl.Squeezed(), G, tq, D),
                             lambda n, qi, ki: (n, 0, qi, 0)),
                pl.BlockSpec((pl.Squeezed(), G, tk, D),
                             lambda n, qi, ki: (n, 0, ki, 0)),
                pl.BlockSpec((pl.Squeezed(), G, tk, D),
                             lambda n, qi, ki: (n, 0, ki, 0)),
            ],
            out_specs=pl.BlockSpec((pl.Squeezed(), tq, G * D),
                                   lambda n, qi, ki: (n, qi, 0)),
            scratch_shapes=[
                pltpu.VMEM((G, tq, 1), jnp.float32),   # running max m
                pltpu.VMEM((G, tq, 1), jnp.float32),   # running denom l
                pltpu.VMEM((G, tq, D), jnp.float32),   # running accumulator
            ],
        ),
        compiler_params=pltpu.CompilerParams(
            dimension_semantics=("parallel", "parallel", "arbitrary"),
            vmem_limit_bytes=_vmem_limit_bytes(),
        ),
    )(q, k, v)

    # [NG, Sq, G*D] -> [B, H, Sq, D]  (groups may span batch boundaries).
    out = out.reshape(NG, Sq, G, D)
    out = jnp.swapaxes(out, 1, 2)            # (NG, G, Sq, D)
    return out.reshape(B, H, Sq, D)


def _reference_attention(query, key, value, scale):
    s = jnp.einsum("bhqd,bhkd->bhqk", query, key) * scale
    p = jax.nn.softmax(s, axis=-1)
    return jnp.einsum("bhqk,bhkd->bhqd", p, value)


if __name__ == "__main__":
    # TODO(synk): only the forward pass is implemented (the PyTorch module's
    # autograd backward via naive_fmha_cpp.backward is out of scope here).
    root = jax.random.PRNGKey(0)
    k1, k2 = jax.random.split(root)

    # Case 1: [B, H, S, D] with H divisible by 128 // D.
    B, H, S, D = 2, 8, 256, 32
    scale = 1.0 / math.sqrt(D)
    kq, kk, kv = jax.random.split(k1, 3)
    query = jax.random.normal(kq, (B, H, S, D), dtype=jnp.float32)
    key_t = jax.random.normal(kk, (B, H, S, D), dtype=jnp.float32)
    value = jax.random.normal(kv, (B, H, S, D), dtype=jnp.float32)

    out = jax.block_until_ready(flash_mha_forward(query, key_t, value, scale))
    ref = _reference_attention(query, key_t, value, scale)
    assert out.shape == (B, H, S, D)
    max_err = float(jnp.max(jnp.abs(out - ref)))
    assert jnp.allclose(out, ref, atol=2e-2, rtol=2e-2), (
        f"mismatch vs reference, max abs err={max_err}"
    )

    # Case 2: H=2 < 128//D -> head grouping spans the batch axis.
    B2, H2, S2, D2 = 2, 2, 128, 32
    scale2 = 1.0 / math.sqrt(D2)
    kq2, kk2, kv2 = jax.random.split(k2, 3)
    q2 = jax.random.normal(kq2, (B2, H2, S2, D2), dtype=jnp.float32)
    k2_ = jax.random.normal(kk2, (B2, H2, S2, D2), dtype=jnp.float32)
    v2 = jax.random.normal(kv2, (B2, H2, S2, D2), dtype=jnp.float32)

    out2 = jax.block_until_ready(flash_mha_forward(q2, k2_, v2, scale2))
    ref2 = _reference_attention(q2, k2_, v2, scale2)
    max_err2 = float(jnp.max(jnp.abs(out2 - ref2)))
    assert jnp.allclose(out2, ref2, atol=2e-2, rtol=2e-2), (
        f"mismatch vs reference (case 2), max abs err={max_err2}"
    )

    print("KERNEL_OK")
</pallas_src>

<mosaic_0001>
module attributes {stable_mosaic.version = 11 : i64} {
  func.func @_flash_fwd_kernel(%arg0: i32, %arg1: i32, %arg2: i32, %arg3: memref<1x4x256x32xbf16, #tpu.memory_space<vmem>>, %arg4: memref<1x4x256x32xbf16, #tpu.memory_space<vmem>>, %arg5: memref<1x4x256x32xbf16, #tpu.memory_space<vmem>>, %arg6: memref<1x256x128xf32, #tpu.memory_space<vmem>>, %arg7: memref<4x256x1xf32, #tpu.memory_space<vmem>>, %arg8: memref<4x256x1xf32, #tpu.memory_space<vmem>>, %arg9: memref<4x256x32xf32, #tpu.memory_space<vmem>>) attributes {dimension_semantics = [#tpu.dimension_semantics<parallel>, #tpu.dimension_semantics<parallel>, #tpu.dimension_semantics<arbitrary>], iteration_bounds = array<i64: 4, 1, 1>, scalar_prefetch = 0 : i64, scratch_operands = 3 : i64, tpu.core_type = #tpu.core_type<tc>, window_params = [{transform_indices = @transform_0, window_bounds = array<i64: 1, 4, 256, 32>}, {transform_indices = @transform_1, window_bounds = array<i64: 1, 4, 256, 32>}, {transform_indices = @transform_2, window_bounds = array<i64: 1, 4, 256, 32>}, {transform_indices = @transform_3, window_bounds = array<i64: 1, 256, 128>}]} {
    %c0_i32 = arith.constant 0 : i32
    %0 = arith.cmpi eq, %arg2, %c0_i32 : i32
    %1 = arith.extui %0 : i1 to i32
    %c0_i32_0 = arith.constant 0 : i32
    %2 = arith.cmpi ne, %1, %c0_i32_0 : i32
    scf.if %2 {
      %cst_35 = arith.constant 0xFF800000 : f32
      %37 = vector.broadcast %cst_35 : f32 to vector<4x256x1xf32>
      %c0_36 = arith.constant 0 : index
      %c0_37 = arith.constant 0 : index
      %c0_38 = arith.constant 0 : index
      %38 = vector.load %arg7[%c0_36, %c0_37, %c0_38] : memref<4x256x1xf32, #tpu.memory_space<vmem>>, vector<4x256x1xf32>
      tpu.vector_store %arg7[%c0_36, %c0_37, %c0_38], %37 {strides = array<i32>} : memref<4x256x1xf32, #tpu.memory_space<vmem>>, vector<4x256x1xf32>,
      %cst_39 = arith.constant 0.000000e+00 : f32
      %39 = vector.broadcast %cst_39 : f32 to vector<4x256x1xf32>
      %c0_40 = arith.constant 0 : index
      %c0_41 = arith.constant 0 : index
      %c0_42 = arith.constant 0 : index
      %40 = vector.load %arg8[%c0_40, %c0_41, %c0_42] : memref<4x256x1xf32, #tpu.memory_space<vmem>>, vector<4x256x1xf32>
      tpu.vector_store %arg8[%c0_40, %c0_41, %c0_42], %39 {strides = array<i32>} : memref<4x256x1xf32, #tpu.memory_space<vmem>>, vector<4x256x1xf32>,
      %cst_43 = arith.constant 0.000000e+00 : f32
      %41 = vector.broadcast %cst_43 : f32 to vector<4x256x32xf32>
      %c0_44 = arith.constant 0 : index
      %c0_45 = arith.constant 0 : index
      %c0_46 = arith.constant 0 : index
      %42 = vector.load %arg9[%c0_44, %c0_45, %c0_46] : memref<4x256x32xf32, #tpu.memory_space<vmem>>, vector<4x256x32xf32>
      tpu.vector_store %arg9[%c0_44, %c0_45, %c0_46], %41 {strides = array<i32>} : memref<4x256x32xf32, #tpu.memory_space<vmem>>, vector<4x256x32xf32>,
    } else {
    }
    %c0 = arith.constant 0 : index
    %c0_1 = arith.constant 0 : index
    %c0_2 = arith.constant 0 : index
    %c0_3 = arith.constant 0 : index
    %3 = vector.load %arg3[%c0, %c0_1, %c0_2, %c0_3] : memref<1x4x256x32xbf16, #tpu.memory_space<vmem>>, vector<1x4x256x32xbf16>
    %4 = vector.shape_cast %3 : vector<1x4x256x32xbf16> to vector<4x256x32xbf16>
    %c0_4 = arith.constant 0 : index
    %c0_5 = arith.constant 0 : index
    %c0_6 = arith.constant 0 : index
    %c0_7 = arith.constant 0 : index
    %5 = vector.load %arg4[%c0_4, %c0_5, %c0_6, %c0_7] : memref<1x4x256x32xbf16, #tpu.memory_space<vmem>>, vector<1x4x256x32xbf16>
    %6 = vector.shape_cast %5 : vector<1x4x256x32xbf16> to vector<4x256x32xbf16>
    %c0_8 = arith.constant 0 : index
    %c0_9 = arith.constant 0 : index
    %c0_10 = arith.constant 0 : index
    %c0_11 = arith.constant 0 : index
    %7 = vector.load %arg5[%c0_8, %c0_9, %c0_10, %c0_11] : memref<1x4x256x32xbf16, #tpu.memory_space<vmem>>, vector<1x4x256x32xbf16>
    %8 = vector.shape_cast %7 : vector<1x4x256x32xbf16> to vector<4x256x32xbf16>
    %cst = arith.constant dense<0.000000e+00> : vector<4x256x256xf32>
    %9 = tpu.matmul %4, %6, %cst {dimension_numbers = #tpu.dot_dimension_numbers<[2], [2], [1], [1], [0, 0, 0, 1, 1, 1], [0], [0]>} : vector<4x256x32xbf16>, vector<4x256x32xbf16>, vector<4x256x256xf32> -> vector<4x256x256xf32>
    %c0_12 = arith.constant 0 : index
    %c0_13 = arith.constant 0 : index
    %c0_14 = arith.constant 0 : index
    %10 = vector.load %arg7[%c0_12, %c0_13, %c0_14] : memref<4x256x1xf32, #tpu.memory_space<vmem>>, vector<4x256x1xf32>
    %cst_15 = arith.constant dense<0xFF800000> : vector<4x256xf32>
    %11 = vector.multi_reduction <maximumf>, %9, %cst_15 [2] : vector<4x256x256xf32> to vector<4x256xf32>
    %12 = vector.shape_cast %11 : vector<4x256xf32> to vector<4x256x1xf32>
    %13 = arith.maximumf %10, %12 : vector<4x256x1xf32>
    %14 = arith.subf %10, %13 : vector<4x256x1xf32>
    %15 = math.exp %14 : vector<4x256x1xf32>
    %16 = vector.broadcast %13 : vector<4x256x1xf32> to vector<4x256x256xf32>
    %17 = arith.subf %9, %16 : vector<4x256x256xf32>
    %18 = math.exp %17 : vector<4x256x256xf32>
    %19 = arith.truncf %18 : vector<4x256x256xf32> to vector<4x256x256xbf16>
    %c0_16 = arith.constant 0 : index
    %c0_17 = arith.constant 0 : index
    %c0_18 = arith.constant 0 : index
    %20 = vector.load %arg8[%c0_16, %c0_17, %c0_18] : memref<4x256x1xf32, #tpu.memory_space<vmem>>, vector<4x256x1xf32>
    %21 = arith.mulf %15, %20 : vector<4x256x1xf32>
    %22 = arith.extf %19 : vector<4x256x256xbf16> to vector<4x256x256xf32>
    %cst_19 = arith.constant dense<0.000000e+00> : vector<4x256xf32>
    %23 = vector.multi_reduction <add>, %22, %cst_19 [2] : vector<4x256x256xf32> to vector<4x256xf32>
    %24 = vector.shape_cast %23 : vector<4x256xf32> to vector<4x256x1xf32>
    %25 = arith.addf %21, %24 : vector<4x256x1xf32>
    %c0_20 = arith.constant 0 : index
    %c0_21 = arith.constant 0 : index
    %c0_22 = arith.constant 0 : index
    %26 = vector.load %arg8[%c0_20, %c0_21, %c0_22] : memref<4x256x1xf32, #tpu.memory_space<vmem>>, vector<4x256x1xf32>
    tpu.vector_store %arg8[%c0_20, %c0_21, %c0_22], %25 {strides = array<i32>} : memref<4x256x1xf32, #tpu.memory_space<vmem>>, vector<4x256x1xf32>,
    %cst_23 = arith.constant dense<0.000000e+00> : vector<4x256x32xf32>
    %27 = tpu.matmul %19, %8, %cst_23 {dimension_numbers = #tpu.dot_dimension_numbers<[2], [1], [1], [2], [0, 0, 0, 1, 1, 2], [0], [0]>} : vector<4x256x256xbf16>, vector<4x256x32xbf16>, vector<4x256x32xf32> -> vector<4x256x32xf32>
    %c0_24 = arith.constant 0 : index
    %c0_25 = arith.constant 0 : index
    %c0_26 = arith.constant 0 : index
    %28 = vector.load %arg9[%c0_24, %c0_25, %c0_26] : memref<4x256x32xf32, #tpu.memory_space<vmem>>, vector<4x256x32xf32>
    %29 = vector.broadcast %15 : vector<4x256x1xf32> to vector<4x256x32xf32>
    %30 = arith.mulf %29, %28 : vector<4x256x32xf32>
    %31 = arith.addf %30, %27 : vector<4x256x32xf32>
    %c0_27 = arith.constant 0 : index
    %c0_28 = arith.constant 0 : index
    %c0_29 = arith.constant 0 : index
    %32 = vector.load %arg9[%c0_27, %c0_28, %c0_29] : memref<4x256x32xf32, #tpu.memory_space<vmem>>, vector<4x256x32xf32>
    tpu.vector_store %arg9[%c0_27, %c0_28, %c0_29], %31 {strides = array<i32>} : memref<4x256x32xf32, #tpu.memory_space<vmem>>, vector<4x256x32xf32>,
    %c0_30 = arith.constant 0 : index
    %c0_31 = arith.constant 0 : index
    %c0_32 = arith.constant 0 : index
    %33 = vector.load %arg7[%c0_30, %c0_31, %c0_32] : memref<4x256x1xf32, #tpu.memory_space<vmem>>, vector<4x256x1xf32>
    tpu.vector_store %arg7[%c0_30, %c0_31, %c0_32], %13 {strides = array<i32>} : memref<4x256x1xf32, #tpu.memory_space<vmem>>, vector<4x256x1xf32>,
    %c0_i32_33 = arith.constant 0 : i32
    %34 = arith.cmpi eq, %arg2, %c0_i32_33 : i32
    %35 = arith.extui %34 : i1 to i32
    %c0_i32_34 = arith.constant 0 : i32
    %36 = arith.cmpi ne, %35, %c0_i32_34 : i32
    scf.if %36 {
      %c0_35 = arith.constant 0 : index
      %c0_36 = arith.constant 0 : index
      %c0_37 = arith.constant 0 : index
      %37 = vector.load %arg8[%c0_35, %c0_36, %c0_37] : memref<4x256x1xf32, #tpu.memory_space<vmem>>, vector<4x256x1xf32>
      %38 = tpu.reciprocal %37 : vector<4x256x1xf32> -> vector<4x256x1xf32>
      %c0_38 = arith.constant 0 : index
      %c0_39 = arith.constant 0 : index
      %c0_40 = arith.constant 0 : index
      %39 = vector.load %arg9[%c0_38, %c0_39, %c0_40] : memref<4x256x32xf32, #tpu.memory_space<vmem>>, vector<4x256x32xf32>
      %40 = vector.broadcast %38 : vector<4x256x1xf32> to vector<4x256x32xf32>
      %41 = arith.mulf %39, %40 : vector<4x256x32xf32>
      %42 = vector.extract_strided_slice %41 {offsets = [0, 0, 0], sizes = [1, 256, 32], strides = [1, 1, 1]} : vector<4x256x32xf32> to vector<1x256x32xf32>
      %43 = vector.shape_cast %42 : vector<1x256x32xf32> to vector<256x32xf32>
      %44 = vector.extract_strided_slice %41 {offsets = [1, 0, 0], sizes = [1, 256, 32], strides = [1, 1, 1]} : vector<4x256x32xf32> to vector<1x256x32xf32>
      %45 = vector.shape_cast %44 : vector<1x256x32xf32> to vector<256x32xf32>
      %46 = vector.extract_strided_slice %41 {offsets = [2, 0, 0], sizes = [1, 256, 32], strides = [1, 1, 1]} : vector<4x256x32xf32> to vector<1x256x32xf32>
      %47 = vector.shape_cast %46 : vector<1x256x32xf32> to vector<256x32xf32>
      %48 = vector.extract_strided_slice %41 {offsets = [3, 0, 0], sizes = [1, 256, 32], strides = [1, 1, 1]} : vector<4x256x32xf32> to vector<1x256x32xf32>
      %49 = vector.shape_cast %48 : vector<1x256x32xf32> to vector<256x32xf32>
      %50 = tpu.concatenate %43, %45, %47, %49 in 1 : vector<256x32xf32>, vector<256x32xf32>, vector<256x32xf32>, vector<256x32xf32> -> vector<256x128xf32>
      %c0_41 = arith.constant 0 : index
      %c0_42 = arith.constant 0 : index
      %c0_43 = arith.constant 0 : index
      %51 = vector.load %arg6[%c0_41, %c0_42, %c0_43] : memref<1x256x128xf32, #tpu.memory_space<vmem>>, vector<1x256x128xf32>
      %52 = vector.shape_cast %51 : vector<1x256x128xf32> to vector<256x128xf32>
      %53 = vector.shape_cast %50 : vector<256x128xf32> to vector<1x256x128xf32>
      tpu.vector_store %arg6[%c0_41, %c0_42, %c0_43], %53 {strides = array<i32>} : memref<1x256x128xf32, #tpu.memory_space<vmem>>, vector<1x256x128xf32>,
    } else {
    }
    return
  }
  func.func @transform_0(%arg0: i32, %arg1: i32, %arg2: i32) -> (i32, i32, i32, i32) {
    %c0_i32 = arith.constant 0 : i32
    %c0_i32_0 = arith.constant 0 : i32
    %c0_i32_1 = arith.constant 0 : i32
    return %arg0, %c0_i32, %arg1, %c0_i32_0 : i32, i32, i32, i32
  }
  func.func @transform_1(%arg0: i32, %arg1: i32, %arg2: i32) -> (i32, i32, i32, i32) {
    %c0_i32 = arith.constant 0 : i32
    %c0_i32_0 = arith.constant 0 : i32
    %c0_i32_1 = arith.constant 0 : i32
    return %arg0, %c0_i32, %arg2, %c0_i32_0 : i32, i32, i32, i32
  }
  func.func @transform_2(%arg0: i32, %arg1: i32, %arg2: i32) -> (i32, i32, i32, i32) {
    %c0_i32 = arith.constant 0 : i32
    %c0_i32_0 = arith.constant 0 : i32
    %c0_i32_1 = arith.constant 0 : i32
    return %arg0, %c0_i32, %arg2, %c0_i32_0 : i32, i32, i32, i32
  }
  func.func @transform_3(%arg0: i32, %arg1: i32, %arg2: i32) -> (i32, i32, i32) {
    %c0_i32 = arith.constant 0 : i32
    %c0_i32_0 = arith.constant 0 : i32
    return %arg0, %arg1, %c0_i32 : i32, i32, i32
  }
}

</mosaic_0001>

<llo_original>
// kernel: tpu_custom_call.1
$region0: #{tpu_custom_call.1}
  #allocation0 [shape = 'u32[]', space=smem, size = 0x4, offset = 0x4, fixed_abs, tag = 'smem constant byte address 0x4 - core index']
  #allocation1 [shape = 'u32[144,128]{1,0:T(1,128)}', space=vmem, size = 0x12000, scoped, tag = 'internal scratch']
  #allocation2 [shape = 'f32[4,256,1]{2,1,0:T(8,128)}', space=vmem, size = 0x80000, scoped, tag = 'scratch operand']
  #allocation3 [shape = 'f32[4,256,1]{2,1,0:T(8,128)}', space=vmem, size = 0x80000, scoped, tag = 'scratch operand']
  #allocation4 [shape = 'f32[4,256,32]{2,1,0:T(8,128)}', space=vmem, size = 0x80000, scoped, tag = 'scratch operand']
  %s0 = inlined_call_operand.vmem [shape: bf16[4,4,256,32], index: 0, kind: input, shape index: {}]
  %s1 = inlined_call_operand.vmem [shape: bf16[4,4,256,32], index: 1, kind: input, shape index: {}]
  %s2 = inlined_call_operand.vmem [shape: bf16[4,4,256,32], index: 2, kind: input, shape index: {}]
  %s3 = inlined_call_operand.hbm [shape: f32[4,256,128], index: 3, kind: output, shape index: {}]
  %s4 = sld [smem:[#allocation0]]
  $region53: #{tpu_custom_call.1} parent=0
    _
  %s6 = ssub.s32 1, %s4
  %s7 = scalar_select 0, %s6, %s4
  $region1: #{tpu_custom_call.1} parent=0
    #allocation5 [shape = 'u8[262144]{0}', space=vmem, size = 0x40000, scoped, tag = 'output window, operand 0']
    #allocation6 [shape = 's32[2]{0}', space=sflag, size = 0x8, scoped, tag = 'scoped memory for tpu_custom_call.1']
    %8 = vsyncpa [#allocation6], 0
    %s9 = scalar_lea.sflag [#allocation6], 1
    %10 = vsyncpa %s9, 0
    loop: start=0, step=1, limit=6
    $region2: #{tpu_custom_call.1} parent=1 // loop_pre_header
      _
    $region3: #{tpu_custom_call.1} parent=1 // loop_header
      %s12 = sphi 0, %s16
      %p13 = scmp.ge.s32.totalorder %s12, 6
      %s19 = sphi 0, %s38
      %s20 = sphi 0, %s34
      %s21 = sphi 0, %s30
      %s22 = sphi 0, %s19
      %s23 = sphi 0, %s20
      %s24 = sphi 0, %s21
      %s25 = sphi 0, %s22
      %s26 = sphi 0, %s23
      %s27 = sphi 0, %s24
      %s43 = sphi 0, %s45
      %s46 = sphi 0, %s43
      %s47 = sphi 0, %s46
      %s63 = sphi 0, %s47
      %s71 = sphi 0, %s73
      %s74 = sphi 0, %s71
      %s75 = sphi 0, %s74
      %s91 = sphi 0, %s75
      %s99 = sphi 0, %s101
      %s102 = sphi 0, %s99
      %s103 = sphi 0, %s102
      %s119 = sphi 0, %s103
      %s127 = sphi 0, %s129
      %s130 = sphi 0, %s127
      %s131 = sphi 0, %s130
      %s147 = sphi 0, %s131
    $region4: #{tpu_custom_call.1} parent=1 // loop_header_branch
      %15 = sbr.rel (%p13) target = $region8
    $region5: #{tpu_custom_call.1} parent=1 // loop_body
      %s17 = ssub.s32 %s12, 1
      %s18 = ssub.s32 %s12, 2
      %s28 = sadd.s32 1, %s21
      %p29 = scmp.ge.s32.totalorder %s28, 1
      %s30 = scalar_select %p29, 0, %s28
      %s31 = sadd.s32 1, %s20
      %s32 = scalar_select %p29, %s31, %s20
      %p33 = scmp.ge.s32.totalorder %s32, 1
      %s34 = scalar_select %p33, 0, %s32
      %s35 = sadd.s32 1, %s19
      %s36 = scalar_select %p33, %s35, %s19
      %p37 = scmp.ge.s32.totalorder %s36, 4
      %s38 = scalar_select %p37, 0, %s36
      %s39 = ssub.s32 %s19, %s38
      %s40 = ssub.s32 %s20, %s34
      %s41 = sor.u32 %s39, %s40
      %p42 = scmp.eq.s32.totalorder %s41, 0
      %s44 = sadd.s32 %s43, 1
      %s45 = scalar_select %p42, %s43, %s44
      %p48 = pneg %p42
      %p49 = scmp.eq.s32.totalorder %s12, 3
      %p50 = por %p48, %p49
      %p51 = scmp.ne.s32.totalorder %s43, %s46
      %p52 = scmp.eq.s32.totalorder %s12, 0
      %p53 = por %p51, %p52
      %p54 = scmp.ne.s32.totalorder %s43, %s46
      %p55 = scmp.eq.s32.totalorder %s17, 3
      %p56 = por %p54, %p55
      %p57 = scmp.ne.s32.totalorder %s46, %s47
      %p58 = scmp.eq.s32.totalorder %s17, 0
      %p59 = por %p57, %p58
      %p60 = scmp.ne.s32.totalorder %s46, %s47
      %p61 = scmp.eq.s32.totalorder %s18, 3
      %p62 = por %p60, %p61
      %p64 = scmp.ne.s32.totalorder %s47, %s63
      %p65 = scmp.eq.s32.totalorder %s18, 0
      %p66 = por %p64, %p65
      %s67 = ssub.s32 %s19, %s38
      %s68 = ssub.s32 %s21, %s30
      %s69 = sor.u32 %s67, %s68
      %p70 = scmp.eq.s32.totalorder %s69, 0
      %s72 = sadd.s32 %s71, 1
      %s73 = scalar_select %p70, %s71, %s72
      %p76 = pneg %p70
      %p77 = scmp.eq.s32.totalorder %s12, 3
      %p78 = por %p76, %p77
      %p79 = scmp.ne.s32.totalorder %s71, %s74
      %p80 = scmp.eq.s32.totalorder %s12, 0
      %p81 = por %p79, %p80
      %p82 = scmp.ne.s32.totalorder %s71, %s74
      %p83 = scmp.eq.s32.totalorder %s17, 3
      %p84 = por %p82, %p83
      %p85 = scmp.ne.s32.totalorder %s74, %s75
      %p86 = scmp.eq.s32.totalorder %s17, 0
      %p87 = por %p85, %p86
      %p88 = scmp.ne.s32.totalorder %s74, %s75
      %p89 = scmp.eq.s32.totalorder %s18, 3
      %p90 = por %p88, %p89
      %p92 = scmp.ne.s32.totalorder %s75, %s91
      %p93 = scmp.eq.s32.totalorder %s18, 0
      %p94 = por %p92, %p93
      %s95 = ssub.s32 %s19, %s38
      %s96 = ssub.s32 %s21, %s30
      %s97 = sor.u32 %s95, %s96
      %p98 = scmp.eq.s32.totalorder %s97, 0
      %s100 = sadd.s32 %s99, 1
      %s101 = scalar_select %p98, %s99, %s100
      %p104 = pneg %p98
      %p105 = scmp.eq.s32.totalorder %s12, 3
      %p106 = por %p104, %p105
      %p107 = scmp.ne.s32.totalorder %s99, %s102
      %p108 = scmp.eq.s32.totalorder %s12, 0
      %p109 = por %p107, %p108
      %p110 = scmp.ne.s32.totalorder %s99, %s102
      %p111 = scmp.eq.s32.totalorder %s17, 3
      %p112 = por %p110, %p111
      %p113 = scmp.ne.s32.totalorder %s102, %s103
      %p114 = scmp.eq.s32.totalorder %s17, 0
      %p115 = por %p113, %p114
      %p116 = scmp.ne.s32.totalorder %s102, %s103
      %p117 = scmp.eq.s32.totalorder %s18, 3
      %p118 = por %p116, %p117
      %p120 = scmp.ne.s32.totalorder %s103, %s119
      %p121 = scmp.eq.s32.totalorder %s18, 0
      %p122 = por %p120, %p121
      %s123 = ssub.s32 %s19, %s38
      %s124 = ssub.s32 %s20, %s34
      %s125 = sor.u32 %s123, %s124
      %p126 = scmp.eq.s32.totalorder %s125, 0
      %s128 = sadd.s32 %s127, 1
      %s129 = scalar_select %p126, %s127, %s128
      %p132 = pneg %p126
      %p133 = scmp.eq.s32.totalorder %s12, 3
      %p134 = por %p132, %p133
      %p135 = scmp.ne.s32.totalorder %s127, %s130
      %p136 = scmp.eq.s32.totalorder %s12, 0
      %p137 = por %p135, %p136
      %p138 = scmp.ne.s32.totalorder %s127, %s130
      %p139 = scmp.eq.s32.totalorder %s17, 3
      %p140 = por %p138, %p139
      %p141 = scmp.ne.s32.totalorder %s130, %s131
      %p142 = scmp.eq.s32.totalorder %s17, 0
      %p143 = por %p141, %p142
      %p144 = scmp.ne.s32.totalorder %s130, %s131
      %p145 = scmp.eq.s32.totalorder %s18, 3
      %p146 = por %p144, %p145
      %p148 = scmp.ne.s32.totalorder %s131, %s147
      %p149 = scmp.eq.s32.totalorder %s18, 0
      %p150 = por %p148, %p149
      %p151 = scmp.le.s32.totalorder 1, %s12
      %p152 = scmp.lt.s32.totalorder %s12, 5
      %p153 = pnand %p151, %p152
      %p154 = pneg %p153
      // Predicated region
      $region9: #{tpu_custom_call.1} parent=5 // pred_check
        _
      $region10: #{tpu_custom_call.1} parent=5 // pred_check_branch
        %156 = sbr.rel (%p153) target = $region12
      $region11: #{tpu_custom_call.1} parent=5 // pred_region
        %s157 = ssub.s32 %s12, 1
      $region12: #{tpu_custom_call.1} parent=5 // pred_fallthru
        _
      %p158 = scmp.lt.s32.totalorder %s12, 4
      // Predicated region
      $region13: #{tpu_custom_call.1} parent=5 // pred_check
        %p159 = pneg %p158
      $region14: #{tpu_custom_call.1} parent=5 // pred_check_branch
        %161 = sbr.rel (%p159) target = $region16
      $region15: #{tpu_custom_call.1} parent=5 // pred_region
        // Predicated region
        $region17: #{tpu_custom_call.1} parent=15 // pred_check
          %p162 = pneg %p53
        $region18: #{tpu_custom_call.1} parent=15 // pred_check_branch
          %164 = sbr.rel (%p162) target = $region20
        $region19: #{tpu_custom_call.1} parent=15 // pred_region
          %s165 = smul.u32 32, %s20
          %p166 = scmp.lt.s32.totalorder %s19, 3
          %s167 = scalar_select %p166, %s19, 3
          %p168 = scmp.lt.s32.totalorder %s165, 31
          %s169 = scalar_select %p168, %s165, 31
          %s170 = smul.addr %s167, 128
          %s171 = sadd.s32 %s169, %s170
          %s172 = smul.addr %s171, 4
          %s173 = scalar_lea.vmem %s0, %s172
          %s174 = smul.u32 32, %s20
        $region20: #{tpu_custom_call.1} parent=15 // pred_fallthru
          _
        // Predicated region
        $region21: #{tpu_custom_call.1} parent=15 // pred_check
          %p175 = pneg %p81
        $region22: #{tpu_custom_call.1} parent=15 // pred_check_branch
          %177 = sbr.rel (%p175) target = $region24
        $region23: #{tpu_custom_call.1} parent=15 // pred_region
          %s178 = smul.u32 32, %s21
          %p179 = scmp.lt.s32.totalorder %s19, 3
          %s180 = scalar_select %p179, %s19, 3
          %p181 = scmp.lt.s32.totalorder %s178, 31
          %s182 = scalar_select %p181, %s178, 31
          %s183 = smul.addr %s180, 128
          %s184 = sadd.s32 %s182, %s183
          %s185 = smul.addr %s184, 4
          %s186 = scalar_lea.vmem %s1, %s185
          %s187 = smul.u32 32, %s21
        $region24: #{tpu_custom_call.1} parent=15 // pred_fallthru
          _
        // Predicated region
        $region25: #{tpu_custom_call.1} parent=15 // pred_check
          %p188 = pneg %p109
        $region26: #{tpu_custom_call.1} parent=15 // pred_check_branch
          %190 = sbr.rel (%p188) target = $region28
        $region27: #{tpu_custom_call.1} parent=15 // pred_region
          %s191 = smul.u32 32, %s21
          %p192 = scmp.lt.s32.totalorder %s19, 3
          %s193 = scalar_select %p192, %s19, 3
          %p194 = scmp.lt.s32.totalorder %s191, 31
          %s195 = scalar_select %p194, %s191, 31
          %s196 = smul.addr %s193, 128
          %s197 = sadd.s32 %s195, %s196
          %s198 = smul.addr %s197, 4
          %s199 = scalar_lea.vmem %s2, %s198
          %s200 = smul.u32 32, %s21
        $region28: #{tpu_custom_call.1} parent=15 // pred_fallthru
          _
      $region16: #{tpu_custom_call.1} parent=5 // pred_fallthru
        _
      %p201 = scmp.le.s32.totalorder 1, %s12
      %p202 = scmp.lt.s32.totalorder %s12, 5
      %p203 = pnand %p201, %p202
      %p204 = pneg %p203
      // Predicated region
      $region29: #{tpu_custom_call.1} parent=5 // pred_check
        _
      $region30: #{tpu_custom_call.1} parent=5 // pred_check_branch
        %206 = sbr.rel (%p203) target = $region32
      $region31: #{tpu_custom_call.1} parent=5 // pred_region
        %s207 = ssub.s32 %s12, 1
        %s208 = smul.u32 32, %s23
        %p209 = scmp.lt.s32.totalorder %s22, 3
        %s210 = scalar_select %p209, %s22, 3
        %p211 = scmp.lt.s32.totalorder %s208, 31
        %s212 = scalar_select %p211, %s208, 31
        %s213 = smul.addr %s210, 128
        %s214 = sadd.s32 %s212, %s213
        %s215 = smul.addr %s214, 4
        %s216 = scalar_lea.vmem %s0, %s215
        %p217 = pneg %p59
        %p218 = pneg %p56
        %s219 = smul.u32 32, %s24
        %p220 = scmp.lt.s32.totalorder %s22, 3
        %s221 = scalar_select %p220, %s22, 3
        %p222 = scmp.lt.s32.totalorder %s219, 31
        %s223 = scalar_select %p222, %s219, 31
        %s224 = smul.addr %s221, 128
        %s225 = sadd.s32 %s223, %s224
        %s226 = smul.addr %s225, 4
        %s227 = scalar_lea.vmem %s1, %s226
        %p228 = pneg %p87
        %p229 = pneg %p84
        %s230 = smul.u32 32, %s24
        %p231 = scmp.lt.s32.totalorder %s22, 3
        %s232 = scalar_select %p231, %s22, 3
        %p233 = scmp.lt.s32.totalorder %s230, 31
        %s234 = scalar_select %p233, %s230, 31
        %s235 = smul.addr %s232, 128
        %s236 = sadd.s32 %s234, %s235
        %s237 = smul.addr %s236, 4
        %s238 = scalar_lea.vmem %s2, %s237
        %p239 = pneg %p115
        %p240 = pneg %p112
        %p241 = pneg %p143
        %p242 = pneg %p140
        %s243 = sand.u32 %s130, 1
        %s244 = scalar_lea.sflag [#allocation6], %s243
        %s245 = sand.u32 %s130, 1
        %s246 = smul.addr %s245, 256
        %s247 = scalar_lea.vmem [#allocation5], %s246
        %s248 = smul.u32 32, %s23
        %p249 = scmp.lt.s32.totalorder %s22, 3
        %s250 = scalar_select %p249, %s22, 3
        %p251 = scmp.lt.s32.totalorder %s248, 31
        %s252 = scalar_select %p251, %s248, 31
        %s253 = smul.addr %s250, 128
        %s254 = sadd.s32 %s252, %s253
        %s255 = smul.addr %s254, 4
        %s256 = scalar_lea.vmem %s0, %s255
        %s257 = smul.u32 32, %s23
        %s258 = smul.u32 32, %s24
        %p259 = scmp.lt.s32.totalorder %s22, 3
        %s260 = scalar_select %p259, %s22, 3
        %p261 = scmp.lt.s32.totalorder %s258, 31
        %s262 = scalar_select %p261, %s258, 31
        %s263 = smul.addr %s260, 128
        %s264 = sadd.s32 %s262, %s263
        %s265 = smul.addr %s264, 4
        %s266 = scalar_lea.vmem %s1, %s265
        %s267 = smul.u32 32, %s24
        %s268 = smul.u32 32, %s24
        %p269 = scmp.lt.s32.totalorder %s22, 3
        %s270 = scalar_select %p269, %s22, 3
        %p271 = scmp.lt.s32.totalorder %s268, 31
        %s272 = scalar_select %p271, %s268, 31
        %s273 = smul.addr %s270, 128
        %s274 = sadd.s32 %s272, %s273
        %s275 = smul.addr %s274, 4
        %s276 = scalar_lea.vmem %s2, %s275
        %s277 = smul.u32 32, %s24
        %s278 = smul.u32 32, %s23
        %p280 = scmp.eq.s32.totalorder %s24, 0
        // Predicated region
        $region33: #{tpu_custom_call.1} parent=31 // pred_check
          %p281 = pneg %p280
        $region34: #{tpu_custom_call.1} parent=31 // pred_check_branch
          %283 = sbr.rel (%p281) target = $region36
        $region35: #{tpu_custom_call.1} parent=31 // pred_region
          %vm284 = vcmask 7168
          %285 = vst.msk [vmem:[#allocation2] sm:$0xff] %vm284, -inf
          %286 = vst.msk [vmem:[#allocation2 + $0x8] sm:$0xff] %vm284, -inf
          %287 = vst.msk [vmem:[#allocation2 + $0x10] sm:$0xff] %vm284, -inf
          %288 = vst.msk [vmem:[#allocation2 + $0x18] sm:$0xff] %vm284, -inf
          %289 = vst.msk [vmem:[#allocation2 + $0x20] sm:$0xff] %vm284, -inf
          %290 = vst.msk [vmem:[#allocation2 + $0x28] sm:$0xff] %vm284, -inf
          %291 = vst.msk [vmem:[#allocation2 + $0x30] sm:$0xff] %vm284, -inf
          %292 = vst.msk [vmem:[#allocation2 + $0x38] sm:$0xff] %vm284, -inf
          %293 = vst.msk [vmem:[#allocation2 + $0x40] sm:$0xff] %vm284, -inf
          %294 = vst.msk [vmem:[#allocation2 + $0x48] sm:$0xff] %vm284, -inf
          %295 = vst.msk [vmem:[#allocation2 + $0x50] sm:$0xff] %vm284, -inf
          %296 = vst.msk [vmem:[#allocation2 + $0x58] sm:$0xff] %vm284, -inf
          %297 = vst.msk [vmem:[#allocation2 + $0x60] sm:$0xff] %vm284, -inf
          %298 = vst.msk [vmem:[#allocation2 + $0x68] sm:$0xff] %vm284, -inf
          %299 = vst.msk [vmem:[#allocation2 + $0x70] sm:$0xff] %vm284, -inf
          %300 = vst.msk [vmem:[#allocation2 + $0x78] sm:$0xff] %vm284, -inf
          %301 = vst.msk [vmem:[#allocation2 + $0x80] sm:$0xff] %vm284, -inf
          %302 = vst.msk [vmem:[#allocation2 + $0x88] sm:$0xff] %vm284, -inf
          %303 = vst.msk [vmem:[#allocation2 + $0x90] sm:$0xff] %vm284, -inf
          %304 = vst.msk [vmem:[#allocation2 + $0x98] sm:$0xff] %vm284, -inf
          %305 = vst.msk [vmem:[#allocation2 + $0xa0] sm:$0xff] %vm284, -inf
          %306 = vst.msk [vmem:[#allocation2 + $0xa8] sm:$0xff] %vm284, -inf
          %307 = vst.msk [vmem:[#allocation2 + $0xb0] sm:$0xff] %vm284, -inf
          %308 = vst.msk [vmem:[#allocation2 + $0xb8] sm:$0xff] %vm284, -inf
          %309 = vst.msk [vmem:[#allocation2 + $0xc0] sm:$0xff] %vm284, -inf
          %310 = vst.msk [vmem:[#allocation2 + $0xc8] sm:$0xff] %vm284, -inf
          %311 = vst.msk [vmem:[#allocation2 + $0xd0] sm:$0xff] %vm284, -inf
          %312 = vst.msk [vmem:[#allocation2 + $0xd8] sm:$0xff] %vm284, -inf
          %313 = vst.msk [vmem:[#allocation2 + $0xe0] sm:$0xff] %vm284, -inf
          %314 = vst.msk [vmem:[#allocation2 + $0xe8] sm:$0xff] %vm284, -inf
          %315 = vst.msk [vmem:[#allocation2 + $0xf0] sm:$0xff] %vm284, -inf
          %316 = vst.msk [vmem:[#allocation2 + $0xf8] sm:$0xff] %vm284, -inf
          %317 = vst.msk [vmem:[#allocation2 + $0x100] sm:$0xff] %vm284, -inf
          %318 = vst.msk [vmem:[#allocation2 + $0x108] sm:$0xff] %vm284, -inf
          %319 = vst.msk [vmem:[#allocation2 + $0x110] sm:$0xff] %vm284, -inf
          %320 = vst.msk [vmem:[#allocation2 + $0x118] sm:$0xff] %vm284, -inf
          %321 = vst.msk [vmem:[#allocation2 + $0x120] sm:$0xff] %vm284, -inf
          %322 = vst.msk [vmem:[#allocation2 + $0x128] sm:$0xff] %vm284, -inf
          %323 = vst.msk [vmem:[#allocation2 + $0x130] sm:$0xff] %vm284, -inf
          %324 = vst.msk [vmem:[#allocation2 + $0x138] sm:$0xff] %vm284, -inf
          %325 = vst.msk [vmem:[#allocation2 + $0x140] sm:$0xff] %vm284, -inf
          %326 = vst.msk [vmem:[#allocation2 + $0x148] sm:$0xff] %vm284, -inf
          %327 = vst.msk [vmem:[#allocation2 + $0x150] sm:$0xff] %vm284, -inf
          %328 = vst.msk [vmem:[#allocation2 + $0x158] sm:$0xff] %vm284, -inf
          %329 = vst.msk [vmem:[#allocation2 + $0x160] sm:$0xff] %vm284, -inf
          %330 = vst.msk [vmem:[#allocation2 + $0x168] sm:$0xff] %vm284, -inf
          %331 = vst.msk [vmem:[#allocation2 + $0x170] sm:$0xff] %vm284, -inf
          %332 = vst.msk [vmem:[#allocation2 + $0x178] sm:$0xff] %vm284, -inf
          %333 = vst.msk [vmem:[#allocation2 + $0x180] sm:$0xff] %vm284, -inf
          %334 = vst.msk [vmem:[#allocation2 + $0x188] sm:$0xff] %vm284, -inf
          %335 = vst.msk [vmem:[#allocation2 + $0x190] sm:$0xff] %vm284, -inf
          %336 = vst.msk [vmem:[#allocation2 + $0x198] sm:$0xff] %vm284, -inf
          %337 = vst.msk [vmem:[#allocation2 + $0x1a0] sm:$0xff] %vm284, -inf
          %338 = vst.msk [vmem:[#allocation2 + $0x1a8] sm:$0xff] %vm284, -inf
          %339 = vst.msk [vmem:[#allocation2 + $0x1b0] sm:$0xff] %vm284, -inf
          %340 = vst.msk [vmem:[#allocation2 + $0x1b8] sm:$0xff] %vm284, -inf
          %341 = vst.msk [vmem:[#allocation2 + $0x1c0] sm:$0xff] %vm284, -inf
          %342 = vst.msk [vmem:[#allocation2 + $0x1c8] sm:$0xff] %vm284, -inf
          %343 = vst.msk [vmem:[#allocation2 + $0x1d0] sm:$0xff] %vm284, -inf
          %344 = vst.msk [vmem:[#allocation2 + $0x1d8] sm:$0xff] %vm284, -inf
          %345 = vst.msk [vmem:[#allocation2 + $0x1e0] sm:$0xff] %vm284, -inf
          %346 = vst.msk [vmem:[#allocation2 + $0x1e8] sm:$0xff] %vm284, -inf
          %347 = vst.msk [vmem:[#allocation2 + $0x1f0] sm:$0xff] %vm284, -inf
          %348 = vst.msk [vmem:[#allocation2 + $0x1f8] sm:$0xff] %vm284, -inf
          %349 = vst.msk [vmem:[#allocation2 + $0x200] sm:$0xff] %vm284, -inf
          %350 = vst.msk [vmem:[#allocation2 + $0x208] sm:$0xff] %vm284, -inf
          %351 = vst.msk [vmem:[#allocation2 + $0x210] sm:$0xff] %vm284, -inf
          %352 = vst.msk [vmem:[#allocation2 + $0x218] sm:$0xff] %vm284, -inf
          %353 = vst.msk [vmem:[#allocation2 + $0x220] sm:$0xff] %vm284, -inf
          %354 = vst.msk [vmem:[#allocation2 + $0x228] sm:$0xff] %vm284, -inf
          %355 = vst.msk [vmem:[#allocation2 + $0x230] sm:$0xff] %vm284, -inf
          %356 = vst.msk [vmem:[#allocation2 + $0x238] sm:$0xff] %vm284, -inf
          %357 = vst.msk [vmem:[#allocation2 + $0x240] sm:$0xff] %vm284, -inf
          %358 = vst.msk [vmem:[#allocation2 + $0x248] sm:$0xff] %vm284, -inf
          %359 = vst.msk [vmem:[#allocation2 + $0x250] sm:$0xff] %vm284, -inf
          %360 = vst.msk [vmem:[#allocation2 + $0x258] sm:$0xff] %vm284, -inf
          %361 = vst.msk [vmem:[#allocation2 + $0x260] sm:$0xff] %vm284, -inf
          %362 = vst.msk [vmem:[#allocation2 + $0x268] sm:$0xff] %vm284, -inf
          %363 = vst.msk [vmem:[#allocation2 + $0x270] sm:$0xff] %vm284, -inf
          %364 = vst.msk [vmem:[#allocation2 + $0x278] sm:$0xff] %vm284, -inf
          %365 = vst.msk [vmem:[#allocation2 + $0x280] sm:$0xff] %vm284, -inf
          %366 = vst.msk [vmem:[#allocation2 + $0x288] sm:$0xff] %vm284, -inf
          %367 = vst.msk [vmem:[#allocation2 + $0x290] sm:$0xff] %vm284, -inf
          %368 = vst.msk [vmem:[#allocation2 + $0x298] sm:$0xff] %vm284, -inf
          %369 = vst.msk [vmem:[#allocation2 + $0x2a0] sm:$0xff] %vm284, -inf
          %370 = vst.msk [vmem:[#allocation2 + $0x2a8] sm:$0xff] %vm284, -inf
          %371 = vst.msk [vmem:[#allocation2 + $0x2b0] sm:$0xff] %vm284, -inf
          %372 = vst.msk [vmem:[#allocation2 + $0x2b8] sm:$0xff] %vm284, -inf
          %373 = vst.msk [vmem:[#allocation2 + $0x2c0] sm:$0xff] %vm284, -inf
          %374 = vst.msk [vmem:[#allocation2 + $0x2c8] sm:$0xff] %vm284, -inf
          %375 = vst.msk [vmem:[#allocation2 + $0x2d0] sm:$0xff] %vm284, -inf
          %376 = vst.msk [vmem:[#allocation2 + $0x2d8] sm:$0xff] %vm284, -inf
          %377 = vst.msk [vmem:[#allocation2 + $0x2e0] sm:$0xff] %vm284, -inf
          %378 = vst.msk [vmem:[#allocation2 + $0x2e8] sm:$0xff] %vm284, -inf
          %379 = vst.msk [vmem:[#allocation2 + $0x2f0] sm:$0xff] %vm284, -inf
          %380 = vst.msk [vmem:[#allocation2 + $0x2f8] sm:$0xff] %vm284, -inf
          %381 = vst.msk [vmem:[#allocation2 + $0x300] sm:$0xff] %vm284, -inf
          %382 = vst.msk [vmem:[#allocation2 + $0x308] sm:$0xff] %vm284, -inf
          %383 = vst.msk [vmem:[#allocation2 + $0x310] sm:$0xff] %vm284, -inf
          %384 = vst.msk [vmem:[#allocation2 + $0x318] sm:$0xff] %vm284, -inf
          %385 = vst.msk [vmem:[#allocation2 + $0x320] sm:$0xff] %vm284, -inf
          %386 = vst.msk [vmem:[#allocation2 + $0x328] sm:$0xff] %vm284, -inf
          %387 = vst.msk [vmem:[#allocation2 + $0x330] sm:$0xff] %vm284, -inf
          %388 = vst.msk [vmem:[#allocation2 + $0x338] sm:$0xff] %vm284, -inf
          %389 = vst.msk [vmem:[#allocation2 + $0x340] sm:$0xff] %vm284, -inf
          %390 = vst.msk [vmem:[#allocation2 + $0x348] sm:$0xff] %vm284, -inf
          %391 = vst.msk [vmem:[#allocation2 + $0x350] sm:$0xff] %vm284, -inf
          %392 = vst.msk [vmem:[#allocation2 + $0x358] sm:$0xff] %vm284, -inf
          %393 = vst.msk [vmem:[#allocation2 + $0x360] sm:$0xff] %vm284, -inf
          %394 = vst.msk [vmem:[#allocation2 + $0x368] sm:$0xff] %vm284, -inf
          %395 = vst.msk [vmem:[#allocation2 + $0x370] sm:$0xff] %vm284, -inf
          %396 = vst.msk [vmem:[#allocation2 + $0x378] sm:$0xff] %vm284, -inf
          %397 = vst.msk [vmem:[#allocation2 + $0x380] sm:$0xff] %vm284, -inf
          %398 = vst.msk [vmem:[#allocation2 + $0x388] sm:$0xff] %vm284, -inf
          %399 = vst.msk [vmem:[#allocation2 + $0x390] sm:$0xff] %vm284, -inf
          %400 = vst.msk [vmem:[#allocation2 + $0x398] sm:$0xff] %vm284, -inf
          %401 = vst.msk [vmem:[#allocation2 + $0x3a0] sm:$0xff] %vm284, -inf
          %402 = vst.msk [vmem:[#allocation2 + $0x3a8] sm:$0xff] %vm284, -inf
          %403 = vst.msk [vmem:[#allocation2 + $0x3b0] sm:$0xff] %vm284, -inf
          %404 = vst.msk [vmem:[#allocation2 + $0x3b8] sm:$0xff] %vm284, -inf
          %405 = vst.msk [vmem:[#allocation2 + $0x3c0] sm:$0xff] %vm284, -inf
          %406 = vst.msk [vmem:[#allocation2 + $0x3c8] sm:$0xff] %vm284, -inf
          %407 = vst.msk [vmem:[#allocation2 + $0x3d0] sm:$0xff] %vm284, -inf
          %408 = vst.msk [vmem:[#allocation2 + $0x3d8] sm:$0xff] %vm284, -inf
          %409 = vst.msk [vmem:[#allocation2 + $0x3e0] sm:$0xff] %vm284, -inf
          %410 = vst.msk [vmem:[#allocation2 + $0x3e8] sm:$0xff] %vm284, -inf
          %411 = vst.msk [vmem:[#allocation2 + $0x3f0] sm:$0xff] %vm284, -inf
          %412 = vst.msk [vmem:[#allocation2 + $0x3f8] sm:$0xff] %vm284, -inf
          %413 = vst.msk [vmem:[#allocation3] sm:$0xff] %vm284, 0.0
          %414 = vst.msk [vmem:[#allocation3 + $0x8] sm:$0xff] %vm284, 0.0
          %415 = vst.msk [vmem:[#allocation3 + $0x10] sm:$0xff] %vm284, 0.0
          %416 = vst.msk [vmem:[#allocation3 + $0x18] sm:$0xff] %vm284, 0.0
          %417 = vst.msk [vmem:[#allocation3 + $0x20] sm:$0xff] %vm284, 0.0
          %418 = vst.msk [vmem:[#allocation3 + $0x28] sm:$0xff] %vm284, 0.0
          %419 = vst.msk [vmem:[#allocation3 + $0x30] sm:$0xff] %vm284, 0.0
          %420 = vst.msk [vmem:[#allocation3 + $0x38] sm:$0xff] %vm284, 0.0
          %421 = vst.msk [vmem:[#allocation3 + $0x40] sm:$0xff] %vm284, 0.0
          %422 = vst.msk [vmem:[#allocation3 + $0x48] sm:$0xff] %vm284, 0.0
          %423 = vst.msk [vmem:[#allocation3 + $0x50] sm:$0xff] %vm284, 0.0
          %424 = vst.msk [vmem:[#allocation3 + $0x58] sm:$0xff] %vm284, 0.0
          %425 = vst.msk [vmem:[#allocation3 + $0x60] sm:$0xff] %vm284, 0.0
          %426 = vst.msk [vmem:[#allocation3 + $0x68] sm:$0xff] %vm284, 0.0
          %427 = vst.msk [vmem:[#allocation3 + $0x70] sm:$0xff] %vm284, 0.0
          %428 = vst.msk [vmem:[#allocation3 + $0x78] sm:$0xff] %vm284, 0.0
          %429 = vst.msk [vmem:[#allocation3 + $0x80] sm:$0xff] %vm284, 0.0
          %430 = vst.msk [vmem:[#allocation3 + $0x88] sm:$0xff] %vm284, 0.0
          %431 = vst.msk [vmem:[#allocation3 + $0x90] sm:$0xff] %vm284, 0.0
          %432 = vst.msk [vmem:[#allocation3 + $0x98] sm:$0xff] %vm284, 0.0
          %433 = vst.msk [vmem:[#allocation3 + $0xa0] sm:$0xff] %vm284, 0.0
          %434 = vst.msk [vmem:[#allocation3 + $0xa8] sm:$0xff] %vm284, 0.0
          %435 = vst.msk [vmem:[#allocation3 + $0xb0] sm:$0xff] %vm284, 0.0
          %436 = vst.msk [vmem:[#allocation3 + $0xb8] sm:$0xff] %vm284, 0.0
          %437 = vst.msk [vmem:[#allocation3 + $0xc0] sm:$0xff] %vm284, 0.0
          %438 = vst.msk [vmem:[#allocation3 + $0xc8] sm:$0xff] %vm284, 0.0
          %439 = vst.msk [vmem:[#allocation3 + $0xd0] sm:$0xff] %vm284, 0.0
          %440 = vst.msk [vmem:[#allocation3 + $0xd8] sm:$0xff] %vm284, 0.0
          %441 = vst.msk [vmem:[#allocation3 + $0xe0] sm:$0xff] %vm284, 0.0
          %442 = vst.msk [vmem:[#allocation3 + $0xe8] sm:$0xff] %vm284, 0.0
          %443 = vst.msk [vmem:[#allocation3 + $0xf0] sm:$0xff] %vm284, 0.0
          %444 = vst.msk [vmem:[#allocation3 + $0xf8] sm:$0xff] %vm284, 0.0
          %445 = vst.msk [vmem:[#allocation3 + $0x100] sm:$0xff] %vm284, 0.0
          %446 = vst.msk [vmem:[#allocation3 + $0x108] sm:$0xff] %vm284, 0.0
          %447 = vst.msk [vmem:[#allocation3 + $0x110] sm:$0xff] %vm284, 0.0
          %448 = vst.msk [vmem:[#allocation3 + $0x118] sm:$0xff] %vm284, 0.0
          %449 = vst.msk [vmem:[#allocation3 + $0x120] sm:$0xff] %vm284, 0.0
          %450 = vst.msk [vmem:[#allocation3 + $0x128] sm:$0xff] %vm284, 0.0
          %451 = vst.msk [vmem:[#allocation3 + $0x130] sm:$0xff] %vm284, 0.0
          %452 = vst.msk [vmem:[#allocation3 + $0x138] sm:$0xff] %vm284, 0.0
          %453 = vst.msk [vmem:[#allocation3 + $0x140] sm:$0xff] %vm284, 0.0
          %454 = vst.msk [vmem:[#allocation3 + $0x148] sm:$0xff] %vm284, 0.0
          %455 = vst.msk [vmem:[#allocation3 + $0x150] sm:$0xff] %vm284, 0.0
          %456 = vst.msk [vmem:[#allocation3 + $0x158] sm:$0xff] %vm284, 0.0
          %457 = vst.msk [vmem:[#allocation3 + $0x160] sm:$0xff] %vm284, 0.0
          %458 = vst.msk [vmem:[#allocation3 + $0x168] sm:$0xff] %vm284, 0.0
          %459 = vst.msk [vmem:[#allocation3 + $0x170] sm:$0xff] %vm284, 0.0
          %460 = vst.msk [vmem:[#allocation3 + $0x178] sm:$0xff] %vm284, 0.0
          %461 = vst.msk [vmem:[#allocation3 + $0x180] sm:$0xff] %vm284, 0.0
          %462 = vst.msk [vmem:[#allocation3 + $0x188] sm:$0xff] %vm284, 0.0
          %463 = vst.msk [vmem:[#allocation3 + $0x190] sm:$0xff] %vm284, 0.0
          %464 = vst.msk [vmem:[#allocation3 + $0x198] sm:$0xff] %vm284, 0.0
          %465 = vst.msk [vmem:[#allocation3 + $0x1a0] sm:$0xff] %vm284, 0.0
          %466 = vst.msk [vmem:[#allocation3 + $0x1a8] sm:$0xff] %vm284, 0.0
          %467 = vst.msk [vmem:[#allocation3 + $0x1b0] sm:$0xff] %vm284, 0.0
          %468 = vst.msk [vmem:[#allocation3 + $0x1b8] sm:$0xff] %vm284, 0.0
          %469 = vst.msk [vmem:[#allocation3 + $0x1c0] sm:$0xff] %vm284, 0.0
          %470 = vst.msk [vmem:[#allocation3 + $0x1c8] sm:$0xff] %vm284, 0.0
          %471 = vst.msk [vmem:[#allocation3 + $0x1d0] sm:$0xff] %vm284, 0.0
          %472 = vst.msk [vmem:[#allocation3 + $0x1d8] sm:$0xff] %vm284, 0.0
          %473 = vst.msk [vmem:[#allocation3 + $0x1e0] sm:$0xff] %vm284, 0.0
          %474 = vst.msk [vmem:[#allocation3 + $0x1e8] sm:$0xff] %vm284, 0.0
          %475 = vst.msk [vmem:[#allocation3 + $0x1f0] sm:$0xff] %vm284, 0.0
          %476 = vst.msk [vmem:[#allocation3 + $0x1f8] sm:$0xff] %vm284, 0.0
          %477 = vst.msk [vmem:[#allocation3 + $0x200] sm:$0xff] %vm284, 0.0
          %478 = vst.msk [vmem:[#allocation3 + $0x208] sm:$0xff] %vm284, 0.0
          %479 = vst.msk [vmem:[#allocation3 + $0x210] sm:$0xff] %vm284, 0.0
          %480 = vst.msk [vmem:[#allocation3 + $0x218] sm:$0xff] %vm284, 0.0
          %481 = vst.msk [vmem:[#allocation3 + $0x220] sm:$0xff] %vm284, 0.0
          %482 = vst.msk [vmem:[#allocation3 + $0x228] sm:$0xff] %vm284, 0.0
          %483 = vst.msk [vmem:[#allocation3 + $0x230] sm:$0xff] %vm284, 0.0
          %484 = vst.msk [vmem:[#allocation3 + $0x238] sm:$0xff] %vm284, 0.0
          %485 = vst.msk [vmem:[#allocation3 + $0x240] sm:$0xff] %vm284, 0.0
          %486 = vst.msk [vmem:[#allocation3 + $0x248] sm:$0xff] %vm284, 0.0
          %487 = vst.msk [vmem:[#allocation3 + $0x250] sm:$0xff] %vm284, 0.0
          %488 = vst.msk [vmem:[#allocation3 + $0x258] sm:$0xff] %vm284, 0.0
          %489 = vst.msk [vmem:[#allocation3 + $0x260] sm:$0xff] %vm284, 0.0
          %490 = vst.msk [vmem:[#allocation3 + $0x268] sm:$0xff] %vm284, 0.0
          %491 = vst.msk [vmem:[#allocation3 + $0x270] sm:$0xff] %vm284, 0.0
          %492 = vst.msk [vmem:[#allocation3 + $0x278] sm:$0xff] %vm284, 0.0
          %493 = vst.msk [vmem:[#allocation3 + $0x280] sm:$0xff] %vm284, 0.0
          %494 = vst.msk [vmem:[#allocation3 + $0x288] sm:$0xff] %vm284, 0.0
          %495 = vst.msk [vmem:[#allocation3 + $0x290] sm:$0xff] %vm284, 0.0
          %496 = vst.msk [vmem:[#allocation3 + $0x298] sm:$0xff] %vm284, 0.0
          %497 = vst.msk [vmem:[#allocation3 + $0x2a0] sm:$0xff] %vm284, 0.0
          %498 = vst.msk [vmem:[#allocation3 + $0x2a8] sm:$0xff] %vm284, 0.0
          %499 = vst.msk [vmem:[#allocation3 + $0x2b0] sm:$0xff] %vm284, 0.0
          %500 = vst.msk [vmem:[#allocation3 + $0x2b8] sm:$0xff] %vm284, 0.0
          %501 = vst.msk [vmem:[#allocation3 + $0x2c0] sm:$0xff] %vm284, 0.0
          %502 = vst.msk [vmem:[#allocation3 + $0x2c8] sm:$0xff] %vm284, 0.0
          %503 = vst.msk [vmem:[#allocation3 + $0x2d0] sm:$0xff] %vm284, 0.0
          %504 = vst.msk [vmem:[#allocation3 + $0x2d8] sm:$0xff] %vm284, 0.0
          %505 = vst.msk [vmem:[#allocation3 + $0x2e0] sm:$0xff] %vm284, 0.0
          %506 = vst.msk [vmem:[#allocation3 + $0x2e8] sm:$0xff] %vm284, 0.0
          %507 = vst.msk [vmem:[#allocation3 + $0x2f0] sm:$0xff] %vm284, 0.0
          %508 = vst.msk [vmem:[#allocation3 + $0x2f8] sm:$0xff] %vm284, 0.0
          %509 = vst.msk [vmem:[#allocation3 + $0x300] sm:$0xff] %vm284, 0.0
          %510 = vst.msk [vmem:[#allocation3 + $0x308] sm:$0xff] %vm284, 0.0
          %511 = vst.msk [vmem:[#allocation3 + $0x310] sm:$0xff] %vm284, 0.0
          %512 = vst.msk [vmem:[#allocation3 + $0x318] sm:$0xff] %vm284, 0.0
          %513 = vst.msk [vmem:[#allocation3 + $0x320] sm:$0xff] %vm284, 0.0
          %514 = vst.msk [vmem:[#allocation3 + $0x328] sm:$0xff] %vm284, 0.0
          %515 = vst.msk [vmem:[#allocation3 + $0x330] sm:$0xff] %vm284, 0.0
          %516 = vst.msk [vmem:[#allocation3 + $0x338] sm:$0xff] %vm284, 0.0
          %517 = vst.msk [vmem:[#allocation3 + $0x340] sm:$0xff] %vm284, 0.0
          %518 = vst.msk [vmem:[#allocation3 + $0x348] sm:$0xff] %vm284, 0.0
          %519 = vst.msk [vmem:[#allocation3 + $0x350] sm:$0xff] %vm284, 0.0
          %520 = vst.msk [vmem:[#allocation3 + $0x358] sm:$0xff] %vm284, 0.0
          %521 = vst.msk [vmem:[#allocation3 + $0x360] sm:$0xff] %vm284, 0.0
          %522 = vst.msk [vmem:[#allocation3 + $0x368] sm:$0xff] %vm284, 0.0
          %523 = vst.msk [vmem:[#allocation3 + $0x370] sm:$0xff] %vm284, 0.0
          %524 = vst.msk [vmem:[#allocation3 + $0x378] sm:$0xff] %vm284, 0.0
          %525 = vst.msk [vmem:[#allocation3 + $0x380] sm:$0xff] %vm284, 0.0
          %526 = vst.msk [vmem:[#allocation3 + $0x388] sm:$0xff] %vm284, 0.0
          %527 = vst.msk [vmem:[#allocation3 + $0x390] sm:$0xff] %vm284, 0.0
          %528 = vst.msk [vmem:[#allocation3 + $0x398] sm:$0xff] %vm284, 0.0
          %529 = vst.msk [vmem:[#allocation3 + $0x3a0] sm:$0xff] %vm284, 0.0
          %530 = vst.msk [vmem:[#allocation3 + $0x3a8] sm:$0xff] %vm284, 0.0
          %531 = vst.msk [vmem:[#allocation3 + $0x3b0] sm:$0xff] %vm284, 0.0
          %532 = vst.msk [vmem:[#allocation3 + $0x3b8] sm:$0xff] %vm284, 0.0
          %533 = vst.msk [vmem:[#allocation3 + $0x3c0] sm:$0xff] %vm284, 0.0
          %534 = vst.msk [vmem:[#allocation3 + $0x3c8] sm:$0xff] %vm284, 0.0
          %535 = vst.msk [vmem:[#allocation3 + $0x3d0] sm:$0xff] %vm284, 0.0
          %536 = vst.msk [vmem:[#allocation3 + $0x3d8] sm:$0xff] %vm284, 0.0
          %537 = vst.msk [vmem:[#allocation3 + $0x3e0] sm:$0xff] %vm284, 0.0
          %538 = vst.msk [vmem:[#allocation3 + $0x3e8] sm:$0xff] %vm284, 0.0
          %539 = vst.msk [vmem:[#allocation3 + $0x3f0] sm:$0xff] %vm284, 0.0
          %540 = vst.msk [vmem:[#allocation3 + $0x3f8] sm:$0xff] %vm284, 0.0
          %vm541 = vcmask 261120
          %542 = vst.msk [vmem:[#allocation4] sm:$0xff] %vm541, 0.0
          %543 = vst.msk [vmem:[#allocation4 + $0x8] sm:$0xff] %vm541, 0.0
          %544 = vst.msk [vmem:[#allocation4 + $0x10] sm:$0xff] %vm541, 0.0
          %545 = vst.msk [vmem:[#allocation4 + $0x18] sm:$0xff] %vm541, 0.0
          %546 = vst.msk [vmem:[#allocation4 + $0x20] sm:$0xff] %vm541, 0.0
          %547 = vst.msk [vmem:[#allocation4 + $0x28] sm:$0xff] %vm541, 0.0
          %548 = vst.msk [vmem:[#allocation4 + $0x30] sm:$0xff] %vm541, 0.0
          %549 = vst.msk [vmem:[#allocation4 + $0x38] sm:$0xff] %vm541, 0.0
          %550 = vst.msk [vmem:[#allocation4 + $0x40] sm:$0xff] %vm541, 0.0
          %551 = vst.msk [vmem:[#allocation4 + $0x48] sm:$0xff] %vm541, 0.0
          %552 = vst.msk [vmem:[#allocation4 + $0x50] sm:$0xff] %vm541, 0.0
          %553 = vst.msk [vmem:[#allocation4 + $0x58] sm:$0xff] %vm541, 0.0
          %554 = vst.msk [vmem:[#allocation4 + $0x60] sm:$0xff] %vm541, 0.0
          %555 = vst.msk [vmem:[#allocation4 + $0x68] sm:$0xff] %vm541, 0.0
          %556 = vst.msk [vmem:[#allocation4 + $0x70] sm:$0xff] %vm541, 0.0
          %557 = vst.msk [vmem:[#allocation4 + $0x78] sm:$0xff] %vm541, 0.0
          %558 = vst.msk [vmem:[#allocation4 + $0x80] sm:$0xff] %vm541, 0.0
          %559 = vst.msk [vmem:[#allocation4 + $0x88] sm:$0xff] %vm541, 0.0
          %560 = vst.msk [vmem:[#allocation4 + $0x90] sm:$0xff] %vm541, 0.0
          %561 = vst.msk [vmem:[#allocation4 + $0x98] sm:$0xff] %vm541, 0.0
          %562 = vst.msk [vmem:[#allocation4 + $0xa0] sm:$0xff] %vm541, 0.0
          %563 = vst.msk [vmem:[#allocation4 + $0xa8] sm:$0xff] %vm541, 0.0
          %564 = vst.msk [vmem:[#allocation4 + $0xb0] sm:$0xff] %vm541, 0.0
          %565 = vst.msk [vmem:[#allocation4 + $0xb8] sm:$0xff] %vm541, 0.0
          %566 = vst.msk [vmem:[#allocation4 + $0xc0] sm:$0xff] %vm541, 0.0
          %567 = vst.msk [vmem:[#allocation4 + $0xc8] sm:$0xff] %vm541, 0.0
          %568 = vst.msk [vmem:[#allocation4 + $0xd0] sm:$0xff] %vm541, 0.0
          %569 = vst.msk [vmem:[#allocation4 + $0xd8] sm:$0xff] %vm541, 0.0
          %570 = vst.msk [vmem:[#allocation4 + $0xe0] sm:$0xff] %vm541, 0.0
          %571 = vst.msk [vmem:[#allocation4 + $0xe8] sm:$0xff] %vm541, 0.0
          %572 = vst.msk [vmem:[#allocation4 + $0xf0] sm:$0xff] %vm541, 0.0
          %573 = vst.msk [vmem:[#allocation4 + $0xf8] sm:$0xff] %vm541, 0.0
          %574 = vst.msk [vmem:[#allocation4 + $0x100] sm:$0xff] %vm541, 0.0
          %575 = vst.msk [vmem:[#allocation4 + $0x108] sm:$0xff] %vm541, 0.0
          %576 = vst.msk [vmem:[#allocation4 + $0x110] sm:$0xff] %vm541, 0.0
          %577 = vst.msk [vmem:[#allocation4 + $0x118] sm:$0xff] %vm541, 0.0
          %578 = vst.msk [vmem:[#allocation4 + $0x120] sm:$0xff] %vm541, 0.0
          %579 = vst.msk [vmem:[#allocation4 + $0x128] sm:$0xff] %vm541, 0.0
          %580 = vst.msk [vmem:[#allocation4 + $0x130] sm:$0xff] %vm541, 0.0
          %581 = vst.msk [vmem:[#allocation4 + $0x138] sm:$0xff] %vm541, 0.0
          %582 = vst.msk [vmem:[#allocation4 + $0x140] sm:$0xff] %vm541, 0.0
          %583 = vst.msk [vmem:[#allocation4 + $0x148] sm:$0xff] %vm541, 0.0
          %584 = vst.msk [vmem:[#allocation4 + $0x150] sm:$0xff] %vm541, 0.0
          %585 = vst.msk [vmem:[#allocation4 + $0x158] sm:$0xff] %vm541, 0.0
          %586 = vst.msk [vmem:[#allocation4 + $0x160] sm:$0xff] %vm541, 0.0
          %587 = vst.msk [vmem:[#allocation4 + $0x168] sm:$0xff] %vm541, 0.0
          %588 = vst.msk [vmem:[#allocation4 + $0x170] sm:$0xff] %vm541, 0.0
          %589 = vst.msk [vmem:[#allocation4 + $0x178] sm:$0xff] %vm541, 0.0
          %590 = vst.msk [vmem:[#allocation4 + $0x180] sm:$0xff] %vm541, 0.0
          %591 = vst.msk [vmem:[#allocation4 + $0x188] sm:$0xff] %vm541, 0.0
          %592 = vst.msk [vmem:[#allocation4 + $0x190] sm:$0xff] %vm541, 0.0
          %593 = vst.msk [vmem:[#allocation4 + $0x198] sm:$0xff] %vm541, 0.0
          %594 = vst.msk [vmem:[#allocation4 + $0x1a0] sm:$0xff] %vm541, 0.0
          %595 = vst.msk [vmem:[#allocation4 + $0x1a8] sm:$0xff] %vm541, 0.0
          %596 = vst.msk [vmem:[#allocation4 + $0x1b0] sm:$0xff] %vm541, 0.0
          %597 = vst.msk [vmem:[#allocation4 + $0x1b8] sm:$0xff] %vm541, 0.0
          %598 = vst.msk [vmem:[#allocation4 + $0x1c0] sm:$0xff] %vm541, 0.0
          %599 = vst.msk [vmem:[#allocation4 + $0x1c8] sm:$0xff] %vm541, 0.0
          %600 = vst.msk [vmem:[#allocation4 + $0x1d0] sm:$0xff] %vm541, 0.0
          %601 = vst.msk [vmem:[#allocation4 + $0x1d8] sm:$0xff] %vm541, 0.0
          %602 = vst.msk [vmem:[#allocation4 + $0x1e0] sm:$0xff] %vm541, 0.0
          %603 = vst.msk [vmem:[#allocation4 + $0x1e8] sm:$0xff] %vm541, 0.0
          %604 = vst.msk [vmem:[#allocation4 + $0x1f0] sm:$0xff] %vm541, 0.0
          %605 = vst.msk [vmem:[#allocation4 + $0x1f8] sm:$0xff] %vm541, 0.0
          %606 = vst.msk [vmem:[#allocation4 + $0x200] sm:$0xff] %vm541, 0.0
          %607 = vst.msk [vmem:[#allocation4 + $0x208] sm:$0xff] %vm541, 0.0
          %608 = vst.msk [vmem:[#allocation4 + $0x210] sm:$0xff] %vm541, 0.0
          %609 = vst.msk [vmem:[#allocation4 + $0x218] sm:$0xff] %vm541, 0.0
          %610 = vst.msk [vmem:[#allocation4 + $0x220] sm:$0xff] %vm541, 0.0
          %611 = vst.msk [vmem:[#allocation4 + $0x228] sm:$0xff] %vm541, 0.0
          %612 = vst.msk [vmem:[#allocation4 + $0x230] sm:$0xff] %vm541, 0.0
          %613 = vst.msk [vmem:[#allocation4 + $0x238] sm:$0xff] %vm541, 0.0
          %614 = vst.msk [vmem:[#allocation4 + $0x240] sm:$0xff] %vm541, 0.0
          %615 = vst.msk [vmem:[#allocation4 + $0x248] sm:$0xff] %vm541, 0.0
          %616 = vst.msk [vmem:[#allocation4 + $0x250] sm:$0xff] %vm541, 0.0
          %617 = vst.msk [vmem:[#allocation4 + $0x258] sm:$0xff] %vm541, 0.0
          %618 = vst.msk [vmem:[#allocation4 + $0x260] sm:$0xff] %vm541, 0.0
          %619 = vst.msk [vmem:[#allocation4 + $0x268] sm:$0xff] %vm541, 0.0
          %620 = vst.msk [vmem:[#allocation4 + $0x270] sm:$0xff] %vm541, 0.0
          %621 = vst.msk [vmem:[#allocation4 + $0x278] sm:$0xff] %vm541, 0.0
          %622 = vst.msk [vmem:[#allocation4 + $0x280] sm:$0xff] %vm541, 0.0
          %623 = vst.msk [vmem:[#allocation4 + $0x288] sm:$0xff] %vm541, 0.0
          %624 = vst.msk [vmem:[#allocation4 + $0x290] sm:$0xff] %vm541, 0.0
          %625 = vst.msk [vmem:[#allocation4 + $0x298] sm:$0xff] %vm541, 0.0
          %626 = vst.msk [vmem:[#allocation4 + $0x2a0] sm:$0xff] %vm541, 0.0
          %627 = vst.msk [vmem:[#allocation4 + $0x2a8] sm:$0xff] %vm541, 0.0
          %628 = vst.msk [vmem:[#allocation4 + $0x2b0] sm:$0xff] %vm541, 0.0
          %629 = vst.msk [vmem:[#allocation4 + $0x2b8] sm:$0xff] %vm541, 0.0
          %630 = vst.msk [vmem:[#allocation4 + $0x2c0] sm:$0xff] %vm541, 0.0
          %631 = vst.msk [vmem:[#allocation4 + $0x2c8] sm:$0xff] %vm541, 0.0
          %632 = vst.msk [vmem:[#allocation4 + $0x2d0] sm:$0xff] %vm541, 0.0
          %633 = vst.msk [vmem:[#allocation4 + $0x2d8] sm:$0xff] %vm541, 0.0
          %634 = vst.msk [vmem:[#allocation4 + $0x2e0] sm:$0xff] %vm541, 0.0
          %635 = vst.msk [vmem:[#allocation4 + $0x2e8] sm:$0xff] %vm541, 0.0
          %636 = vst.msk [vmem:[#allocation4 + $0x2f0] sm:$0xff] %vm541, 0.0
          %637 = vst.msk [vmem:[#allocation4 + $0x2f8] sm:$0xff] %vm541, 0.0
          %638 = vst.msk [vmem:[#allocation4 + $0x300] sm:$0xff] %vm541, 0.0
          %639 = vst.msk [vmem:[#allocation4 + $0x308] sm:$0xff] %vm541, 0.0
          %640 = vst.msk [vmem:[#allocation4 + $0x310] sm:$0xff] %vm541, 0.0
          %641 = vst.msk [vmem:[#allocation4 + $0x318] sm:$0xff] %vm541, 0.0
          %642 = vst.msk [vmem:[#allocation4 + $0x320] sm:$0xff] %vm541, 0.0
          %643 = vst.msk [vmem:[#allocation4 + $0x328] sm:$0xff] %vm541, 0.0
          %644 = vst.msk [vmem:[#allocation4 + $0x330] sm:$0xff] %vm541, 0.0
          %645 = vst.msk [vmem:[#allocation4 + $0x338] sm:$0xff] %vm541, 0.0
          %646 = vst.msk [vmem:[#allocation4 + $0x340] sm:$0xff] %vm541, 0.0
          %647 = vst.msk [vmem:[#allocation4 + $0x348] sm:$0xff] %vm541, 0.0
          %648 = vst.msk [vmem:[#allocation4 + $0x350] sm:$0xff] %vm541, 0.0
          %649 = vst.msk [vmem:[#allocation4 + $0x358] sm:$0xff] %vm541, 0.0
          %650 = vst.msk [vmem:[#allocation4 + $0x360] sm:$0xff] %vm541, 0.0
          %651 = vst.msk [vmem:[#allocation4 + $0x368] sm:$0xff] %vm541, 0.0
          %652 = vst.msk [vmem:[#allocation4 + $0x370] sm:$0xff] %vm541, 0.0
          %653 = vst.msk [vmem:[#allocation4 + $0x378] sm:$0xff] %vm541, 0.0
          %654 = vst.msk [vmem:[#allocation4 + $0x380] sm:$0xff] %vm541, 0.0
          %655 = vst.msk [vmem:[#allocation4 + $0x388] sm:$0xff] %vm541, 0.0
          %656 = vst.msk [vmem:[#allocation4 + $0x390] sm:$0xff] %vm541, 0.0
          %657 = vst.msk [vmem:[#allocation4 + $0x398] sm:$0xff] %vm541, 0.0
          %658 = vst.msk [vmem:[#allocation4 + $0x3a0] sm:$0xff] %vm541, 0.0
          %659 = vst.msk [vmem:[#allocation4 + $0x3a8] sm:$0xff] %vm541, 0.0
          %660 = vst.msk [vmem:[#allocation4 + $0x3b0] sm:$0xff] %vm541, 0.0
          %661 = vst.msk [vmem:[#allocation4 + $0x3b8] sm:$0xff] %vm541, 0.0
          %662 = vst.msk [vmem:[#allocation4 + $0x3c0] sm:$0xff] %vm541, 0.0
          %663 = vst.msk [vmem:[#allocation4 + $0x3c8] sm:$0xff] %vm541, 0.0
          %664 = vst.msk [vmem:[#allocation4 + $0x3d0] sm:$0xff] %vm541, 0.0
          %665 = vst.msk [vmem:[#allocation4 + $0x3d8] sm:$0xff] %vm541, 0.0
          %666 = vst.msk [vmem:[#allocation4 + $0x3e0] sm:$0xff] %vm541, 0.0
          %667 = vst.msk [vmem:[#allocation4 + $0x3e8] sm:$0xff] %vm541, 0.0
          %668 = vst.msk [vmem:[#allocation4 + $0x3f0] sm:$0xff] %vm541, 0.0
          %669 = vst.msk [vmem:[#allocation4 + $0x3f8] sm:$0xff] %vm541, 0.0
        $region36: #{tpu_custom_call.1} parent=31 // pred_fallthru
          _
        %v670 = vld [vmem:[%s256] sm:$0xf]
        %v671 = vld [vmem:[%s256 + $0x4] sm:$0xf]
        %v672 = vld [vmem:[%s256 + $0x8] sm:$0xf]
        %v673 = vld [vmem:[%s256 + $0xc] sm:$0xf]
        %v674 = vld [vmem:[%s256 + $0x10] sm:$0xf]
        %v675 = vld [vmem:[%s256 + $0x14] sm:$0xf]
        %v676 = vld [vmem:[%s256 + $0x18] sm:$0xf]
        %v677 = vld [vmem:[%s256 + $0x1c] sm:$0xf]
        %v678 = vld [vmem:[%s256 + $0x20] sm:$0xf]
        %v679 = vld [vmem:[%s256 + $0x24] sm:$0xf]
        %v680 = vld [vmem:[%s256 + $0x28] sm:$0xf]
        %v681 = vld [vmem:[%s256 + $0x2c] sm:$0xf]
        %v682 = vld [vmem:[%s256 + $0x30] sm:$0xf]
        %v683 = vld [vmem:[%s256 + $0x34] sm:$0xf]
        %v684 = vld [vmem:[%s256 + $0x38] sm:$0xf]
        %v685 = vld [vmem:[%s256 + $0x3c] sm:$0xf]
        %v686 = vld [vmem:[%s256 + $0x40] sm:$0xf]
        %v687 = vld [vmem:[%s256 + $0x44] sm:$0xf]
        %v688 = vld [vmem:[%s256 + $0x48] sm:$0xf]
        %v689 = vld [vmem:[%s256 + $0x4c] sm:$0xf]
        %v690 = vld [vmem:[%s256 + $0x50] sm:$0xf]
        %v691 = vld [vmem:[%s256 + $0x54] sm:$0xf]
        %v692 = vld [vmem:[%s256 + $0x58] sm:$0xf]
        %v693 = vld [vmem:[%s256 + $0x5c] sm:$0xf]
        %v694 = vld [vmem:[%s256 + $0x60] sm:$0xf]
        %v695 = vld [vmem:[%s256 + $0x64] sm:$0xf]
        %v696 = vld [vmem:[%s256 + $0x68] sm:$0xf]
        %v697 = vld [vmem:[%s256 + $0x6c] sm:$0xf]
        %v698 = vld [vmem:[%s256 + $0x70] sm:$0xf]
        %v699 = vld [vmem:[%s256 + $0x74] sm:$0xf]
        %v700 = vld [vmem:[%s256 + $0x78] sm:$0xf]
        %v701 = vld [vmem:[%s256 + $0x7c] sm:$0xf]
        %v702 = vld [vmem:[%s256 + $0x80] sm:$0xf]
        %v703 = vld [vmem:[%s256 + $0x84] sm:$0xf]
        %v704 = vld [vmem:[%s256 + $0x88] sm:$0xf]
        %v705 = vld [vmem:[%s256 + $0x8c] sm:$0xf]
        %v706 = vld [vmem:[%s256 + $0x90] sm:$0xf]
        %v707 = vld [vmem:[%s256 + $0x94] sm:$0xf]
        %v708 = vld [vmem:[%s256 + $0x98] sm:$0xf]
        %v709 = vld [vmem:[%s256 + $0x9c] sm:$0xf]
        %v710 = vld [vmem:[%s256 + $0xa0] sm:$0xf]
        %v711 = vld [vmem:[%s256 + $0xa4] sm:$0xf]
        %v712 = vld [vmem:[%s256 + $0xa8] sm:$0xf]
        %v713 = vld [vmem:[%s256 + $0xac] sm:$0xf]
        %v714 = vld [vmem:[%s256 + $0xb0] sm:$0xf]
        %v715 = vld [vmem:[%s256 + $0xb4] sm:$0xf]
        %v716 = vld [vmem:[%s256 + $0xb8] sm:$0xf]
        %v717 = vld [vmem:[%s256 + $0xbc] sm:$0xf]
        %v718 = vld [vmem:[%s256 + $0xc0] sm:$0xf]
        %v719 = vld [vmem:[%s256 + $0xc4] sm:$0xf]
        %v720 = vld [vmem:[%s256 + $0xc8] sm:$0xf]
        %v721 = vld [vmem:[%s256 + $0xcc] sm:$0xf]
        %v722 = vld [vmem:[%s256 + $0xd0] sm:$0xf]
        %v723 = vld [vmem:[%s256 + $0xd4] sm:$0xf]
        %v724 = vld [vmem:[%s256 + $0xd8] sm:$0xf]
        %v725 = vld [vmem:[%s256 + $0xdc] sm:$0xf]
        %v726 = vld [vmem:[%s256 + $0xe0] sm:$0xf]
        %v727 = vld [vmem:[%s256 + $0xe4] sm:$0xf]
        %v728 = vld [vmem:[%s256 + $0xe8] sm:$0xf]
        %v729 = vld [vmem:[%s256 + $0xec] sm:$0xf]
        %v730 = vld [vmem:[%s256 + $0xf0] sm:$0xf]
        %v731 = vld [vmem:[%s256 + $0xf4] sm:$0xf]
        %v732 = vld [vmem:[%s256 + $0xf8] sm:$0xf]
        %v733 = vld [vmem:[%s256 + $0xfc] sm:$0xf]
        %v734 = vld [vmem:[%s256 + $0x100] sm:$0xf]
        %v735 = vld [vmem:[%s256 + $0x104] sm:$0xf]
        %v736 = vld [vmem:[%s256 + $0x108] sm:$0xf]
        %v737 = vld [vmem:[%s256 + $0x10c] sm:$0xf]
        %v738 = vld [vmem:[%s256 + $0x110] sm:$0xf]
        %v739 = vld [vmem:[%s256 + $0x114] sm:$0xf]
        %v740 = vld [vmem:[%s256 + $0x118] sm:$0xf]
        %v741 = vld [vmem:[%s256 + $0x11c] sm:$0xf]
        %v742 = vld [vmem:[%s256 + $0x120] sm:$0xf]
        %v743 = vld [vmem:[%s256 + $0x124] sm:$0xf]
        %v744 = vld [vmem:[%s256 + $0x128] sm:$0xf]
        %v745 = vld [vmem:[%s256 + $0x12c] sm:$0xf]
        %v746 = vld [vmem:[%s256 + $0x130] sm:$0xf]
        %v747 = vld [vmem:[%s256 + $0x134] sm:$0xf]
        %v748 = vld [vmem:[%s256 + $0x138] sm:$0xf]
        %v749 = vld [vmem:[%s256 + $0x13c] sm:$0xf]
        %v750 = vld [vmem:[%s256 + $0x140] sm:$0xf]
        %v751 = vld [vmem:[%s256 + $0x144] sm:$0xf]
        %v752 = vld [vmem:[%s256 + $0x148] sm:$0xf]
        %v753 = vld [vmem:[%s256 + $0x14c] sm:$0xf]
        %v754 = vld [vmem:[%s256 + $0x150] sm:$0xf]
        %v755 = vld [vmem:[%s256 + $0x154] sm:$0xf]
        %v756 = vld [vmem:[%s256 + $0x158] sm:$0xf]
        %v757 = vld [vmem:[%s256 + $0x15c] sm:$0xf]
        %v758 = vld [vmem:[%s256 + $0x160] sm:$0xf]
        %v759 = vld [vmem:[%s256 + $0x164] sm:$0xf]
        %v760 = vld [vmem:[%s256 + $0x168] sm:$0xf]
        %v761 = vld [vmem:[%s256 + $0x16c] sm:$0xf]
        %v762 = vld [vmem:[%s256 + $0x170] sm:$0xf]
        %v763 = vld [vmem:[%s256 + $0x174] sm:$0xf]
        %v764 = vld [vmem:[%s256 + $0x178] sm:$0xf]
        %v765 = vld [vmem:[%s256 + $0x17c] sm:$0xf]
        %v766 = vld [vmem:[%s256 + $0x180] sm:$0xf]
        %v767 = vld [vmem:[%s256 + $0x184] sm:$0xf]
        %v768 = vld [vmem:[%s256 + $0x188] sm:$0xf]
        %v769 = vld [vmem:[%s256 + $0x18c] sm:$0xf]
        %v770 = vld [vmem:[%s256 + $0x190] sm:$0xf]
        %v771 = vld [vmem:[%s256 + $0x194] sm:$0xf]
        %v772 = vld [vmem:[%s256 + $0x198] sm:$0xf]
        %v773 = vld [vmem:[%s256 + $0x19c] sm:$0xf]
        %v774 = vld [vmem:[%s256 + $0x1a0] sm:$0xf]
        %v775 = vld [vmem:[%s256 + $0x1a4] sm:$0xf]
        %v776 = vld [vmem:[%s256 + $0x1a8] sm:$0xf]
        %v777 = vld [vmem:[%s256 + $0x1ac] sm:$0xf]
        %v778 = vld [vmem:[%s256 + $0x1b0] sm:$0xf]
        %v779 = vld [vmem:[%s256 + $0x1b4] sm:$0xf]
        %v780 = vld [vmem:[%s256 + $0x1b8] sm:$0xf]
        %v781 = vld [vmem:[%s256 + $0x1bc] sm:$0xf]
        %v782 = vld [vmem:[%s256 + $0x1c0] sm:$0xf]
        %v783 = vld [vmem:[%s256 + $0x1c4] sm:$0xf]
        %v784 = vld [vmem:[%s256 + $0x1c8] sm:$0xf]
        %v785 = vld [vmem:[%s256 + $0x1cc] sm:$0xf]
        %v786 = vld [vmem:[%s256 + $0x1d0] sm:$0xf]
        %v787 = vld [vmem:[%s256 + $0x1d4] sm:$0xf]
        %v788 = vld [vmem:[%s256 + $0x1d8] sm:$0xf]
        %v789 = vld [vmem:[%s256 + $0x1dc] sm:$0xf]
        %v790 = vld [vmem:[%s256 + $0x1e0] sm:$0xf]
        %v791 = vld [vmem:[%s256 + $0x1e4] sm:$0xf]
        %v792 = vld [vmem:[%s256 + $0x1e8] sm:$0xf]
        %v793 = vld [vmem:[%s256 + $0x1ec] sm:$0xf]
        %v794 = vld [vmem:[%s256 + $0x1f0] sm:$0xf]
        %v795 = vld [vmem:[%s256 + $0x1f4] sm:$0xf]
        %v796 = vld [vmem:[%s256 + $0x1f8] sm:$0xf]
        %v797 = vld [vmem:[%s256 + $0x1fc] sm:$0xf]
        %v798 = vld [vmem:[%s266] sm:$0xf]
        %v799 = vld [vmem:[%s266 + $0x4] sm:$0xf]
        %v800 = vld [vmem:[%s266 + $0x8] sm:$0xf]
        %v801 = vld [vmem:[%s266 + $0xc] sm:$0xf]
        %v802 = vld [vmem:[%s266 + $0x10] sm:$0xf]
        %v803 = vld [vmem:[%s266 + $0x14] sm:$0xf]
        %v804 = vld [vmem:[%s266 + $0x18] sm:$0xf]
        %v805 = vld [vmem:[%s266 + $0x1c] sm:$0xf]
        %v806 = vld [vmem:[%s266 + $0x20] sm:$0xf]
        %v807 = vld [vmem:[%s266 + $0x24] sm:$0xf]
        %v808 = vld [vmem:[%s266 + $0x28] sm:$0xf]
        %v809 = vld [vmem:[%s266 + $0x2c] sm:$0xf]
        %v810 = vld [vmem:[%s266 + $0x30] sm:$0xf]
        %v811 = vld [vmem:[%s266 + $0x34] sm:$0xf]
        %v812 = vld [vmem:[%s266 + $0x38] sm:$0xf]
        %v813 = vld [vmem:[%s266 + $0x3c] sm:$0xf]
        %v814 = vld [vmem:[%s266 + $0x40] sm:$0xf]
        %v815 = vld [vmem:[%s266 + $0x44] sm:$0xf]
        %v816 = vld [vmem:[%s266 + $0x48] sm:$0xf]
        %v817 = vld [vmem:[%s266 + $0x4c] sm:$0xf]
        %v818 = vld [vmem:[%s266 + $0x50] sm:$0xf]
        %v819 = vld [vmem:[%s266 + $0x54] sm:$0xf]
        %v820 = vld [vmem:[%s266 + $0x58] sm:$0xf]
        %v821 = vld [vmem:[%s266 + $0x5c] sm:$0xf]
        %v822 = vld [vmem:[%s266 + $0x60] sm:$0xf]
        %v823 = vld [vmem:[%s266 + $0x64] sm:$0xf]
        %v824 = vld [vmem:[%s266 + $0x68] sm:$0xf]
        %v825 = vld [vmem:[%s266 + $0x6c] sm:$0xf]
        %v826 = vld [vmem:[%s266 + $0x70] sm:$0xf]
        %v827 = vld [vmem:[%s266 + $0x74] sm:$0xf]
        %v828 = vld [vmem:[%s266 + $0x78] sm:$0xf]
        %v829 = vld [vmem:[%s266 + $0x7c] sm:$0xf]
        %v830 = vld [vmem:[%s266 + $0x80] sm:$0xf]
        %v831 = vld [vmem:[%s266 + $0x84] sm:$0xf]
        %v832 = vld [vmem:[%s266 + $0x88] sm:$0xf]
        %v833 = vld [vmem:[%s266 + $0x8c] sm:$0xf]
        %v834 = vld [vmem:[%s266 + $0x90] sm:$0xf]
        %v835 = vld [vmem:[%s266 + $0x94] sm:$0xf]
        %v836 = vld [vmem:[%s266 + $0x98] sm:$0xf]
        %v837 = vld [vmem:[%s266 + $0x9c] sm:$0xf]
        %v838 = vld [vmem:[%s266 + $0xa0] sm:$0xf]
        %v839 = vld [vmem:[%s266 + $0xa4] sm:$0xf]
        %v840 = vld [vmem:[%s266 + $0xa8] sm:$0xf]
        %v841 = vld [vmem:[%s266 + $0xac] sm:$0xf]
        %v842 = vld [vmem:[%s266 + $0xb0] sm:$0xf]
        %v843 = vld [vmem:[%s266 + $0xb4] sm:$0xf]
        %v844 = vld [vmem:[%s266 + $0xb8] sm:$0xf]
        %v845 = vld [vmem:[%s266 + $0xbc] sm:$0xf]
        %v846 = vld [vmem:[%s266 + $0xc0] sm:$0xf]
        %v847 = vld [vmem:[%s266 + $0xc4] sm:$0xf]
        %v848 = vld [vmem:[%s266 + $0xc8] sm:$0xf]
        %v849 = vld [vmem:[%s266 + $0xcc] sm:$0xf]
        %v850 = vld [vmem:[%s266 + $0xd0] sm:$0xf]
        %v851 = vld [vmem:[%s266 + $0xd4] sm:$0xf]
        %v852 = vld [vmem:[%s266 + $0xd8] sm:$0xf]
        %v853 = vld [vmem:[%s266 + $0xdc] sm:$0xf]
        %v854 = vld [vmem:[%s266 + $0xe0] sm:$0xf]
        %v855 = vld [vmem:[%s266 + $0xe4] sm:$0xf]
        %v856 = vld [vmem:[%s266 + $0xe8] sm:$0xf]
        %v857 = vld [vmem:[%s266 + $0xec] sm:$0xf]
        %v858 = vld [vmem:[%s266 + $0xf0] sm:$0xf]
        %v859 = vld [vmem:[%s266 + $0xf4] sm:$0xf]
        %v860 = vld [vmem:[%s266 + $0xf8] sm:$0xf]
        %v861 = vld [vmem:[%s266 + $0xfc] sm:$0xf]
        %v862 = vld [vmem:[%s266 + $0x100] sm:$0xf]
        %v863 = vld [vmem:[%s266 + $0x104] sm:$0xf]
        %v864 = vld [vmem:[%s266 + $0x108] sm:$0xf]
        %v865 = vld [vmem:[%s266 + $0x10c] sm:$0xf]
        %v866 = vld [vmem:[%s266 + $0x110] sm:$0xf]
        %v867 = vld [vmem:[%s266 + $0x114] sm:$0xf]
        %v868 = vld [vmem:[%s266 + $0x118] sm:$0xf]
        %v869 = vld [vmem:[%s266 + $0x11c] sm:$0xf]
        %v870 = vld [vmem:[%s266 + $0x120] sm:$0xf]
        %v871 = vld [vmem:[%s266 + $0x124] sm:$0xf]
        %v872 = vld [vmem:[%s266 + $0x128] sm:$0xf]
        %v873 = vld [vmem:[%s266 + $0x12c] sm:$0xf]
        %v874 = vld [vmem:[%s266 + $0x130] sm:$0xf]
        %v875 = vld [vmem:[%s266 + $0x134] sm:$0xf]
        %v876 = vld [vmem:[%s266 + $0x138] sm:$0xf]
        %v877 = vld [vmem:[%s266 + $0x13c] sm:$0xf]
        %v878 = vld [vmem:[%s266 + $0x140] sm:$0xf]
        %v879 = vld [vmem:[%s266 + $0x144] sm:$0xf]
        %v880 = vld [vmem:[%s266 + $0x148] sm:$0xf]
        %v881 = vld [vmem:[%s266 + $0x14c] sm:$0xf]
        %v882 = vld [vmem:[%s266 + $0x150] sm:$0xf]
        %v883 = vld [vmem:[%s266 + $0x154] sm:$0xf]
        %v884 = vld [vmem:[%s266 + $0x158] sm:$0xf]
        %v885 = vld [vmem:[%s266 + $0x15c] sm:$0xf]
        %v886 = vld [vmem:[%s266 + $0x160] sm:$0xf]
        %v887 = vld [vmem:[%s266 + $0x164] sm:$0xf]
        %v888 = vld [vmem:[%s266 + $0x168] sm:$0xf]
        %v889 = vld [vmem:[%s266 + $0x16c] sm:$0xf]
        %v890 = vld [vmem:[%s266 + $0x170] sm:$0xf]
        %v891 = vld [vmem:[%s266 + $0x174] sm:$0xf]
        %v892 = vld [vmem:[%s266 + $0x178] sm:$0xf]
        %v893 = vld [vmem:[%s266 + $0x17c] sm:$0xf]
        %v894 = vld [vmem:[%s266 + $0x180] sm:$0xf]
        %v895 = vld [vmem:[%s266 + $0x184] sm:$0xf]
        %v896 = vld [vmem:[%s266 + $0x188] sm:$0xf]
        %v897 = vld [vmem:[%s266 + $0x18c] sm:$0xf]
        %v898 = vld [vmem:[%s266 + $0x190] sm:$0xf]
        %v899 = vld [vmem:[%s266 + $0x194] sm:$0xf]
        %v900 = vld [vmem:[%s266 + $0x198] sm:$0xf]
        %v901 = vld [vmem:[%s266 + $0x19c] sm:$0xf]
        %v902 = vld [vmem:[%s266 + $0x1a0] sm:$0xf]
        %v903 = vld [vmem:[%s266 + $0x1a4] sm:$0xf]
        %v904 = vld [vmem:[%s266 + $0x1a8] sm:$0xf]
        %v905 = vld [vmem:[%s266 + $0x1ac] sm:$0xf]
        %v906 = vld [vmem:[%s266 + $0x1b0] sm:$0xf]
        %v907 = vld [vmem:[%s266 + $0x1b4] sm:$0xf]
        %v908 = vld [vmem:[%s266 + $0x1b8] sm:$0xf]
        %v909 = vld [vmem:[%s266 + $0x1bc] sm:$0xf]
        %v910 = vld [vmem:[%s266 + $0x1c0] sm:$0xf]
        %v911 = vld [vmem:[%s266 + $0x1c4] sm:$0xf]
        %v912 = vld [vmem:[%s266 + $0x1c8] sm:$0xf]
        %v913 = vld [vmem:[%s266 + $0x1cc] sm:$0xf]
        %v914 = vld [vmem:[%s266 + $0x1d0] sm:$0xf]
        %v915 = vld [vmem:[%s266 + $0x1d4] sm:$0xf]
        %v916 = vld [vmem:[%s266 + $0x1d8] sm:$0xf]
        %v917 = vld [vmem:[%s266 + $0x1dc] sm:$0xf]
        %v918 = vld [vmem:[%s266 + $0x1e0] sm:$0xf]
        %v919 = vld [vmem:[%s266 + $0x1e4] sm:$0xf]
        %v920 = vld [vmem:[%s266 + $0x1e8] sm:$0xf]
        %v921 = vld [vmem:[%s266 + $0x1ec] sm:$0xf]
        %v922 = vld [vmem:[%s266 + $0x1f0] sm:$0xf]
        %v923 = vld [vmem:[%s266 + $0x1f4] sm:$0xf]
        %v924 = vld [vmem:[%s266 + $0x1f8] sm:$0xf]
        %v925 = vld [vmem:[%s266 + $0x1fc] sm:$0xf]
        %v926 = vld [vmem:[%s276] sm:$0xf]
        %v927 = vld [vmem:[%s276 + $0x4] sm:$0xf]
        %v928 = vld [vmem:[%s276 + $0x8] sm:$0xf]
        %v929 = vld [vmem:[%s276 + $0xc] sm:$0xf]
        %v930 = vld [vmem:[%s276 + $0x10] sm:$0xf]
        %v931 = vld [vmem:[%s276 + $0x14] sm:$0xf]
        %v932 = vld [vmem:[%s276 + $0x18] sm:$0xf]
        %v933 = vld [vmem:[%s276 + $0x1c] sm:$0xf]
        %v934 = vld [vmem:[%s276 + $0x20] sm:$0xf]
        %v935 = vld [vmem:[%s276 + $0x24] sm:$0xf]
        %v936 = vld [vmem:[%s276 + $0x28] sm:$0xf]
        %v937 = vld [vmem:[%s276 + $0x2c] sm:$0xf]
        %v938 = vld [vmem:[%s276 + $0x30] sm:$0xf]
        %v939 = vld [vmem:[%s276 + $0x34] sm:$0xf]
        %v940 = vld [vmem:[%s276 + $0x38] sm:$0xf]
        %v941 = vld [vmem:[%s276 + $0x3c] sm:$0xf]
        %v942 = vld [vmem:[%s276 + $0x40] sm:$0xf]
        %v943 = vld [vmem:[%s276 + $0x44] sm:$0xf]
        %v944 = vld [vmem:[%s276 + $0x48] sm:$0xf]
        %v945 = vld [vmem:[%s276 + $0x4c] sm:$0xf]
        %v946 = vld [vmem:[%s276 + $0x50] sm:$0xf]
        %v947 = vld [vmem:[%s276 + $0x54] sm:$0xf]
        %v948 = vld [vmem:[%s276 + $0x58] sm:$0xf]
        %v949 = vld [vmem:[%s276 + $0x5c] sm:$0xf]
        %v950 = vld [vmem:[%s276 + $0x60] sm:$0xf]
        %v951 = vld [vmem:[%s276 + $0x64] sm:$0xf]
        %v952 = vld [vmem:[%s276 + $0x68] sm:$0xf]
        %v953 = vld [vmem:[%s276 + $0x6c] sm:$0xf]
        %v954 = vld [vmem:[%s276 + $0x70] sm:$0xf]
        %v955 = vld [vmem:[%s276 + $0x74] sm:$0xf]
        %v956 = vld [vmem:[%s276 + $0x78] sm:$0xf]
        %v957 = vld [vmem:[%s276 + $0x7c] sm:$0xf]
        %v958 = vld [vmem:[%s276 + $0x80] sm:$0xf]
        %v959 = vld [vmem:[%s276 + $0x84] sm:$0xf]
        %v960 = vld [vmem:[%s276 + $0x88] sm:$0xf]
        %v961 = vld [vmem:[%s276 + $0x8c] sm:$0xf]
        %v962 = vld [vmem:[%s276 + $0x90] sm:$0xf]
        %v963 = vld [vmem:[%s276 + $0x94] sm:$0xf]
        %v964 = vld [vmem:[%s276 + $0x98] sm:$0xf]
        %v965 = vld [vmem:[%s276 + $0x9c] sm:$0xf]
        %v966 = vld [vmem:[%s276 + $0xa0] sm:$0xf]
        %v967 = vld [vmem:[%s276 + $0xa4] sm:$0xf]
        %v968 = vld [vmem:[%s276 + $0xa8] sm:$0xf]
        %v969 = vld [vmem:[%s276 + $0xac] sm:$0xf]
        %v970 = vld [vmem:[%s276 + $0xb0] sm:$0xf]
        %v971 = vld [vmem:[%s276 + $0xb4] sm:$0xf]
        %v972 = vld [vmem:[%s276 + $0xb8] sm:$0xf]
        %v973 = vld [vmem:[%s276 + $0xbc] sm:$0xf]
        %v974 = vld [vmem:[%s276 + $0xc0] sm:$0xf]
        %v975 = vld [vmem:[%s276 + $0xc4] sm:$0xf]
        %v976 = vld [vmem:[%s276 + $0xc8] sm:$0xf]
        %v977 = vld [vmem:[%s276 + $0xcc] sm:$0xf]
        %v978 = vld [vmem:[%s276 + $0xd0] sm:$0xf]
        %v979 = vld [vmem:[%s276 + $0xd4] sm:$0xf]
        %v980 = vld [vmem:[%s276 + $0xd8] sm:$0xf]
        %v981 = vld [vmem:[%s276 + $0xdc] sm:$0xf]
        %v982 = vld [vmem:[%s276 + $0xe0] sm:$0xf]
        %v983 = vld [vmem:[%s276 + $0xe4] sm:$0xf]
        %v984 = vld [vmem:[%s276 + $0xe8] sm:$0xf]
        %v985 = vld [vmem:[%s276 + $0xec] sm:$0xf]
        %v986 = vld [vmem:[%s276 + $0xf0] sm:$0xf]
        %v987 = vld [vmem:[%s276 + $0xf4] sm:$0xf]
        %v988 = vld [vmem:[%s276 + $0xf8] sm:$0xf]
        %v989 = vld [vmem:[%s276 + $0xfc] sm:$0xf]
        %v990 = vld [vmem:[%s276 + $0x100] sm:$0xf]
        %v991 = vld [vmem:[%s276 + $0x104] sm:$0xf]
        %v992 = vld [vmem:[%s276 + $0x108] sm:$0xf]
        %v993 = vld [vmem:[%s276 + $0x10c] sm:$0xf]
        %v994 = vld [vmem:[%s276 + $0x110] sm:$0xf]
        %v995 = vld [vmem:[%s276 + $0x114] sm:$0xf]
        %v996 = vld [vmem:[%s276 + $0x118] sm:$0xf]
        %v997 = vld [vmem:[%s276 + $0x11c] sm:$0xf]
        %v998 = vld [vmem:[%s276 + $0x120] sm:$0xf]
        %v999 = vld [vmem:[%s276 + $0x124] sm:$0xf]
        %v1000 = vld [vmem:[%s276 + $0x128] sm:$0xf]
        %v1001 = vld [vmem:[%s276 + $0x12c] sm:$0xf]
        %v1002 = vld [vmem:[%s276 + $0x130] sm:$0xf]
        %v1003 = vld [vmem:[%s276 + $0x134] sm:$0xf]
        %v1004 = vld [vmem:[%s276 + $0x138] sm:$0xf]
        %v1005 = vld [vmem:[%s276 + $0x13c] sm:$0xf]
        %v1006 = vld [vmem:[%s276 + $0x140] sm:$0xf]
        %v1007 = vld [vmem:[%s276 + $0x144] sm:$0xf]
        %v1008 = vld [vmem:[%s276 + $0x148] sm:$0xf]
        %v1009 = vld [vmem:[%s276 + $0x14c] sm:$0xf]
        %v1010 = vld [vmem:[%s276 + $0x150] sm:$0xf]
        %v1011 = vld [vmem:[%s276 + $0x154] sm:$0xf]
        %v1012 = vld [vmem:[%s276 + $0x158] sm:$0xf]
        %v1013 = vld [vmem:[%s276 + $0x15c] sm:$0xf]
        %v1014 = vld [vmem:[%s276 + $0x160] sm:$0xf]
        %v1015 = vld [vmem:[%s276 + $0x164] sm:$0xf]
        %v1016 = vld [vmem:[%s276 + $0x168] sm:$0xf]
        %v1017 = vld [vmem:[%s276 + $0x16c] sm:$0xf]
        %v1018 = vld [vmem:[%s276 + $0x170] sm:$0xf]
        %v1019 = vld [vmem:[%s276 + $0x174] sm:$0xf]
        %v1020 = vld [vmem:[%s276 + $0x178] sm:$0xf]
        %v1021 = vld [vmem:[%s276 + $0x17c] sm:$0xf]
        %v1022 = vld [vmem:[%s276 + $0x180] sm:$0xf]
        %v1023 = vld [vmem:[%s276 + $0x184] sm:$0xf]
        %v1024 = vld [vmem:[%s276 + $0x188] sm:$0xf]
        %v1025 = vld [vmem:[%s276 + $0x18c] sm:$0xf]
        %v1026 = vld [vmem:[%s276 + $0x190] sm:$0xf]
        %v1027 = vld [vmem:[%s276 + $0x194] sm:$0xf]
        %v1028 = vld [vmem:[%s276 + $0x198] sm:$0xf]
        %v1029 = vld [vmem:[%s276 + $0x19c] sm:$0xf]
        %v1030 = vld [vmem:[%s276 + $0x1a0] sm:$0xf]
        %v1031 = vld [vmem:[%s276 + $0x1a4] sm:$0xf]
        %v1032 = vld [vmem:[%s276 + $0x1a8] sm:$0xf]
        %v1033 = vld [vmem:[%s276 + $0x1ac] sm:$0xf]
        %v1034 = vld [vmem:[%s276 + $0x1b0] sm:$0xf]
        %v1035 = vld [vmem:[%s276 + $0x1b4] sm:$0xf]
        %v1036 = vld [vmem:[%s276 + $0x1b8] sm:$0xf]
        %v1037 = vld [vmem:[%s276 + $0x1bc] sm:$0xf]
        %v1038 = vld [vmem:[%s276 + $0x1c0] sm:$0xf]
        %v1039 = vld [vmem:[%s276 + $0x1c4] sm:$0xf]
        %v1040 = vld [vmem:[%s276 + $0x1c8] sm:$0xf]
        %v1041 = vld [vmem:[%s276 + $0x1cc] sm:$0xf]
        %v1042 = vld [vmem:[%s276 + $0x1d0] sm:$0xf]
        %v1043 = vld [vmem:[%s276 + $0x1d4] sm:$0xf]
        %v1044 = vld [vmem:[%s276 + $0x1d8] sm:$0xf]
        %v1045 = vld [vmem:[%s276 + $0x1dc] sm:$0xf]
        %v1046 = vld [vmem:[%s276 + $0x1e0] sm:$0xf]
        %v1047 = vld [vmem:[%s276 + $0x1e4] sm:$0xf]
        %v1048 = vld [vmem:[%s276 + $0x1e8] sm:$0xf]
        %v1049 = vld [vmem:[%s276 + $0x1ec] sm:$0xf]
        %v1050 = vld [vmem:[%s276 + $0x1f0] sm:$0xf]
        %v1051 = vld [vmem:[%s276 + $0x1f4] sm:$0xf]
        %v1052 = vld [vmem:[%s276 + $0x1f8] sm:$0xf]
        %v1053 = vld [vmem:[%s276 + $0x1fc] sm:$0xf]
        %v1086 = vunpack.c.l.b16 %v670
        %v1087 = vunpack.c.l.b16 %v671
        %v1088 = vunpack.c.l.b16 %v672
        %v1089 = vunpack.c.l.b16 %v673
        %v1090 = vunpack.c.l.b16 %v674
        %v1091 = vunpack.c.l.b16 %v675
        %v1092 = vunpack.c.l.b16 %v676
        %v1093 = vunpack.c.l.b16 %v677
        %v1094 = vunpack.c.l.b16 %v678
        %v1095 = vunpack.c.l.b16 %v679
        %v1096 = vunpack.c.l.b16 %v680
        %v1097 = vunpack.c.l.b16 %v681
        %v1098 = vunpack.c.l.b16 %v682
        %v1099 = vunpack.c.l.b16 %v683
        %v1100 = vunpack.c.l.b16 %v684
        %v1101 = vunpack.c.l.b16 %v685
        %v1102 = vunpack.c.l.b16 %v686
        %v1103 = vunpack.c.l.b16 %v687
        %v1104 = vunpack.c.l.b16 %v688
        %v1105 = vunpack.c.l.b16 %v689
        %v1106 = vunpack.c.l.b16 %v690
        %v1107 = vunpack.c.l.b16 %v691
        %v1108 = vunpack.c.l.b16 %v692
        %v1109 = vunpack.c.l.b16 %v693
        %v1110 = vunpack.c.l.b16 %v694
        %v1111 = vunpack.c.l.b16 %v695
        %v1112 = vunpack.c.l.b16 %v696
        %v1113 = vunpack.c.l.b16 %v697
        %v1114 = vunpack.c.l.b16 %v698
        %v1115 = vunpack.c.l.b16 %v699
        %v1116 = vunpack.c.l.b16 %v700
        %v1117 = vunpack.c.l.b16 %v701
        %v1118 = vpack.c.b16 %v1087, %v1086
        %v1119 = vpack.c.b16 %v1089, %v1088
        %v1120 = vpack.c.b16 %v1091, %v1090
        %v1121 = vpack.c.b16 %v1093, %v1092
        %v1122 = vpack.c.b16 %v1095, %v1094
        %v1123 = vpack.c.b16 %v1097, %v1096
        %v1124 = vpack.c.b16 %v1099, %v1098
        %v1125 = vpack.c.b16 %v1101, %v1100
        %v1126 = vpack.c.b16 %v1103, %v1102
        %v1127 = vpack.c.b16 %v1105, %v1104
        %v1128 = vpack.c.b16 %v1107, %v1106
        %v1129 = vpack.c.b16 %v1109, %v1108
        %v1130 = vpack.c.b16 %v1111, %v1110
        %v1131 = vpack.c.b16 %v1113, %v1112
        %v1132 = vpack.c.b16 %v1115, %v1114
        %v1133 = vpack.c.b16 %v1117, %v1116
        %v1166 = vunpack.c.l.b16 %v798
        %v1167 = vunpack.c.l.b16 %v799
        %v1168 = vunpack.c.l.b16 %v800
        %v1169 = vunpack.c.l.b16 %v801
        %v1170 = vunpack.c.l.b16 %v802
        %v1171 = vunpack.c.l.b16 %v803
        %v1172 = vunpack.c.l.b16 %v804
        %v1173 = vunpack.c.l.b16 %v805
        %v1174 = vunpack.c.l.b16 %v806
        %v1175 = vunpack.c.l.b16 %v807
        %v1176 = vunpack.c.l.b16 %v808
        %v1177 = vunpack.c.l.b16 %v809
        %v1178 = vunpack.c.l.b16 %v810
        %v1179 = vunpack.c.l.b16 %v811
        %v1180 = vunpack.c.l.b16 %v812
        %v1181 = vunpack.c.l.b16 %v813
        %v1182 = vunpack.c.l.b16 %v814
        %v1183 = vunpack.c.l.b16 %v815
        %v1184 = vunpack.c.l.b16 %v816
        %v1185 = vunpack.c.l.b16 %v817
        %v1186 = vunpack.c.l.b16 %v818
        %v1187 = vunpack.c.l.b16 %v819
        %v1188 = vunpack.c.l.b16 %v820
        %v1189 = vunpack.c.l.b16 %v821
        %v1190 = vunpack.c.l.b16 %v822
        %v1191 = vunpack.c.l.b16 %v823
        %v1192 = vunpack.c.l.b16 %v824
        %v1193 = vunpack.c.l.b16 %v825
        %v1194 = vunpack.c.l.b16 %v826
        %v1195 = vunpack.c.l.b16 %v827
        %v1196 = vunpack.c.l.b16 %v828
        %v1197 = vunpack.c.l.b16 %v829
        %v1198 = vpack.c.b16 %v1167, %v1166
        %v1199 = vpack.c.b16 %v1169, %v1168
        %v1200 = vpack.c.b16 %v1171, %v1170
        %v1201 = vpack.c.b16 %v1173, %v1172
        %v1202 = vpack.c.b16 %v1175, %v1174
        %v1203 = vpack.c.b16 %v1177, %v1176
        %v1204 = vpack.c.b16 %v1179, %v1178
        %v1205 = vpack.c.b16 %v1181, %v1180
        %v1206 = vpack.c.b16 %v1183, %v1182
        %v1207 = vpack.c.b16 %v1185, %v1184
        %v1208 = vpack.c.b16 %v1187, %v1186
        %v1209 = vpack.c.b16 %v1189, %v1188
        %v1210 = vpack.c.b16 %v1191, %v1190
        %v1211 = vpack.c.b16 %v1193, %v1192
        %v1212 = vpack.c.b16 %v1195, %v1194
        %v1213 = vpack.c.b16 %v1197, %v1196
        %vm1214 = vcmask 261120
        %v1216 = vsel %vm1214, %v1118, 0
        %v1219 = vsel %vm1214, %v1119, 0
        %v1222 = vsel %vm1214, %v1120, 0
        %v1225 = vsel %vm1214, %v1121, 0
        %v1228 = vsel %vm1214, %v1122, 0
        %v1231 = vsel %vm1214, %v1123, 0
        %v1234 = vsel %vm1214, %v1124, 0
        %v1237 = vsel %vm1214, %v1125, 0
        %v1240 = vsel %vm1214, %v1126, 0
        %v1243 = vsel %vm1214, %v1127, 0
        %v1246 = vsel %vm1214, %v1128, 0
        %v1249 = vsel %vm1214, %v1129, 0
        %v1252 = vsel %vm1214, %v1130, 0
        %v1255 = vsel %vm1214, %v1131, 0
        %v1258 = vsel %vm1214, %v1132, 0
        %v1261 = vsel %vm1214, %v1133, 0
        %v1264 = vsel %vm1214, %v1198, 0
        %v1267 = vsel %vm1214, %v1199, 0
        %v1270 = vsel %vm1214, %v1200, 0
        %v1273 = vsel %vm1214, %v1201, 0
        %v1276 = vsel %vm1214, %v1202, 0
        %v1279 = vsel %vm1214, %v1203, 0
        %v1282 = vsel %vm1214, %v1204, 0
        %v1285 = vsel %vm1214, %v1205, 0
        %v1288 = vsel %vm1214, %v1206, 0
        %v1291 = vsel %vm1214, %v1207, 0
        %v1294 = vsel %vm1214, %v1208, 0
        %v1297 = vsel %vm1214, %v1209, 0
        %v1300 = vsel %vm1214, %v1210, 0
        %v1303 = vsel %vm1214, %v1211, 0
        %v1306 = vsel %vm1214, %v1212, 0
        %v1309 = vsel %vm1214, %v1213, 0
        %1311 = vmatprep.subr.bf16.mxu0 0
        %1312 = vmatpush1.bf16.xpose.msra.mxu0 %v1264
        %1313 = vmatprep.subr.bf16.mxu0 0
        %1314 = vmatpush1.bf16.xpose.msra.mxu0 %v1267
        %1315 = vmatprep.subr.bf16.mxu0 0
        %1316 = vmatpush1.bf16.xpose.msra.mxu0 %v1270
        %1317 = vmatprep.subr.bf16.mxu0 0
        %1318 = vmatpush1.bf16.xpose.msra.mxu0 %v1273
        %1319 = vmatprep.subr.bf16.mxu0 0
        %1320 = vmatpush1.bf16.xpose.msra.mxu0 %v1276
        %1321 = vmatprep.subr.bf16.mxu0 0
        %1322 = vmatpush1.bf16.xpose.msra.mxu0 %v1279
        %1323 = vmatprep.subr.bf16.mxu0 0
        %1324 = vmatpush1.bf16.xpose.msra.mxu0 %v1282
        %1325 = vmatprep.subr.bf16.mxu0 0
        %1326 = vmatpush1.bf16.xpose.msra.mxu0 %v1285
        %1327 = vmatprep.subr.bf16.mxu0 0
        %1328 = vmatpush1.bf16.xpose.msra.mxu0 %v1288
        %1329 = vmatprep.subr.bf16.mxu0 0
        %1330 = vmatpush1.bf16.xpose.msra.mxu0 %v1291
        %1331 = vmatprep.subr.bf16.mxu0 0
        %1332 = vmatpush1.bf16.xpose.msra.mxu0 %v1294
        %1333 = vmatprep.subr.bf16.mxu0 0
        %1334 = vmatpush1.bf16.xpose.msra.mxu0 %v1297
        %1335 = vmatprep.subr.bf16.mxu0 0
        %1336 = vmatpush1.bf16.xpose.msra.mxu0 %v1300
        %1337 = vmatprep.subr.bf16.mxu0 0
        %1338 = vmatpush1.bf16.xpose.msra.mxu0 %v1303
        %1339 = vmatprep.subr.bf16.mxu0 0
        %1340 = vmatpush1.bf16.xpose.msra.mxu0 %v1306
        %1341 = vmatprep.subr.bf16.mxu0 0
        %1342 = vmatpush1.bf16.xpose.msra.mxu0 %v1309
        %1343 = vmatprep.mubr.bf16.mxu0 0
        %1344 = vmatmul.mubr.bf16.gmra.mrb[0].mxu0 %v1216
        %v1345 = vpop.f32.mrb[0].mxu0
        %v1346 = vadd.f32 0.0, %v1345
        %v1347 = vpop.f32.mrb[0].mxu0
        %v1348 = vadd.f32 0.0, %v1347
        %v1349 = vpop.f32.mrb[0].mxu0
        %v1350 = vadd.f32 0.0, %v1349
        %v1351 = vpop.f32.mrb[0].mxu0
        %v1352 = vadd.f32 0.0, %v1351
        %1353 = vmatprep.mubr.bf16.mxu0 0
        %1354 = vmatmul.mubr.bf16.gmra.mrb[0].mxu0 %v1219
        %v1355 = vpop.f32.mrb[0].mxu0
        %v1356 = vadd.f32 0.0, %v1355
        %v1357 = vpop.f32.mrb[0].mxu0
        %v1358 = vadd.f32 0.0, %v1357
        %v1359 = vpop.f32.mrb[0].mxu0
        %v1360 = vadd.f32 0.0, %v1359
        %v1361 = vpop.f32.mrb[0].mxu0
        %v1362 = vadd.f32 0.0, %v1361
        %1363 = vmatprep.mubr.bf16.mxu0 0
        %1364 = vmatmul.mubr.bf16.gmra.mrb[0].mxu0 %v1222
        %v1365 = vpop.f32.mrb[0].mxu0
        %v1366 = vadd.f32 0.0, %v1365
        %v1367 = vpop.f32.mrb[0].mxu0
        %v1368 = vadd.f32 0.0, %v1367
        %v1369 = vpop.f32.mrb[0].mxu0
        %v1370 = vadd.f32 0.0, %v1369
        %v1371 = vpop.f32.mrb[0].mxu0
        %v1372 = vadd.f32 0.0, %v1371
        %1373 = vmatprep.mubr.bf16.mxu0 0
        %1374 = vmatmul.mubr.bf16.gmra.mrb[0].mxu0 %v1225
        %v1375 = vpop.f32.mrb[0].mxu0
        %v1376 = vadd.f32 0.0, %v1375
        %v1377 = vpop.f32.mrb[0].mxu0
        %v1378 = vadd.f32 0.0, %v1377
        %v1379 = vpop.f32.mrb[0].mxu0
        %v1380 = vadd.f32 0.0, %v1379
        %v1381 = vpop.f32.mrb[0].mxu0
        %v1382 = vadd.f32 0.0, %v1381
        %1383 = vmatprep.mubr.bf16.mxu0 0
        %1384 = vmatmul.mubr.bf16.gmra.mrb[0].mxu0 %v1228
        %v1385 = vpop.f32.mrb[0].mxu0
        %v1386 = vadd.f32 0.0, %v1385
        %v1387 = vpop.f32.mrb[0].mxu0
        %v1388 = vadd.f32 0.0, %v1387
        %v1389 = vpop.f32.mrb[0].mxu0
        %v1390 = vadd.f32 0.0, %v1389
        %v1391 = vpop.f32.mrb[0].mxu0
        %v1392 = vadd.f32 0.0, %v1391
        %1393 = vmatprep.mubr.bf16.mxu0 0
        %1394 = vmatmul.mubr.bf16.gmra.mrb[0].mxu0 %v1231
        %v1395 = vpop.f32.mrb[0].mxu0
        %v1396 = vadd.f32 0.0, %v1395
        %v1397 = vpop.f32.mrb[0].mxu0
        %v1398 = vadd.f32 0.0, %v1397
        %v1399 = vpop.f32.mrb[0].mxu0
        %v1400 = vadd.f32 0.0, %v1399
        %v1401 = vpop.f32.mrb[0].mxu0
        %v1402 = vadd.f32 0.0, %v1401
        %1403 = vmatprep.mubr.bf16.mxu0 0
        %1404 = vmatmul.mubr.bf16.gmra.mrb[0].mxu0 %v1234
        %v1405 = vpop.f32.mrb[0].mxu0
        %v1406 = vadd.f32 0.0, %v1405
        %v1407 = vpop.f32.mrb[0].mxu0
        %v1408 = vadd.f32 0.0, %v1407
        %v1409 = vpop.f32.mrb[0].mxu0
        %v1410 = vadd.f32 0.0, %v1409
        %v1411 = vpop.f32.mrb[0].mxu0
        %v1412 = vadd.f32 0.0, %v1411
        %1413 = vmatprep.mubr.bf16.mxu0 0
        %1414 = vmatmul.mubr.bf16.gmra.mrb[0].mxu0 %v1237
        %v1415 = vpop.f32.mrb[0].mxu0
        %v1416 = vadd.f32 0.0, %v1415
        %v1417 = vpop.f32.mrb[0].mxu0
        %v1418 = vadd.f32 0.0, %v1417
        %v1419 = vpop.f32.mrb[0].mxu0
        %v1420 = vadd.f32 0.0, %v1419
        %v1421 = vpop.f32.mrb[0].mxu0
        %v1422 = vadd.f32 0.0, %v1421
        %1423 = vmatprep.mubr.bf16.mxu0 0
        %1424 = vmatmul.mubr.bf16.gmra.mrb[0].mxu0 %v1240
        %v1425 = vpop.f32.mrb[0].mxu0
        %v1426 = vadd.f32 0.0, %v1425
        %v1427 = vpop.f32.mrb[0].mxu0
        %v1428 = vadd.f32 0.0, %v1427
        %v1429 = vpop.f32.mrb[0].mxu0
        %v1430 = vadd.f32 0.0, %v1429
        %v1431 = vpop.f32.mrb[0].mxu0
        %v1432 = vadd.f32 0.0, %v1431
        %1433 = vmatprep.mubr.bf16.mxu0 0
        %1434 = vmatmul.mubr.bf16.gmra.mrb[0].mxu0 %v1243
        %v1435 = vpop.f32.mrb[0].mxu0
        %v1436 = vadd.f32 0.0, %v1435
        %v1437 = vpop.f32.mrb[0].mxu0
        %v1438 = vadd.f32 0.0, %v1437
        %v1439 = vpop.f32.mrb[0].mxu0
        %v1440 = vadd.f32 0.0, %v1439
        %v1441 = vpop.f32.mrb[0].mxu0
        %v1442 = vadd.f32 0.0, %v1441
        %1443 = vmatprep.mubr.bf16.mxu0 0
        %1444 = vmatmul.mubr.bf16.gmra.mrb[0].mxu0 %v1246
        %v1445 = vpop.f32.mrb[0].mxu0
        %v1446 = vadd.f32 0.0, %v1445
        %v1447 = vpop.f32.mrb[0].mxu0
        %v1448 = vadd.f32 0.0, %v1447
        %v1449 = vpop.f32.mrb[0].mxu0
        %v1450 = vadd.f32 0.0, %v1449
        %v1451 = vpop.f32.mrb[0].mxu0
        %v1452 = vadd.f32 0.0, %v1451
        %1453 = vmatprep.mubr.bf16.mxu0 0
        %1454 = vmatmul.mubr.bf16.gmra.mrb[0].mxu0 %v1249
        %v1455 = vpop.f32.mrb[0].mxu0
        %v1456 = vadd.f32 0.0, %v1455
        %v1457 = vpop.f32.mrb[0].mxu0
        %v1458 = vadd.f32 0.0, %v1457
        %v1459 = vpop.f32.mrb[0].mxu0
        %v1460 = vadd.f32 0.0, %v1459
        %v1461 = vpop.f32.mrb[0].mxu0
        %v1462 = vadd.f32 0.0, %v1461
        %1463 = vmatprep.mubr.bf16.mxu0 0
        %1464 = vmatmul.mubr.bf16.gmra.mrb[0].mxu0 %v1252
        %v1465 = vpop.f32.mrb[0].mxu0
        %v1466 = vadd.f32 0.0, %v1465
        %v1467 = vpop.f32.mrb[0].mxu0
        %v1468 = vadd.f32 0.0, %v1467
        %v1469 = vpop.f32.mrb[0].mxu0
        %v1470 = vadd.f32 0.0, %v1469
        %v1471 = vpop.f32.mrb[0].mxu0
        %v1472 = vadd.f32 0.0, %v1471
        %1473 = vmatprep.mubr.bf16.mxu0 0
        %1474 = vmatmul.mubr.bf16.gmra.mrb[0].mxu0 %v1255
        %v1475 = vpop.f32.mrb[0].mxu0
        %v1476 = vadd.f32 0.0, %v1475
        %v1477 = vpop.f32.mrb[0].mxu0
        %v1478 = vadd.f32 0.0, %v1477
        %v1479 = vpop.f32.mrb[0].mxu0
        %v1480 = vadd.f32 0.0, %v1479
        %v1481 = vpop.f32.mrb[0].mxu0
        %v1482 = vadd.f32 0.0, %v1481
        %1483 = vmatprep.mubr.bf16.mxu0 0
        %1484 = vmatmul.mubr.bf16.gmra.mrb[0].mxu0 %v1258
        %v1485 = vpop.f32.mrb[0].mxu0
        %v1486 = vadd.f32 0.0, %v1485
        %v1487 = vpop.f32.mrb[0].mxu0
        %v1488 = vadd.f32 0.0, %v1487
        %v1489 = vpop.f32.mrb[0].mxu0
        %v1490 = vadd.f32 0.0, %v1489
        %v1491 = vpop.f32.mrb[0].mxu0
        %v1492 = vadd.f32 0.0, %v1491
        %1493 = vmatprep.mubr.bf16.mxu0 0
        %1494 = vmatmul.mubr.bf16.gmra.mrb[0].mxu0 %v1261
        %v1495 = vpop.f32.mrb[0].mxu0
        %v1496 = vadd.f32 0.0, %v1495
        %v1497 = vpop.f32.mrb[0].mxu0
        %v1498 = vadd.f32 0.0, %v1497
        %v1499 = vpop.f32.mrb[0].mxu0
        %v1500 = vadd.f32 0.0, %v1499
        %v1501 = vpop.f32.mrb[0].mxu0
        %v1502 = vadd.f32 0.0, %v1501
        %1503 = vdwg.mxu0
        %v1536 = vunpack.c.l.b16 %v702
        %v1537 = vunpack.c.l.b16 %v703
        %v1538 = vunpack.c.l.b16 %v704
        %v1539 = vunpack.c.l.b16 %v705
        %v1540 = vunpack.c.l.b16 %v706
        %v1541 = vunpack.c.l.b16 %v707
        %v1542 = vunpack.c.l.b16 %v708
        %v1543 = vunpack.c.l.b16 %v709
        %v1544 = vunpack.c.l.b16 %v710
        %v1545 = vunpack.c.l.b16 %v711
        %v1546 = vunpack.c.l.b16 %v712
        %v1547 = vunpack.c.l.b16 %v713
        %v1548 = vunpack.c.l.b16 %v714
        %v1549 = vunpack.c.l.b16 %v715
        %v1550 = vunpack.c.l.b16 %v716
        %v1551 = vunpack.c.l.b16 %v717
        %v1552 = vunpack.c.l.b16 %v718
        %v1553 = vunpack.c.l.b16 %v719
        %v1554 = vunpack.c.l.b16 %v720
        %v1555 = vunpack.c.l.b16 %v721
        %v1556 = vunpack.c.l.b16 %v722
        %v1557 = vunpack.c.l.b16 %v723
        %v1558 = vunpack.c.l.b16 %v724
        %v1559 = vunpack.c.l.b16 %v725
        %v1560 = vunpack.c.l.b16 %v726
        %v1561 = vunpack.c.l.b16 %v727
        %v1562 = vunpack.c.l.b16 %v728
        %v1563 = vunpack.c.l.b16 %v729
        %v1564 = vunpack.c.l.b16 %v730
        %v1565 = vunpack.c.l.b16 %v731
        %v1566 = vunpack.c.l.b16 %v732
        %v1567 = vunpack.c.l.b16 %v733
        %v1568 = vpack.c.b16 %v1537, %v1536
        %v1569 = vpack.c.b16 %v1539, %v1538
        %v1570 = vpack.c.b16 %v1541, %v1540
        %v1571 = vpack.c.b16 %v1543, %v1542
        %v1572 = vpack.c.b16 %v1545, %v1544
        %v1573 = vpack.c.b16 %v1547, %v1546
        %v1574 = vpack.c.b16 %v1549, %v1548
        %v1575 = vpack.c.b16 %v1551, %v1550
        %v1576 = vpack.c.b16 %v1553, %v1552
        %v1577 = vpack.c.b16 %v1555, %v1554
        %v1578 = vpack.c.b16 %v1557, %v1556
        %v1579 = vpack.c.b16 %v1559, %v1558
        %v1580 = vpack.c.b16 %v1561, %v1560
        %v1581 = vpack.c.b16 %v1563, %v1562
        %v1582 = vpack.c.b16 %v1565, %v1564
        %v1583 = vpack.c.b16 %v1567, %v1566
        %v1616 = vunpack.c.l.b16 %v830
        %v1617 = vunpack.c.l.b16 %v831
        %v1618 = vunpack.c.l.b16 %v832
        %v1619 = vunpack.c.l.b16 %v833
        %v1620 = vunpack.c.l.b16 %v834
        %v1621 = vunpack.c.l.b16 %v835
        %v1622 = vunpack.c.l.b16 %v836
        %v1623 = vunpack.c.l.b16 %v837
        %v1624 = vunpack.c.l.b16 %v838
        %v1625 = vunpack.c.l.b16 %v839
        %v1626 = vunpack.c.l.b16 %v840
        %v1627 = vunpack.c.l.b16 %v841
        %v1628 = vunpack.c.l.b16 %v842
        %v1629 = vunpack.c.l.b16 %v843
        %v1630 = vunpack.c.l.b16 %v844
        %v1631 = vunpack.c.l.b16 %v845
        %v1632 = vunpack.c.l.b16 %v846
        %v1633 = vunpack.c.l.b16 %v847
        %v1634 = vunpack.c.l.b16 %v848
        %v1635 = vunpack.c.l.b16 %v849
        %v1636 = vunpack.c.l.b16 %v850
        %v1637 = vunpack.c.l.b16 %v851
        %v1638 = vunpack.c.l.b16 %v852
        %v1639 = vunpack.c.l.b16 %v853
        %v1640 = vunpack.c.l.b16 %v854
        %v1641 = vunpack.c.l.b16 %v855
        %v1642 = vunpack.c.l.b16 %v856
        %v1643 = vunpack.c.l.b16 %v857
        %v1644 = vunpack.c.l.b16 %v858
        %v1645 = vunpack.c.l.b16 %v859
        %v1646 = vunpack.c.l.b16 %v860
        %v1647 = vunpack.c.l.b16 %v861
        %v1648 = vpack.c.b16 %v1617, %v1616
        %v1649 = vpack.c.b16 %v1619, %v1618
        %v1650 = vpack.c.b16 %v1621, %v1620
        %v1651 = vpack.c.b16 %v1623, %v1622
        %v1652 = vpack.c.b16 %v1625, %v1624
        %v1653 = vpack.c.b16 %v1627, %v1626
        %v1654 = vpack.c.b16 %v1629, %v1628
        %v1655 = vpack.c.b16 %v1631, %v1630
        %v1656 = vpack.c.b16 %v1633, %v1632
        %v1657 = vpack.c.b16 %v1635, %v1634
        %v1658 = vpack.c.b16 %v1637, %v1636
        %v1659 = vpack.c.b16 %v1639, %v1638
        %v1660 = vpack.c.b16 %v1641, %v1640
        %v1661 = vpack.c.b16 %v1643, %v1642
        %v1662 = vpack.c.b16 %v1645, %v1644
        %v1663 = vpack.c.b16 %v1647, %v1646
        %v1665 = vsel %vm1214, %v1568, 0
        %v1668 = vsel %vm1214, %v1569, 0
        %v1671 = vsel %vm1214, %v1570, 0
        %v1674 = vsel %vm1214, %v1571, 0
        %v1677 = vsel %vm1214, %v1572, 0
        %v1680 = vsel %vm1214, %v1573, 0
        %v1683 = vsel %vm1214, %v1574, 0
        %v1686 = vsel %vm1214, %v1575, 0
        %v1689 = vsel %vm1214, %v1576, 0
        %v1692 = vsel %vm1214, %v1577, 0
        %v1695 = vsel %vm1214, %v1578, 0
        %v1698 = vsel %vm1214, %v1579, 0
        %v1701 = vsel %vm1214, %v1580, 0
        %v1704 = vsel %vm1214, %v1581, 0
        %v1707 = vsel %vm1214, %v1582, 0
        %v1710 = vsel %vm1214, %v1583, 0
        %v1713 = vsel %vm1214, %v1648, 0
        %v1716 = vsel %vm1214, %v1649, 0
        %v1719 = vsel %vm1214, %v1650, 0
        %v1722 = vsel %vm1214, %v1651, 0
        %v1725 = vsel %vm1214, %v1652, 0
        %v1728 = vsel %vm1214, %v1653, 0
        %v1731 = vsel %vm1214, %v1654, 0
        %v1734 = vsel %vm1214, %v1655, 0
        %v1737 = vsel %vm1214, %v1656, 0
        %v1740 = vsel %vm1214, %v1657, 0
        %v1743 = vsel %vm1214, %v1658, 0
        %v1746 = vsel %vm1214, %v1659, 0
        %v1749 = vsel %vm1214, %v1660, 0
        %v1752 = vsel %vm1214, %v1661, 0
        %v1755 = vsel %vm1214, %v1662, 0
        %v1758 = vsel %vm1214, %v1663, 0
        %1760 = vmatprep.subr.bf16.mxu0 0
        %1761 = vmatpush1.bf16.xpose.msra.mxu0 %v1713
        %1762 = vmatprep.subr.bf16.mxu0 0
        %1763 = vmatpush1.bf16.xpose.msra.mxu0 %v1716
        %1764 = vmatprep.subr.bf16.mxu0 0
        %1765 = vmatpush1.bf16.xpose.msra.mxu0 %v1719
        %1766 = vmatprep.subr.bf16.mxu0 0
        %1767 = vmatpush1.bf16.xpose.msra.mxu0 %v1722
        %1768 = vmatprep.subr.bf16.mxu0 0
        %1769 = vmatpush1.bf16.xpose.msra.mxu0 %v1725
        %1770 = vmatprep.subr.bf16.mxu0 0
        %1771 = vmatpush1.bf16.xpose.msra.mxu0 %v1728
        %1772 = vmatprep.subr.bf16.mxu0 0
        %1773 = vmatpush1.bf16.xpose.msra.mxu0 %v1731
        %1774 = vmatprep.subr.bf16.mxu0 0
        %1775 = vmatpush1.bf16.xpose.msra.mxu0 %v1734
        %1776 = vmatprep.subr.bf16.mxu0 0
        %1777 = vmatpush1.bf16.xpose.msra.mxu0 %v1737
        %1778 = vmatprep.subr.bf16.mxu0 0
        %1779 = vmatpush1.bf16.xpose.msra.mxu0 %v1740
        %1780 = vmatprep.subr.bf16.mxu0 0
        %1781 = vmatpush1.bf16.xpose.msra.mxu0 %v1743
        %1782 = vmatprep.subr.bf16.mxu0 0
        %1783 = vmatpush1.bf16.xpose.msra.mxu0 %v1746
        %1784 = vmatprep.subr.bf16.mxu0 0
        %1785 = vmatpush1.bf16.xpose.msra.mxu0 %v1749
        %1786 = vmatprep.subr.bf16.mxu0 0
        %1787 = vmatpush1.bf16.xpose.msra.mxu0 %v1752
        %1788 = vmatprep.subr.bf16.mxu0 0
        %1789 = vmatpush1.bf16.xpose.msra.mxu0 %v1755
        %1790 = vmatprep.subr.bf16.mxu0 0
        %1791 = vmatpush1.bf16.xpose.msra.mxu0 %v1758
        %1792 = vmatprep.mubr.bf16.mxu0 0
        %1793 = vmatmul.mubr.bf16.gmra.mrb[0].mxu0 %v1665
        %v1794 = vpop.f32.mrb[0].mxu0
        %v1795 = vadd.f32 0.0, %v1794
        %v1796 = vpop.f32.mrb[0].mxu0
        %v1797 = vadd.f32 0.0, %v1796
        %v1798 = vpop.f32.mrb[0].mxu0
        %v1799 = vadd.f32 0.0, %v1798
        %v1800 = vpop.f32.mrb[0].mxu0
        %v1801 = vadd.f32 0.0, %v1800
        %1802 = vmatprep.mubr.bf16.mxu0 0
        %1803 = vmatmul.mubr.bf16.gmra.mrb[0].mxu0 %v1668
        %v1804 = vpop.f32.mrb[0].mxu0
        %v1805 = vadd.f32 0.0, %v1804
        %v1806 = vpop.f32.mrb[0].mxu0
        %v1807 = vadd.f32 0.0, %v1806
        %v1808 = vpop.f32.mrb[0].mxu0
        %v1809 = vadd.f32 0.0, %v1808
        %v1810 = vpop.f32.mrb[0].mxu0
        %v1811 = vadd.f32 0.0, %v1810
        %1812 = vmatprep.mubr.bf16.mxu0 0
        %1813 = vmatmul.mubr.bf16.gmra.mrb[0].mxu0 %v1671
        %v1814 = vpop.f32.mrb[0].mxu0
        %v1815 = vadd.f32 0.0, %v1814
        %v1816 = vpop.f32.mrb[0].mxu0
        %v1817 = vadd.f32 0.0, %v1816
        %v1818 = vpop.f32.mrb[0].mxu0
        %v1819 = vadd.f32 0.0, %v1818
        %v1820 = vpop.f32.mrb[0].mxu0
        %v1821 = vadd.f32 0.0, %v1820
        %1822 = vmatprep.mubr.bf16.mxu0 0
        %1823 = vmatmul.mubr.bf16.gmra.mrb[0].mxu0 %v1674
        %v1824 = vpop.f32.mrb[0].mxu0
        %v1825 = vadd.f32 0.0, %v1824
        %v1826 = vpop.f32.mrb[0].mxu0
        %v1827 = vadd.f32 0.0, %v1826
        %v1828 = vpop.f32.mrb[0].mxu0
        %v1829 = vadd.f32 0.0, %v1828
        %v1830 = vpop.f32.mrb[0].mxu0
        %v1831 = vadd.f32 0.0, %v1830
        %1832 = vmatprep.mubr.bf16.mxu0 0
        %1833 = vmatmul.mubr.bf16.gmra.mrb[0].mxu0 %v1677
        %v1834 = vpop.f32.mrb[0].mxu0
        %v1835 = vadd.f32 0.0, %v1834
        %v1836 = vpop.f32.mrb[0].mxu0
        %v1837 = vadd.f32 0.0, %v1836
        %v1838 = vpop.f32.mrb[0].mxu0
        %v1839 = vadd.f32 0.0, %v1838
        %v1840 = vpop.f32.mrb[0].mxu0
        %v1841 = vadd.f32 0.0, %v1840
        %1842 = vmatprep.mubr.bf16.mxu0 0
        %1843 = vmatmul.mubr.bf16.gmra.mrb[0].mxu0 %v1680
        %v1844 = vpop.f32.mrb[0].mxu0
        %v1845 = vadd.f32 0.0, %v1844
        %v1846 = vpop.f32.mrb[0].mxu0
        %v1847 = vadd.f32 0.0, %v1846
        %v1848 = vpop.f32.mrb[0].mxu0
        %v1849 = vadd.f32 0.0, %v1848
        %v1850 = vpop.f32.mrb[0].mxu0
        %v1851 = vadd.f32 0.0, %v1850
        %1852 = vmatprep.mubr.bf16.mxu0 0
        %1853 = vmatmul.mubr.bf16.gmra.mrb[0].mxu0 %v1683
        %v1854 = vpop.f32.mrb[0].mxu0
        %v1855 = vadd.f32 0.0, %v1854
        %v1856 = vpop.f32.mrb[0].mxu0
        %v1857 = vadd.f32 0.0, %v1856
        %v1858 = vpop.f32.mrb[0].mxu0
        %v1859 = vadd.f32 0.0, %v1858
        %v1860 = vpop.f32.mrb[0].mxu0
        %v1861 = vadd.f32 0.0, %v1860
        %1862 = vmatprep.mubr.bf16.mxu0 0
        %1863 = vmatmul.mubr.bf16.gmra.mrb[0].mxu0 %v1686
        %v1864 = vpop.f32.mrb[0].mxu0
        %v1865 = vadd.f32 0.0, %v1864
        %v1866 = vpop.f32.mrb[0].mxu0
        %v1867 = vadd.f32 0.0, %v1866
        %v1868 = vpop.f32.mrb[0].mxu0
        %v1869 = vadd.f32 0.0, %v1868
        %v1870 = vpop.f32.mrb[0].mxu0
        %v1871 = vadd.f32 0.0, %v1870
        %1872 = vmatprep.mubr.bf16.mxu0 0
        %1873 = vmatmul.mubr.bf16.gmra.mrb[0].mxu0 %v1689
        %v1874 = vpop.f32.mrb[0].mxu0
        %v1875 = vadd.f32 0.0, %v1874
        %v1876 = vpop.f32.mrb[0].mxu0
        %v1877 = vadd.f32 0.0, %v1876
        %v1878 = vpop.f32.mrb[0].mxu0
        %v1879 = vadd.f32 0.0, %v1878
        %v1880 = vpop.f32.mrb[0].mxu0
        %v1881 = vadd.f32 0.0, %v1880
        %1882 = vmatprep.mubr.bf16.mxu0 0
        %1883 = vmatmul.mubr.bf16.gmra.mrb[0].mxu0 %v1692
        %v1884 = vpop.f32.mrb[0].mxu0
        %v1885 = vadd.f32 0.0, %v1884
        %v1886 = vpop.f32.mrb[0].mxu0
        %v1887 = vadd.f32 0.0, %v1886
        %v1888 = vpop.f32.mrb[0].mxu0
        %v1889 = vadd.f32 0.0, %v1888
        %v1890 = vpop.f32.mrb[0].mxu0
        %v1891 = vadd.f32 0.0, %v1890
        %1892 = vmatprep.mubr.bf16.mxu0 0
        %1893 = vmatmul.mubr.bf16.gmra.mrb[0].mxu0 %v1695
        %v1894 = vpop.f32.mrb[0].mxu0
        %v1895 = vadd.f32 0.0, %v1894
        %v1896 = vpop.f32.mrb[0].mxu0
        %v1897 = vadd.f32 0.0, %v1896
        %v1898 = vpop.f32.mrb[0].mxu0
        %v1899 = vadd.f32 0.0, %v1898
        %v1900 = vpop.f32.mrb[0].mxu0
        %v1901 = vadd.f32 0.0, %v1900
        %1902 = vmatprep.mubr.bf16.mxu0 0
        %1903 = vmatmul.mubr.bf16.gmra.mrb[0].mxu0 %v1698
        %v1904 = vpop.f32.mrb[0].mxu0
        %v1905 = vadd.f32 0.0, %v1904
        %v1906 = vpop.f32.mrb[0].mxu0
        %v1907 = vadd.f32 0.0, %v1906
        %v1908 = vpop.f32.mrb[0].mxu0
        %v1909 = vadd.f32 0.0, %v1908
        %v1910 = vpop.f32.mrb[0].mxu0
        %v1911 = vadd.f32 0.0, %v1910
        %1912 = vmatprep.mubr.bf16.mxu0 0
        %1913 = vmatmul.mubr.bf16.gmra.mrb[0].mxu0 %v1701
        %v1914 = vpop.f32.mrb[0].mxu0
        %v1915 = vadd.f32 0.0, %v1914
        %v1916 = vpop.f32.mrb[0].mxu0
        %v1917 = vadd.f32 0.0, %v1916
        %v1918 = vpop.f32.mrb[0].mxu0
        %v1919 = vadd.f32 0.0, %v1918
        %v1920 = vpop.f32.mrb[0].mxu0
        %v1921 = vadd.f32 0.0, %v1920
        %1922 = vmatprep.mubr.bf16.mxu0 0
        %1923 = vmatmul.mubr.bf16.gmra.mrb[0].mxu0 %v1704
        %v1924 = vpop.f32.mrb[0].mxu0
        %v1925 = vadd.f32 0.0, %v1924
        %v1926 = vpop.f32.mrb[0].mxu0
        %v1927 = vadd.f32 0.0, %v1926
        %v1928 = vpop.f32.mrb[0].mxu0
        %v1929 = vadd.f32 0.0, %v1928
        %v1930 = vpop.f32.mrb[0].mxu0
        %v1931 = vadd.f32 0.0, %v1930
        %1932 = vmatprep.mubr.bf16.mxu0 0
        %1933 = vmatmul.mubr.bf16.gmra.mrb[0].mxu0 %v1707
        %v1934 = vpop.f32.mrb[0].mxu0
        %v1935 = vadd.f32 0.0, %v1934
        %v1936 = vpop.f32.mrb[0].mxu0
        %v1937 = vadd.f32 0.0, %v1936
        %v1938 = vpop.f32.mrb[0].mxu0
        %v1939 = vadd.f32 0.0, %v1938
        %v1940 = vpop.f32.mrb[0].mxu0
        %v1941 = vadd.f32 0.0, %v1940
        %1942 = vmatprep.mubr.bf16.mxu0 0
        %1943 = vmatmul.mubr.bf16.gmra.mrb[0].mxu0 %v1710
        %v1944 = vpop.f32.mrb[0].mxu0
        %v1945 = vadd.f32 0.0, %v1944
        %v1946 = vpop.f32.mrb[0].mxu0
        %v1947 = vadd.f32 0.0, %v1946
        %v1948 = vpop.f32.mrb[0].mxu0
        %v1949 = vadd.f32 0.0, %v1948
        %v1950 = vpop.f32.mrb[0].mxu0
        %v1951 = vadd.f32 0.0, %v1950
        %1952 = vdwg.mxu0
        %v1985 = vunpack.c.l.b16 %v734
        %v1986 = vunpack.c.l.b16 %v735
        %v1987 = vunpack.c.l.b16 %v736
        %v1988 = vunpack.c.l.b16 %v737
        %v1989 = vunpack.c.l.b16 %v738
        %v1990 = vunpack.c.l.b16 %v739
        %v1991 = vunpack.c.l.b16 %v740
        %v1992 = vunpack.c.l.b16 %v741
        %v1993 = vunpack.c.l.b16 %v742
        %v1994 = vunpack.c.l.b16 %v743
        %v1995 = vunpack.c.l.b16 %v744
        %v1996 = vunpack.c.l.b16 %v745
        %v1997 = vunpack.c.l.b16 %v746
        %v1998 = vunpack.c.l.b16 %v747
        %v1999 = vunpack.c.l.b16 %v748
        %v2000 = vunpack.c.l.b16 %v749
        %v2001 = vunpack.c.l.b16 %v750
        %v2002 = vunpack.c.l.b16 %v751
        %v2003 = vunpack.c.l.b16 %v752
        %v2004 = vunpack.c.l.b16 %v753
        %v2005 = vunpack.c.l.b16 %v754
        %v2006 = vunpack.c.l.b16 %v755
        %v2007 = vunpack.c.l.b16 %v756
        %v2008 = vunpack.c.l.b16 %v757
        %v2009 = vunpack.c.l.b16 %v758
        %v2010 = vunpack.c.l.b16 %v759
        %v2011 = vunpack.c.l.b16 %v760
        %v2012 = vunpack.c.l.b16 %v761
        %v2013 = vunpack.c.l.b16 %v762
        %v2014 = vunpack.c.l.b16 %v763
        %v2015 = vunpack.c.l.b16 %v764
        %v2016 = vunpack.c.l.b16 %v765
        %v2017 = vpack.c.b16 %v1986, %v1985
        %v2018 = vpack.c.b16 %v1988, %v1987
        %v2019 = vpack.c.b16 %v1990, %v1989
        %v2020 = vpack.c.b16 %v1992, %v1991
        %v2021 = vpack.c.b16 %v1994, %v1993
        %v2022 = vpack.c.b16 %v1996, %v1995
        %v2023 = vpack.c.b16 %v1998, %v1997
        %v2024 = vpack.c.b16 %v2000, %v1999
        %v2025 = vpack.c.b16 %v2002, %v2001
        %v2026 = vpack.c.b16 %v2004, %v2003
        %v2027 = vpack.c.b16 %v2006, %v2005
        %v2028 = vpack.c.b16 %v2008, %v2007
        %v2029 = vpack.c.b16 %v2010, %v2009
        %v2030 = vpack.c.b16 %v2012, %v2011
        %v2031 = vpack.c.b16 %v2014, %v2013
        %v2032 = vpack.c.b16 %v2016, %v2015
        %v2065 = vunpack.c.l.b16 %v862
        %v2066 = vunpack.c.l.b16 %v863
        %v2067 = vunpack.c.l.b16 %v864
        %v2068 = vunpack.c.l.b16 %v865
        %v2069 = vunpack.c.l.b16 %v866
        %v2070 = vunpack.c.l.b16 %v867
        %v2071 = vunpack.c.l.b16 %v868
        %v2072 = vunpack.c.l.b16 %v869
        %v2073 = vunpack.c.l.b16 %v870
        %v2074 = vunpack.c.l.b16 %v871
        %v2075 = vunpack.c.l.b16 %v872
        %v2076 = vunpack.c.l.b16 %v873
        %v2077 = vunpack.c.l.b16 %v874
        %v2078 = vunpack.c.l.b16 %v875
        %v2079 = vunpack.c.l.b16 %v876
        %v2080 = vunpack.c.l.b16 %v877
        %v2081 = vunpack.c.l.b16 %v878
        %v2082 = vunpack.c.l.b16 %v879
        %v2083 = vunpack.c.l.b16 %v880
        %v2084 = vunpack.c.l.b16 %v881
        %v2085 = vunpack.c.l.b16 %v882
        %v2086 = vunpack.c.l.b16 %v883
        %v2087 = vunpack.c.l.b16 %v884
        %v2088 = vunpack.c.l.b16 %v885
        %v2089 = vunpack.c.l.b16 %v886
        %v2090 = vunpack.c.l.b16 %v887
        %v2091 = vunpack.c.l.b16 %v888
        %v2092 = vunpack.c.l.b16 %v889
        %v2093 = vunpack.c.l.b16 %v890
        %v2094 = vunpack.c.l.b16 %v891
        %v2095 = vunpack.c.l.b16 %v892
        %v2096 = vunpack.c.l.b16 %v893
        %v2097 = vpack.c.b16 %v2066, %v2065
        %v2098 = vpack.c.b16 %v2068, %v2067
        %v2099 = vpack.c.b16 %v2070, %v2069
        %v2100 = vpack.c.b16 %v2072, %v2071
        %v2101 = vpack.c.b16 %v2074, %v2073
        %v2102 = vpack.c.b16 %v2076, %v2075
        %v2103 = vpack.c.b16 %v2078, %v2077
        %v2104 = vpack.c.b16 %v2080, %v2079
        %v2105 = vpack.c.b16 %v2082, %v2081
        %v2106 = vpack.c.b16 %v2084, %v2083
        %v2107 = vpack.c.b16 %v2086, %v2085
        %v2108 = vpack.c.b16 %v2088, %v2087
        %v2109 = vpack.c.b16 %v2090, %v2089
        %v2110 = vpack.c.b16 %v2092, %v2091
        %v2111 = vpack.c.b16 %v2094, %v2093
        %v2112 = vpack.c.b16 %v2096, %v2095
        %v2114 = vsel %vm1214, %v2017, 0
        %v2117 = vsel %vm1214, %v2018, 0
        %v2120 = vsel %vm1214, %v2019, 0
        %v2123 = vsel %vm1214, %v2020, 0
        %v2126 = vsel %vm1214, %v2021, 0
        %v2129 = vsel %vm1214, %v2022, 0
        %v2132 = vsel %vm1214, %v2023, 0
        %v2135 = vsel %vm1214, %v2024, 0
        %v2138 = vsel %vm1214, %v2025, 0
        %v2141 = vsel %vm1214, %v2026, 0
        %v2144 = vsel %vm1214, %v2027, 0
        %v2147 = vsel %vm1214, %v2028, 0
        %v2150 = vsel %vm1214, %v2029, 0
        %v2153 = vsel %vm1214, %v2030, 0
        %v2156 = vsel %vm1214, %v2031, 0
        %v2159 = vsel %vm1214, %v2032, 0
        %v2162 = vsel %vm1214, %v2097, 0
        %v2165 = vsel %vm1214, %v2098, 0
        %v2168 = vsel %vm1214, %v2099, 0
        %v2171 = vsel %vm1214, %v2100, 0
        %v2174 = vsel %vm1214, %v2101, 0
        %v2177 = vsel %vm1214, %v2102, 0
        %v2180 = vsel %vm1214, %v2103, 0
        %v2183 = vsel %vm1214, %v2104, 0
        %v2186 = vsel %vm1214, %v2105, 0
        %v2189 = vsel %vm1214, %v2106, 0
        %v2192 = vsel %vm1214, %v2107, 0
        %v2195 = vsel %vm1214, %v2108, 0
        %v2198 = vsel %vm1214, %v2109, 0
        %v2201 = vsel %vm1214, %v2110, 0
        %v2204 = vsel %vm1214, %v2111, 0
        %v2207 = vsel %vm1214, %v2112, 0
        %2209 = vmatprep.subr.bf16.mxu0 0
        %2210 = vmatpush1.bf16.xpose.msra.mxu0 %v2162
        %2211 = vmatprep.subr.bf16.mxu0 0
        %2212 = vmatpush1.bf16.xpose.msra.mxu0 %v2165
        %2213 = vmatprep.subr.bf16.mxu0 0
        %2214 = vmatpush1.bf16.xpose.msra.mxu0 %v2168
        %2215 = vmatprep.subr.bf16.mxu0 0
        %2216 = vmatpush1.bf16.xpose.msra.mxu0 %v2171
        %2217 = vmatprep.subr.bf16.mxu0 0
        %2218 = vmatpush1.bf16.xpose.msra.mxu0 %v2174
        %2219 = vmatprep.subr.bf16.mxu0 0
        %2220 = vmatpush1.bf16.xpose.msra.mxu0 %v2177
        %2221 = vmatprep.subr.bf16.mxu0 0
        %2222 = vmatpush1.bf16.xpose.msra.mxu0 %v2180
        %2223 = vmatprep.subr.bf16.mxu0 0
        %2224 = vmatpush1.bf16.xpose.msra.mxu0 %v2183
        %2225 = vmatprep.subr.bf16.mxu0 0
        %2226 = vmatpush1.bf16.xpose.msra.mxu0 %v2186
        %2227 = vmatprep.subr.bf16.mxu0 0
        %2228 = vmatpush1.bf16.xpose.msra.mxu0 %v2189
        %2229 = vmatprep.subr.bf16.mxu0 0
        %2230 = vmatpush1.bf16.xpose.msra.mxu0 %v2192
        %2231 = vmatprep.subr.bf16.mxu0 0
        %2232 = vmatpush1.bf16.xpose.msra.mxu0 %v2195
        %2233 = vmatprep.subr.bf16.mxu0 0
        %2234 = vmatpush1.bf16.xpose.msra.mxu0 %v2198
        %2235 = vmatprep.subr.bf16.mxu0 0
        %2236 = vmatpush1.bf16.xpose.msra.mxu0 %v2201
        %2237 = vmatprep.subr.bf16.mxu0 0
        %2238 = vmatpush1.bf16.xpose.msra.mxu0 %v2204
        %2239 = vmatprep.subr.bf16.mxu0 0
        %2240 = vmatpush1.bf16.xpose.msra.mxu0 %v2207
        %2241 = vmatprep.mubr.bf16.mxu0 0
        %2242 = vmatmul.mubr.bf16.gmra.mrb[0].mxu0 %v2114
        %v2243 = vpop.f32.mrb[0].mxu0
        %v2244 = vadd.f32 0.0, %v2243
        %v2245 = vpop.f32.mrb[0].mxu0
        %v2246 = vadd.f32 0.0, %v2245
        %v2247 = vpop.f32.mrb[0].mxu0
        %v2248 = vadd.f32 0.0, %v2247
        %v2249 = vpop.f32.mrb[0].mxu0
        %v2250 = vadd.f32 0.0, %v2249
        %2251 = vmatprep.mubr.bf16.mxu0 0
        %2252 = vmatmul.mubr.bf16.gmra.mrb[0].mxu0 %v2117
        %v2253 = vpop.f32.mrb[0].mxu0
        %v2254 = vadd.f32 0.0, %v2253
        %v2255 = vpop.f32.mrb[0].mxu0
        %v2256 = vadd.f32 0.0, %v2255
        %v2257 = vpop.f32.mrb[0].mxu0
        %v2258 = vadd.f32 0.0, %v2257
        %v2259 = vpop.f32.mrb[0].mxu0
        %v2260 = vadd.f32 0.0, %v2259
        %2261 = vmatprep.mubr.bf16.mxu0 0
        %2262 = vmatmul.mubr.bf16.gmra.mrb[0].mxu0 %v2120
        %v2263 = vpop.f32.mrb[0].mxu0
        %v2264 = vadd.f32 0.0, %v2263
        %v2265 = vpop.f32.mrb[0].mxu0
        %v2266 = vadd.f32 0.0, %v2265
        %v2267 = vpop.f32.mrb[0].mxu0
        %v2268 = vadd.f32 0.0, %v2267
        %v2269 = vpop.f32.mrb[0].mxu0
        %v2270 = vadd.f32 0.0, %v2269
        %2271 = vmatprep.mubr.bf16.mxu0 0
        %2272 = vmatmul.mubr.bf16.gmra.mrb[0].mxu0 %v2123
        %v2273 = vpop.f32.mrb[0].mxu0
        %v2274 = vadd.f32 0.0, %v2273
        %v2275 = vpop.f32.mrb[0].mxu0
        %v2276 = vadd.f32 0.0, %v2275
        %v2277 = vpop.f32.mrb[0].mxu0
        %v2278 = vadd.f32 0.0, %v2277
        %v2279 = vpop.f32.mrb[0].mxu0
        %v2280 = vadd.f32 0.0, %v2279
        %2281 = vmatprep.mubr.bf16.mxu0 0
        %2282 = vmatmul.mubr.bf16.gmra.mrb[0].mxu0 %v2126
        %v2283 = vpop.f32.mrb[0].mxu0
        %v2284 = vadd.f32 0.0, %v2283
        %v2285 = vpop.f32.mrb[0].mxu0
        %v2286 = vadd.f32 0.0, %v2285
        %v2287 = vpop.f32.mrb[0].mxu0
        %v2288 = vadd.f32 0.0, %v2287
        %v2289 = vpop.f32.mrb[0].mxu0
        %v2290 = vadd.f32 0.0, %v2289
        %2291 = vmatprep.mubr.bf16.mxu0 0
        %2292 = vmatmul.mubr.bf16.gmra.mrb[0].mxu0 %v2129
        %v2293 = vpop.f32.mrb[0].mxu0
        %v2294 = vadd.f32 0.0, %v2293
        %v2295 = vpop.f32.mrb[0].mxu0
        %v2296 = vadd.f32 0.0, %v2295
        %v2297 = vpop.f32.mrb[0].mxu0
        %v2298 = vadd.f32 0.0, %v2297
        %v2299 = vpop.f32.mrb[0].mxu0
        %v2300 = vadd.f32 0.0, %v2299
        %2301 = vmatprep.mubr.bf16.mxu0 0
        %2302 = vmatmul.mubr.bf16.gmra.mrb[0].mxu0 %v2132
        %v2303 = vpop.f32.mrb[0].mxu0
        %v2304 = vadd.f32 0.0, %v2303
        %v2305 = vpop.f32.mrb[0].mxu0
        %v2306 = vadd.f32 0.0, %v2305
        %v2307 = vpop.f32.mrb[0].mxu0
        %v2308 = vadd.f32 0.0, %v2307
        %v2309 = vpop.f32.mrb[0].mxu0
        %v2310 = vadd.f32 0.0, %v2309
        %2311 = vmatprep.mubr.bf16.mxu0 0
        %2312 = vmatmul.mubr.bf16.gmra.mrb[0].mxu0 %v2135
        %v2313 = vpop.f32.mrb[0].mxu0
        %v2314 = vadd.f32 0.0, %v2313
        %v2315 = vpop.f32.mrb[0].mxu0
        %v2316 = vadd.f32 0.0, %v2315
        %v2317 = vpop.f32.mrb[0].mxu0
        %v2318 = vadd.f32 0.0, %v2317
        %v2319 = vpop.f32.mrb[0].mxu0
        %v2320 = vadd.f32 0.0, %v2319
        %2321 = vmatprep.mubr.bf16.mxu0 0
        %2322 = vmatmul.mubr.bf16.gmra.mrb[0].mxu0 %v2138
        %v2323 = vpop.f32.mrb[0].mxu0
        %v2324 = vadd.f32 0.0, %v2323
        %v2325 = vpop.f32.mrb[0].mxu0
        %v2326 = vadd.f32 0.0, %v2325
        %v2327 = vpop.f32.mrb[0].mxu0
        %v2328 = vadd.f32 0.0, %v2327
        %v2329 = vpop.f32.mrb[0].mxu0
        %v2330 = vadd.f32 0.0, %v2329
        %2331 = vmatprep.mubr.bf16.mxu0 0
        %2332 = vmatmul.mubr.bf16.gmra.mrb[0].mxu0 %v2141
        %v2333 = vpop.f32.mrb[0].mxu0
        %v2334 = vadd.f32 0.0, %v2333
        %v2335 = vpop.f32.mrb[0].mxu0
        %v2336 = vadd.f32 0.0, %v2335
        %v2337 = vpop.f32.mrb[0].mxu0
        %v2338 = vadd.f32 0.0, %v2337
        %v2339 = vpop.f32.mrb[0].mxu0
        %v2340 = vadd.f32 0.0, %v2339
        %2341 = vmatprep.mubr.bf16.mxu0 0
        %2342 = vmatmul.mubr.bf16.gmra.mrb[0].mxu0 %v2144
        %v2343 = vpop.f32.mrb[0].mxu0
        %v2344 = vadd.f32 0.0, %v2343
        %v2345 = vpop.f32.mrb[0].mxu0
        %v2346 = vadd.f32 0.0, %v2345
        %v2347 = vpop.f32.mrb[0].mxu0
        %v2348 = vadd.f32 0.0, %v2347
        %v2349 = vpop.f32.mrb[0].mxu0
        %v2350 = vadd.f32 0.0, %v2349
        %2351 = vmatprep.mubr.bf16.mxu0 0
        %2352 = vmatmul.mubr.bf16.gmra.mrb[0].mxu0 %v2147
        %v2353 = vpop.f32.mrb[0].mxu0
        %v2354 = vadd.f32 0.0, %v2353
        %v2355 = vpop.f32.mrb[0].mxu0
        %v2356 = vadd.f32 0.0, %v2355
        %v2357 = vpop.f32.mrb[0].mxu0
        %v2358 = vadd.f32 0.0, %v2357
        %v2359 = vpop.f32.mrb[0].mxu0
        %v2360 = vadd.f32 0.0, %v2359
        %2361 = vmatprep.mubr.bf16.mxu0 0
        %2362 = vmatmul.mubr.bf16.gmra.mrb[0].mxu0 %v2150
        %v2363 = vpop.f32.mrb[0].mxu0
        %v2364 = vadd.f32 0.0, %v2363
        %v2365 = vpop.f32.mrb[0].mxu0
        %v2366 = vadd.f32 0.0, %v2365
        %v2367 = vpop.f32.mrb[0].mxu0
        %v2368 = vadd.f32 0.0, %v2367
        %v2369 = vpop.f32.mrb[0].mxu0
        %v2370 = vadd.f32 0.0, %v2369
        %2371 = vmatprep.mubr.bf16.mxu0 0
        %2372 = vmatmul.mubr.bf16.gmra.mrb[0].mxu0 %v2153
        %v2373 = vpop.f32.mrb[0].mxu0
        %v2374 = vadd.f32 0.0, %v2373
        %v2375 = vpop.f32.mrb[0].mxu0
        %v2376 = vadd.f32 0.0, %v2375
        %v2377 = vpop.f32.mrb[0].mxu0
        %v2378 = vadd.f32 0.0, %v2377
        %v2379 = vpop.f32.mrb[0].mxu0
        %v2380 = vadd.f32 0.0, %v2379
        %2381 = vmatprep.mubr.bf16.mxu0 0
        %2382 = vmatmul.mubr.bf16.gmra.mrb[0].mxu0 %v2156
        %v2383 = vpop.f32.mrb[0].mxu0
        %v2384 = vadd.f32 0.0, %v2383
        %v2385 = vpop.f32.mrb[0].mxu0
        %v2386 = vadd.f32 0.0, %v2385
        %v2387 = vpop.f32.mrb[0].mxu0
        %v2388 = vadd.f32 0.0, %v2387
        %v2389 = vpop.f32.mrb[0].mxu0
        %v2390 = vadd.f32 0.0, %v2389
        %2391 = vmatprep.mubr.bf16.mxu0 0
        %2392 = vmatmul.mubr.bf16.gmra.mrb[0].mxu0 %v2159
        %v2393 = vpop.f32.mrb[0].mxu0
        %v2394 = vadd.f32 0.0, %v2393
        %v2395 = vpop.f32.mrb[0].mxu0
        %v2396 = vadd.f32 0.0, %v2395
        %v2397 = vpop.f32.mrb[0].mxu0
        %v2398 = vadd.f32 0.0, %v2397
        %v2399 = vpop.f32.mrb[0].mxu0
        %v2400 = vadd.f32 0.0, %v2399
        %2401 = vdwg.mxu0
        %v2434 = vunpack.c.l.b16 %v766
        %v2435 = vunpack.c.l.b16 %v767
        %v2436 = vunpack.c.l.b16 %v768
        %v2437 = vunpack.c.l.b16 %v769
        %v2438 = vunpack.c.l.b16 %v770
        %v2439 = vunpack.c.l.b16 %v771
        %v2440 = vunpack.c.l.b16 %v772
        %v2441 = vunpack.c.l.b16 %v773
        %v2442 = vunpack.c.l.b16 %v774
        %v2443 = vunpack.c.l.b16 %v775
        %v2444 = vunpack.c.l.b16 %v776
        %v2445 = vunpack.c.l.b16 %v777
        %v2446 = vunpack.c.l.b16 %v778
        %v2447 = vunpack.c.l.b16 %v779
        %v2448 = vunpack.c.l.b16 %v780
        %v2449 = vunpack.c.l.b16 %v781
        %v2450 = vunpack.c.l.b16 %v782
        %v2451 = vunpack.c.l.b16 %v783
        %v2452 = vunpack.c.l.b16 %v784
        %v2453 = vunpack.c.l.b16 %v785
        %v2454 = vunpack.c.l.b16 %v786
        %v2455 = vunpack.c.l.b16 %v787
        %v2456 = vunpack.c.l.b16 %v788
        %v2457 = vunpack.c.l.b16 %v789
        %v2458 = vunpack.c.l.b16 %v790
        %v2459 = vunpack.c.l.b16 %v791
        %v2460 = vunpack.c.l.b16 %v792
        %v2461 = vunpack.c.l.b16 %v793
        %v2462 = vunpack.c.l.b16 %v794
        %v2463 = vunpack.c.l.b16 %v795
        %v2464 = vunpack.c.l.b16 %v796
        %v2465 = vunpack.c.l.b16 %v797
        %v2466 = vpack.c.b16 %v2435, %v2434
        %v2467 = vpack.c.b16 %v2437, %v2436
        %v2468 = vpack.c.b16 %v2439, %v2438
        %v2469 = vpack.c.b16 %v2441, %v2440
        %v2470 = vpack.c.b16 %v2443, %v2442
        %v2471 = vpack.c.b16 %v2445, %v2444
        %v2472 = vpack.c.b16 %v2447, %v2446
        %v2473 = vpack.c.b16 %v2449, %v2448
        %v2474 = vpack.c.b16 %v2451, %v2450
        %v2475 = vpack.c.b16 %v2453, %v2452
        %v2476 = vpack.c.b16 %v2455, %v2454
        %v2477 = vpack.c.b16 %v2457, %v2456
        %v2478 = vpack.c.b16 %v2459, %v2458
        %v2479 = vpack.c.b16 %v2461, %v2460
        %v2480 = vpack.c.b16 %v2463, %v2462
        %v2481 = vpack.c.b16 %v2465, %v2464
        %v2514 = vunpack.c.l.b16 %v894
        %v2515 = vunpack.c.l.b16 %v895
        %v2516 = vunpack.c.l.b16 %v896
        %v2517 = vunpack.c.l.b16 %v897
        %v2518 = vunpack.c.l.b16 %v898
        %v2519 = vunpack.c.l.b16 %v899
        %v2520 = vunpack.c.l.b16 %v900
        %v2521 = vunpack.c.l.b16 %v901
        %v2522 = vunpack.c.l.b16 %v902
        %v2523 = vunpack.c.l.b16 %v903
        %v2524 = vunpack.c.l.b16 %v904
        %v2525 = vunpack.c.l.b16 %v905
        %v2526 = vunpack.c.l.b16 %v906
        %v2527 = vunpack.c.l.b16 %v907
        %v2528 = vunpack.c.l.b16 %v908
        %v2529 = vunpack.c.l.b16 %v909
        %v2530 = vunpack.c.l.b16 %v910
        %v2531 = vunpack.c.l.b16 %v911
        %v2532 = vunpack.c.l.b16 %v912
        %v2533 = vunpack.c.l.b16 %v913
        %v2534 = vunpack.c.l.b16 %v914
        %v2535 = vunpack.c.l.b16 %v915
        %v2536 = vunpack.c.l.b16 %v916
        %v2537 = vunpack.c.l.b16 %v917
        %v2538 = vunpack.c.l.b16 %v918
        %v2539 = vunpack.c.l.b16 %v919
        %v2540 = vunpack.c.l.b16 %v920
        %v2541 = vunpack.c.l.b16 %v921
        %v2542 = vunpack.c.l.b16 %v922
        %v2543 = vunpack.c.l.b16 %v923
        %v2544 = vunpack.c.l.b16 %v924
        %v2545 = vunpack.c.l.b16 %v925
        %v2546 = vpack.c.b16 %v2515, %v2514
        %v2547 = vpack.c.b16 %v2517, %v2516
        %v2548 = vpack.c.b16 %v2519, %v2518
        %v2549 = vpack.c.b16 %v2521, %v2520
        %v2550 = vpack.c.b16 %v2523, %v2522
        %v2551 = vpack.c.b16 %v2525, %v2524
        %v2552 = vpack.c.b16 %v2527, %v2526
        %v2553 = vpack.c.b16 %v2529, %v2528
        %v2554 = vpack.c.b16 %v2531, %v2530
        %v2555 = vpack.c.b16 %v2533, %v2532
        %v2556 = vpack.c.b16 %v2535, %v2534
        %v2557 = vpack.c.b16 %v2537, %v2536
        %v2558 = vpack.c.b16 %v2539, %v2538
        %v2559 = vpack.c.b16 %v2541, %v2540
        %v2560 = vpack.c.b16 %v2543, %v2542
        %v2561 = vpack.c.b16 %v2545, %v2544
        %v2563 = vsel %vm1214, %v2466, 0
        %v2566 = vsel %vm1214, %v2467, 0
        %v2569 = vsel %vm1214, %v2468, 0
        %v2572 = vsel %vm1214, %v2469, 0
        %v2575 = vsel %vm1214, %v2470, 0
        %v2578 = vsel %vm1214, %v2471, 0
        %v2581 = vsel %vm1214, %v2472, 0
        %v2584 = vsel %vm1214, %v2473, 0
        %v2587 = vsel %vm1214, %v2474, 0
        %v2590 = vsel %vm1214, %v2475, 0
        %v2593 = vsel %vm1214, %v2476, 0
        %v2596 = vsel %vm1214, %v2477, 0
        %v2599 = vsel %vm1214, %v2478, 0
        %v2602 = vsel %vm1214, %v2479, 0
        %v2605 = vsel %vm1214, %v2480, 0
        %v2608 = vsel %vm1214, %v2481, 0
        %v2611 = vsel %vm1214, %v2546, 0
        %v2614 = vsel %vm1214, %v2547, 0
        %v2617 = vsel %vm1214, %v2548, 0
        %v2620 = vsel %vm1214, %v2549, 0
        %v2623 = vsel %vm1214, %v2550, 0
        %v2626 = vsel %vm1214, %v2551, 0
        %v2629 = vsel %vm1214, %v2552, 0
        %v2632 = vsel %vm1214, %v2553, 0
        %v2635 = vsel %vm1214, %v2554, 0
        %v2638 = vsel %vm1214, %v2555, 0
        %v2641 = vsel %vm1214, %v2556, 0
        %v2644 = vsel %vm1214, %v2557, 0
        %v2647 = vsel %vm1214, %v2558, 0
        %v2650 = vsel %vm1214, %v2559, 0
        %v2653 = vsel %vm1214, %v2560, 0
        %v2656 = vsel %vm1214, %v2561, 0
        %2658 = vmatprep.subr.bf16.mxu0 0
        %2659 = vmatpush1.bf16.xpose.msra.mxu0 %v2611
        %2660 = vmatprep.subr.bf16.mxu0 0
        %2661 = vmatpush1.bf16.xpose.msra.mxu0 %v2614
        %2662 = vmatprep.subr.bf16.mxu0 0
        %2663 = vmatpush1.bf16.xpose.msra.mxu0 %v2617
        %2664 = vmatprep.subr.bf16.mxu0 0
        %2665 = vmatpush1.bf16.xpose.msra.mxu0 %v2620
        %2666 = vmatprep.subr.bf16.mxu0 0
        %2667 = vmatpush1.bf16.xpose.msra.mxu0 %v2623
        %2668 = vmatprep.subr.bf16.mxu0 0
        %2669 = vmatpush1.bf16.xpose.msra.mxu0 %v2626
        %2670 = vmatprep.subr.bf16.mxu0 0
        %2671 = vmatpush1.bf16.xpose.msra.mxu0 %v2629
        %2672 = vmatprep.subr.bf16.mxu0 0
        %2673 = vmatpush1.bf16.xpose.msra.mxu0 %v2632
        %2674 = vmatprep.subr.bf16.mxu0 0
        %2675 = vmatpush1.bf16.xpose.msra.mxu0 %v2635
        %2676 = vmatprep.subr.bf16.mxu0 0
        %2677 = vmatpush1.bf16.xpose.msra.mxu0 %v2638
        %2678 = vmatprep.subr.bf16.mxu0 0
        %2679 = vmatpush1.bf16.xpose.msra.mxu0 %v2641
        %2680 = vmatprep.subr.bf16.mxu0 0
        %2681 = vmatpush1.bf16.xpose.msra.mxu0 %v2644
        %2682 = vmatprep.subr.bf16.mxu0 0
        %2683 = vmatpush1.bf16.xpose.msra.mxu0 %v2647
        %2684 = vmatprep.subr.bf16.mxu0 0
        %2685 = vmatpush1.bf16.xpose.msra.mxu0 %v2650
        %2686 = vmatprep.subr.bf16.mxu0 0
        %2687 = vmatpush1.bf16.xpose.msra.mxu0 %v2653
        %2688 = vmatprep.subr.bf16.mxu0 0
        %2689 = vmatpush1.bf16.xpose.msra.mxu0 %v2656
        %2690 = vmatprep.mubr.bf16.mxu0 0
        %2691 = vmatmul.mubr.bf16.gmra.mrb[0].mxu0 %v2563
        %v2692 = vpop.f32.mrb[0].mxu0
        %v2693 = vadd.f32 0.0, %v2692
        %v2694 = vpop.f32.mrb[0].mxu0
        %v2695 = vadd.f32 0.0, %v2694
        %v2696 = vpop.f32.mrb[0].mxu0
        %v2697 = vadd.f32 0.0, %v2696
        %v2698 = vpop.f32.mrb[0].mxu0
        %v2699 = vadd.f32 0.0, %v2698
        %2700 = vmatprep.mubr.bf16.mxu0 0
        %2701 = vmatmul.mubr.bf16.gmra.mrb[0].mxu0 %v2566
        %v2702 = vpop.f32.mrb[0].mxu0
        %v2703 = vadd.f32 0.0, %v2702
        %v2704 = vpop.f32.mrb[0].mxu0
        %v2705 = vadd.f32 0.0, %v2704
        %v2706 = vpop.f32.mrb[0].mxu0
        %v2707 = vadd.f32 0.0, %v2706
        %v2708 = vpop.f32.mrb[0].mxu0
        %v2709 = vadd.f32 0.0, %v2708
        %2710 = vmatprep.mubr.bf16.mxu0 0
        %2711 = vmatmul.mubr.bf16.gmra.mrb[0].mxu0 %v2569
        %v2712 = vpop.f32.mrb[0].mxu0
        %v2713 = vadd.f32 0.0, %v2712
        %v2714 = vpop.f32.mrb[0].mxu0
        %v2715 = vadd.f32 0.0, %v2714
        %v2716 = vpop.f32.mrb[0].mxu0
        %v2717 = vadd.f32 0.0, %v2716
        %v2718 = vpop.f32.mrb[0].mxu0
        %v2719 = vadd.f32 0.0, %v2718
        %2720 = vmatprep.mubr.bf16.mxu0 0
        %2721 = vmatmul.mubr.bf16.gmra.mrb[0].mxu0 %v2572
        %v2722 = vpop.f32.mrb[0].mxu0
        %v2723 = vadd.f32 0.0, %v2722
        %v2724 = vpop.f32.mrb[0].mxu0
        %v2725 = vadd.f32 0.0, %v2724
        %v2726 = vpop.f32.mrb[0].mxu0
        %v2727 = vadd.f32 0.0, %v2726
        %v2728 = vpop.f32.mrb[0].mxu0
        %v2729 = vadd.f32 0.0, %v2728
        %2730 = vmatprep.mubr.bf16.mxu0 0
        %2731 = vmatmul.mubr.bf16.gmra.mrb[0].mxu0 %v2575
        %v2732 = vpop.f32.mrb[0].mxu0
        %v2733 = vadd.f32 0.0, %v2732
        %v2734 = vpop.f32.mrb[0].mxu0
        %v2735 = vadd.f32 0.0, %v2734
        %v2736 = vpop.f32.mrb[0].mxu0
        %v2737 = vadd.f32 0.0, %v2736
        %v2738 = vpop.f32.mrb[0].mxu0
        %v2739 = vadd.f32 0.0, %v2738
        %2740 = vmatprep.mubr.bf16.mxu0 0
        %2741 = vmatmul.mubr.bf16.gmra.mrb[0].mxu0 %v2578
        %v2742 = vpop.f32.mrb[0].mxu0
        %v2743 = vadd.f32 0.0, %v2742
        %v2744 = vpop.f32.mrb[0].mxu0
        %v2745 = vadd.f32 0.0, %v2744
        %v2746 = vpop.f32.mrb[0].mxu0
        %v2747 = vadd.f32 0.0, %v2746
        %v2748 = vpop.f32.mrb[0].mxu0
        %v2749 = vadd.f32 0.0, %v2748
        %2750 = vmatprep.mubr.bf16.mxu0 0
        %2751 = vmatmul.mubr.bf16.gmra.mrb[0].mxu0 %v2581
        %v2752 = vpop.f32.mrb[0].mxu0
        %v2753 = vadd.f32 0.0, %v2752
        %v2754 = vpop.f32.mrb[0].mxu0
        %v2755 = vadd.f32 0.0, %v2754
        %v2756 = vpop.f32.mrb[0].mxu0
        %v2757 = vadd.f32 0.0, %v2756
        %v2758 = vpop.f32.mrb[0].mxu0
        %v2759 = vadd.f32 0.0, %v2758
        %2760 = vmatprep.mubr.bf16.mxu0 0
        %2761 = vmatmul.mubr.bf16.gmra.mrb[0].mxu0 %v2584
        %v2762 = vpop.f32.mrb[0].mxu0
        %v2763 = vadd.f32 0.0, %v2762
        %v2764 = vpop.f32.mrb[0].mxu0
        %v2765 = vadd.f32 0.0, %v2764
        %v2766 = vpop.f32.mrb[0].mxu0
        %v2767 = vadd.f32 0.0, %v2766
        %v2768 = vpop.f32.mrb[0].mxu0
        %v2769 = vadd.f32 0.0, %v2768
        %2770 = vmatprep.mubr.bf16.mxu0 0
        %2771 = vmatmul.mubr.bf16.gmra.mrb[0].mxu0 %v2587
        %v2772 = vpop.f32.mrb[0].mxu0
        %v2773 = vadd.f32 0.0, %v2772
        %v2774 = vpop.f32.mrb[0].mxu0
        %v2775 = vadd.f32 0.0, %v2774
        %v2776 = vpop.f32.mrb[0].mxu0
        %v2777 = vadd.f32 0.0, %v2776
        %v2778 = vpop.f32.mrb[0].mxu0
        %v2779 = vadd.f32 0.0, %v2778
        %2780 = vmatprep.mubr.bf16.mxu0 0
        %2781 = vmatmul.mubr.bf16.gmra.mrb[0].mxu0 %v2590
        %v2782 = vpop.f32.mrb[0].mxu0
        %v2783 = vadd.f32 0.0, %v2782
        %v2784 = vpop.f32.mrb[0].mxu0
        %v2785 = vadd.f32 0.0, %v2784
        %v2786 = vpop.f32.mrb[0].mxu0
        %v2787 = vadd.f32 0.0, %v2786
        %v2788 = vpop.f32.mrb[0].mxu0
        %v2789 = vadd.f32 0.0, %v2788
        %2790 = vmatprep.mubr.bf16.mxu0 0
        %2791 = vmatmul.mubr.bf16.gmra.mrb[0].mxu0 %v2593
        %v2792 = vpop.f32.mrb[0].mxu0
        %v2793 = vadd.f32 0.0, %v2792
        %v2794 = vpop.f32.mrb[0].mxu0
        %v2795 = vadd.f32 0.0, %v2794
        %v2796 = vpop.f32.mrb[0].mxu0
        %v2797 = vadd.f32 0.0, %v2796
        %v2798 = vpop.f32.mrb[0].mxu0
        %v2799 = vadd.f32 0.0, %v2798
        %2800 = vmatprep.mubr.bf16.mxu0 0
        %2801 = vmatmul.mubr.bf16.gmra.mrb[0].mxu0 %v2596
        %v2802 = vpop.f32.mrb[0].mxu0
        %v2803 = vadd.f32 0.0, %v2802
        %v2804 = vpop.f32.mrb[0].mxu0
        %v2805 = vadd.f32 0.0, %v2804
        %v2806 = vpop.f32.mrb[0].mxu0
        %v2807 = vadd.f32 0.0, %v2806
        %v2808 = vpop.f32.mrb[0].mxu0
        %v2809 = vadd.f32 0.0, %v2808
        %2810 = vmatprep.mubr.bf16.mxu0 0
        %2811 = vmatmul.mubr.bf16.gmra.mrb[0].mxu0 %v2599
        %v2812 = vpop.f32.mrb[0].mxu0
        %v2813 = vadd.f32 0.0, %v2812
        %v2814 = vpop.f32.mrb[0].mxu0
        %v2815 = vadd.f32 0.0, %v2814
        %v2816 = vpop.f32.mrb[0].mxu0
        %v2817 = vadd.f32 0.0, %v2816
        %v2818 = vpop.f32.mrb[0].mxu0
        %v2819 = vadd.f32 0.0, %v2818
        %2820 = vmatprep.mubr.bf16.mxu0 0
        %2821 = vmatmul.mubr.bf16.gmra.mrb[0].mxu0 %v2602
        %v2822 = vpop.f32.mrb[0].mxu0
        %v2823 = vadd.f32 0.0, %v2822
        %v2824 = vpop.f32.mrb[0].mxu0
        %v2825 = vadd.f32 0.0, %v2824
        %v2826 = vpop.f32.mrb[0].mxu0
        %v2827 = vadd.f32 0.0, %v2826
        %v2828 = vpop.f32.mrb[0].mxu0
        %v2829 = vadd.f32 0.0, %v2828
        %2830 = vmatprep.mubr.bf16.mxu0 0
        %2831 = vmatmul.mubr.bf16.gmra.mrb[0].mxu0 %v2605
        %v2832 = vpop.f32.mrb[0].mxu0
        %v2833 = vadd.f32 0.0, %v2832
        %v2834 = vpop.f32.mrb[0].mxu0
        %v2835 = vadd.f32 0.0, %v2834
        %v2836 = vpop.f32.mrb[0].mxu0
        %v2837 = vadd.f32 0.0, %v2836
        %v2838 = vpop.f32.mrb[0].mxu0
        %v2839 = vadd.f32 0.0, %v2838
        %2840 = vmatprep.mubr.bf16.mxu0 0
        %2841 = vmatmul.mubr.bf16.gmra.mrb[0].mxu0 %v2608
        %v2842 = vpop.f32.mrb[0].mxu0
        %v2843 = vadd.f32 0.0, %v2842
        %v2844 = vpop.f32.mrb[0].mxu0
        %v2845 = vadd.f32 0.0, %v2844
        %v2846 = vpop.f32.mrb[0].mxu0
        %v2847 = vadd.f32 0.0, %v2846
        %v2848 = vpop.f32.mrb[0].mxu0
        %v2849 = vadd.f32 0.0, %v2848
        %2850 = vdwg.mxu0
        %v2851 = vld [vmem:[#allocation2] sm:$0xff]
        %v2852 = vld [vmem:[#allocation2 + $0x8] sm:$0xff]
        %v2853 = vld [vmem:[#allocation2 + $0x10] sm:$0xff]
        %v2854 = vld [vmem:[#allocation2 + $0x18] sm:$0xff]
        %v2855 = vld [vmem:[#allocation2 + $0x20] sm:$0xff]
        %v2856 = vld [vmem:[#allocation2 + $0x28] sm:$0xff]
        %v2857 = vld [vmem:[#allocation2 + $0x30] sm:$0xff]
        %v2858 = vld [vmem:[#allocation2 + $0x38] sm:$0xff]
        %v2859 = vld [vmem:[#allocation2 + $0x40] sm:$0xff]
        %v2860 = vld [vmem:[#allocation2 + $0x48] sm:$0xff]
        %v2861 = vld [vmem:[#allocation2 + $0x50] sm:$0xff]
        %v2862 = vld [vmem:[#allocation2 + $0x58] sm:$0xff]
        %v2863 = vld [vmem:[#allocation2 + $0x60] sm:$0xff]
        %v2864 = vld [vmem:[#allocation2 + $0x68] sm:$0xff]
        %v2865 = vld [vmem:[#allocation2 + $0x70] sm:$0xff]
        %v2866 = vld [vmem:[#allocation2 + $0x78] sm:$0xff]
        %v2867 = vld [vmem:[#allocation2 + $0x80] sm:$0xff]
        %v2868 = vld [vmem:[#allocation2 + $0x88] sm:$0xff]
        %v2869 = vld [vmem:[#allocation2 + $0x90] sm:$0xff]
        %v2870 = vld [vmem:[#allocation2 + $0x98] sm:$0xff]
        %v2871 = vld [vmem:[#allocation2 + $0xa0] sm:$0xff]
        %v2872 = vld [vmem:[#allocation2 + $0xa8] sm:$0xff]
        %v2873 = vld [vmem:[#allocation2 + $0xb0] sm:$0xff]
        %v2874 = vld [vmem:[#allocation2 + $0xb8] sm:$0xff]
        %v2875 = vld [vmem:[#allocation2 + $0xc0] sm:$0xff]
        %v2876 = vld [vmem:[#allocation2 + $0xc8] sm:$0xff]
        %v2877 = vld [vmem:[#allocation2 + $0xd0] sm:$0xff]
        %v2878 = vld [vmem:[#allocation2 + $0xd8] sm:$0xff]
        %v2879 = vld [vmem:[#allocation2 + $0xe0] sm:$0xff]
        %v2880 = vld [vmem:[#allocation2 + $0xe8] sm:$0xff]
        %v2881 = vld [vmem:[#allocation2 + $0xf0] sm:$0xff]
        %v2882 = vld [vmem:[#allocation2 + $0xf8] sm:$0xff]
        %v2883 = vld [vmem:[#allocation2 + $0x100] sm:$0xff]
        %v2884 = vld [vmem:[#allocation2 + $0x108] sm:$0xff]
        %v2885 = vld [vmem:[#allocation2 + $0x110] sm:$0xff]
        %v2886 = vld [vmem:[#allocation2 + $0x118] sm:$0xff]
        %v2887 = vld [vmem:[#allocation2 + $0x120] sm:$0xff]
        %v2888 = vld [vmem:[#allocation2 + $0x128] sm:$0xff]
        %v2889 = vld [vmem:[#allocation2 + $0x130] sm:$0xff]
        %v2890 = vld [vmem:[#allocation2 + $0x138] sm:$0xff]
        %v2891 = vld [vmem:[#allocation2 + $0x140] sm:$0xff]
        %v2892 = vld [vmem:[#allocation2 + $0x148] sm:$0xff]
        %v2893 = vld [vmem:[#allocation2 + $0x150] sm:$0xff]
        %v2894 = vld [vmem:[#allocation2 + $0x158] sm:$0xff]
        %v2895 = vld [vmem:[#allocation2 + $0x160] sm:$0xff]
        %v2896 = vld [vmem:[#allocation2 + $0x168] sm:$0xff]
        %v2897 = vld [vmem:[#allocation2 + $0x170] sm:$0xff]
        %v2898 = vld [vmem:[#allocation2 + $0x178] sm:$0xff]
        %v2899 = vld [vmem:[#allocation2 + $0x180] sm:$0xff]
        %v2900 = vld [vmem:[#allocation2 + $0x188] sm:$0xff]
        %v2901 = vld [vmem:[#allocation2 + $0x190] sm:$0xff]
        %v2902 = vld [vmem:[#allocation2 + $0x198] sm:$0xff]
        %v2903 = vld [vmem:[#allocation2 + $0x1a0] sm:$0xff]
        %v2904 = vld [vmem:[#allocation2 + $0x1a8] sm:$0xff]
        %v2905 = vld [vmem:[#allocation2 + $0x1b0] sm:$0xff]
        %v2906 = vld [vmem:[#allocation2 + $0x1b8] sm:$0xff]
        %v2907 = vld [vmem:[#allocation2 + $0x1c0] sm:$0xff]
        %v2908 = vld [vmem:[#allocation2 + $0x1c8] sm:$0xff]
        %v2909 = vld [vmem:[#allocation2 + $0x1d0] sm:$0xff]
        %v2910 = vld [vmem:[#allocation2 + $0x1d8] sm:$0xff]
        %v2911 = vld [vmem:[#allocation2 + $0x1e0] sm:$0xff]
        %v2912 = vld [vmem:[#allocation2 + $0x1e8] sm:$0xff]
        %v2913 = vld [vmem:[#allocation2 + $0x1f0] sm:$0xff]
        %v2914 = vld [vmem:[#allocation2 + $0x1f8] sm:$0xff]
        %v2915 = vld [vmem:[#allocation2 + $0x200] sm:$0xff]
        %v2916 = vld [vmem:[#allocation2 + $0x208] sm:$0xff]
        %v2917 = vld [vmem:[#allocation2 + $0x210] sm:$0xff]
        %v2918 = vld [vmem:[#allocation2 + $0x218] sm:$0xff]
        %v2919 = vld [vmem:[#allocation2 + $0x220] sm:$0xff]
        %v2920 = vld [vmem:[#allocation2 + $0x228] sm:$0xff]
        %v2921 = vld [vmem:[#allocation2 + $0x230] sm:$0xff]
        %v2922 = vld [vmem:[#allocation2 + $0x238] sm:$0xff]
        %v2923 = vld [vmem:[#allocation2 + $0x240] sm:$0xff]
        %v2924 = vld [vmem:[#allocation2 + $0x248] sm:$0xff]
        %v2925 = vld [vmem:[#allocation2 + $0x250] sm:$0xff]
        %v2926 = vld [vmem:[#allocation2 + $0x258] sm:$0xff]
        %v2927 = vld [vmem:[#allocation2 + $0x260] sm:$0xff]
        %v2928 = vld [vmem:[#allocation2 + $0x268] sm:$0xff]
        %v2929 = vld [vmem:[#allocation2 + $0x270] sm:$0xff]
        %v2930 = vld [vmem:[#allocation2 + $0x278] sm:$0xff]
        %v2931 = vld [vmem:[#allocation2 + $0x280] sm:$0xff]
        %v2932 = vld [vmem:[#allocation2 + $0x288] sm:$0xff]
        %v2933 = vld [vmem:[#allocation2 + $0x290] sm:$0xff]
        %v2934 = vld [vmem:[#allocation2 + $0x298] sm:$0xff]
        %v2935 = vld [vmem:[#allocation2 + $0x2a0] sm:$0xff]
        %v2936 = vld [vmem:[#allocation2 + $0x2a8] sm:$0xff]
        %v2937 = vld [vmem:[#allocation2 + $0x2b0] sm:$0xff]
        %v2938 = vld [vmem:[#allocation2 + $0x2b8] sm:$0xff]
        %v2939 = vld [vmem:[#allocation2 + $0x2c0] sm:$0xff]
        %v2940 = vld [vmem:[#allocation2 + $0x2c8] sm:$0xff]
        %v2941 = vld [vmem:[#allocation2 + $0x2d0] sm:$0xff]
        %v2942 = vld [vmem:[#allocation2 + $0x2d8] sm:$0xff]
        %v2943 = vld [vmem:[#allocation2 + $0x2e0] sm:$0xff]
        %v2944 = vld [vmem:[#allocation2 + $0x2e8] sm:$0xff]
        %v2945 = vld [vmem:[#allocation2 + $0x2f0] sm:$0xff]
        %v2946 = vld [vmem:[#allocation2 + $0x2f8] sm:$0xff]
        %v2947 = vld [vmem:[#allocation2 + $0x300] sm:$0xff]
        %v2948 = vld [vmem:[#allocation2 + $0x308] sm:$0xff]
        %v2949 = vld [vmem:[#allocation2 + $0x310] sm:$0xff]
        %v2950 = vld [vmem:[#allocation2 + $0x318] sm:$0xff]
        %v2951 = vld [vmem:[#allocation2 + $0x320] sm:$0xff]
        %v2952 = vld [vmem:[#allocation2 + $0x328] sm:$0xff]
        %v2953 = vld [vmem:[#allocation2 + $0x330] sm:$0xff]
        %v2954 = vld [vmem:[#allocation2 + $0x338] sm:$0xff]
        %v2955 = vld [vmem:[#allocation2 + $0x340] sm:$0xff]
        %v2956 = vld [vmem:[#allocation2 + $0x348] sm:$0xff]
        %v2957 = vld [vmem:[#allocation2 + $0x350] sm:$0xff]
        %v2958 = vld [vmem:[#allocation2 + $0x358] sm:$0xff]
        %v2959 = vld [vmem:[#allocation2 + $0x360] sm:$0xff]
        %v2960 = vld [vmem:[#allocation2 + $0x368] sm:$0xff]
        %v2961 = vld [vmem:[#allocation2 + $0x370] sm:$0xff]
        %v2962 = vld [vmem:[#allocation2 + $0x378] sm:$0xff]
        %v2963 = vld [vmem:[#allocation2 + $0x380] sm:$0xff]
        %v2964 = vld [vmem:[#allocation2 + $0x388] sm:$0xff]
        %v2965 = vld [vmem:[#allocation2 + $0x390] sm:$0xff]
        %v2966 = vld [vmem:[#allocation2 + $0x398] sm:$0xff]
        %v2967 = vld [vmem:[#allocation2 + $0x3a0] sm:$0xff]
        %v2968 = vld [vmem:[#allocation2 + $0x3a8] sm:$0xff]
        %v2969 = vld [vmem:[#allocation2 + $0x3b0] sm:$0xff]
        %v2970 = vld [vmem:[#allocation2 + $0x3b8] sm:$0xff]
        %v2971 = vld [vmem:[#allocation2 + $0x3c0] sm:$0xff]
        %v2972 = vld [vmem:[#allocation2 + $0x3c8] sm:$0xff]
        %v2973 = vld [vmem:[#allocation2 + $0x3d0] sm:$0xff]
        %v2974 = vld [vmem:[#allocation2 + $0x3d8] sm:$0xff]
        %v2975 = vld [vmem:[#allocation2 + $0x3e0] sm:$0xff]
        %v2976 = vld [vmem:[#allocation2 + $0x3e8] sm:$0xff]
        %v2977 = vld [vmem:[#allocation2 + $0x3f0] sm:$0xff]
        %v2978 = vld [vmem:[#allocation2 + $0x3f8] sm:$0xff]
        %v2979 = vmax.f32 %v1346, %v1348
        %2980 = vmax.xlane.f32.xlu0 %v2979
        %v2981 = vpop.xlane.xlu0 %2980
        %v2982 = vmax.f32 %v1350, %v1352
        %2983 = vmax.xlane.f32.xlu0 %v2982
        %v2984 = vpop.xlane.xlu0 %2983
        %v2985 = vmax.f32 %v1356, %v1358
        %2986 = vmax.xlane.f32.xlu0 %v2985
        %v2987 = vpop.xlane.xlu0 %2986
        %v2988 = vmax.f32 %v1360, %v1362
        %2989 = vmax.xlane.f32.xlu0 %v2988
        %v2990 = vpop.xlane.xlu0 %2989
        %v2991 = vmax.f32 %v1366, %v1368
        %2992 = vmax.xlane.f32.xlu0 %v2991
        %v2993 = vpop.xlane.xlu0 %2992
        %v2994 = vmax.f32 %v1370, %v1372
        %2995 = vmax.xlane.f32.xlu0 %v2994
        %v2996 = vpop.xlane.xlu0 %2995
        %v2997 = vmax.f32 %v1376, %v1378
        %2998 = vmax.xlane.f32.xlu0 %v2997
        %v2999 = vpop.xlane.xlu0 %2998
        %v3000 = vmax.f32 %v1380, %v1382
        %3001 = vmax.xlane.f32.xlu0 %v3000
        %v3002 = vpop.xlane.xlu0 %3001
        %v3003 = vmax.f32 %v1386, %v1388
        %3004 = vmax.xlane.f32.xlu0 %v3003
        %v3005 = vpop.xlane.xlu0 %3004
        %v3006 = vmax.f32 %v1390, %v1392
        %3007 = vmax.xlane.f32.xlu0 %v3006
        %v3008 = vpop.xlane.xlu0 %3007
        %v3009 = vmax.f32 %v1396, %v1398
        %3010 = vmax.xlane.f32.xlu0 %v3009
        %v3011 = vpop.xlane.xlu0 %3010
        %v3012 = vmax.f32 %v1400, %v1402
        %3013 = vmax.xlane.f32.xlu0 %v3012
        %v3014 = vpop.xlane.xlu0 %3013
        %v3015 = vmax.f32 %v1406, %v1408
        %3016 = vmax.xlane.f32.xlu0 %v3015
        %v3017 = vpop.xlane.xlu0 %3016
        %v3018 = vmax.f32 %v1410, %v1412
        %3019 = vmax.xlane.f32.xlu0 %v3018
        %v3020 = vpop.xlane.xlu0 %3019
        %v3021 = vmax.f32 %v1416, %v1418
        %3022 = vmax.xlane.f32.xlu0 %v3021
        %v3023 = vpop.xlane.xlu0 %3022
        %v3024 = vmax.f32 %v1420, %v1422
        %3025 = vmax.xlane.f32.xlu0 %v3024
        %v3026 = vpop.xlane.xlu0 %3025
        %v3027 = vmax.f32 %v1426, %v1428
        %3028 = vmax.xlane.f32.xlu0 %v3027
        %v3029 = vpop.xlane.xlu0 %3028
        %v3030 = vmax.f32 %v1430, %v1432
        %3031 = vmax.xlane.f32.xlu0 %v3030
        %v3032 = vpop.xlane.xlu0 %3031
        %v3033 = vmax.f32 %v1436, %v1438
        %3034 = vmax.xlane.f32.xlu0 %v3033
        %v3035 = vpop.xlane.xlu0 %3034
        %v3036 = vmax.f32 %v1440, %v1442
        %3037 = vmax.xlane.f32.xlu0 %v3036
        %v3038 = vpop.xlane.xlu0 %3037
        %v3039 = vmax.f32 %v1446, %v1448
        %3040 = vmax.xlane.f32.xlu0 %v3039
        %v3041 = vpop.xlane.xlu0 %3040
        %v3042 = vmax.f32 %v1450, %v1452
        %3043 = vmax.xlane.f32.xlu0 %v3042
        %v3044 = vpop.xlane.xlu0 %3043
        %v3045 = vmax.f32 %v1456, %v1458
        %3046 = vmax.xlane.f32.xlu0 %v3045
        %v3047 = vpop.xlane.xlu0 %3046
        %v3048 = vmax.f32 %v1460, %v1462
        %3049 = vmax.xlane.f32.xlu0 %v3048
        %v3050 = vpop.xlane.xlu0 %3049
        %v3051 = vmax.f32 %v1466, %v1468
        %3052 = vmax.xlane.f32.xlu0 %v3051
        %v3053 = vpop.xlane.xlu0 %3052
        %v3054 = vmax.f32 %v1470, %v1472
        %3055 = vmax.xlane.f32.xlu0 %v3054
        %v3056 = vpop.xlane.xlu0 %3055
        %v3057 = vmax.f32 %v1476, %v1478
        %3058 = vmax.xlane.f32.xlu0 %v3057
        %v3059 = vpop.xlane.xlu0 %3058
        %v3060 = vmax.f32 %v1480, %v1482
        %3061 = vmax.xlane.f32.xlu0 %v3060
        %v3062 = vpop.xlane.xlu0 %3061
        %v3063 = vmax.f32 %v1486, %v1488
        %3064 = vmax.xlane.f32.xlu0 %v3063
        %v3065 = vpop.xlane.xlu0 %3064
        %v3066 = vmax.f32 %v1490, %v1492
        %3067 = vmax.xlane.f32.xlu0 %v3066
        %v3068 = vpop.xlane.xlu0 %3067
        %v3069 = vmax.f32 %v1496, %v1498
        %3070 = vmax.xlane.f32.xlu0 %v3069
        %v3071 = vpop.xlane.xlu0 %3070
        %v3072 = vmax.f32 %v1500, %v1502
        %3073 = vmax.xlane.f32.xlu0 %v3072
        %v3074 = vpop.xlane.xlu0 %3073
        %v3075 = vmax.f32 %v1795, %v1797
        %3076 = vmax.xlane.f32.xlu0 %v3075
        %v3077 = vpop.xlane.xlu0 %3076
        %v3078 = vmax.f32 %v1799, %v1801
        %3079 = vmax.xlane.f32.xlu0 %v3078
        %v3080 = vpop.xlane.xlu0 %3079
        %v3081 = vmax.f32 %v1805, %v1807
        %3082 = vmax.xlane.f32.xlu0 %v3081
        %v3083 = vpop.xlane.xlu0 %3082
        %v3084 = vmax.f32 %v1809, %v1811
        %3085 = vmax.xlane.f32.xlu0 %v3084
        %v3086 = vpop.xlane.xlu0 %3085
        %v3087 = vmax.f32 %v1815, %v1817
        %3088 = vmax.xlane.f32.xlu0 %v3087
        %v3089 = vpop.xlane.xlu0 %3088
        %v3090 = vmax.f32 %v1819, %v1821
        %3091 = vmax.xlane.f32.xlu0 %v3090
        %v3092 = vpop.xlane.xlu0 %3091
        %v3093 = vmax.f32 %v1825, %v1827
        %3094 = vmax.xlane.f32.xlu0 %v3093
        %v3095 = vpop.xlane.xlu0 %3094
        %v3096 = vmax.f32 %v1829, %v1831
        %3097 = vmax.xlane.f32.xlu0 %v3096
        %v3098 = vpop.xlane.xlu0 %3097
        %v3099 = vmax.f32 %v1835, %v1837
        %3100 = vmax.xlane.f32.xlu0 %v3099
        %v3101 = vpop.xlane.xlu0 %3100
        %v3102 = vmax.f32 %v1839, %v1841
        %3103 = vmax.xlane.f32.xlu0 %v3102
        %v3104 = vpop.xlane.xlu0 %3103
        %v3105 = vmax.f32 %v1845, %v1847
        %3106 = vmax.xlane.f32.xlu0 %v3105
        %v3107 = vpop.xlane.xlu0 %3106
        %v3108 = vmax.f32 %v1849, %v1851
        %3109 = vmax.xlane.f32.xlu0 %v3108
        %v3110 = vpop.xlane.xlu0 %3109
        %v3111 = vmax.f32 %v1855, %v1857
        %3112 = vmax.xlane.f32.xlu0 %v3111
        %v3113 = vpop.xlane.xlu0 %3112
        %v3114 = vmax.f32 %v1859, %v1861
        %3115 = vmax.xlane.f32.xlu0 %v3114
        %v3116 = vpop.xlane.xlu0 %3115
        %v3117 = vmax.f32 %v1865, %v1867
        %3118 = vmax.xlane.f32.xlu0 %v3117
        %v3119 = vpop.xlane.xlu0 %3118
        %v3120 = vmax.f32 %v1869, %v1871
        %3121 = vmax.xlane.f32.xlu0 %v3120
        %v3122 = vpop.xlane.xlu0 %3121
        %v3123 = vmax.f32 %v1875, %v1877
        %3124 = vmax.xlane.f32.xlu0 %v3123
        %v3125 = vpop.xlane.xlu0 %3124
        %v3126 = vmax.f32 %v1879, %v1881
        %3127 = vmax.xlane.f32.xlu0 %v3126
        %v3128 = vpop.xlane.xlu0 %3127
        %v3129 = vmax.f32 %v1885, %v1887
        %3130 = vmax.xlane.f32.xlu0 %v3129
        %v3131 = vpop.xlane.xlu0 %3130
        %v3132 = vmax.f32 %v1889, %v1891
        %3133 = vmax.xlane.f32.xlu0 %v3132
        %v3134 = vpop.xlane.xlu0 %3133
        %v3135 = vmax.f32 %v1895, %v1897
        %3136 = vmax.xlane.f32.xlu0 %v3135
        %v3137 = vpop.xlane.xlu0 %3136
        %v3138 = vmax.f32 %v1899, %v1901
        %3139 = vmax.xlane.f32.xlu0 %v3138
        %v3140 = vpop.xlane.xlu0 %3139
        %v3141 = vmax.f32 %v1905, %v1907
        %3142 = vmax.xlane.f32.xlu0 %v3141
        %v3143 = vpop.xlane.xlu0 %3142
        %v3144 = vmax.f32 %v1909, %v1911
        %3145 = vmax.xlane.f32.xlu0 %v3144
        %v3146 = vpop.xlane.xlu0 %3145
        %v3147 = vmax.f32 %v1915, %v1917
        %3148 = vmax.xlane.f32.xlu0 %v3147
        %v3149 = vpop.xlane.xlu0 %3148
        %v3150 = vmax.f32 %v1919, %v1921
        %3151 = vmax.xlane.f32.xlu0 %v3150
        %v3152 = vpop.xlane.xlu0 %3151
        %v3153 = vmax.f32 %v1925, %v1927
        %3154 = vmax.xlane.f32.xlu0 %v3153
        %v3155 = vpop.xlane.xlu0 %3154
        %v3156 = vmax.f32 %v1929, %v1931
        %3157 = vmax.xlane.f32.xlu0 %v3156
        %v3158 = vpop.xlane.xlu0 %3157
        %v3159 = vmax.f32 %v1935, %v1937
        %3160 = vmax.xlane.f32.xlu0 %v3159
        %v3161 = vpop.xlane.xlu0 %3160
        %v3162 = vmax.f32 %v1939, %v1941
        %3163 = vmax.xlane.f32.xlu0 %v3162
        %v3164 = vpop.xlane.xlu0 %3163
        %v3165 = vmax.f32 %v1945, %v1947
        %3166 = vmax.xlane.f32.xlu0 %v3165
        %v3167 = vpop.xlane.xlu0 %3166
        %v3168 = vmax.f32 %v1949, %v1951
        %3169 = vmax.xlane.f32.xlu0 %v3168
        %v3170 = vpop.xlane.xlu0 %3169
        %v3171 = vmax.f32 %v2244, %v2246
        %3172 = vmax.xlane.f32.xlu0 %v3171
        %v3173 = vpop.xlane.xlu0 %3172
        %v3174 = vmax.f32 %v2248, %v2250
        %3175 = vmax.xlane.f32.xlu0 %v3174
        %v3176 = vpop.xlane.xlu0 %3175
        %v3177 = vmax.f32 %v2254, %v2256
        %3178 = vmax.xlane.f32.xlu0 %v3177
        %v3179 = vpop.xlane.xlu0 %3178
        %v3180 = vmax.f32 %v2258, %v2260
        %3181 = vmax.xlane.f32.xlu0 %v3180
        %v3182 = vpop.xlane.xlu0 %3181
        %v3183 = vmax.f32 %v2264, %v2266
        %3184 = vmax.xlane.f32.xlu0 %v3183
        %v3185 = vpop.xlane.xlu0 %3184
        %v3186 = vmax.f32 %v2268, %v2270
        %3187 = vmax.xlane.f32.xlu0 %v3186
        %v3188 = vpop.xlane.xlu0 %3187
        %v3189 = vmax.f32 %v2274, %v2276
        %3190 = vmax.xlane.f32.xlu0 %v3189
        %v3191 = vpop.xlane.xlu0 %3190
        %v3192 = vmax.f32 %v2278, %v2280
        %3193 = vmax.xlane.f32.xlu0 %v3192
        %v3194 = vpop.xlane.xlu0 %3193
        %v3195 = vmax.f32 %v2284, %v2286
        %3196 = vmax.xlane.f32.xlu0 %v3195
        %v3197 = vpop.xlane.xlu0 %3196
        %v3198 = vmax.f32 %v2288, %v2290
        %3199 = vmax.xlane.f32.xlu0 %v3198
        %v3200 = vpop.xlane.xlu0 %3199
        %v3201 = vmax.f32 %v2294, %v2296
        %3202 = vmax.xlane.f32.xlu0 %v3201
        %v3203 = vpop.xlane.xlu0 %3202
        %v3204 = vmax.f32 %v2298, %v2300
        %3205 = vmax.xlane.f32.xlu0 %v3204
        %v3206 = vpop.xlane.xlu0 %3205
        %v3207 = vmax.f32 %v2304, %v2306
        %3208 = vmax.xlane.f32.xlu0 %v3207
        %v3209 = vpop.xlane.xlu0 %3208
        %v3210 = vmax.f32 %v2308, %v2310
        %3211 = vmax.xlane.f32.xlu0 %v3210
        %v3212 = vpop.xlane.xlu0 %3211
        %v3213 = vmax.f32 %v2314, %v2316
        %3214 = vmax.xlane.f32.xlu0 %v3213
        %v3215 = vpop.xlane.xlu0 %3214
        %v3216 = vmax.f32 %v2318, %v2320
        %3217 = vmax.xlane.f32.xlu0 %v3216
        %v3218 = vpop.xlane.xlu0 %3217
        %v3219 = vmax.f32 %v2324, %v2326
        %3220 = vmax.xlane.f32.xlu0 %v3219
        %v3221 = vpop.xlane.xlu0 %3220
        %v3222 = vmax.f32 %v2328, %v2330
        %3223 = vmax.xlane.f32.xlu0 %v3222
        %v3224 = vpop.xlane.xlu0 %3223
        %v3225 = vmax.f32 %v2334, %v2336
        %3226 = vmax.xlane.f32.xlu0 %v3225
        %v3227 = vpop.xlane.xlu0 %3226
        %v3228 = vmax.f32 %v2338, %v2340
        %3229 = vmax.xlane.f32.xlu0 %v3228
        %v3230 = vpop.xlane.xlu0 %3229
        %v3231 = vmax.f32 %v2344, %v2346
        %3232 = vmax.xlane.f32.xlu0 %v3231
        %v3233 = vpop.xlane.xlu0 %3232
        %v3234 = vmax.f32 %v2348, %v2350
        %3235 = vmax.xlane.f32.xlu0 %v3234
        %v3236 = vpop.xlane.xlu0 %3235
        %v3237 = vmax.f32 %v2354, %v2356
        %3238 = vmax.xlane.f32.xlu0 %v3237
        %v3239 = vpop.xlane.xlu0 %3238
        %v3240 = vmax.f32 %v2358, %v2360
        %3241 = vmax.xlane.f32.xlu0 %v3240
        %v3242 = vpop.xlane.xlu0 %3241
        %v3243 = vmax.f32 %v2364, %v2366
        %3244 = vmax.xlane.f32.xlu0 %v3243
        %v3245 = vpop.xlane.xlu0 %3244
        %v3246 = vmax.f32 %v2368, %v2370
        %3247 = vmax.xlane.f32.xlu0 %v3246
        %v3248 = vpop.xlane.xlu0 %3247
        %v3249 = vmax.f32 %v2374, %v2376
        %3250 = vmax.xlane.f32.xlu0 %v3249
        %v3251 = vpop.xlane.xlu0 %3250
        %v3252 = vmax.f32 %v2378, %v2380
        %3253 = vmax.xlane.f32.xlu0 %v3252
        %v3254 = vpop.xlane.xlu0 %3253
        %v3255 = vmax.f32 %v2384, %v2386
        %3256 = vmax.xlane.f32.xlu0 %v3255
        %v3257 = vpop.xlane.xlu0 %3256
        %v3258 = vmax.f32 %v2388, %v2390
        %3259 = vmax.xlane.f32.xlu0 %v3258
        %v3260 = vpop.xlane.xlu0 %3259
        %v3261 = vmax.f32 %v2394, %v2396
        %3262 = vmax.xlane.f32.xlu0 %v3261
        %v3263 = vpop.xlane.xlu0 %3262
        %v3264 = vmax.f32 %v2398, %v2400
        %3265 = vmax.xlane.f32.xlu0 %v3264
        %v3266 = vpop.xlane.xlu0 %3265
        %v3267 = vmax.f32 %v2693, %v2695
        %3268 = vmax.xlane.f32.xlu0 %v3267
        %v3269 = vpop.xlane.xlu0 %3268
        %v3270 = vmax.f32 %v2697, %v2699
        %3271 = vmax.xlane.f32.xlu0 %v3270
        %v3272 = vpop.xlane.xlu0 %3271
        %v3273 = vmax.f32 %v2703, %v2705
        %3274 = vmax.xlane.f32.xlu0 %v3273
        %v3275 = vpop.xlane.xlu0 %3274
        %v3276 = vmax.f32 %v2707, %v2709
        %3277 = vmax.xlane.f32.xlu0 %v3276
        %v3278 = vpop.xlane.xlu0 %3277
        %v3279 = vmax.f32 %v2713, %v2715
        %3280 = vmax.xlane.f32.xlu0 %v3279
        %v3281 = vpop.xlane.xlu0 %3280
        %v3282 = vmax.f32 %v2717, %v2719
        %3283 = vmax.xlane.f32.xlu0 %v3282
        %v3284 = vpop.xlane.xlu0 %3283
        %v3285 = vmax.f32 %v2723, %v2725
        %3286 = vmax.xlane.f32.xlu0 %v3285
        %v3287 = vpop.xlane.xlu0 %3286
        %v3288 = vmax.f32 %v2727, %v2729
        %3289 = vmax.xlane.f32.xlu0 %v3288
        %v3290 = vpop.xlane.xlu0 %3289
        %v3291 = vmax.f32 %v2733, %v2735
        %3292 = vmax.xlane.f32.xlu0 %v3291
        %v3293 = vpop.xlane.xlu0 %3292
        %v3294 = vmax.f32 %v2737, %v2739
        %3295 = vmax.xlane.f32.xlu0 %v3294
        %v3296 = vpop.xlane.xlu0 %3295
        %v3297 = vmax.f32 %v2743, %v2745
        %3298 = vmax.xlane.f32.xlu0 %v3297
        %v3299 = vpop.xlane.xlu0 %3298
        %v3300 = vmax.f32 %v2747, %v2749
        %3301 = vmax.xlane.f32.xlu0 %v3300
        %v3302 = vpop.xlane.xlu0 %3301
        %v3303 = vmax.f32 %v2753, %v2755
        %3304 = vmax.xlane.f32.xlu0 %v3303
        %v3305 = vpop.xlane.xlu0 %3304
        %v3306 = vmax.f32 %v2757, %v2759
        %3307 = vmax.xlane.f32.xlu0 %v3306
        %v3308 = vpop.xlane.xlu0 %3307
        %v3309 = vmax.f32 %v2763, %v2765
        %3310 = vmax.xlane.f32.xlu0 %v3309
        %v3311 = vpop.xlane.xlu0 %3310
        %v3312 = vmax.f32 %v2767, %v2769
        %3313 = vmax.xlane.f32.xlu0 %v3312
        %v3314 = vpop.xlane.xlu0 %3313
        %v3315 = vmax.f32 %v2773, %v2775
        %3316 = vmax.xlane.f32.xlu0 %v3315
        %v3317 = vpop.xlane.xlu0 %3316
        %v3318 = vmax.f32 %v2777, %v2779
        %3319 = vmax.xlane.f32.xlu0 %v3318
        %v3320 = vpop.xlane.xlu0 %3319
        %v3321 = vmax.f32 %v2783, %v2785
        %3322 = vmax.xlane.f32.xlu0 %v3321
        %v3323 = vpop.xlane.xlu0 %3322
        %v3324 = vmax.f32 %v2787, %v2789
        %3325 = vmax.xlane.f32.xlu0 %v3324
        %v3326 = vpop.xlane.xlu0 %3325
        %v3327 = vmax.f32 %v2793, %v2795
        %3328 = vmax.xlane.f32.xlu0 %v3327
        %v3329 = vpop.xlane.xlu0 %3328
        %v3330 = vmax.f32 %v2797, %v2799
        %3331 = vmax.xlane.f32.xlu0 %v3330
        %v3332 = vpop.xlane.xlu0 %3331
        %v3333 = vmax.f32 %v2803, %v2805
        %3334 = vmax.xlane.f32.xlu0 %v3333
        %v3335 = vpop.xlane.xlu0 %3334
        %v3336 = vmax.f32 %v2807, %v2809
        %3337 = vmax.xlane.f32.xlu0 %v3336
        %v3338 = vpop.xlane.xlu0 %3337
        %v3339 = vmax.f32 %v2813, %v2815
        %3340 = vmax.xlane.f32.xlu0 %v3339
        %v3341 = vpop.xlane.xlu0 %3340
        %v3342 = vmax.f32 %v2817, %v2819
        %3343 = vmax.xlane.f32.xlu0 %v3342
        %v3344 = vpop.xlane.xlu0 %3343
        %v3345 = vmax.f32 %v2823, %v2825
        %3346 = vmax.xlane.f32.xlu0 %v3345
        %v3347 = vpop.xlane.xlu0 %3346
        %v3348 = vmax.f32 %v2827, %v2829
        %3349 = vmax.xlane.f32.xlu0 %v3348
        %v3350 = vpop.xlane.xlu0 %3349
        %v3351 = vmax.f32 %v2833, %v2835
        %3352 = vmax.xlane.f32.xlu0 %v3351
        %v3353 = vpop.xlane.xlu0 %3352
        %v3354 = vmax.f32 %v2837, %v2839
        %3355 = vmax.xlane.f32.xlu0 %v3354
        %v3356 = vpop.xlane.xlu0 %3355
        %v3357 = vmax.f32 %v2843, %v2845
        %3358 = vmax.xlane.f32.xlu0 %v3357
        %v3359 = vpop.xlane.xlu0 %3358
        %v3360 = vmax.f32 %v2847, %v2849
        %3361 = vmax.xlane.f32.xlu0 %v3360
        %v3362 = vpop.xlane.xlu0 %3361
        %v3363 = vmax.f32 %v2851, %v2981
        %v3364 = vmax.f32 %v2852, %v2984
        %v3365 = vmax.f32 %v2853, %v2987
        %v3366 = vmax.f32 %v2854, %v2990
        %v3367 = vmax.f32 %v2855, %v2993
        %v3368 = vmax.f32 %v2856, %v2996
        %v3369 = vmax.f32 %v2857, %v2999
        %v3370 = vmax.f32 %v2858, %v3002
        %v3371 = vmax.f32 %v2859, %v3005
        %v3372 = vmax.f32 %v2860, %v3008
        %v3373 = vmax.f32 %v2861, %v3011
        %v3374 = vmax.f32 %v2862, %v3014
        %v3375 = vmax.f32 %v2863, %v3017
        %v3376 = vmax.f32 %v2864, %v3020
        %v3377 = vmax.f32 %v2865, %v3023
        %v3378 = vmax.f32 %v2866, %v3026
        %v3379 = vmax.f32 %v2867, %v3029
        %v3380 = vmax.f32 %v2868, %v3032
        %v3381 = vmax.f32 %v2869, %v3035
        %v3382 = vmax.f32 %v2870, %v3038
        %v3383 = vmax.f32 %v2871, %v3041
        %v3384 = vmax.f32 %v2872, %v3044
        %v3385 = vmax.f32 %v2873, %v3047
        %v3386 = vmax.f32 %v2874, %v3050
        %v3387 = vmax.f32 %v2875, %v3053
        %v3388 = vmax.f32 %v2876, %v3056
        %v3389 = vmax.f32 %v2877, %v3059
        %v3390 = vmax.f32 %v2878, %v3062
        %v3391 = vmax.f32 %v2879, %v3065
        %v3392 = vmax.f32 %v2880, %v3068
        %v3393 = vmax.f32 %v2881, %v3071
        %v3394 = vmax.f32 %v2882, %v3074
        %v3395 = vmax.f32 %v2883, %v3077
        %v3396 = vmax.f32 %v2884, %v3080
        %v3397 = vmax.f32 %v2885, %v3083
        %v3398 = vmax.f32 %v2886, %v3086
        %v3399 = vmax.f32 %v2887, %v3089
        %v3400 = vmax.f32 %v2888, %v3092
        %v3401 = vmax.f32 %v2889, %v3095
        %v3402 = vmax.f32 %v2890, %v3098
        %v3403 = vmax.f32 %v2891, %v3101
        %v3404 = vmax.f32 %v2892, %v3104
        %v3405 = vmax.f32 %v2893, %v3107
        %v3406 = vmax.f32 %v2894, %v3110
        %v3407 = vmax.f32 %v2895, %v3113
        %v3408 = vmax.f32 %v2896, %v3116
        %v3409 = vmax.f32 %v2897, %v3119
        %v3410 = vmax.f32 %v2898, %v3122
        %v3411 = vmax.f32 %v2899, %v3125
        %v3412 = vmax.f32 %v2900, %v3128
        %v3413 = vmax.f32 %v2901, %v3131
        %v3414 = vmax.f32 %v2902, %v3134
        %v3415 = vmax.f32 %v2903, %v3137
        %v3416 = vmax.f32 %v2904, %v3140
        %v3417 = vmax.f32 %v2905, %v3143
        %v3418 = vmax.f32 %v2906, %v3146
        %v3419 = vmax.f32 %v2907, %v3149
        %v3420 = vmax.f32 %v2908, %v3152
        %v3421 = vmax.f32 %v2909, %v3155
        %v3422 = vmax.f32 %v2910, %v3158
        %v3423 = vmax.f32 %v2911, %v3161
        %v3424 = vmax.f32 %v2912, %v3164
        %v3425 = vmax.f32 %v2913, %v3167
        %v3426 = vmax.f32 %v2914, %v3170
        %v3427 = vmax.f32 %v2915, %v3173
        %v3428 = vmax.f32 %v2916, %v3176
        %v3429 = vmax.f32 %v2917, %v3179
        %v3430 = vmax.f32 %v2918, %v3182
        %v3431 = vmax.f32 %v2919, %v3185
        %v3432 = vmax.f32 %v2920, %v3188
        %v3433 = vmax.f32 %v2921, %v3191
        %v3434 = vmax.f32 %v2922, %v3194
        %v3435 = vmax.f32 %v2923, %v3197
        %v3436 = vmax.f32 %v2924, %v3200
        %v3437 = vmax.f32 %v2925, %v3203
        %v3438 = vmax.f32 %v2926, %v3206
        %v3439 = vmax.f32 %v2927, %v3209
        %v3440 = vmax.f32 %v2928, %v3212
        %v3441 = vmax.f32 %v2929, %v3215
        %v3442 = vmax.f32 %v2930, %v3218
        %v3443 = vmax.f32 %v2931, %v3221
        %v3444 = vmax.f32 %v2932, %v3224
        %v3445 = vmax.f32 %v2933, %v3227
        %v3446 = vmax.f32 %v2934, %v3230
        %v3447 = vmax.f32 %v2935, %v3233
        %v3448 = vmax.f32 %v2936, %v3236
        %v3449 = vmax.f32 %v2937, %v3239
        %v3450 = vmax.f32 %v2938, %v3242
        %v3451 = vmax.f32 %v2939, %v3245
        %v3452 = vmax.f32 %v2940, %v3248
        %v3453 = vmax.f32 %v2941, %v3251
        %v3454 = vmax.f32 %v2942, %v3254
        %v3455 = vmax.f32 %v2943, %v3257
        %v3456 = vmax.f32 %v2944, %v3260
        %v3457 = vmax.f32 %v2945, %v3263
        %v3458 = vmax.f32 %v2946, %v3266
        %v3459 = vmax.f32 %v2947, %v3269
        %v3460 = vmax.f32 %v2948, %v3272
        %v3461 = vmax.f32 %v2949, %v3275
        %v3462 = vmax.f32 %v2950, %v3278
        %v3463 = vmax.f32 %v2951, %v3281
        %v3464 = vmax.f32 %v2952, %v3284
        %v3465 = vmax.f32 %v2953, %v3287
        %v3466 = vmax.f32 %v2954, %v3290
        %v3467 = vmax.f32 %v2955, %v3293
        %v3468 = vmax.f32 %v2956, %v3296
        %v3469 = vmax.f32 %v2957, %v3299
        %v3470 = vmax.f32 %v2958, %v3302
        %v3471 = vmax.f32 %v2959, %v3305
        %v3472 = vmax.f32 %v2960, %v3308
        %v3473 = vmax.f32 %v2961, %v3311
        %v3474 = vmax.f32 %v2962, %v3314
        %v3475 = vmax.f32 %v2963, %v3317
        %v3476 = vmax.f32 %v2964, %v3320
        %v3477 = vmax.f32 %v2965, %v3323
        %v3478 = vmax.f32 %v2966, %v3326
        %v3479 = vmax.f32 %v2967, %v3329
        %v3480 = vmax.f32 %v2968, %v3332
        %v3481 = vmax.f32 %v2969, %v3335
        %v3482 = vmax.f32 %v2970, %v3338
        %v3483 = vmax.f32 %v2971, %v3341
        %v3484 = vmax.f32 %v2972, %v3344
        %v3485 = vmax.f32 %v2973, %v3347
        %v3486 = vmax.f32 %v2974, %v3350
        %v3487 = vmax.f32 %v2975, %v3353
        %v3488 = vmax.f32 %v2976, %v3356
        %v3489 = vmax.f32 %v2977, %v3359
        %v3490 = vmax.f32 %v2978, %v3362
        %v3491 = vsub.f32 %v2851, %v3363
        %v3492 = vsub.f32 %v2852, %v3364
        %v3493 = vsub.f32 %v2853, %v3365
        %v3494 = vsub.f32 %v2854, %v3366
        %v3495 = vsub.f32 %v2855, %v3367
        %v3496 = vsub.f32 %v2856, %v3368
        %v3497 = vsub.f32 %v2857, %v3369
        %v3498 = vsub.f32 %v2858, %v3370
        %v3499 = vsub.f32 %v2859, %v3371
        %v3500 = vsub.f32 %v2860, %v3372
        %v3501 = vsub.f32 %v2861, %v3373
        %v3502 = vsub.f32 %v2862, %v3374
        %v3503 = vsub.f32 %v2863, %v3375
        %v3504 = vsub.f32 %v2864, %v3376
        %v3505 = vsub.f32 %v2865, %v3377
        %v3506 = vsub.f32 %v2866, %v3378
        %v3507 = vsub.f32 %v2867, %v3379
        %v3508 = vsub.f32 %v2868, %v3380
        %v3509 = vsub.f32 %v2869, %v3381
        %v3510 = vsub.f32 %v2870, %v3382
        %v3511 = vsub.f32 %v2871, %v3383
        %v3512 = vsub.f32 %v2872, %v3384
        %v3513 = vsub.f32 %v2873, %v3385
        %v3514 = vsub.f32 %v2874, %v3386
        %v3515 = vsub.f32 %v2875, %v3387
        %v3516 = vsub.f32 %v2876, %v3388
        %v3517 = vsub.f32 %v2877, %v3389
        %v3518 = vsub.f32 %v2878, %v3390
        %v3519 = vsub.f32 %v2879, %v3391
        %v3520 = vsub.f32 %v2880, %v3392
        %v3521 = vsub.f32 %v2881, %v3393
        %v3522 = vsub.f32 %v2882, %v3394
        %v3523 = vsub.f32 %v2883, %v3395
        %v3524 = vsub.f32 %v2884, %v3396
        %v3525 = vsub.f32 %v2885, %v3397
        %v3526 = vsub.f32 %v2886, %v3398
        %v3527 = vsub.f32 %v2887, %v3399
        %v3528 = vsub.f32 %v2888, %v3400
        %v3529 = vsub.f32 %v2889, %v3401
        %v3530 = vsub.f32 %v2890, %v3402
        %v3531 = vsub.f32 %v2891, %v3403
        %v3532 = vsub.f32 %v2892, %v3404
        %v3533 = vsub.f32 %v2893, %v3405
        %v3534 = vsub.f32 %v2894, %v3406
        %v3535 = vsub.f32 %v2895, %v3407
        %v3536 = vsub.f32 %v2896, %v3408
        %v3537 = vsub.f32 %v2897, %v3409
        %v3538 = vsub.f32 %v2898, %v3410
        %v3539 = vsub.f32 %v2899, %v3411
        %v3540 = vsub.f32 %v2900, %v3412
        %v3541 = vsub.f32 %v2901, %v3413
        %v3542 = vsub.f32 %v2902, %v3414
        %v3543 = vsub.f32 %v2903, %v3415
        %v3544 = vsub.f32 %v2904, %v3416
        %v3545 = vsub.f32 %v2905, %v3417
        %v3546 = vsub.f32 %v2906, %v3418
        %v3547 = vsub.f32 %v2907, %v3419
        %v3548 = vsub.f32 %v2908, %v3420
        %v3549 = vsub.f32 %v2909, %v3421
        %v3550 = vsub.f32 %v2910, %v3422
        %v3551 = vsub.f32 %v2911, %v3423
        %v3552 = vsub.f32 %v2912, %v3424
        %v3553 = vsub.f32 %v2913, %v3425
        %v3554 = vsub.f32 %v2914, %v3426
        %v3555 = vsub.f32 %v2915, %v3427
        %v3556 = vsub.f32 %v2916, %v3428
        %v3557 = vsub.f32 %v2917, %v3429
        %v3558 = vsub.f32 %v2918, %v3430
        %v3559 = vsub.f32 %v2919, %v3431
        %v3560 = vsub.f32 %v2920, %v3432
        %v3561 = vsub.f32 %v2921, %v3433
        %v3562 = vsub.f32 %v2922, %v3434
        %v3563 = vsub.f32 %v2923, %v3435
        %v3564 = vsub.f32 %v2924, %v3436
        %v3565 = vsub.f32 %v2925, %v3437
        %v3566 = vsub.f32 %v2926, %v3438
        %v3567 = vsub.f32 %v2927, %v3439
        %v3568 = vsub.f32 %v2928, %v3440
        %v3569 = vsub.f32 %v2929, %v3441
        %v3570 = vsub.f32 %v2930, %v3442
        %v3571 = vsub.f32 %v2931, %v3443
        %v3572 = vsub.f32 %v2932, %v3444
        %v3573 = vsub.f32 %v2933, %v3445
        %v3574 = vsub.f32 %v2934, %v3446
        %v3575 = vsub.f32 %v2935, %v3447
        %v3576 = vsub.f32 %v2936, %v3448
        %v3577 = vsub.f32 %v2937, %v3449
        %v3578 = vsub.f32 %v2938, %v3450
        %v3579 = vsub.f32 %v2939, %v3451
        %v3580 = vsub.f32 %v2940, %v3452
        %v3581 = vsub.f32 %v2941, %v3453
        %v3582 = vsub.f32 %v2942, %v3454
        %v3583 = vsub.f32 %v2943, %v3455
        %v3584 = vsub.f32 %v2944, %v3456
        %v3585 = vsub.f32 %v2945, %v3457
        %v3586 = vsub.f32 %v2946, %v3458
        %v3587 = vsub.f32 %v2947, %v3459
        %v3588 = vsub.f32 %v2948, %v3460
        %v3589 = vsub.f32 %v2949, %v3461
        %v3590 = vsub.f32 %v2950, %v3462
        %v3591 = vsub.f32 %v2951, %v3463
        %v3592 = vsub.f32 %v2952, %v3464
        %v3593 = vsub.f32 %v2953, %v3465
        %v3594 = vsub.f32 %v2954, %v3466
        %v3595 = vsub.f32 %v2955, %v3467
        %v3596 = vsub.f32 %v2956, %v3468
        %v3597 = vsub.f32 %v2957, %v3469
        %v3598 = vsub.f32 %v2958, %v3470
        %v3599 = vsub.f32 %v2959, %v3471
        %v3600 = vsub.f32 %v2960, %v3472
        %v3601 = vsub.f32 %v2961, %v3473
        %v3602 = vsub.f32 %v2962, %v3474
        %v3603 = vsub.f32 %v2963, %v3475
        %v3604 = vsub.f32 %v2964, %v3476
        %v3605 = vsub.f32 %v2965, %v3477
        %v3606 = vsub.f32 %v2966, %v3478
        %v3607 = vsub.f32 %v2967, %v3479
        %v3608 = vsub.f32 %v2968, %v3480
        %v3609 = vsub.f32 %v2969, %v3481
        %v3610 = vsub.f32 %v2970, %v3482
        %v3611 = vsub.f32 %v2971, %v3483
        %v3612 = vsub.f32 %v2972, %v3484
        %v3613 = vsub.f32 %v2973, %v3485
        %v3614 = vsub.f32 %v2974, %v3486
        %v3615 = vsub.f32 %v2975, %v3487
        %v3616 = vsub.f32 %v2976, %v3488
        %v3617 = vsub.f32 %v2977, %v3489
        %v3618 = vsub.f32 %v2978, %v3490
        %v3619 = vmul.f32 %v3491, 1.442695
        %v3620 = vpow.pop %v3619
        %v3621 = vmul.f32 %v3492, 1.442695
        %v3622 = vpow.pop %v3621
        %v3623 = vmul.f32 %v3493, 1.442695
        %v3624 = vpow.pop %v3623
        %v3625 = vmul.f32 %v3494, 1.442695
        %v3626 = vpow.pop %v3625
        %v3627 = vmul.f32 %v3495, 1.442695
        %v3628 = vpow.pop %v3627
        %v3629 = vmul.f32 %v3496, 1.442695
        %v3630 = vpow.pop %v3629
        %v3631 = vmul.f32 %v3497, 1.442695
        %v3632 = vpow.pop %v3631
        %v3633 = vmul.f32 %v3498, 1.442695
        %v3634 = vpow.pop %v3633
        %v3635 = vmul.f32 %v3499, 1.442695
        %v3636 = vpow.pop %v3635
        %v3637 = vmul.f32 %v3500, 1.442695
        %v3638 = vpow.pop %v3637
        %v3639 = vmul.f32 %v3501, 1.442695
        %v3640 = vpow.pop %v3639
        %v3641 = vmul.f32 %v3502, 1.442695
        %v3642 = vpow.pop %v3641
        %v3643 = vmul.f32 %v3503, 1.442695
        %v3644 = vpow.pop %v3643
        %v3645 = vmul.f32 %v3504, 1.442695
        %v3646 = vpow.pop %v3645
        %v3647 = vmul.f32 %v3505, 1.442695
        %v3648 = vpow.pop %v3647
        %v3649 = vmul.f32 %v3506, 1.442695
        %v3650 = vpow.pop %v3649
        %v3651 = vmul.f32 %v3507, 1.442695
        %v3652 = vpow.pop %v3651
        %v3653 = vmul.f32 %v3508, 1.442695
        %v3654 = vpow.pop %v3653
        %v3655 = vmul.f32 %v3509, 1.442695
        %v3656 = vpow.pop %v3655
        %v3657 = vmul.f32 %v3510, 1.442695
        %v3658 = vpow.pop %v3657
        %v3659 = vmul.f32 %v3511, 1.442695
        %v3660 = vpow.pop %v3659
        %v3661 = vmul.f32 %v3512, 1.442695
        %v3662 = vpow.pop %v3661
        %v3663 = vmul.f32 %v3513, 1.442695
        %v3664 = vpow.pop %v3663
        %v3665 = vmul.f32 %v3514, 1.442695
        %v3666 = vpow.pop %v3665
        %v3667 = vmul.f32 %v3515, 1.442695
        %v3668 = vpow.pop %v3667
        %v3669 = vmul.f32 %v3516, 1.442695
        %v3670 = vpow.pop %v3669
        %v3671 = vmul.f32 %v3517, 1.442695
        %v3672 = vpow.pop %v3671
        %v3673 = vmul.f32 %v3518, 1.442695
        %v3674 = vpow.pop %v3673
        %v3675 = vmul.f32 %v3519, 1.442695
        %v3676 = vpow.pop %v3675
        %v3677 = vmul.f32 %v3520, 1.442695
        %v3678 = vpow.pop %v3677
        %v3679 = vmul.f32 %v3521, 1.442695
        %v3680 = vpow.pop %v3679
        %v3681 = vmul.f32 %v3522, 1.442695
        %v3682 = vpow.pop %v3681
        %v3683 = vmul.f32 %v3523, 1.442695
        %v3684 = vpow.pop %v3683
        %v3685 = vmul.f32 %v3524, 1.442695
        %v3686 = vpow.pop %v3685
        %v3687 = vmul.f32 %v3525, 1.442695
        %v3688 = vpow.pop %v3687
        %v3689 = vmul.f32 %v3526, 1.442695
        %v3690 = vpow.pop %v3689
        %v3691 = vmul.f32 %v3527, 1.442695
        %v3692 = vpow.pop %v3691
        %v3693 = vmul.f32 %v3528, 1.442695
        %v3694 = vpow.pop %v3693
        %v3695 = vmul.f32 %v3529, 1.442695
        %v3696 = vpow.pop %v3695
        %v3697 = vmul.f32 %v3530, 1.442695
        %v3698 = vpow.pop %v3697
        %v3699 = vmul.f32 %v3531, 1.442695
        %v3700 = vpow.pop %v3699
        %v3701 = vmul.f32 %v3532, 1.442695
        %v3702 = vpow.pop %v3701
        %v3703 = vmul.f32 %v3533, 1.442695
        %v3704 = vpow.pop %v3703
        %v3705 = vmul.f32 %v3534, 1.442695
        %v3706 = vpow.pop %v3705
        %v3707 = vmul.f32 %v3535, 1.442695
        %v3708 = vpow.pop %v3707
        %v3709 = vmul.f32 %v3536, 1.442695
        %v3710 = vpow.pop %v3709
        %v3711 = vmul.f32 %v3537, 1.442695
        %v3712 = vpow.pop %v3711
        %v3713 = vmul.f32 %v3538, 1.442695
        %v3714 = vpow.pop %v3713
        %v3715 = vmul.f32 %v3539, 1.442695
        %v3716 = vpow.pop %v3715
        %v3717 = vmul.f32 %v3540, 1.442695
        %v3718 = vpow.pop %v3717
        %v3719 = vmul.f32 %v3541, 1.442695
        %v3720 = vpow.pop %v3719
        %v3721 = vmul.f32 %v3542, 1.442695
        %v3722 = vpow.pop %v3721
        %v3723 = vmul.f32 %v3543, 1.442695
        %v3724 = vpow.pop %v3723
        %v3725 = vmul.f32 %v3544, 1.442695
        %v3726 = vpow.pop %v3725
        %v3727 = vmul.f32 %v3545, 1.442695
        %v3728 = vpow.pop %v3727
        %v3729 = vmul.f32 %v3546, 1.442695
        %v3730 = vpow.pop %v3729
        %v3731 = vmul.f32 %v3547, 1.442695
        %v3732 = vpow.pop %v3731
        %v3733 = vmul.f32 %v3548, 1.442695
        %v3734 = vpow.pop %v3733
        %v3735 = vmul.f32 %v3549, 1.442695
        %v3736 = vpow.pop %v3735
        %v3737 = vmul.f32 %v3550, 1.442695
        %v3738 = vpow.pop %v3737
        %v3739 = vmul.f32 %v3551, 1.442695
        %v3740 = vpow.pop %v3739
        %v3741 = vmul.f32 %v3552, 1.442695
        %v3742 = vpow.pop %v3741
        %v3743 = vmul.f32 %v3553, 1.442695
        %v3744 = vpow.pop %v3743
        %v3745 = vmul.f32 %v3554, 1.442695
        %v3746 = vpow.pop %v3745
        %v3747 = vmul.f32 %v3555, 1.442695
        %v3748 = vpow.pop %v3747
        %v3749 = vmul.f32 %v3556, 1.442695
        %v3750 = vpow.pop %v3749
        %v3751 = vmul.f32 %v3557, 1.442695
        %v3752 = vpow.pop %v3751
        %v3753 = vmul.f32 %v3558, 1.442695
        %v3754 = vpow.pop %v3753
        %v3755 = vmul.f32 %v3559, 1.442695
        %v3756 = vpow.pop %v3755
        %v3757 = vmul.f32 %v3560, 1.442695
        %v3758 = vpow.pop %v3757
        %v3759 = vmul.f32 %v3561, 1.442695
        %v3760 = vpow.pop %v3759
        %v3761 = vmul.f32 %v3562, 1.442695
        %v3762 = vpow.pop %v3761
        %v3763 = vmul.f32 %v3563, 1.442695
        %v3764 = vpow.pop %v3763
        %v3765 = vmul.f32 %v3564, 1.442695
        %v3766 = vpow.pop %v3765
        %v3767 = vmul.f32 %v3565, 1.442695
        %v3768 = vpow.pop %v3767
        %v3769 = vmul.f32 %v3566, 1.442695
        %v3770 = vpow.pop %v3769
        %v3771 = vmul.f32 %v3567, 1.442695
        %v3772 = vpow.pop %v3771
        %v3773 = vmul.f32 %v3568, 1.442695
        %v3774 = vpow.pop %v3773
        %v3775 = vmul.f32 %v3569, 1.442695
        %v3776 = vpow.pop %v3775
        %v3777 = vmul.f32 %v3570, 1.442695
        %v3778 = vpow.pop %v3777
        %v3779 = vmul.f32 %v3571, 1.442695
        %v3780 = vpow.pop %v3779
        %v3781 = vmul.f32 %v3572, 1.442695
        %v3782 = vpow.pop %v3781
        %v3783 = vmul.f32 %v3573, 1.442695
        %v3784 = vpow.pop %v3783
        %v3785 = vmul.f32 %v3574, 1.442695
        %v3786 = vpow.pop %v3785
        %v3787 = vmul.f32 %v3575, 1.442695
        %v3788 = vpow.pop %v3787
        %v3789 = vmul.f32 %v3576, 1.442695
        %v3790 = vpow.pop %v3789
        %v3791 = vmul.f32 %v3577, 1.442695
        %v3792 = vpow.pop %v3791
        %v3793 = vmul.f32 %v3578, 1.442695
        %v3794 = vpow.pop %v3793
        %v3795 = vmul.f32 %v3579, 1.442695
        %v3796 = vpow.pop %v3795
        %v3797 = vmul.f32 %v3580, 1.442695
        %v3798 = vpow.pop %v3797
        %v3799 = vmul.f32 %v3581, 1.442695
        %v3800 = vpow.pop %v3799
        %v3801 = vmul.f32 %v3582, 1.442695
        %v3802 = vpow.pop %v3801
        %v3803 = vmul.f32 %v3583, 1.442695
        %v3804 = vpow.pop %v3803
        %v3805 = vmul.f32 %v3584, 1.442695
        %v3806 = vpow.pop %v3805
        %v3807 = vmul.f32 %v3585, 1.442695
        %v3808 = vpow.pop %v3807
        %v3809 = vmul.f32 %v3586, 1.442695
        %v3810 = vpow.pop %v3809
        %v3811 = vmul.f32 %v3587, 1.442695
        %v3812 = vpow.pop %v3811
        %v3813 = vmul.f32 %v3588, 1.442695
        %v3814 = vpow.pop %v3813
        %v3815 = vmul.f32 %v3589, 1.442695
        %v3816 = vpow.pop %v3815
        %v3817 = vmul.f32 %v3590, 1.442695
        %v3818 = vpow.pop %v3817
        %v3819 = vmul.f32 %v3591, 1.442695
        %v3820 = vpow.pop %v3819
        %v3821 = vmul.f32 %v3592, 1.442695
        %v3822 = vpow.pop %v3821
        %v3823 = vmul.f32 %v3593, 1.442695
        %v3824 = vpow.pop %v3823
        %v3825 = vmul.f32 %v3594, 1.442695
        %v3826 = vpow.pop %v3825
        %v3827 = vmul.f32 %v3595, 1.442695
        %v3828 = vpow.pop %v3827
        %v3829 = vmul.f32 %v3596, 1.442695
        %v3830 = vpow.pop %v3829
        %v3831 = vmul.f32 %v3597, 1.442695
        %v3832 = vpow.pop %v3831
        %v3833 = vmul.f32 %v3598, 1.442695
        %v3834 = vpow.pop %v3833
        %v3835 = vmul.f32 %v3599, 1.442695
        %v3836 = vpow.pop %v3835
        %v3837 = vmul.f32 %v3600, 1.442695
        %v3838 = vpow.pop %v3837
        %v3839 = vmul.f32 %v3601, 1.442695
        %v3840 = vpow.pop %v3839
        %v3841 = vmul.f32 %v3602, 1.442695
        %v3842 = vpow.pop %v3841
        %v3843 = vmul.f32 %v3603, 1.442695
        %v3844 = vpow.pop %v3843
        %v3845 = vmul.f32 %v3604, 1.442695
        %v3846 = vpow.pop %v3845
        %v3847 = vmul.f32 %v3605, 1.442695
        %v3848 = vpow.pop %v3847
        %v3849 = vmul.f32 %v3606, 1.442695
        %v3850 = vpow.pop %v3849
        %v3851 = vmul.f32 %v3607, 1.442695
        %v3852 = vpow.pop %v3851
        %v3853 = vmul.f32 %v3608, 1.442695
        %v3854 = vpow.pop %v3853
        %v3855 = vmul.f32 %v3609, 1.442695
        %v3856 = vpow.pop %v3855
        %v3857 = vmul.f32 %v3610, 1.442695
        %v3858 = vpow.pop %v3857
        %v3859 = vmul.f32 %v3611, 1.442695
        %v3860 = vpow.pop %v3859
        %v3861 = vmul.f32 %v3612, 1.442695
        %v3862 = vpow.pop %v3861
        %v3863 = vmul.f32 %v3613, 1.442695
        %v3864 = vpow.pop %v3863
        %v3865 = vmul.f32 %v3614, 1.442695
        %v3866 = vpow.pop %v3865
        %v3867 = vmul.f32 %v3615, 1.442695
        %v3868 = vpow.pop %v3867
        %v3869 = vmul.f32 %v3616, 1.442695
        %v3870 = vpow.pop %v3869
        %v3871 = vmul.f32 %v3617, 1.442695
        %v3872 = vpow.pop %v3871
        %v3873 = vmul.f32 %v3618, 1.442695
        %v3874 = vpow.pop %v3873
        %3876 = vset.pattern.permute.xlu0 0
        %3877 = vperm.xlu0 %3876, %v3363
        %v3878 = vpop.permute.xlu0 %3877
        %3881 = vset.pattern.permute.xlu0 0
        %3882 = vperm.xlu0 %3881, %v3364
        %v3883 = vpop.permute.xlu0 %3882
        %3886 = vset.pattern.permute.xlu0 0
        %3887 = vperm.xlu0 %3886, %v3365
        %v3888 = vpop.permute.xlu0 %3887
        %3891 = vset.pattern.permute.xlu0 0
        %3892 = vperm.xlu0 %3891, %v3366
        %v3893 = vpop.permute.xlu0 %3892
        %3896 = vset.pattern.permute.xlu0 0
        %3897 = vperm.xlu0 %3896, %v3367
        %v3898 = vpop.permute.xlu0 %3897
        %3901 = vset.pattern.permute.xlu0 0
        %3902 = vperm.xlu0 %3901, %v3368
        %v3903 = vpop.permute.xlu0 %3902
        %3906 = vset.pattern.permute.xlu0 0
        %3907 = vperm.xlu0 %3906, %v3369
        %v3908 = vpop.permute.xlu0 %3907
        %3911 = vset.pattern.permute.xlu0 0
        %3912 = vperm.xlu0 %3911, %v3370
        %v3913 = vpop.permute.xlu0 %3912
        %3916 = vset.pattern.permute.xlu0 0
        %3917 = vperm.xlu0 %3916, %v3371
        %v3918 = vpop.permute.xlu0 %3917
        %3921 = vset.pattern.permute.xlu0 0
        %3922 = vperm.xlu0 %3921, %v3372
        %v3923 = vpop.permute.xlu0 %3922
        %3926 = vset.pattern.permute.xlu0 0
        %3927 = vperm.xlu0 %3926, %v3373
        %v3928 = vpop.permute.xlu0 %3927
        %3931 = vset.pattern.permute.xlu0 0
        %3932 = vperm.xlu0 %3931, %v3374
        %v3933 = vpop.permute.xlu0 %3932
        %3936 = vset.pattern.permute.xlu0 0
        %3937 = vperm.xlu0 %3936, %v3375
        %v3938 = vpop.permute.xlu0 %3937
        %3941 = vset.pattern.permute.xlu0 0
        %3942 = vperm.xlu0 %3941, %v3376
        %v3943 = vpop.permute.xlu0 %3942
        %3946 = vset.pattern.permute.xlu0 0
        %3947 = vperm.xlu0 %3946, %v3377
        %v3948 = vpop.permute.xlu0 %3947
        %3951 = vset.pattern.permute.xlu0 0
        %3952 = vperm.xlu0 %3951, %v3378
        %v3953 = vpop.permute.xlu0 %3952
        %3956 = vset.pattern.permute.xlu0 0
        %3957 = vperm.xlu0 %3956, %v3379
        %v3958 = vpop.permute.xlu0 %3957
        %3961 = vset.pattern.permute.xlu0 0
        %3962 = vperm.xlu0 %3961, %v3380
        %v3963 = vpop.permute.xlu0 %3962
        %3966 = vset.pattern.permute.xlu0 0
        %3967 = vperm.xlu0 %3966, %v3381
        %v3968 = vpop.permute.xlu0 %3967
        %3971 = vset.pattern.permute.xlu0 0
        %3972 = vperm.xlu0 %3971, %v3382
        %v3973 = vpop.permute.xlu0 %3972
        %3976 = vset.pattern.permute.xlu0 0
        %3977 = vperm.xlu0 %3976, %v3383
        %v3978 = vpop.permute.xlu0 %3977
        %3981 = vset.pattern.permute.xlu0 0
        %3982 = vperm.xlu0 %3981, %v3384
        %v3983 = vpop.permute.xlu0 %3982
        %3986 = vset.pattern.permute.xlu0 0
        %3987 = vperm.xlu0 %3986, %v3385
        %v3988 = vpop.permute.xlu0 %3987
        %3991 = vset.pattern.permute.xlu0 0
        %3992 = vperm.xlu0 %3991, %v3386
        %v3993 = vpop.permute.xlu0 %3992
        %3996 = vset.pattern.permute.xlu0 0
        %3997 = vperm.xlu0 %3996, %v3387
        %v3998 = vpop.permute.xlu0 %3997
        %4001 = vset.pattern.permute.xlu0 0
        %4002 = vperm.xlu0 %4001, %v3388
        %v4003 = vpop.permute.xlu0 %4002
        %4006 = vset.pattern.permute.xlu0 0
        %4007 = vperm.xlu0 %4006, %v3389
        %v4008 = vpop.permute.xlu0 %4007
        %4011 = vset.pattern.permute.xlu0 0
        %4012 = vperm.xlu0 %4011, %v3390
        %v4013 = vpop.permute.xlu0 %4012
        %4016 = vset.pattern.permute.xlu0 0
        %4017 = vperm.xlu0 %4016, %v3391
        %v4018 = vpop.permute.xlu0 %4017
        %4021 = vset.pattern.permute.xlu0 0
        %4022 = vperm.xlu0 %4021, %v3392
        %v4023 = vpop.permute.xlu0 %4022
        %4026 = vset.pattern.permute.xlu0 0
        %4027 = vperm.xlu0 %4026, %v3393
        %v4028 = vpop.permute.xlu0 %4027
        %4031 = vset.pattern.permute.xlu0 0
        %4032 = vperm.xlu0 %4031, %v3394
        %v4033 = vpop.permute.xlu0 %4032
        %4036 = vset.pattern.permute.xlu0 0
        %4037 = vperm.xlu0 %4036, %v3395
        %v4038 = vpop.permute.xlu0 %4037
        %4041 = vset.pattern.permute.xlu0 0
        %4042 = vperm.xlu0 %4041, %v3396
        %v4043 = vpop.permute.xlu0 %4042
        %4046 = vset.pattern.permute.xlu0 0
        %4047 = vperm.xlu0 %4046, %v3397
        %v4048 = vpop.permute.xlu0 %4047
        %4051 = vset.pattern.permute.xlu0 0
        %4052 = vperm.xlu0 %4051, %v3398
        %v4053 = vpop.permute.xlu0 %4052
        %4056 = vset.pattern.permute.xlu0 0
        %4057 = vperm.xlu0 %4056, %v3399
        %v4058 = vpop.permute.xlu0 %4057
        %4061 = vset.pattern.permute.xlu0 0
        %4062 = vperm.xlu0 %4061, %v3400
        %v4063 = vpop.permute.xlu0 %4062
        %4066 = vset.pattern.permute.xlu0 0
        %4067 = vperm.xlu0 %4066, %v3401
        %v4068 = vpop.permute.xlu0 %4067
        %4071 = vset.pattern.permute.xlu0 0
        %4072 = vperm.xlu0 %4071, %v3402
        %v4073 = vpop.permute.xlu0 %4072
        %4076 = vset.pattern.permute.xlu0 0
        %4077 = vperm.xlu0 %4076, %v3403
        %v4078 = vpop.permute.xlu0 %4077
        %4081 = vset.pattern.permute.xlu0 0
        %4082 = vperm.xlu0 %4081, %v3404
        %v4083 = vpop.permute.xlu0 %4082
        %4086 = vset.pattern.permute.xlu0 0
        %4087 = vperm.xlu0 %4086, %v3405
        %v4088 = vpop.permute.xlu0 %4087
        %4091 = vset.pattern.permute.xlu0 0
        %4092 = vperm.xlu0 %4091, %v3406
        %v4093 = vpop.permute.xlu0 %4092
        %4096 = vset.pattern.permute.xlu0 0
        %4097 = vperm.xlu0 %4096, %v3407
        %v4098 = vpop.permute.xlu0 %4097
        %4101 = vset.pattern.permute.xlu0 0
        %4102 = vperm.xlu0 %4101, %v3408
        %v4103 = vpop.permute.xlu0 %4102
        %4106 = vset.pattern.permute.xlu0 0
        %4107 = vperm.xlu0 %4106, %v3409
        %v4108 = vpop.permute.xlu0 %4107
        %4111 = vset.pattern.permute.xlu0 0
        %4112 = vperm.xlu0 %4111, %v3410
        %v4113 = vpop.permute.xlu0 %4112
        %4116 = vset.pattern.permute.xlu0 0
        %4117 = vperm.xlu0 %4116, %v3411
        %v4118 = vpop.permute.xlu0 %4117
        %4121 = vset.pattern.permute.xlu0 0
        %4122 = vperm.xlu0 %4121, %v3412
        %v4123 = vpop.permute.xlu0 %4122
        %4126 = vset.pattern.permute.xlu0 0
        %4127 = vperm.xlu0 %4126, %v3413
        %v4128 = vpop.permute.xlu0 %4127
        %4131 = vset.pattern.permute.xlu0 0
        %4132 = vperm.xlu0 %4131, %v3414
        %v4133 = vpop.permute.xlu0 %4132
        %4136 = vset.pattern.permute.xlu0 0
        %4137 = vperm.xlu0 %4136, %v3415
        %v4138 = vpop.permute.xlu0 %4137
        %4141 = vset.pattern.permute.xlu0 0
        %4142 = vperm.xlu0 %4141, %v3416
        %v4143 = vpop.permute.xlu0 %4142
        %4146 = vset.pattern.permute.xlu0 0
        %4147 = vperm.xlu0 %4146, %v3417
        %v4148 = vpop.permute.xlu0 %4147
        %4151 = vset.pattern.permute.xlu0 0
        %4152 = vperm.xlu0 %4151, %v3418
        %v4153 = vpop.permute.xlu0 %4152
        %4156 = vset.pattern.permute.xlu0 0
        %4157 = vperm.xlu0 %4156, %v3419
        %v4158 = vpop.permute.xlu0 %4157
        %4161 = vset.pattern.permute.xlu0 0
        %4162 = vperm.xlu0 %4161, %v3420
        %v4163 = vpop.permute.xlu0 %4162
        %4166 = vset.pattern.permute.xlu0 0
        %4167 = vperm.xlu0 %4166, %v3421
        %v4168 = vpop.permute.xlu0 %4167
        %4171 = vset.pattern.permute.xlu0 0
        %4172 = vperm.xlu0 %4171, %v3422
        %v4173 = vpop.permute.xlu0 %4172
        %4176 = vset.pattern.permute.xlu0 0
        %4177 = vperm.xlu0 %4176, %v3423
        %v4178 = vpop.permute.xlu0 %4177
        %4181 = vset.pattern.permute.xlu0 0
        %4182 = vperm.xlu0 %4181, %v3424
        %v4183 = vpop.permute.xlu0 %4182
        %4186 = vset.pattern.permute.xlu0 0
        %4187 = vperm.xlu0 %4186, %v3425
        %v4188 = vpop.permute.xlu0 %4187
        %4191 = vset.pattern.permute.xlu0 0
        %4192 = vperm.xlu0 %4191, %v3426
        %v4193 = vpop.permute.xlu0 %4192
        %4196 = vset.pattern.permute.xlu0 0
        %4197 = vperm.xlu0 %4196, %v3427
        %v4198 = vpop.permute.xlu0 %4197
        %4201 = vset.pattern.permute.xlu0 0
        %4202 = vperm.xlu0 %4201, %v3428
        %v4203 = vpop.permute.xlu0 %4202
        %4206 = vset.pattern.permute.xlu0 0
        %4207 = vperm.xlu0 %4206, %v3429
        %v4208 = vpop.permute.xlu0 %4207
        %4211 = vset.pattern.permute.xlu0 0
        %4212 = vperm.xlu0 %4211, %v3430
        %v4213 = vpop.permute.xlu0 %4212
        %4216 = vset.pattern.permute.xlu0 0
        %4217 = vperm.xlu0 %4216, %v3431
        %v4218 = vpop.permute.xlu0 %4217
        %4221 = vset.pattern.permute.xlu0 0
        %4222 = vperm.xlu0 %4221, %v3432
        %v4223 = vpop.permute.xlu0 %4222
        %4226 = vset.pattern.permute.xlu0 0
        %4227 = vperm.xlu0 %4226, %v3433
        %v4228 = vpop.permute.xlu0 %4227
        %4231 = vset.pattern.permute.xlu0 0
        %4232 = vperm.xlu0 %4231, %v3434
        %v4233 = vpop.permute.xlu0 %4232
        %4236 = vset.pattern.permute.xlu0 0
        %4237 = vperm.xlu0 %4236, %v3435
        %v4238 = vpop.permute.xlu0 %4237
        %4241 = vset.pattern.permute.xlu0 0
        %4242 = vperm.xlu0 %4241, %v3436
        %v4243 = vpop.permute.xlu0 %4242
        %4246 = vset.pattern.permute.xlu0 0
        %4247 = vperm.xlu0 %4246, %v3437
        %v4248 = vpop.permute.xlu0 %4247
        %4251 = vset.pattern.permute.xlu0 0
        %4252 = vperm.xlu0 %4251, %v3438
        %v4253 = vpop.permute.xlu0 %4252
        %4256 = vset.pattern.permute.xlu0 0
        %4257 = vperm.xlu0 %4256, %v3439
        %v4258 = vpop.permute.xlu0 %4257
        %4261 = vset.pattern.permute.xlu0 0
        %4262 = vperm.xlu0 %4261, %v3440
        %v4263 = vpop.permute.xlu0 %4262
        %4266 = vset.pattern.permute.xlu0 0
        %4267 = vperm.xlu0 %4266, %v3441
        %v4268 = vpop.permute.xlu0 %4267
        %4271 = vset.pattern.permute.xlu0 0
        %4272 = vperm.xlu0 %4271, %v3442
        %v4273 = vpop.permute.xlu0 %4272
        %4276 = vset.pattern.permute.xlu0 0
        %4277 = vperm.xlu0 %4276, %v3443
        %v4278 = vpop.permute.xlu0 %4277
        %4281 = vset.pattern.permute.xlu0 0
        %4282 = vperm.xlu0 %4281, %v3444
        %v4283 = vpop.permute.xlu0 %4282
        %4286 = vset.pattern.permute.xlu0 0
        %4287 = vperm.xlu0 %4286, %v3445
        %v4288 = vpop.permute.xlu0 %4287
        %4291 = vset.pattern.permute.xlu0 0
        %4292 = vperm.xlu0 %4291, %v3446
        %v4293 = vpop.permute.xlu0 %4292
        %4296 = vset.pattern.permute.xlu0 0
        %4297 = vperm.xlu0 %4296, %v3447
        %v4298 = vpop.permute.xlu0 %4297
        %4301 = vset.pattern.permute.xlu0 0
        %4302 = vperm.xlu0 %4301, %v3448
        %v4303 = vpop.permute.xlu0 %4302
        %4306 = vset.pattern.permute.xlu0 0
        %4307 = vperm.xlu0 %4306, %v3449
        %v4308 = vpop.permute.xlu0 %4307
        %4311 = vset.pattern.permute.xlu0 0
        %4312 = vperm.xlu0 %4311, %v3450
        %v4313 = vpop.permute.xlu0 %4312
        %4316 = vset.pattern.permute.xlu0 0
        %4317 = vperm.xlu0 %4316, %v3451
        %v4318 = vpop.permute.xlu0 %4317
        %4321 = vset.pattern.permute.xlu0 0
        %4322 = vperm.xlu0 %4321, %v3452
        %v4323 = vpop.permute.xlu0 %4322
        %4326 = vset.pattern.permute.xlu0 0
        %4327 = vperm.xlu0 %4326, %v3453
        %v4328 = vpop.permute.xlu0 %4327
        %4331 = vset.pattern.permute.xlu0 0
        %4332 = vperm.xlu0 %4331, %v3454
        %v4333 = vpop.permute.xlu0 %4332
        %4336 = vset.pattern.permute.xlu0 0
        %4337 = vperm.xlu0 %4336, %v3455
        %v4338 = vpop.permute.xlu0 %4337
        %4341 = vset.pattern.permute.xlu0 0
        %4342 = vperm.xlu0 %4341, %v3456
        %v4343 = vpop.permute.xlu0 %4342
        %4346 = vset.pattern.permute.xlu0 0
        %4347 = vperm.xlu0 %4346, %v3457
        %v4348 = vpop.permute.xlu0 %4347
        %4351 = vset.pattern.permute.xlu0 0
        %4352 = vperm.xlu0 %4351, %v3458
        %v4353 = vpop.permute.xlu0 %4352
        %4356 = vset.pattern.permute.xlu0 0
        %4357 = vperm.xlu0 %4356, %v3459
        %v4358 = vpop.permute.xlu0 %4357
        %4361 = vset.pattern.permute.xlu0 0
        %4362 = vperm.xlu0 %4361, %v3460
        %v4363 = vpop.permute.xlu0 %4362
        %4366 = vset.pattern.permute.xlu0 0
        %4367 = vperm.xlu0 %4366, %v3461
        %v4368 = vpop.permute.xlu0 %4367
        %4371 = vset.pattern.permute.xlu0 0
        %4372 = vperm.xlu0 %4371, %v3462
        %v4373 = vpop.permute.xlu0 %4372
        %4376 = vset.pattern.permute.xlu0 0
        %4377 = vperm.xlu0 %4376, %v3463
        %v4378 = vpop.permute.xlu0 %4377
        %4381 = vset.pattern.permute.xlu0 0
        %4382 = vperm.xlu0 %4381, %v3464
        %v4383 = vpop.permute.xlu0 %4382
        %4386 = vset.pattern.permute.xlu0 0
        %4387 = vperm.xlu0 %4386, %v3465
        %v4388 = vpop.permute.xlu0 %4387
        %4391 = vset.pattern.permute.xlu0 0
        %4392 = vperm.xlu0 %4391, %v3466
        %v4393 = vpop.permute.xlu0 %4392
        %4396 = vset.pattern.permute.xlu0 0
        %4397 = vperm.xlu0 %4396, %v3467
        %v4398 = vpop.permute.xlu0 %4397
        %4401 = vset.pattern.permute.xlu0 0
        %4402 = vperm.xlu0 %4401, %v3468
        %v4403 = vpop.permute.xlu0 %4402
        %4406 = vset.pattern.permute.xlu0 0
        %4407 = vperm.xlu0 %4406, %v3469
        %v4408 = vpop.permute.xlu0 %4407
        %4411 = vset.pattern.permute.xlu0 0
        %4412 = vperm.xlu0 %4411, %v3470
        %v4413 = vpop.permute.xlu0 %4412
        %4416 = vset.pattern.permute.xlu0 0
        %4417 = vperm.xlu0 %4416, %v3471
        %v4418 = vpop.permute.xlu0 %4417
        %4421 = vset.pattern.permute.xlu0 0
        %4422 = vperm.xlu0 %4421, %v3472
        %v4423 = vpop.permute.xlu0 %4422
        %4426 = vset.pattern.permute.xlu0 0
        %4427 = vperm.xlu0 %4426, %v3473
        %v4428 = vpop.permute.xlu0 %4427
        %4431 = vset.pattern.permute.xlu0 0
        %4432 = vperm.xlu0 %4431, %v3474
        %v4433 = vpop.permute.xlu0 %4432
        %4436 = vset.pattern.permute.xlu0 0
        %4437 = vperm.xlu0 %4436, %v3475
        %v4438 = vpop.permute.xlu0 %4437
        %4441 = vset.pattern.permute.xlu0 0
        %4442 = vperm.xlu0 %4441, %v3476
        %v4443 = vpop.permute.xlu0 %4442
        %4446 = vset.pattern.permute.xlu0 0
        %4447 = vperm.xlu0 %4446, %v3477
        %v4448 = vpop.permute.xlu0 %4447
        %4451 = vset.pattern.permute.xlu0 0
        %4452 = vperm.xlu0 %4451, %v3478
        %v4453 = vpop.permute.xlu0 %4452
        %4456 = vset.pattern.permute.xlu0 0
        %4457 = vperm.xlu0 %4456, %v3479
        %v4458 = vpop.permute.xlu0 %4457
        %4461 = vset.pattern.permute.xlu0 0
        %4462 = vperm.xlu0 %4461, %v3480
        %v4463 = vpop.permute.xlu0 %4462
        %4466 = vset.pattern.permute.xlu0 0
        %4467 = vperm.xlu0 %4466, %v3481
        %v4468 = vpop.permute.xlu0 %4467
        %4471 = vset.pattern.permute.xlu0 0
        %4472 = vperm.xlu0 %4471, %v3482
        %v4473 = vpop.permute.xlu0 %4472
        %4476 = vset.pattern.permute.xlu0 0
        %4477 = vperm.xlu0 %4476, %v3483
        %v4478 = vpop.permute.xlu0 %4477
        %4481 = vset.pattern.permute.xlu0 0
        %4482 = vperm.xlu0 %4481, %v3484
        %v4483 = vpop.permute.xlu0 %4482
        %4486 = vset.pattern.permute.xlu0 0
        %4487 = vperm.xlu0 %4486, %v3485
        %v4488 = vpop.permute.xlu0 %4487
        %4491 = vset.pattern.permute.xlu0 0
        %4492 = vperm.xlu0 %4491, %v3486
        %v4493 = vpop.permute.xlu0 %4492
        %4496 = vset.pattern.permute.xlu0 0
        %4497 = vperm.xlu0 %4496, %v3487
        %v4498 = vpop.permute.xlu0 %4497
        %4501 = vset.pattern.permute.xlu0 0
        %4502 = vperm.xlu0 %4501, %v3488
        %v4503 = vpop.permute.xlu0 %4502
        %4506 = vset.pattern.permute.xlu0 0
        %4507 = vperm.xlu0 %4506, %v3489
        %v4508 = vpop.permute.xlu0 %4507
        %4511 = vset.pattern.permute.xlu0 0
        %4512 = vperm.xlu0 %4511, %v3490
        %v4513 = vpop.permute.xlu0 %4512
        %v4515 = vsub.f32 %v1346, %v3878
        %v4516 = vsub.f32 %v1348, %v3878
        %v4517 = vsub.f32 %v1350, %v3883
        %v4518 = vsub.f32 %v1352, %v3883
        %v4519 = vsub.f32 %v1356, %v3888
        %v4520 = vsub.f32 %v1358, %v3888
        %v4521 = vsub.f32 %v1360, %v3893
        %v4522 = vsub.f32 %v1362, %v3893
        %v4523 = vsub.f32 %v1366, %v3898
        %v4524 = vsub.f32 %v1368, %v3898
        %v4525 = vsub.f32 %v1370, %v3903
        %v4526 = vsub.f32 %v1372, %v3903
        %v4527 = vsub.f32 %v1376, %v3908
        %v4528 = vsub.f32 %v1378, %v3908
        %v4529 = vsub.f32 %v1380, %v3913
        %v4530 = vsub.f32 %v1382, %v3913
        %v4531 = vsub.f32 %v1386, %v3918
        %v4532 = vsub.f32 %v1388, %v3918
        %v4533 = vsub.f32 %v1390, %v3923
        %v4534 = vsub.f32 %v1392, %v3923
        %v4535 = vsub.f32 %v1396, %v3928
        %v4536 = vsub.f32 %v1398, %v3928
        %v4537 = vsub.f32 %v1400, %v3933
        %v4538 = vsub.f32 %v1402, %v3933
        %v4539 = vsub.f32 %v1406, %v3938
        %v4540 = vsub.f32 %v1408, %v3938
        %v4541 = vsub.f32 %v1410, %v3943
        %v4542 = vsub.f32 %v1412, %v3943
        %v4543 = vsub.f32 %v1416, %v3948
        %v4544 = vsub.f32 %v1418, %v3948
        %v4545 = vsub.f32 %v1420, %v3953
        %v4546 = vsub.f32 %v1422, %v3953
        %v4547 = vsub.f32 %v1426, %v3958
        %v4548 = vsub.f32 %v1428, %v3958
        %v4549 = vsub.f32 %v1430, %v3963
        %v4550 = vsub.f32 %v1432, %v3963
        %v4551 = vsub.f32 %v1436, %v3968
        %v4552 = vsub.f32 %v1438, %v3968
        %v4553 = vsub.f32 %v1440, %v3973
        %v4554 = vsub.f32 %v1442, %v3973
        %v4555 = vsub.f32 %v1446, %v3978
        %v4556 = vsub.f32 %v1448, %v3978
        %v4557 = vsub.f32 %v1450, %v3983
        %v4558 = vsub.f32 %v1452, %v3983
        %v4559 = vsub.f32 %v1456, %v3988
        %v4560 = vsub.f32 %v1458, %v3988
        %v4561 = vsub.f32 %v1460, %v3993
        %v4562 = vsub.f32 %v1462, %v3993
        %v4563 = vsub.f32 %v1466, %v3998
        %v4564 = vsub.f32 %v1468, %v3998
        %v4565 = vsub.f32 %v1470, %v4003
        %v4566 = vsub.f32 %v1472, %v4003
        %v4567 = vsub.f32 %v1476, %v4008
        %v4568 = vsub.f32 %v1478, %v4008
        %v4569 = vsub.f32 %v1480, %v4013
        %v4570 = vsub.f32 %v1482, %v4013
        %v4571 = vsub.f32 %v1486, %v4018
        %v4572 = vsub.f32 %v1488, %v4018
        %v4573 = vsub.f32 %v1490, %v4023
        %v4574 = vsub.f32 %v1492, %v4023
        %v4575 = vsub.f32 %v1496, %v4028
        %v4576 = vsub.f32 %v1498, %v4028
        %v4577 = vsub.f32 %v1500, %v4033
        %v4578 = vsub.f32 %v1502, %v4033
        %v4579 = vsub.f32 %v1795, %v4038
        %v4580 = vsub.f32 %v1797, %v4038
        %v4581 = vsub.f32 %v1799, %v4043
        %v4582 = vsub.f32 %v1801, %v4043
        %v4583 = vsub.f32 %v1805, %v4048
        %v4584 = vsub.f32 %v1807, %v4048
        %v4585 = vsub.f32 %v1809, %v4053
        %v4586 = vsub.f32 %v1811, %v4053
        %v4587 = vsub.f32 %v1815, %v4058
        %v4588 = vsub.f32 %v1817, %v4058
        %v4589 = vsub.f32 %v1819, %v4063
        %v4590 = vsub.f32 %v1821, %v4063
        %v4591 = vsub.f32 %v1825, %v4068
        %v4592 = vsub.f32 %v1827, %v4068
        %v4593 = vsub.f32 %v1829, %v4073
        %v4594 = vsub.f32 %v1831, %v4073
        %v4595 = vsub.f32 %v1835, %v4078
        %v4596 = vsub.f32 %v1837, %v4078
        %v4597 = vsub.f32 %v1839, %v4083
        %v4598 = vsub.f32 %v1841, %v4083
        %v4599 = vsub.f32 %v1845, %v4088
        %v4600 = vsub.f32 %v1847, %v4088
        %v4601 = vsub.f32 %v1849, %v4093
        %v4602 = vsub.f32 %v1851, %v4093
        %v4603 = vsub.f32 %v1855, %v4098
        %v4604 = vsub.f32 %v1857, %v4098
        %v4605 = vsub.f32 %v1859, %v4103
        %v4606 = vsub.f32 %v1861, %v4103
        %v4607 = vsub.f32 %v1865, %v4108
        %v4608 = vsub.f32 %v1867, %v4108
        %v4609 = vsub.f32 %v1869, %v4113
        %v4610 = vsub.f32 %v1871, %v4113
        %v4611 = vsub.f32 %v1875, %v4118
        %v4612 = vsub.f32 %v1877, %v4118
        %v4613 = vsub.f32 %v1879, %v4123
        %v4614 = vsub.f32 %v1881, %v4123
        %v4615 = vsub.f32 %v1885, %v4128
        %v4616 = vsub.f32 %v1887, %v4128
        %v4617 = vsub.f32 %v1889, %v4133
        %v4618 = vsub.f32 %v1891, %v4133
        %v4619 = vsub.f32 %v1895, %v4138
        %v4620 = vsub.f32 %v1897, %v4138
        %v4621 = vsub.f32 %v1899, %v4143
        %v4622 = vsub.f32 %v1901, %v4143
        %v4623 = vsub.f32 %v1905, %v4148
        %v4624 = vsub.f32 %v1907, %v4148
        %v4625 = vsub.f32 %v1909, %v4153
        %v4626 = vsub.f32 %v1911, %v4153
        %v4627 = vsub.f32 %v1915, %v4158
        %v4628 = vsub.f32 %v1917, %v4158
        %v4629 = vsub.f32 %v1919, %v4163
        %v4630 = vsub.f32 %v1921, %v4163
        %v4631 = vsub.f32 %v1925, %v4168
        %v4632 = vsub.f32 %v1927, %v4168
        %v4633 = vsub.f32 %v1929, %v4173
        %v4634 = vsub.f32 %v1931, %v4173
        %v4635 = vsub.f32 %v1935, %v4178
        %v4636 = vsub.f32 %v1937, %v4178
        %v4637 = vsub.f32 %v1939, %v4183
        %v4638 = vsub.f32 %v1941, %v4183
        %v4639 = vsub.f32 %v1945, %v4188
        %v4640 = vsub.f32 %v1947, %v4188
        %v4641 = vsub.f32 %v1949, %v4193
        %v4642 = vsub.f32 %v1951, %v4193
        %v4643 = vsub.f32 %v2244, %v4198
        %v4644 = vsub.f32 %v2246, %v4198
        %v4645 = vsub.f32 %v2248, %v4203
        %v4646 = vsub.f32 %v2250, %v4203
        %v4647 = vsub.f32 %v2254, %v4208
        %v4648 = vsub.f32 %v2256, %v4208
        %v4649 = vsub.f32 %v2258, %v4213
        %v4650 = vsub.f32 %v2260, %v4213
        %v4651 = vsub.f32 %v2264, %v4218
        %v4652 = vsub.f32 %v2266, %v4218
        %v4653 = vsub.f32 %v2268, %v4223
        %v4654 = vsub.f32 %v2270, %v4223
        %v4655 = vsub.f32 %v2274, %v4228
        %v4656 = vsub.f32 %v2276, %v4228
        %v4657 = vsub.f32 %v2278, %v4233
        %v4658 = vsub.f32 %v2280, %v4233
        %v4659 = vsub.f32 %v2284, %v4238
        %v4660 = vsub.f32 %v2286, %v4238
        %v4661 = vsub.f32 %v2288, %v4243
        %v4662 = vsub.f32 %v2290, %v4243
        %v4663 = vsub.f32 %v2294, %v4248
        %v4664 = vsub.f32 %v2296, %v4248
        %v4665 = vsub.f32 %v2298, %v4253
        %v4666 = vsub.f32 %v2300, %v4253
        %v4667 = vsub.f32 %v2304, %v4258
        %v4668 = vsub.f32 %v2306, %v4258
        %v4669 = vsub.f32 %v2308, %v4263
        %v4670 = vsub.f32 %v2310, %v4263
        %v4671 = vsub.f32 %v2314, %v4268
        %v4672 = vsub.f32 %v2316, %v4268
        %v4673 = vsub.f32 %v2318, %v4273
        %v4674 = vsub.f32 %v2320, %v4273
        %v4675 = vsub.f32 %v2324, %v4278
        %v4676 = vsub.f32 %v2326, %v4278
        %v4677 = vsub.f32 %v2328, %v4283
        %v4678 = vsub.f32 %v2330, %v4283
        %v4679 = vsub.f32 %v2334, %v4288
        %v4680 = vsub.f32 %v2336, %v4288
        %v4681 = vsub.f32 %v2338, %v4293
        %v4682 = vsub.f32 %v2340, %v4293
        %v4683 = vsub.f32 %v2344, %v4298
        %v4684 = vsub.f32 %v2346, %v4298
        %v4685 = vsub.f32 %v2348, %v4303
        %v4686 = vsub.f32 %v2350, %v4303
        %v4687 = vsub.f32 %v2354, %v4308
        %v4688 = vsub.f32 %v2356, %v4308
        %v4689 = vsub.f32 %v2358, %v4313
        %v4690 = vsub.f32 %v2360, %v4313
        %v4691 = vsub.f32 %v2364, %v4318
        %v4692 = vsub.f32 %v2366, %v4318
        %v4693 = vsub.f32 %v2368, %v4323
        %v4694 = vsub.f32 %v2370, %v4323
        %v4695 = vsub.f32 %v2374, %v4328
        %v4696 = vsub.f32 %v2376, %v4328
        %v4697 = vsub.f32 %v2378, %v4333
        %v4698 = vsub.f32 %v2380, %v4333
        %v4699 = vsub.f32 %v2384, %v4338
        %v4700 = vsub.f32 %v2386, %v4338
        %v4701 = vsub.f32 %v2388, %v4343
        %v4702 = vsub.f32 %v2390, %v4343
        %v4703 = vsub.f32 %v2394, %v4348
        %v4704 = vsub.f32 %v2396, %v4348
        %v4705 = vsub.f32 %v2398, %v4353
        %v4706 = vsub.f32 %v2400, %v4353
        %v4707 = vsub.f32 %v2693, %v4358
        %v4708 = vsub.f32 %v2695, %v4358
        %v4709 = vsub.f32 %v2697, %v4363
        %v4710 = vsub.f32 %v2699, %v4363
        %v4711 = vsub.f32 %v2703, %v4368
        %v4712 = vsub.f32 %v2705, %v4368
        %v4713 = vsub.f32 %v2707, %v4373
        %v4714 = vsub.f32 %v2709, %v4373
        %v4715 = vsub.f32 %v2713, %v4378
        %v4716 = vsub.f32 %v2715, %v4378
        %v4717 = vsub.f32 %v2717, %v4383
        %v4718 = vsub.f32 %v2719, %v4383
        %v4719 = vsub.f32 %v2723, %v4388
        %v4720 = vsub.f32 %v2725, %v4388
        %v4721 = vsub.f32 %v2727, %v4393
        %v4722 = vsub.f32 %v2729, %v4393
        %v4723 = vsub.f32 %v2733, %v4398
        %v4724 = vsub.f32 %v2735, %v4398
        %v4725 = vsub.f32 %v2737, %v4403
        %v4726 = vsub.f32 %v2739, %v4403
        %v4727 = vsub.f32 %v2743, %v4408
        %v4728 = vsub.f32 %v2745, %v4408
        %v4729 = vsub.f32 %v2747, %v4413
        %v4730 = vsub.f32 %v2749, %v4413
        %v4731 = vsub.f32 %v2753, %v4418
        %v4732 = vsub.f32 %v2755, %v4418
        %v4733 = vsub.f32 %v2757, %v4423
        %v4734 = vsub.f32 %v2759, %v4423
        %v4735 = vsub.f32 %v2763, %v4428
        %v4736 = vsub.f32 %v2765, %v4428
        %v4737 = vsub.f32 %v2767, %v4433
        %v4738 = vsub.f32 %v2769, %v4433
        %v4739 = vsub.f32 %v2773, %v4438
        %v4740 = vsub.f32 %v2775, %v4438
        %v4741 = vsub.f32 %v2777, %v4443
        %v4742 = vsub.f32 %v2779, %v4443
        %v4743 = vsub.f32 %v2783, %v4448
        %v4744 = vsub.f32 %v2785, %v4448
        %v4745 = vsub.f32 %v2787, %v4453
        %v4746 = vsub.f32 %v2789, %v4453
        %v4747 = vsub.f32 %v2793, %v4458
        %v4748 = vsub.f32 %v2795, %v4458
        %v4749 = vsub.f32 %v2797, %v4463
        %v4750 = vsub.f32 %v2799, %v4463
        %v4751 = vsub.f32 %v2803, %v4468
        %v4752 = vsub.f32 %v2805, %v4468
        %v4753 = vsub.f32 %v2807, %v4473
        %v4754 = vsub.f32 %v2809, %v4473
        %v4755 = vsub.f32 %v2813, %v4478
        %v4756 = vsub.f32 %v2815, %v4478
        %v4757 = vsub.f32 %v2817, %v4483
        %v4758 = vsub.f32 %v2819, %v4483
        %v4759 = vsub.f32 %v2823, %v4488
        %v4760 = vsub.f32 %v2825, %v4488
        %v4761 = vsub.f32 %v2827, %v4493
        %v4762 = vsub.f32 %v2829, %v4493
        %v4763 = vsub.f32 %v2833, %v4498
        %v4764 = vsub.f32 %v2835, %v4498
        %v4765 = vsub.f32 %v2837, %v4503
        %v4766 = vsub.f32 %v2839, %v4503
        %v4767 = vsub.f32 %v2843, %v4508
        %v4768 = vsub.f32 %v2845, %v4508
        %v4769 = vsub.f32 %v2847, %v4513
        %v4770 = vsub.f32 %v2849, %v4513
        %v4771 = vmul.f32 %v4515, 1.442695
        %v4772 = vpow.pop %v4771
        %v4773 = vmul.f32 %v4516, 1.442695
        %v4774 = vpow.pop %v4773
        %v4775 = vmul.f32 %v4517, 1.442695
        %v4776 = vpow.pop %v4775
        %v4777 = vmul.f32 %v4518, 1.442695
        %v4778 = vpow.pop %v4777
        %v4779 = vmul.f32 %v4519, 1.442695
        %v4780 = vpow.pop %v4779
        %v4781 = vmul.f32 %v4520, 1.442695
        %v4782 = vpow.pop %v4781
        %v4783 = vmul.f32 %v4521, 1.442695
        %v4784 = vpow.pop %v4783
        %v4785 = vmul.f32 %v4522, 1.442695
        %v4786 = vpow.pop %v4785
        %v4787 = vmul.f32 %v4523, 1.442695
        %v4788 = vpow.pop %v4787
        %v4789 = vmul.f32 %v4524, 1.442695
        %v4790 = vpow.pop %v4789
        %v4791 = vmul.f32 %v4525, 1.442695
        %v4792 = vpow.pop %v4791
        %v4793 = vmul.f32 %v4526, 1.442695
        %v4794 = vpow.pop %v4793
        %v4795 = vmul.f32 %v4527, 1.442695
        %v4796 = vpow.pop %v4795
        %v4797 = vmul.f32 %v4528, 1.442695
        %v4798 = vpow.pop %v4797
        %v4799 = vmul.f32 %v4529, 1.442695
        %v4800 = vpow.pop %v4799
        %v4801 = vmul.f32 %v4530, 1.442695
        %v4802 = vpow.pop %v4801
        %v4803 = vmul.f32 %v4531, 1.442695
        %v4804 = vpow.pop %v4803
        %v4805 = vmul.f32 %v4532, 1.442695
        %v4806 = vpow.pop %v4805
        %v4807 = vmul.f32 %v4533, 1.442695
        %v4808 = vpow.pop %v4807
        %v4809 = vmul.f32 %v4534, 1.442695
        %v4810 = vpow.pop %v4809
        %v4811 = vmul.f32 %v4535, 1.442695
        %v4812 = vpow.pop %v4811
        %v4813 = vmul.f32 %v4536, 1.442695
        %v4814 = vpow.pop %v4813
        %v4815 = vmul.f32 %v4537, 1.442695
        %v4816 = vpow.pop %v4815
        %v4817 = vmul.f32 %v4538, 1.442695
        %v4818 = vpow.pop %v4817
        %v4819 = vmul.f32 %v4539, 1.442695
        %v4820 = vpow.pop %v4819
        %v4821 = vmul.f32 %v4540, 1.442695
        %v4822 = vpow.pop %v4821
        %v4823 = vmul.f32 %v4541, 1.442695
        %v4824 = vpow.pop %v4823
        %v4825 = vmul.f32 %v4542, 1.442695
        %v4826 = vpow.pop %v4825
        %v4827 = vmul.f32 %v4543, 1.442695
        %v4828 = vpow.pop %v4827
        %v4829 = vmul.f32 %v4544, 1.442695
        %v4830 = vpow.pop %v4829
        %v4831 = vmul.f32 %v4545, 1.442695
        %v4832 = vpow.pop %v4831
        %v4833 = vmul.f32 %v4546, 1.442695
        %v4834 = vpow.pop %v4833
        %v4835 = vmul.f32 %v4547, 1.442695
        %v4836 = vpow.pop %v4835
        %v4837 = vmul.f32 %v4548, 1.442695
        %v4838 = vpow.pop %v4837
        %v4839 = vmul.f32 %v4549, 1.442695
        %v4840 = vpow.pop %v4839
        %v4841 = vmul.f32 %v4550, 1.442695
        %v4842 = vpow.pop %v4841
        %v4843 = vmul.f32 %v4551, 1.442695
        %v4844 = vpow.pop %v4843
        %v4845 = vmul.f32 %v4552, 1.442695
        %v4846 = vpow.pop %v4845
        %v4847 = vmul.f32 %v4553, 1.442695
        %v4848 = vpow.pop %v4847
        %v4849 = vmul.f32 %v4554, 1.442695
        %v4850 = vpow.pop %v4849
        %v4851 = vmul.f32 %v4555, 1.442695
        %v4852 = vpow.pop %v4851
        %v4853 = vmul.f32 %v4556, 1.442695
        %v4854 = vpow.pop %v4853
        %v4855 = vmul.f32 %v4557, 1.442695
        %v4856 = vpow.pop %v4855
        %v4857 = vmul.f32 %v4558, 1.442695
        %v4858 = vpow.pop %v4857
        %v4859 = vmul.f32 %v4559, 1.442695
        %v4860 = vpow.pop %v4859
        %v4861 = vmul.f32 %v4560, 1.442695
        %v4862 = vpow.pop %v4861
        %v4863 = vmul.f32 %v4561, 1.442695
        %v4864 = vpow.pop %v4863
        %v4865 = vmul.f32 %v4562, 1.442695
        %v4866 = vpow.pop %v4865
        %v4867 = vmul.f32 %v4563, 1.442695
        %v4868 = vpow.pop %v4867
        %v4869 = vmul.f32 %v4564, 1.442695
        %v4870 = vpow.pop %v4869
        %v4871 = vmul.f32 %v4565, 1.442695
        %v4872 = vpow.pop %v4871
        %v4873 = vmul.f32 %v4566, 1.442695
        %v4874 = vpow.pop %v4873
        %v4875 = vmul.f32 %v4567, 1.442695
        %v4876 = vpow.pop %v4875
        %v4877 = vmul.f32 %v4568, 1.442695
        %v4878 = vpow.pop %v4877
        %v4879 = vmul.f32 %v4569, 1.442695
        %v4880 = vpow.pop %v4879
        %v4881 = vmul.f32 %v4570, 1.442695
        %v4882 = vpow.pop %v4881
        %v4883 = vmul.f32 %v4571, 1.442695
        %v4884 = vpow.pop %v4883
        %v4885 = vmul.f32 %v4572, 1.442695
        %v4886 = vpow.pop %v4885
        %v4887 = vmul.f32 %v4573, 1.442695
        %v4888 = vpow.pop %v4887
        %v4889 = vmul.f32 %v4574, 1.442695
        %v4890 = vpow.pop %v4889
        %v4891 = vmul.f32 %v4575, 1.442695
        %v4892 = vpow.pop %v4891
        %v4893 = vmul.f32 %v4576, 1.442695
        %v4894 = vpow.pop %v4893
        %v4895 = vmul.f32 %v4577, 1.442695
        %v4896 = vpow.pop %v4895
        %v4897 = vmul.f32 %v4578, 1.442695
        %v4898 = vpow.pop %v4897
        %v4899 = vmul.f32 %v4579, 1.442695
        %v4900 = vpow.pop %v4899
        %v4901 = vmul.f32 %v4580, 1.442695
        %v4902 = vpow.pop %v4901
        %v4903 = vmul.f32 %v4581, 1.442695
        %v4904 = vpow.pop %v4903
        %v4905 = vmul.f32 %v4582, 1.442695
        %v4906 = vpow.pop %v4905
        %v4907 = vmul.f32 %v4583, 1.442695
        %v4908 = vpow.pop %v4907
        %v4909 = vmul.f32 %v4584, 1.442695
        %v4910 = vpow.pop %v4909
        %v4911 = vmul.f32 %v4585, 1.442695
        %v4912 = vpow.pop %v4911
        %v4913 = vmul.f32 %v4586, 1.442695
        %v4914 = vpow.pop %v4913
        %v4915 = vmul.f32 %v4587, 1.442695
        %v4916 = vpow.pop %v4915
        %v4917 = vmul.f32 %v4588, 1.442695
        %v4918 = vpow.pop %v4917
        %v4919 = vmul.f32 %v4589, 1.442695
        %v4920 = vpow.pop %v4919
        %v4921 = vmul.f32 %v4590, 1.442695
        %v4922 = vpow.pop %v4921
        %v4923 = vmul.f32 %v4591, 1.442695
        %v4924 = vpow.pop %v4923
        %v4925 = vmul.f32 %v4592, 1.442695
        %v4926 = vpow.pop %v4925
        %v4927 = vmul.f32 %v4593, 1.442695
        %v4928 = vpow.pop %v4927
        %v4929 = vmul.f32 %v4594, 1.442695
        %v4930 = vpow.pop %v4929
        %v4931 = vmul.f32 %v4595, 1.442695
        %v4932 = vpow.pop %v4931
        %v4933 = vmul.f32 %v4596, 1.442695
        %v4934 = vpow.pop %v4933
        %v4935 = vmul.f32 %v4597, 1.442695
        %v4936 = vpow.pop %v4935
        %v4937 = vmul.f32 %v4598, 1.442695
        %v4938 = vpow.pop %v4937
        %v4939 = vmul.f32 %v4599, 1.442695
        %v4940 = vpow.pop %v4939
        %v4941 = vmul.f32 %v4600, 1.442695
        %v4942 = vpow.pop %v4941
        %v4943 = vmul.f32 %v4601, 1.442695
        %v4944 = vpow.pop %v4943
        %v4945 = vmul.f32 %v4602, 1.442695
        %v4946 = vpow.pop %v4945
        %v4947 = vmul.f32 %v4603, 1.442695
        %v4948 = vpow.pop %v4947
        %v4949 = vmul.f32 %v4604, 1.442695
        %v4950 = vpow.pop %v4949
        %v4951 = vmul.f32 %v4605, 1.442695
        %v4952 = vpow.pop %v4951
        %v4953 = vmul.f32 %v4606, 1.442695
        %v4954 = vpow.pop %v4953
        %v4955 = vmul.f32 %v4607, 1.442695
        %v4956 = vpow.pop %v4955
        %v4957 = vmul.f32 %v4608, 1.442695
        %v4958 = vpow.pop %v4957
        %v4959 = vmul.f32 %v4609, 1.442695
        %v4960 = vpow.pop %v4959
        %v4961 = vmul.f32 %v4610, 1.442695
        %v4962 = vpow.pop %v4961
        %v4963 = vmul.f32 %v4611, 1.442695
        %v4964 = vpow.pop %v4963
        %v4965 = vmul.f32 %v4612, 1.442695
        %v4966 = vpow.pop %v4965
        %v4967 = vmul.f32 %v4613, 1.442695
        %v4968 = vpow.pop %v4967
        %v4969 = vmul.f32 %v4614, 1.442695
        %v4970 = vpow.pop %v4969
        %v4971 = vmul.f32 %v4615, 1.442695
        %v4972 = vpow.pop %v4971
        %v4973 = vmul.f32 %v4616, 1.442695
        %v4974 = vpow.pop %v4973
        %v4975 = vmul.f32 %v4617, 1.442695
        %v4976 = vpow.pop %v4975
        %v4977 = vmul.f32 %v4618, 1.442695
        %v4978 = vpow.pop %v4977
        %v4979 = vmul.f32 %v4619, 1.442695
        %v4980 = vpow.pop %v4979
        %v4981 = vmul.f32 %v4620, 1.442695
        %v4982 = vpow.pop %v4981
        %v4983 = vmul.f32 %v4621, 1.442695
        %v4984 = vpow.pop %v4983
        %v4985 = vmul.f32 %v4622, 1.442695
        %v4986 = vpow.pop %v4985
        %v4987 = vmul.f32 %v4623, 1.442695
        %v4988 = vpow.pop %v4987
        %v4989 = vmul.f32 %v4624, 1.442695
        %v4990 = vpow.pop %v4989
        %v4991 = vmul.f32 %v4625, 1.442695
        %v4992 = vpow.pop %v4991
        %v4993 = vmul.f32 %v4626, 1.442695
        %v4994 = vpow.pop %v4993
        %v4995 = vmul.f32 %v4627, 1.442695
        %v4996 = vpow.pop %v4995
        %v4997 = vmul.f32 %v4628, 1.442695
        %v4998 = vpow.pop %v4997
        %v4999 = vmul.f32 %v4629, 1.442695
        %v5000 = vpow.pop %v4999
        %v5001 = vmul.f32 %v4630, 1.442695
        %v5002 = vpow.pop %v5001
        %v5003 = vmul.f32 %v4631, 1.442695
        %v5004 = vpow.pop %v5003
        %v5005 = vmul.f32 %v4632, 1.442695
        %v5006 = vpow.pop %v5005
        %v5007 = vmul.f32 %v4633, 1.442695
        %v5008 = vpow.pop %v5007
        %v5009 = vmul.f32 %v4634, 1.442695
        %v5010 = vpow.pop %v5009
        %v5011 = vmul.f32 %v4635, 1.442695
        %v5012 = vpow.pop %v5011
        %v5013 = vmul.f32 %v4636, 1.442695
        %v5014 = vpow.pop %v5013
        %v5015 = vmul.f32 %v4637, 1.442695
        %v5016 = vpow.pop %v5015
        %v5017 = vmul.f32 %v4638, 1.442695
        %v5018 = vpow.pop %v5017
        %v5019 = vmul.f32 %v4639, 1.442695
        %v5020 = vpow.pop %v5019
        %v5021 = vmul.f32 %v4640, 1.442695
        %v5022 = vpow.pop %v5021
        %v5023 = vmul.f32 %v4641, 1.442695
        %v5024 = vpow.pop %v5023
        %v5025 = vmul.f32 %v4642, 1.442695
        %v5026 = vpow.pop %v5025
        %v5027 = vmul.f32 %v4643, 1.442695
        %v5028 = vpow.pop %v5027
        %v5029 = vmul.f32 %v4644, 1.442695
        %v5030 = vpow.pop %v5029
        %v5031 = vmul.f32 %v4645, 1.442695
        %v5032 = vpow.pop %v5031
        %v5033 = vmul.f32 %v4646, 1.442695
        %v5034 = vpow.pop %v5033
        %v5035 = vmul.f32 %v4647, 1.442695
        %v5036 = vpow.pop %v5035
        %v5037 = vmul.f32 %v4648, 1.442695
        %v5038 = vpow.pop %v5037
        %v5039 = vmul.f32 %v4649, 1.442695
        %v5040 = vpow.pop %v5039
        %v5041 = vmul.f32 %v4650, 1.442695
        %v5042 = vpow.pop %v5041
        %v5043 = vmul.f32 %v4651, 1.442695
        %v5044 = vpow.pop %v5043
        %v5045 = vmul.f32 %v4652, 1.442695
        %v5046 = vpow.pop %v5045
        %v5047 = vmul.f32 %v4653, 1.442695
        %v5048 = vpow.pop %v5047
        %v5049 = vmul.f32 %v4654, 1.442695
        %v5050 = vpow.pop %v5049
        %v5051 = vmul.f32 %v4655, 1.442695
        %v5052 = vpow.pop %v5051
        %v5053 = vmul.f32 %v4656, 1.442695
        %v5054 = vpow.pop %v5053
        %v5055 = vmul.f32 %v4657, 1.442695
        %v5056 = vpow.pop %v5055
        %v5057 = vmul.f32 %v4658, 1.442695
        %v5058 = vpow.pop %v5057
        %v5059 = vmul.f32 %v4659, 1.442695
        %v5060 = vpow.pop %v5059
        %v5061 = vmul.f32 %v4660, 1.442695
        %v5062 = vpow.pop %v5061
        %v5063 = vmul.f32 %v4661, 1.442695
        %v5064 = vpow.pop %v5063
        %v5065 = vmul.f32 %v4662, 1.442695
        %v5066 = vpow.pop %v5065
        %v5067 = vmul.f32 %v4663, 1.442695
        %v5068 = vpow.pop %v5067
        %v5069 = vmul.f32 %v4664, 1.442695
        %v5070 = vpow.pop %v5069
        %v5071 = vmul.f32 %v4665, 1.442695
        %v5072 = vpow.pop %v5071
        %v5073 = vmul.f32 %v4666, 1.442695
        %v5074 = vpow.pop %v5073
        %v5075 = vmul.f32 %v4667, 1.442695
        %v5076 = vpow.pop %v5075
        %v5077 = vmul.f32 %v4668, 1.442695
        %v5078 = vpow.pop %v5077
        %v5079 = vmul.f32 %v4669, 1.442695
        %v5080 = vpow.pop %v5079
        %v5081 = vmul.f32 %v4670, 1.442695
        %v5082 = vpow.pop %v5081
        %v5083 = vmul.f32 %v4671, 1.442695
        %v5084 = vpow.pop %v5083
        %v5085 = vmul.f32 %v4672, 1.442695
        %v5086 = vpow.pop %v5085
        %v5087 = vmul.f32 %v4673, 1.442695
        %v5088 = vpow.pop %v5087
        %v5089 = vmul.f32 %v4674, 1.442695
        %v5090 = vpow.pop %v5089
        %v5091 = vmul.f32 %v4675, 1.442695
        %v5092 = vpow.pop %v5091
        %v5093 = vmul.f32 %v4676, 1.442695
        %v5094 = vpow.pop %v5093
        %v5095 = vmul.f32 %v4677, 1.442695
        %v5096 = vpow.pop %v5095
        %v5097 = vmul.f32 %v4678, 1.442695
        %v5098 = vpow.pop %v5097
        %v5099 = vmul.f32 %v4679, 1.442695
        %v5100 = vpow.pop %v5099
        %v5101 = vmul.f32 %v4680, 1.442695
        %v5102 = vpow.pop %v5101
        %v5103 = vmul.f32 %v4681, 1.442695
        %v5104 = vpow.pop %v5103
        %v5105 = vmul.f32 %v4682, 1.442695
        %v5106 = vpow.pop %v5105
        %v5107 = vmul.f32 %v4683, 1.442695
        %v5108 = vpow.pop %v5107
        %v5109 = vmul.f32 %v4684, 1.442695
        %v5110 = vpow.pop %v5109
        %v5111 = vmul.f32 %v4685, 1.442695
        %v5112 = vpow.pop %v5111
        %v5113 = vmul.f32 %v4686, 1.442695
        %v5114 = vpow.pop %v5113
        %v5115 = vmul.f32 %v4687, 1.442695
        %v5116 = vpow.pop %v5115
        %v5117 = vmul.f32 %v4688, 1.442695
        %v5118 = vpow.pop %v5117
        %v5119 = vmul.f32 %v4689, 1.442695
        %v5120 = vpow.pop %v5119
        %v5121 = vmul.f32 %v4690, 1.442695
        %v5122 = vpow.pop %v5121
        %v5123 = vmul.f32 %v4691, 1.442695
        %v5124 = vpow.pop %v5123
        %v5125 = vmul.f32 %v4692, 1.442695
        %v5126 = vpow.pop %v5125
        %v5127 = vmul.f32 %v4693, 1.442695
        %v5128 = vpow.pop %v5127
        %v5129 = vmul.f32 %v4694, 1.442695
        %v5130 = vpow.pop %v5129
        %v5131 = vmul.f32 %v4695, 1.442695
        %v5132 = vpow.pop %v5131
        %v5133 = vmul.f32 %v4696, 1.442695
        %v5134 = vpow.pop %v5133
        %v5135 = vmul.f32 %v4697, 1.442695
        %v5136 = vpow.pop %v5135
        %v5137 = vmul.f32 %v4698, 1.442695
        %v5138 = vpow.pop %v5137
        %v5139 = vmul.f32 %v4699, 1.442695
        %v5140 = vpow.pop %v5139
        %v5141 = vmul.f32 %v4700, 1.442695
        %v5142 = vpow.pop %v5141
        %v5143 = vmul.f32 %v4701, 1.442695
        %v5144 = vpow.pop %v5143
        %v5145 = vmul.f32 %v4702, 1.442695
        %v5146 = vpow.pop %v5145
        %v5147 = vmul.f32 %v4703, 1.442695
        %v5148 = vpow.pop %v5147
        %v5149 = vmul.f32 %v4704, 1.442695
        %v5150 = vpow.pop %v5149
        %v5151 = vmul.f32 %v4705, 1.442695
        %v5152 = vpow.pop %v5151
        %v5153 = vmul.f32 %v4706, 1.442695
        %v5154 = vpow.pop %v5153
        %v5155 = vmul.f32 %v4707, 1.442695
        %v5156 = vpow.pop %v5155
        %v5157 = vmul.f32 %v4708, 1.442695
        %v5158 = vpow.pop %v5157
        %v5159 = vmul.f32 %v4709, 1.442695
        %v5160 = vpow.pop %v5159
        %v5161 = vmul.f32 %v4710, 1.442695
        %v5162 = vpow.pop %v5161
        %v5163 = vmul.f32 %v4711, 1.442695
        %v5164 = vpow.pop %v5163
        %v5165 = vmul.f32 %v4712, 1.442695
        %v5166 = vpow.pop %v5165
        %v5167 = vmul.f32 %v4713, 1.442695
        %v5168 = vpow.pop %v5167
        %v5169 = vmul.f32 %v4714, 1.442695
        %v5170 = vpow.pop %v5169
        %v5171 = vmul.f32 %v4715, 1.442695
        %v5172 = vpow.pop %v5171
        %v5173 = vmul.f32 %v4716, 1.442695
        %v5174 = vpow.pop %v5173
        %v5175 = vmul.f32 %v4717, 1.442695
        %v5176 = vpow.pop %v5175
        %v5177 = vmul.f32 %v4718, 1.442695
        %v5178 = vpow.pop %v5177
        %v5179 = vmul.f32 %v4719, 1.442695
        %v5180 = vpow.pop %v5179
        %v5181 = vmul.f32 %v4720, 1.442695
        %v5182 = vpow.pop %v5181
        %v5183 = vmul.f32 %v4721, 1.442695
        %v5184 = vpow.pop %v5183
        %v5185 = vmul.f32 %v4722, 1.442695
        %v5186 = vpow.pop %v5185
        %v5187 = vmul.f32 %v4723, 1.442695
        %v5188 = vpow.pop %v5187
        %v5189 = vmul.f32 %v4724, 1.442695
        %v5190 = vpow.pop %v5189
        %v5191 = vmul.f32 %v4725, 1.442695
        %v5192 = vpow.pop %v5191
        %v5193 = vmul.f32 %v4726, 1.442695
        %v5194 = vpow.pop %v5193
        %v5195 = vmul.f32 %v4727, 1.442695
        %v5196 = vpow.pop %v5195
        %v5197 = vmul.f32 %v4728, 1.442695
        %v5198 = vpow.pop %v5197
        %v5199 = vmul.f32 %v4729, 1.442695
        %v5200 = vpow.pop %v5199
        %v5201 = vmul.f32 %v4730, 1.442695
        %v5202 = vpow.pop %v5201
        %v5203 = vmul.f32 %v4731, 1.442695
        %v5204 = vpow.pop %v5203
        %v5205 = vmul.f32 %v4732, 1.442695
        %v5206 = vpow.pop %v5205
        %v5207 = vmul.f32 %v4733, 1.442695
        %v5208 = vpow.pop %v5207
        %v5209 = vmul.f32 %v4734, 1.442695
        %v5210 = vpow.pop %v5209
        %v5211 = vmul.f32 %v4735, 1.442695
        %v5212 = vpow.pop %v5211
        %v5213 = vmul.f32 %v4736, 1.442695
        %v5214 = vpow.pop %v5213
        %v5215 = vmul.f32 %v4737, 1.442695
        %v5216 = vpow.pop %v5215
        %v5217 = vmul.f32 %v4738, 1.442695
        %v5218 = vpow.pop %v5217
        %v5219 = vmul.f32 %v4739, 1.442695
        %v5220 = vpow.pop %v5219
        %v5221 = vmul.f32 %v4740, 1.442695
        %v5222 = vpow.pop %v5221
        %v5223 = vmul.f32 %v4741, 1.442695
        %v5224 = vpow.pop %v5223
        %v5225 = vmul.f32 %v4742, 1.442695
        %v5226 = vpow.pop %v5225
        %v5227 = vmul.f32 %v4743, 1.442695
        %v5228 = vpow.pop %v5227
        %v5229 = vmul.f32 %v4744, 1.442695
        %v5230 = vpow.pop %v5229
        %v5231 = vmul.f32 %v4745, 1.442695
        %v5232 = vpow.pop %v5231
        %v5233 = vmul.f32 %v4746, 1.442695
        %v5234 = vpow.pop %v5233
        %v5235 = vmul.f32 %v4747, 1.442695
        %v5236 = vpow.pop %v5235
        %v5237 = vmul.f32 %v4748, 1.442695
        %v5238 = vpow.pop %v5237
        %v5239 = vmul.f32 %v4749, 1.442695
        %v5240 = vpow.pop %v5239
        %v5241 = vmul.f32 %v4750, 1.442695
        %v5242 = vpow.pop %v5241
        %v5243 = vmul.f32 %v4751, 1.442695
        %v5244 = vpow.pop %v5243
        %v5245 = vmul.f32 %v4752, 1.442695
        %v5246 = vpow.pop %v5245
        %v5247 = vmul.f32 %v4753, 1.442695
        %v5248 = vpow.pop %v5247
        %v5249 = vmul.f32 %v4754, 1.442695
        %v5250 = vpow.pop %v5249
        %v5251 = vmul.f32 %v4755, 1.442695
        %v5252 = vpow.pop %v5251
        %v5253 = vmul.f32 %v4756, 1.442695
        %v5254 = vpow.pop %v5253
        %v5255 = vmul.f32 %v4757, 1.442695
        %v5256 = vpow.pop %v5255
        %v5257 = vmul.f32 %v4758, 1.442695
        %v5258 = vpow.pop %v5257
        %v5259 = vmul.f32 %v4759, 1.442695
        %v5260 = vpow.pop %v5259
        %v5261 = vmul.f32 %v4760, 1.442695
        %v5262 = vpow.pop %v5261
        %v5263 = vmul.f32 %v4761, 1.442695
        %v5264 = vpow.pop %v5263
        %v5265 = vmul.f32 %v4762, 1.442695
        %v5266 = vpow.pop %v5265
        %v5267 = vmul.f32 %v4763, 1.442695
        %v5268 = vpow.pop %v5267
        %v5269 = vmul.f32 %v4764, 1.442695
        %v5270 = vpow.pop %v5269
        %v5271 = vmul.f32 %v4765, 1.442695
        %v5272 = vpow.pop %v5271
        %v5273 = vmul.f32 %v4766, 1.442695
        %v5274 = vpow.pop %v5273
        %v5275 = vmul.f32 %v4767, 1.442695
        %v5276 = vpow.pop %v5275
        %v5277 = vmul.f32 %v4768, 1.442695
        %v5278 = vpow.pop %v5277
        %v5279 = vmul.f32 %v4769, 1.442695
        %v5280 = vpow.pop %v5279
        %v5281 = vmul.f32 %v4770, 1.442695
        %v5282 = vpow.pop %v5281
        %v5283 = vpack.c.bf16 %v4776, %v4772
        %v5284 = vpack.c.bf16 %v4778, %v4774
        %v5285 = vpack.c.bf16 %v4784, %v4780
        %v5286 = vpack.c.bf16 %v4786, %v4782
        %v5287 = vpack.c.bf16 %v4792, %v4788
        %v5288 = vpack.c.bf16 %v4794, %v4790
        %v5289 = vpack.c.bf16 %v4800, %v4796
        %v5290 = vpack.c.bf16 %v4802, %v4798
        %v5291 = vpack.c.bf16 %v4808, %v4804
        %v5292 = vpack.c.bf16 %v4810, %v4806
        %v5293 = vpack.c.bf16 %v4816, %v4812
        %v5294 = vpack.c.bf16 %v4818, %v4814
        %v5295 = vpack.c.bf16 %v4824, %v4820
        %v5296 = vpack.c.bf16 %v4826, %v4822
        %v5297 = vpack.c.bf16 %v4832, %v4828
        %v5298 = vpack.c.bf16 %v4834, %v4830
        %v5299 = vpack.c.bf16 %v4840, %v4836
        %v5300 = vpack.c.bf16 %v4842, %v4838
        %v5301 = vpack.c.bf16 %v4848, %v4844
        %v5302 = vpack.c.bf16 %v4850, %v4846
        %v5303 = vpack.c.bf16 %v4856, %v4852
        %v5304 = vpack.c.bf16 %v4858, %v4854
        %v5305 = vpack.c.bf16 %v4864, %v4860
        %v5306 = vpack.c.bf16 %v4866, %v4862
        %v5307 = vpack.c.bf16 %v4872, %v4868
        %v5308 = vpack.c.bf16 %v4874, %v4870
        %v5309 = vpack.c.bf16 %v4880, %v4876
        %v5310 = vpack.c.bf16 %v4882, %v4878
        %v5311 = vpack.c.bf16 %v4888, %v4884
        %v5312 = vpack.c.bf16 %v4890, %v4886
        %v5313 = vpack.c.bf16 %v4896, %v4892
        %v5314 = vpack.c.bf16 %v4898, %v4894
        %v5315 = vpack.c.bf16 %v4904, %v4900
        %v5316 = vpack.c.bf16 %v4906, %v4902
        %v5317 = vpack.c.bf16 %v4912, %v4908
        %v5318 = vpack.c.bf16 %v4914, %v4910
        %v5319 = vpack.c.bf16 %v4920, %v4916
        %v5320 = vpack.c.bf16 %v4922, %v4918
        %v5321 = vpack.c.bf16 %v4928, %v4924
        %v5322 = vpack.c.bf16 %v4930, %v4926
        %v5323 = vpack.c.bf16 %v4936, %v4932
        %v5324 = vpack.c.bf16 %v4938, %v4934
        %v5325 = vpack.c.bf16 %v4944, %v4940
        %v5326 = vpack.c.bf16 %v4946, %v4942
        %v5327 = vpack.c.bf16 %v4952, %v4948
        %v5328 = vpack.c.bf16 %v4954, %v4950
        %v5329 = vpack.c.bf16 %v4960, %v4956
        %v5330 = vpack.c.bf16 %v4962, %v4958
        %v5331 = vpack.c.bf16 %v4968, %v4964
        %v5332 = vpack.c.bf16 %v4970, %v4966
        %v5333 = vpack.c.bf16 %v4976, %v4972
        %v5334 = vpack.c.bf16 %v4978, %v4974
        %v5335 = vpack.c.bf16 %v4984, %v4980
        %v5336 = vpack.c.bf16 %v4986, %v4982
        %v5337 = vpack.c.bf16 %v4992, %v4988
        %v5338 = vpack.c.bf16 %v4994, %v4990
        %v5339 = vpack.c.bf16 %v5000, %v4996
        %v5340 = vpack.c.bf16 %v5002, %v4998
        %v5341 = vpack.c.bf16 %v5008, %v5004
        %v5342 = vpack.c.bf16 %v5010, %v5006
        %v5343 = vpack.c.bf16 %v5016, %v5012
        %v5344 = vpack.c.bf16 %v5018, %v5014
        %v5345 = vpack.c.bf16 %v5024, %v5020
        %v5346 = vpack.c.bf16 %v5026, %v5022
        %v5347 = vpack.c.bf16 %v5032, %v5028
        %v5348 = vpack.c.bf16 %v5034, %v5030
        %v5349 = vpack.c.bf16 %v5040, %v5036
        %v5350 = vpack.c.bf16 %v5042, %v5038
        %v5351 = vpack.c.bf16 %v5048, %v5044
        %v5352 = vpack.c.bf16 %v5050, %v5046
        %v5353 = vpack.c.bf16 %v5056, %v5052
        %v5354 = vpack.c.bf16 %v5058, %v5054
        %v5355 = vpack.c.bf16 %v5064, %v5060
        %v5356 = vpack.c.bf16 %v5066, %v5062
        %v5357 = vpack.c.bf16 %v5072, %v5068
        %v5358 = vpack.c.bf16 %v5074, %v5070
        %v5359 = vpack.c.bf16 %v5080, %v5076
        %v5360 = vpack.c.bf16 %v5082, %v5078
        %v5361 = vpack.c.bf16 %v5088, %v5084
        %v5362 = vpack.c.bf16 %v5090, %v5086
        %v5363 = vpack.c.bf16 %v5096, %v5092
        %v5364 = vpack.c.bf16 %v5098, %v5094
        %v5365 = vpack.c.bf16 %v5104, %v5100
        %v5366 = vpack.c.bf16 %v5106, %v5102
        %v5367 = vpack.c.bf16 %v5112, %v5108
        %v5368 = vpack.c.bf16 %v5114, %v5110
        %v5369 = vpack.c.bf16 %v5120, %v5116
        %v5370 = vpack.c.bf16 %v5122, %v5118
        %v5371 = vpack.c.bf16 %v5128, %v5124
        %v5372 = vpack.c.bf16 %v5130, %v5126
        %v5373 = vpack.c.bf16 %v5136, %v5132
        %v5374 = vpack.c.bf16 %v5138, %v5134
        %v5375 = vpack.c.bf16 %v5144, %v5140
        %v5376 = vpack.c.bf16 %v5146, %v5142
        %v5377 = vpack.c.bf16 %v5152, %v5148
        %v5378 = vpack.c.bf16 %v5154, %v5150
        %v5379 = vpack.c.bf16 %v5160, %v5156
        %v5380 = vpack.c.bf16 %v5162, %v5158
        %v5381 = vpack.c.bf16 %v5168, %v5164
        %v5382 = vpack.c.bf16 %v5170, %v5166
        %v5383 = vpack.c.bf16 %v5176, %v5172
        %v5384 = vpack.c.bf16 %v5178, %v5174
        %v5385 = vpack.c.bf16 %v5184, %v5180
        %v5386 = vpack.c.bf16 %v5186, %v5182
        %v5387 = vpack.c.bf16 %v5192, %v5188
        %v5388 = vpack.c.bf16 %v5194, %v5190
        %v5389 = vpack.c.bf16 %v5200, %v5196
        %v5390 = vpack.c.bf16 %v5202, %v5198
        %v5391 = vpack.c.bf16 %v5208, %v5204
        %v5392 = vpack.c.bf16 %v5210, %v5206
        %v5393 = vpack.c.bf16 %v5216, %v5212
        %v5394 = vpack.c.bf16 %v5218, %v5214
        %v5395 = vpack.c.bf16 %v5224, %v5220
        %v5396 = vpack.c.bf16 %v5226, %v5222
        %v5397 = vpack.c.bf16 %v5232, %v5228
        %v5398 = vpack.c.bf16 %v5234, %v5230
        %v5399 = vpack.c.bf16 %v5240, %v5236
        %v5400 = vpack.c.bf16 %v5242, %v5238
        %v5401 = vpack.c.bf16 %v5248, %v5244
        %v5402 = vpack.c.bf16 %v5250, %v5246
        %v5403 = vpack.c.bf16 %v5256, %v5252
        %v5404 = vpack.c.bf16 %v5258, %v5254
        %v5405 = vpack.c.bf16 %v5264, %v5260
        %v5406 = vpack.c.bf16 %v5266, %v5262
        %v5407 = vpack.c.bf16 %v5272, %v5268
        %v5408 = vpack.c.bf16 %v5274, %v5270
        %v5409 = vpack.c.bf16 %v5280, %v5276
        %v5410 = vpack.c.bf16 %v5282, %v5278
        %v5411 = vld [vmem:[#allocation3] sm:$0xff]
        %v5412 = vld [vmem:[#allocation3 + $0x8] sm:$0xff]
        %v5413 = vld [vmem:[#allocation3 + $0x10] sm:$0xff]
        %v5414 = vld [vmem:[#allocation3 + $0x18] sm:$0xff]
        %v5415 = vld [vmem:[#allocation3 + $0x20] sm:$0xff]
        %v5416 = vld [vmem:[#allocation3 + $0x28] sm:$0xff]
        %v5417 = vld [vmem:[#allocation3 + $0x30] sm:$0xff]
        %v5418 = vld [vmem:[#allocation3 + $0x38] sm:$0xff]
        %v5419 = vld [vmem:[#allocation3 + $0x40] sm:$0xff]
        %v5420 = vld [vmem:[#allocation3 + $0x48] sm:$0xff]
        %v5421 = vld [vmem:[#allocation3 + $0x50] sm:$0xff]
        %v5422 = vld [vmem:[#allocation3 + $0x58] sm:$0xff]
        %v5423 = vld [vmem:[#allocation3 + $0x60] sm:$0xff]
        %v5424 = vld [vmem:[#allocation3 + $0x68] sm:$0xff]
        %v5425 = vld [vmem:[#allocation3 + $0x70] sm:$0xff]
        %v5426 = vld [vmem:[#allocation3 + $0x78] sm:$0xff]
        %v5427 = vld [vmem:[#allocation3 + $0x80] sm:$0xff]
        %v5428 = vld [vmem:[#allocation3 + $0x88] sm:$0xff]
        %v5429 = vld [vmem:[#allocation3 + $0x90] sm:$0xff]
        %v5430 = vld [vmem:[#allocation3 + $0x98] sm:$0xff]
        %v5431 = vld [vmem:[#allocation3 + $0xa0] sm:$0xff]
        %v5432 = vld [vmem:[#allocation3 + $0xa8] sm:$0xff]
        %v5433 = vld [vmem:[#allocation3 + $0xb0] sm:$0xff]
        %v5434 = vld [vmem:[#allocation3 + $0xb8] sm:$0xff]
        %v5435 = vld [vmem:[#allocation3 + $0xc0] sm:$0xff]
        %v5436 = vld [vmem:[#allocation3 + $0xc8] sm:$0xff]
        %v5437 = vld [vmem:[#allocation3 + $0xd0] sm:$0xff]
        %v5438 = vld [vmem:[#allocation3 + $0xd8] sm:$0xff]
        %v5439 = vld [vmem:[#allocation3 + $0xe0] sm:$0xff]
        %v5440 = vld [vmem:[#allocation3 + $0xe8] sm:$0xff]
        %v5441 = vld [vmem:[#allocation3 + $0xf0] sm:$0xff]
        %v5442 = vld [vmem:[#allocation3 + $0xf8] sm:$0xff]
        %v5443 = vld [vmem:[#allocation3 + $0x100] sm:$0xff]
        %v5444 = vld [vmem:[#allocation3 + $0x108] sm:$0xff]
        %v5445 = vld [vmem:[#allocation3 + $0x110] sm:$0xff]
        %v5446 = vld [vmem:[#allocation3 + $0x118] sm:$0xff]
        %v5447 = vld [vmem:[#allocation3 + $0x120] sm:$0xff]
        %v5448 = vld [vmem:[#allocation3 + $0x128] sm:$0xff]
        %v5449 = vld [vmem:[#allocation3 + $0x130] sm:$0xff]
        %v5450 = vld [vmem:[#allocation3 + $0x138] sm:$0xff]
        %v5451 = vld [vmem:[#allocation3 + $0x140] sm:$0xff]
        %v5452 = vld [vmem:[#allocation3 + $0x148] sm:$0xff]
        %v5453 = vld [vmem:[#allocation3 + $0x150] sm:$0xff]
        %v5454 = vld [vmem:[#allocation3 + $0x158] sm:$0xff]
        %v5455 = vld [vmem:[#allocation3 + $0x160] sm:$0xff]
        %v5456 = vld [vmem:[#allocation3 + $0x168] sm:$0xff]
        %v5457 = vld [vmem:[#allocation3 + $0x170] sm:$0xff]
        %v5458 = vld [vmem:[#allocation3 + $0x178] sm:$0xff]
        %v5459 = vld [vmem:[#allocation3 + $0x180] sm:$0xff]
        %v5460 = vld [vmem:[#allocation3 + $0x188] sm:$0xff]
        %v5461 = vld [vmem:[#allocation3 + $0x190] sm:$0xff]
        %v5462 = vld [vmem:[#allocation3 + $0x198] sm:$0xff]
        %v5463 = vld [vmem:[#allocation3 + $0x1a0] sm:$0xff]
        %v5464 = vld [vmem:[#allocation3 + $0x1a8] sm:$0xff]
        %v5465 = vld [vmem:[#allocation3 + $0x1b0] sm:$0xff]
        %v5466 = vld [vmem:[#allocation3 + $0x1b8] sm:$0xff]
        %v5467 = vld [vmem:[#allocation3 + $0x1c0] sm:$0xff]
        %v5468 = vld [vmem:[#allocation3 + $0x1c8] sm:$0xff]
        %v5469 = vld [vmem:[#allocation3 + $0x1d0] sm:$0xff]
        %v5470 = vld [vmem:[#allocation3 + $0x1d8] sm:$0xff]
        %v5471 = vld [vmem:[#allocation3 + $0x1e0] sm:$0xff]
        %v5472 = vld [vmem:[#allocation3 + $0x1e8] sm:$0xff]
        %v5473 = vld [vmem:[#allocation3 + $0x1f0] sm:$0xff]
        %v5474 = vld [vmem:[#allocation3 + $0x1f8] sm:$0xff]
        %v5475 = vld [vmem:[#allocation3 + $0x200] sm:$0xff]
        %v5476 = vld [vmem:[#allocation3 + $0x208] sm:$0xff]
        %v5477 = vld [vmem:[#allocation3 + $0x210] sm:$0xff]
        %v5478 = vld [vmem:[#allocation3 + $0x218] sm:$0xff]
        %v5479 = vld [vmem:[#allocation3 + $0x220] sm:$0xff]
        %v5480 = vld [vmem:[#allocation3 + $0x228] sm:$0xff]
        %v5481 = vld [vmem:[#allocation3 + $0x230] sm:$0xff]
        %v5482 = vld [vmem:[#allocation3 + $0x238] sm:$0xff]
        %v5483 = vld [vmem:[#allocation3 + $0x240] sm:$0xff]
        %v5484 = vld [vmem:[#allocation3 + $0x248] sm:$0xff]
        %v5485 = vld [vmem:[#allocation3 + $0x250] sm:$0xff]
        %v5486 = vld [vmem:[#allocation3 + $0x258] sm:$0xff]
        %v5487 = vld [vmem:[#allocation3 + $0x260] sm:$0xff]
        %v5488 = vld [vmem:[#allocation3 + $0x268] sm:$0xff]
        %v5489 = vld [vmem:[#allocation3 + $0x270] sm:$0xff]
        %v5490 = vld [vmem:[#allocation3 + $0x278] sm:$0xff]
        %v5491 = vld [vmem:[#allocation3 + $0x280] sm:$0xff]
        %v5492 = vld [vmem:[#allocation3 + $0x288] sm:$0xff]
        %v5493 = vld [vmem:[#allocation3 + $0x290] sm:$0xff]
        %v5494 = vld [vmem:[#allocation3 + $0x298] sm:$0xff]
        %v5495 = vld [vmem:[#allocation3 + $0x2a0] sm:$0xff]
        %v5496 = vld [vmem:[#allocation3 + $0x2a8] sm:$0xff]
        %v5497 = vld [vmem:[#allocation3 + $0x2b0] sm:$0xff]
        %v5498 = vld [vmem:[#allocation3 + $0x2b8] sm:$0xff]
        %v5499 = vld [vmem:[#allocation3 + $0x2c0] sm:$0xff]
        %v5500 = vld [vmem:[#allocation3 + $0x2c8] sm:$0xff]
        %v5501 = vld [vmem:[#allocation3 + $0x2d0] sm:$0xff]
        %v5502 = vld [vmem:[#allocation3 + $0x2d8] sm:$0xff]
        %v5503 = vld [vmem:[#allocation3 + $0x2e0] sm:$0xff]
        %v5504 = vld [vmem:[#allocation3 + $0x2e8] sm:$0xff]
        %v5505 = vld [vmem:[#allocation3 + $0x2f0] sm:$0xff]
        %v5506 = vld [vmem:[#allocation3 + $0x2f8] sm:$0xff]
        %v5507 = vld [vmem:[#allocation3 + $0x300] sm:$0xff]
        %v5508 = vld [vmem:[#allocation3 + $0x308] sm:$0xff]
        %v5509 = vld [vmem:[#allocation3 + $0x310] sm:$0xff]
        %v5510 = vld [vmem:[#allocation3 + $0x318] sm:$0xff]
        %v5511 = vld [vmem:[#allocation3 + $0x320] sm:$0xff]
        %v5512 = vld [vmem:[#allocation3 + $0x328] sm:$0xff]
        %v5513 = vld [vmem:[#allocation3 + $0x330] sm:$0xff]
        %v5514 = vld [vmem:[#allocation3 + $0x338] sm:$0xff]
        %v5515 = vld [vmem:[#allocation3 + $0x340] sm:$0xff]
        %v5516 = vld [vmem:[#allocation3 + $0x348] sm:$0xff]
        %v5517 = vld [vmem:[#allocation3 + $0x350] sm:$0xff]
        %v5518 = vld [vmem:[#allocation3 + $0x358] sm:$0xff]
        %v5519 = vld [vmem:[#allocation3 + $0x360] sm:$0xff]
        %v5520 = vld [vmem:[#allocation3 + $0x368] sm:$0xff]
        %v5521 = vld [vmem:[#allocation3 + $0x370] sm:$0xff]
        %v5522 = vld [vmem:[#allocation3 + $0x378] sm:$0xff]
        %v5523 = vld [vmem:[#allocation3 + $0x380] sm:$0xff]
        %v5524 = vld [vmem:[#allocation3 + $0x388] sm:$0xff]
        %v5525 = vld [vmem:[#allocation3 + $0x390] sm:$0xff]
        %v5526 = vld [vmem:[#allocation3 + $0x398] sm:$0xff]
        %v5527 = vld [vmem:[#allocation3 + $0x3a0] sm:$0xff]
        %v5528 = vld [vmem:[#allocation3 + $0x3a8] sm:$0xff]
        %v5529 = vld [vmem:[#allocation3 + $0x3b0] sm:$0xff]
        %v5530 = vld [vmem:[#allocation3 + $0x3b8] sm:$0xff]
        %v5531 = vld [vmem:[#allocation3 + $0x3c0] sm:$0xff]
        %v5532 = vld [vmem:[#allocation3 + $0x3c8] sm:$0xff]
        %v5533 = vld [vmem:[#allocation3 + $0x3d0] sm:$0xff]
        %v5534 = vld [vmem:[#allocation3 + $0x3d8] sm:$0xff]
        %v5535 = vld [vmem:[#allocation3 + $0x3e0] sm:$0xff]
        %v5536 = vld [vmem:[#allocation3 + $0x3e8] sm:$0xff]
        %v5537 = vld [vmem:[#allocation3 + $0x3f0] sm:$0xff]
        %v5538 = vld [vmem:[#allocation3 + $0x3f8] sm:$0xff]
        %v5539 = vmul.f32 %v3620, %v5411
        %v5540 = vmul.f32 %v3622, %v5412
        %v5541 = vmul.f32 %v3624, %v5413
        %v5542 = vmul.f32 %v3626, %v5414
        %v5543 = vmul.f32 %v3628, %v5415
        %v5544 = vmul.f32 %v3630, %v5416
        %v5545 = vmul.f32 %v3632, %v5417
        %v5546 = vmul.f32 %v3634, %v5418
        %v5547 = vmul.f32 %v3636, %v5419
        %v5548 = vmul.f32 %v3638, %v5420
        %v5549 = vmul.f32 %v3640, %v5421
        %v5550 = vmul.f32 %v3642, %v5422
        %v5551 = vmul.f32 %v3644, %v5423
        %v5552 = vmul.f32 %v3646, %v5424
        %v5553 = vmul.f32 %v3648, %v5425
        %v5554 = vmul.f32 %v3650, %v5426
        %v5555 = vmul.f32 %v3652, %v5427
        %v5556 = vmul.f32 %v3654, %v5428
        %v5557 = vmul.f32 %v3656, %v5429
        %v5558 = vmul.f32 %v3658, %v5430
        %v5559 = vmul.f32 %v3660, %v5431
        %v5560 = vmul.f32 %v3662, %v5432
        %v5561 = vmul.f32 %v3664, %v5433
        %v5562 = vmul.f32 %v3666, %v5434
        %v5563 = vmul.f32 %v3668, %v5435
        %v5564 = vmul.f32 %v3670, %v5436
        %v5565 = vmul.f32 %v3672, %v5437
        %v5566 = vmul.f32 %v3674, %v5438
        %v5567 = vmul.f32 %v3676, %v5439
        %v5568 = vmul.f32 %v3678, %v5440
        %v5569 = vmul.f32 %v3680, %v5441
        %v5570 = vmul.f32 %v3682, %v5442
        %v5571 = vmul.f32 %v3684, %v5443
        %v5572 = vmul.f32 %v3686, %v5444
        %v5573 = vmul.f32 %v3688, %v5445
        %v5574 = vmul.f32 %v3690, %v5446
        %v5575 = vmul.f32 %v3692, %v5447
        %v5576 = vmul.f32 %v3694, %v5448
        %v5577 = vmul.f32 %v3696, %v5449
        %v5578 = vmul.f32 %v3698, %v5450
        %v5579 = vmul.f32 %v3700, %v5451
        %v5580 = vmul.f32 %v3702, %v5452
        %v5581 = vmul.f32 %v3704, %v5453
        %v5582 = vmul.f32 %v3706, %v5454
        %v5583 = vmul.f32 %v3708, %v5455
        %v5584 = vmul.f32 %v3710, %v5456
        %v5585 = vmul.f32 %v3712, %v5457
        %v5586 = vmul.f32 %v3714, %v5458
        %v5587 = vmul.f32 %v3716, %v5459
        %v5588 = vmul.f32 %v3718, %v5460
        %v5589 = vmul.f32 %v3720, %v5461
        %v5590 = vmul.f32 %v3722, %v5462
        %v5591 = vmul.f32 %v3724, %v5463
        %v5592 = vmul.f32 %v3726, %v5464
        %v5593 = vmul.f32 %v3728, %v5465
        %v5594 = vmul.f32 %v3730, %v5466
        %v5595 = vmul.f32 %v3732, %v5467
        %v5596 = vmul.f32 %v3734, %v5468
        %v5597 = vmul.f32 %v3736, %v5469
        %v5598 = vmul.f32 %v3738, %v5470
        %v5599 = vmul.f32 %v3740, %v5471
        %v5600 = vmul.f32 %v3742, %v5472
        %v5601 = vmul.f32 %v3744, %v5473
        %v5602 = vmul.f32 %v3746, %v5474
        %v5603 = vmul.f32 %v3748, %v5475
        %v5604 = vmul.f32 %v3750, %v5476
        %v5605 = vmul.f32 %v3752, %v5477
        %v5606 = vmul.f32 %v3754, %v5478
        %v5607 = vmul.f32 %v3756, %v5479
        %v5608 = vmul.f32 %v3758, %v5480
        %v5609 = vmul.f32 %v3760, %v5481
        %v5610 = vmul.f32 %v3762, %v5482
        %v5611 = vmul.f32 %v3764, %v5483
        %v5612 = vmul.f32 %v3766, %v5484
        %v5613 = vmul.f32 %v3768, %v5485
        %v5614 = vmul.f32 %v3770, %v5486
        %v5615 = vmul.f32 %v3772, %v5487
        %v5616 = vmul.f32 %v3774, %v5488
        %v5617 = vmul.f32 %v3776, %v5489
        %v5618 = vmul.f32 %v3778, %v5490
        %v5619 = vmul.f32 %v3780, %v5491
        %v5620 = vmul.f32 %v3782, %v5492
        %v5621 = vmul.f32 %v3784, %v5493
        %v5622 = vmul.f32 %v3786, %v5494
        %v5623 = vmul.f32 %v3788, %v5495
        %v5624 = vmul.f32 %v3790, %v5496
        %v5625 = vmul.f32 %v3792, %v5497
        %v5626 = vmul.f32 %v3794, %v5498
        %v5627 = vmul.f32 %v3796, %v5499
        %v5628 = vmul.f32 %v3798, %v5500
        %v5629 = vmul.f32 %v3800, %v5501
        %v5630 = vmul.f32 %v3802, %v5502
        %v5631 = vmul.f32 %v3804, %v5503
        %v5632 = vmul.f32 %v3806, %v5504
        %v5633 = vmul.f32 %v3808, %v5505
        %v5634 = vmul.f32 %v3810, %v5506
        %v5635 = vmul.f32 %v3812, %v5507
        %v5636 = vmul.f32 %v3814, %v5508
        %v5637 = vmul.f32 %v3816, %v5509
        %v5638 = vmul.f32 %v3818, %v5510
        %v5639 = vmul.f32 %v3820, %v5511
        %v5640 = vmul.f32 %v3822, %v5512
        %v5641 = vmul.f32 %v3824, %v5513
        %v5642 = vmul.f32 %v3826, %v5514
        %v5643 = vmul.f32 %v3828, %v5515
        %v5644 = vmul.f32 %v3830, %v5516
        %v5645 = vmul.f32 %v3832, %v5517
        %v5646 = vmul.f32 %v3834, %v5518
        %v5647 = vmul.f32 %v3836, %v5519
        %v5648 = vmul.f32 %v3838, %v5520
        %v5649 = vmul.f32 %v3840, %v5521
        %v5650 = vmul.f32 %v3842, %v5522
        %v5651 = vmul.f32 %v3844, %v5523
        %v5652 = vmul.f32 %v3846, %v5524
        %v5653 = vmul.f32 %v3848, %v5525
        %v5654 = vmul.f32 %v3850, %v5526
        %v5655 = vmul.f32 %v3852, %v5527
        %v5656 = vmul.f32 %v3854, %v5528
        %v5657 = vmul.f32 %v3856, %v5529
        %v5658 = vmul.f32 %v3858, %v5530
        %v5659 = vmul.f32 %v3860, %v5531
        %v5660 = vmul.f32 %v3862, %v5532
        %v5661 = vmul.f32 %v3864, %v5533
        %v5662 = vmul.f32 %v3866, %v5534
        %v5663 = vmul.f32 %v3868, %v5535
        %v5664 = vmul.f32 %v3870, %v5536
        %v5665 = vmul.f32 %v3872, %v5537
        %v5666 = vmul.f32 %v3874, %v5538
        %v5667 = vunpack.c.l.bf16 %v5283
        %v5668 = vunpack.c.l.bf16 %v5284
        %v5669 = vunpack.c.h.bf16 %v5283
        %v5670 = vunpack.c.h.bf16 %v5284
        %v5671 = vunpack.c.l.bf16 %v5285
        %v5672 = vunpack.c.l.bf16 %v5286
        %v5673 = vunpack.c.h.bf16 %v5285
        %v5674 = vunpack.c.h.bf16 %v5286
        %v5675 = vunpack.c.l.bf16 %v5287
        %v5676 = vunpack.c.l.bf16 %v5288
        %v5677 = vunpack.c.h.bf16 %v5287
        %v5678 = vunpack.c.h.bf16 %v5288
        %v5679 = vunpack.c.l.bf16 %v5289
        %v5680 = vunpack.c.l.bf16 %v5290
        %v5681 = vunpack.c.h.bf16 %v5289
        %v5682 = vunpack.c.h.bf16 %v5290
        %v5683 = vunpack.c.l.bf16 %v5291
        %v5684 = vunpack.c.l.bf16 %v5292
        %v5685 = vunpack.c.h.bf16 %v5291
        %v5686 = vunpack.c.h.bf16 %v5292
        %v5687 = vunpack.c.l.bf16 %v5293
        %v5688 = vunpack.c.l.bf16 %v5294
        %v5689 = vunpack.c.h.bf16 %v5293
        %v5690 = vunpack.c.h.bf16 %v5294
        %v5691 = vunpack.c.l.bf16 %v5295
        %v5692 = vunpack.c.l.bf16 %v5296
        %v5693 = vunpack.c.h.bf16 %v5295
        %v5694 = vunpack.c.h.bf16 %v5296
        %v5695 = vunpack.c.l.bf16 %v5297
        %v5696 = vunpack.c.l.bf16 %v5298
        %v5697 = vunpack.c.h.bf16 %v5297
        %v5698 = vunpack.c.h.bf16 %v5298
        %v5699 = vunpack.c.l.bf16 %v5299
        %v5700 = vunpack.c.l.bf16 %v5300
        %v5701 = vunpack.c.h.bf16 %v5299
        %v5702 = vunpack.c.h.bf16 %v5300
        %v5703 = vunpack.c.l.bf16 %v5301
        %v5704 = vunpack.c.l.bf16 %v5302
        %v5705 = vunpack.c.h.bf16 %v5301
        %v5706 = vunpack.c.h.bf16 %v5302
        %v5707 = vunpack.c.l.bf16 %v5303
        %v5708 = vunpack.c.l.bf16 %v5304
        %v5709 = vunpack.c.h.bf16 %v5303
        %v5710 = vunpack.c.h.bf16 %v5304
        %v5711 = vunpack.c.l.bf16 %v5305
        %v5712 = vunpack.c.l.bf16 %v5306
        %v5713 = vunpack.c.h.bf16 %v5305
        %v5714 = vunpack.c.h.bf16 %v5306
        %v5715 = vunpack.c.l.bf16 %v5307
        %v5716 = vunpack.c.l.bf16 %v5308
        %v5717 = vunpack.c.h.bf16 %v5307
        %v5718 = vunpack.c.h.bf16 %v5308
        %v5719 = vunpack.c.l.bf16 %v5309
        %v5720 = vunpack.c.l.bf16 %v5310
        %v5721 = vunpack.c.h.bf16 %v5309
        %v5722 = vunpack.c.h.bf16 %v5310
        %v5723 = vunpack.c.l.bf16 %v5311
        %v5724 = vunpack.c.l.bf16 %v5312
        %v5725 = vunpack.c.h.bf16 %v5311
        %v5726 = vunpack.c.h.bf16 %v5312
        %v5727 = vunpack.c.l.bf16 %v5313
        %v5728 = vunpack.c.l.bf16 %v5314
        %v5729 = vunpack.c.h.bf16 %v5313
        %v5730 = vunpack.c.h.bf16 %v5314
        %v5731 = vunpack.c.l.bf16 %v5315
        %v5732 = vunpack.c.l.bf16 %v5316
        %v5733 = vunpack.c.h.bf16 %v5315
        %v5734 = vunpack.c.h.bf16 %v5316
        %v5735 = vunpack.c.l.bf16 %v5317
        %v5736 = vunpack.c.l.bf16 %v5318
        %v5737 = vunpack.c.h.bf16 %v5317
        %v5738 = vunpack.c.h.bf16 %v5318
        %v5739 = vunpack.c.l.bf16 %v5319
        %v5740 = vunpack.c.l.bf16 %v5320
        %v5741 = vunpack.c.h.bf16 %v5319
        %v5742 = vunpack.c.h.bf16 %v5320
        %v5743 = vunpack.c.l.bf16 %v5321
        %v5744 = vunpack.c.l.bf16 %v5322
        %v5745 = vunpack.c.h.bf16 %v5321
        %v5746 = vunpack.c.h.bf16 %v5322
        %v5747 = vunpack.c.l.bf16 %v5323
        %v5748 = vunpack.c.l.bf16 %v5324
        %v5749 = vunpack.c.h.bf16 %v5323
        %v5750 = vunpack.c.h.bf16 %v5324
        %v5751 = vunpack.c.l.bf16 %v5325
        %v5752 = vunpack.c.l.bf16 %v5326
        %v5753 = vunpack.c.h.bf16 %v5325
        %v5754 = vunpack.c.h.bf16 %v5326
        %v5755 = vunpack.c.l.bf16 %v5327
        %v5756 = vunpack.c.l.bf16 %v5328
        %v5757 = vunpack.c.h.bf16 %v5327
        %v5758 = vunpack.c.h.bf16 %v5328
        %v5759 = vunpack.c.l.bf16 %v5329
        %v5760 = vunpack.c.l.bf16 %v5330
        %v5761 = vunpack.c.h.bf16 %v5329
        %v5762 = vunpack.c.h.bf16 %v5330
        %v5763 = vunpack.c.l.bf16 %v5331
        %v5764 = vunpack.c.l.bf16 %v5332
        %v5765 = vunpack.c.h.bf16 %v5331
        %v5766 = vunpack.c.h.bf16 %v5332
        %v5767 = vunpack.c.l.bf16 %v5333
        %v5768 = vunpack.c.l.bf16 %v5334
        %v5769 = vunpack.c.h.bf16 %v5333
        %v5770 = vunpack.c.h.bf16 %v5334
        %v5771 = vunpack.c.l.bf16 %v5335
        %v5772 = vunpack.c.l.bf16 %v5336
        %v5773 = vunpack.c.h.bf16 %v5335
        %v5774 = vunpack.c.h.bf16 %v5336
        %v5775 = vunpack.c.l.bf16 %v5337
        %v5776 = vunpack.c.l.bf16 %v5338
        %v5777 = vunpack.c.h.bf16 %v5337
        %v5778 = vunpack.c.h.bf16 %v5338
        %v5779 = vunpack.c.l.bf16 %v5339
        %v5780 = vunpack.c.l.bf16 %v5340
        %v5781 = vunpack.c.h.bf16 %v5339
        %v5782 = vunpack.c.h.bf16 %v5340
        %v5783 = vunpack.c.l.bf16 %v5341
        %v5784 = vunpack.c.l.bf16 %v5342
        %v5785 = vunpack.c.h.bf16 %v5341
        %v5786 = vunpack.c.h.bf16 %v5342
        %v5787 = vunpack.c.l.bf16 %v5343
        %v5788 = vunpack.c.l.bf16 %v5344
        %v5789 = vunpack.c.h.bf16 %v5343
        %v5790 = vunpack.c.h.bf16 %v5344
        %v5791 = vunpack.c.l.bf16 %v5345
        %v5792 = vunpack.c.l.bf16 %v5346
        %v5793 = vunpack.c.h.bf16 %v5345
        %v5794 = vunpack.c.h.bf16 %v5346
        %v5795 = vunpack.c.l.bf16 %v5347
        %v5796 = vunpack.c.l.bf16 %v5348
        %v5797 = vunpack.c.h.bf16 %v5347
        %v5798 = vunpack.c.h.bf16 %v5348
        %v5799 = vunpack.c.l.bf16 %v5349
        %v5800 = vunpack.c.l.bf16 %v5350
        %v5801 = vunpack.c.h.bf16 %v5349
        %v5802 = vunpack.c.h.bf16 %v5350
        %v5803 = vunpack.c.l.bf16 %v5351
        %v5804 = vunpack.c.l.bf16 %v5352
        %v5805 = vunpack.c.h.bf16 %v5351
        %v5806 = vunpack.c.h.bf16 %v5352
        %v5807 = vunpack.c.l.bf16 %v5353
        %v5808 = vunpack.c.l.bf16 %v5354
        %v5809 = vunpack.c.h.bf16 %v5353
        %v5810 = vunpack.c.h.bf16 %v5354
        %v5811 = vunpack.c.l.bf16 %v5355
        %v5812 = vunpack.c.l.bf16 %v5356
        %v5813 = vunpack.c.h.bf16 %v5355
        %v5814 = vunpack.c.h.bf16 %v5356
        %v5815 = vunpack.c.l.bf16 %v5357
        %v5816 = vunpack.c.l.bf16 %v5358
        %v5817 = vunpack.c.h.bf16 %v5357
        %v5818 = vunpack.c.h.bf16 %v5358
        %v5819 = vunpack.c.l.bf16 %v5359
        %v5820 = vunpack.c.l.bf16 %v5360
        %v5821 = vunpack.c.h.bf16 %v5359
        %v5822 = vunpack.c.h.bf16 %v5360
        %v5823 = vunpack.c.l.bf16 %v5361
        %v5824 = vunpack.c.l.bf16 %v5362
        %v5825 = vunpack.c.h.bf16 %v5361
        %v5826 = vunpack.c.h.bf16 %v5362
        %v5827 = vunpack.c.l.bf16 %v5363
        %v5828 = vunpack.c.l.bf16 %v5364
        %v5829 = vunpack.c.h.bf16 %v5363
        %v5830 = vunpack.c.h.bf16 %v5364
        %v5831 = vunpack.c.l.bf16 %v5365
        %v5832 = vunpack.c.l.bf16 %v5366
        %v5833 = vunpack.c.h.bf16 %v5365
        %v5834 = vunpack.c.h.bf16 %v5366
        %v5835 = vunpack.c.l.bf16 %v5367
        %v5836 = vunpack.c.l.bf16 %v5368
        %v5837 = vunpack.c.h.bf16 %v5367
        %v5838 = vunpack.c.h.bf16 %v5368
        %v5839 = vunpack.c.l.bf16 %v5369
        %v5840 = vunpack.c.l.bf16 %v5370
        %v5841 = vunpack.c.h.bf16 %v5369
        %v5842 = vunpack.c.h.bf16 %v5370
        %v5843 = vunpack.c.l.bf16 %v5371
        %v5844 = vunpack.c.l.bf16 %v5372
        %v5845 = vunpack.c.h.bf16 %v5371
        %v5846 = vunpack.c.h.bf16 %v5372
        %v5847 = vunpack.c.l.bf16 %v5373
        %v5848 = vunpack.c.l.bf16 %v5374
        %v5849 = vunpack.c.h.bf16 %v5373
        %v5850 = vunpack.c.h.bf16 %v5374
        %v5851 = vunpack.c.l.bf16 %v5375
        %v5852 = vunpack.c.l.bf16 %v5376
        %v5853 = vunpack.c.h.bf16 %v5375
        %v5854 = vunpack.c.h.bf16 %v5376
        %v5855 = vunpack.c.l.bf16 %v5377
        %v5856 = vunpack.c.l.bf16 %v5378
        %v5857 = vunpack.c.h.bf16 %v5377
        %v5858 = vunpack.c.h.bf16 %v5378
        %v5859 = vunpack.c.l.bf16 %v5379
        %v5860 = vunpack.c.l.bf16 %v5380
        %v5861 = vunpack.c.h.bf16 %v5379
        %v5862 = vunpack.c.h.bf16 %v5380
        %v5863 = vunpack.c.l.bf16 %v5381
        %v5864 = vunpack.c.l.bf16 %v5382
        %v5865 = vunpack.c.h.bf16 %v5381
        %v5866 = vunpack.c.h.bf16 %v5382
        %v5867 = vunpack.c.l.bf16 %v5383
        %v5868 = vunpack.c.l.bf16 %v5384
        %v5869 = vunpack.c.h.bf16 %v5383
        %v5870 = vunpack.c.h.bf16 %v5384
        %v5871 = vunpack.c.l.bf16 %v5385
        %v5872 = vunpack.c.l.bf16 %v5386
        %v5873 = vunpack.c.h.bf16 %v5385
        %v5874 = vunpack.c.h.bf16 %v5386
        %v5875 = vunpack.c.l.bf16 %v5387
        %v5876 = vunpack.c.l.bf16 %v5388
        %v5877 = vunpack.c.h.bf16 %v5387
        %v5878 = vunpack.c.h.bf16 %v5388
        %v5879 = vunpack.c.l.bf16 %v5389
        %v5880 = vunpack.c.l.bf16 %v5390
        %v5881 = vunpack.c.h.bf16 %v5389
        %v5882 = vunpack.c.h.bf16 %v5390
        %v5883 = vunpack.c.l.bf16 %v5391
        %v5884 = vunpack.c.l.bf16 %v5392
        %v5885 = vunpack.c.h.bf16 %v5391
        %v5886 = vunpack.c.h.bf16 %v5392
        %v5887 = vunpack.c.l.bf16 %v5393
        %v5888 = vunpack.c.l.bf16 %v5394
        %v5889 = vunpack.c.h.bf16 %v5393
        %v5890 = vunpack.c.h.bf16 %v5394
        %v5891 = vunpack.c.l.bf16 %v5395
        %v5892 = vunpack.c.l.bf16 %v5396
        %v5893 = vunpack.c.h.bf16 %v5395
        %v5894 = vunpack.c.h.bf16 %v5396
        %v5895 = vunpack.c.l.bf16 %v5397
        %v5896 = vunpack.c.l.bf16 %v5398
        %v5897 = vunpack.c.h.bf16 %v5397
        %v5898 = vunpack.c.h.bf16 %v5398
        %v5899 = vunpack.c.l.bf16 %v5399
        %v5900 = vunpack.c.l.bf16 %v5400
        %v5901 = vunpack.c.h.bf16 %v5399
        %v5902 = vunpack.c.h.bf16 %v5400
        %v5903 = vunpack.c.l.bf16 %v5401
        %v5904 = vunpack.c.l.bf16 %v5402
        %v5905 = vunpack.c.h.bf16 %v5401
        %v5906 = vunpack.c.h.bf16 %v5402
        %v5907 = vunpack.c.l.bf16 %v5403
        %v5908 = vunpack.c.l.bf16 %v5404
        %v5909 = vunpack.c.h.bf16 %v5403
        %v5910 = vunpack.c.h.bf16 %v5404
        %v5911 = vunpack.c.l.bf16 %v5405
        %v5912 = vunpack.c.l.bf16 %v5406
        %v5913 = vunpack.c.h.bf16 %v5405
        %v5914 = vunpack.c.h.bf16 %v5406
        %v5915 = vunpack.c.l.bf16 %v5407
        %v5916 = vunpack.c.l.bf16 %v5408
        %v5917 = vunpack.c.h.bf16 %v5407
        %v5918 = vunpack.c.h.bf16 %v5408
        %v5919 = vunpack.c.l.bf16 %v5409
        %v5920 = vunpack.c.l.bf16 %v5410
        %v5921 = vunpack.c.h.bf16 %v5409
        %v5922 = vunpack.c.h.bf16 %v5410
        %v5923 = vadd.f32 %v5667, %v5668
        %5924 = vadd.xlane.f32.xlu0 %v5923
        %v5925 = vpop.xlane.xlu0 %5924
        %v5926 = vadd.f32 %v5669, %v5670
        %5927 = vadd.xlane.f32.xlu0 %v5926
        %v5928 = vpop.xlane.xlu0 %5927
        %v5929 = vadd.f32 %v5671, %v5672
        %5930 = vadd.xlane.f32.xlu0 %v5929
        %v5931 = vpop.xlane.xlu0 %5930
        %v5932 = vadd.f32 %v5673, %v5674
        %5933 = vadd.xlane.f32.xlu0 %v5932
        %v5934 = vpop.xlane.xlu0 %5933
        %v5935 = vadd.f32 %v5675, %v5676
        %5936 = vadd.xlane.f32.xlu0 %v5935
        %v5937 = vpop.xlane.xlu0 %5936
        %v5938 = vadd.f32 %v5677, %v5678
        %5939 = vadd.xlane.f32.xlu0 %v5938
        %v5940 = vpop.xlane.xlu0 %5939
        %v5941 = vadd.f32 %v5679, %v5680
        %5942 = vadd.xlane.f32.xlu0 %v5941
        %v5943 = vpop.xlane.xlu0 %5942
        %v5944 = vadd.f32 %v5681, %v5682
        %5945 = vadd.xlane.f32.xlu0 %v5944
        %v5946 = vpop.xlane.xlu0 %5945
        %v5947 = vadd.f32 %v5683, %v5684
        %5948 = vadd.xlane.f32.xlu0 %v5947
        %v5949 = vpop.xlane.xlu0 %5948
        %v5950 = vadd.f32 %v5685, %v5686
        %5951 = vadd.xlane.f32.xlu0 %v5950
        %v5952 = vpop.xlane.xlu0 %5951
        %v5953 = vadd.f32 %v5687, %v5688
        %5954 = vadd.xlane.f32.xlu0 %v5953
        %v5955 = vpop.xlane.xlu0 %5954
        %v5956 = vadd.f32 %v5689, %v5690
        %5957 = vadd.xlane.f32.xlu0 %v5956
        %v5958 = vpop.xlane.xlu0 %5957
        %v5959 = vadd.f32 %v5691, %v5692
        %5960 = vadd.xlane.f32.xlu0 %v5959
        %v5961 = vpop.xlane.xlu0 %5960
        %v5962 = vadd.f32 %v5693, %v5694
        %5963 = vadd.xlane.f32.xlu0 %v5962
        %v5964 = vpop.xlane.xlu0 %5963
        %v5965 = vadd.f32 %v5695, %v5696
        %5966 = vadd.xlane.f32.xlu0 %v5965
        %v5967 = vpop.xlane.xlu0 %5966
        %v5968 = vadd.f32 %v5697, %v5698
        %5969 = vadd.xlane.f32.xlu0 %v5968
        %v5970 = vpop.xlane.xlu0 %5969
        %v5971 = vadd.f32 %v5699, %v5700
        %5972 = vadd.xlane.f32.xlu0 %v5971
        %v5973 = vpop.xlane.xlu0 %5972
        %v5974 = vadd.f32 %v5701, %v5702
        %5975 = vadd.xlane.f32.xlu0 %v5974
        %v5976 = vpop.xlane.xlu0 %5975
        %v5977 = vadd.f32 %v5703, %v5704
        %5978 = vadd.xlane.f32.xlu0 %v5977
        %v5979 = vpop.xlane.xlu0 %5978
        %v5980 = vadd.f32 %v5705, %v5706
        %5981 = vadd.xlane.f32.xlu0 %v5980
        %v5982 = vpop.xlane.xlu0 %5981
        %v5983 = vadd.f32 %v5707, %v5708
        %5984 = vadd.xlane.f32.xlu0 %v5983
        %v5985 = vpop.xlane.xlu0 %5984
        %v5986 = vadd.f32 %v5709, %v5710
        %5987 = vadd.xlane.f32.xlu0 %v5986
        %v5988 = vpop.xlane.xlu0 %5987
        %v5989 = vadd.f32 %v5711, %v5712
        %5990 = vadd.xlane.f32.xlu0 %v5989
        %v5991 = vpop.xlane.xlu0 %5990
        %v5992 = vadd.f32 %v5713, %v5714
        %5993 = vadd.xlane.f32.xlu0 %v5992
        %v5994 = vpop.xlane.xlu0 %5993
        %v5995 = vadd.f32 %v5715, %v5716
        %5996 = vadd.xlane.f32.xlu0 %v5995
        %v5997 = vpop.xlane.xlu0 %5996
        %v5998 = vadd.f32 %v5717, %v5718
        %5999 = vadd.xlane.f32.xlu0 %v5998
        %v6000 = vpop.xlane.xlu0 %5999
        %v6001 = vadd.f32 %v5719, %v5720
        %6002 = vadd.xlane.f32.xlu0 %v6001
        %v6003 = vpop.xlane.xlu0 %6002
        %v6004 = vadd.f32 %v5721, %v5722
        %6005 = vadd.xlane.f32.xlu0 %v6004
        %v6006 = vpop.xlane.xlu0 %6005
        %v6007 = vadd.f32 %v5723, %v5724
        %6008 = vadd.xlane.f32.xlu0 %v6007
        %v6009 = vpop.xlane.xlu0 %6008
        %v6010 = vadd.f32 %v5725, %v5726
        %6011 = vadd.xlane.f32.xlu0 %v6010
        %v6012 = vpop.xlane.xlu0 %6011
        %v6013 = vadd.f32 %v5727, %v5728
        %6014 = vadd.xlane.f32.xlu0 %v6013
        %v6015 = vpop.xlane.xlu0 %6014
        %v6016 = vadd.f32 %v5729, %v5730
        %6017 = vadd.xlane.f32.xlu0 %v6016
        %v6018 = vpop.xlane.xlu0 %6017
        %v6019 = vadd.f32 %v5731, %v5732
        %6020 = vadd.xlane.f32.xlu0 %v6019
        %v6021 = vpop.xlane.xlu0 %6020
        %v6022 = vadd.f32 %v5733, %v5734
        %6023 = vadd.xlane.f32.xlu0 %v6022
        %v6024 = vpop.xlane.xlu0 %6023
        %v6025 = vadd.f32 %v5735, %v5736
        %6026 = vadd.xlane.f32.xlu0 %v6025
        %v6027 = vpop.xlane.xlu0 %6026
        %v6028 = vadd.f32 %v5737, %v5738
        %6029 = vadd.xlane.f32.xlu0 %v6028
        %v6030 = vpop.xlane.xlu0 %6029
        %v6031 = vadd.f32 %v5739, %v5740
        %6032 = vadd.xlane.f32.xlu0 %v6031
        %v6033 = vpop.xlane.xlu0 %6032
        %v6034 = vadd.f32 %v5741, %v5742
        %6035 = vadd.xlane.f32.xlu0 %v6034
        %v6036 = vpop.xlane.xlu0 %6035
        %v6037 = vadd.f32 %v5743, %v5744
        %6038 = vadd.xlane.f32.xlu0 %v6037
        %v6039 = vpop.xlane.xlu0 %6038
        %v6040 = vadd.f32 %v5745, %v5746
        %6041 = vadd.xlane.f32.xlu0 %v6040
        %v6042 = vpop.xlane.xlu0 %6041
        %v6043 = vadd.f32 %v5747, %v5748
        %6044 = vadd.xlane.f32.xlu0 %v6043
        %v6045 = vpop.xlane.xlu0 %6044
        %v6046 = vadd.f32 %v5749, %v5750
        %6047 = vadd.xlane.f32.xlu0 %v6046
        %v6048 = vpop.xlane.xlu0 %6047
        %v6049 = vadd.f32 %v5751, %v5752
        %6050 = vadd.xlane.f32.xlu0 %v6049
        %v6051 = vpop.xlane.xlu0 %6050
        %v6052 = vadd.f32 %v5753, %v5754
        %6053 = vadd.xlane.f32.xlu0 %v6052
        %v6054 = vpop.xlane.xlu0 %6053
        %v6055 = vadd.f32 %v5755, %v5756
        %6056 = vadd.xlane.f32.xlu0 %v6055
        %v6057 = vpop.xlane.xlu0 %6056
        %v6058 = vadd.f32 %v5757, %v5758
        %6059 = vadd.xlane.f32.xlu0 %v6058
        %v6060 = vpop.xlane.xlu0 %6059
        %v6061 = vadd.f32 %v5759, %v5760
        %6062 = vadd.xlane.f32.xlu0 %v6061
        %v6063 = vpop.xlane.xlu0 %6062
        %v6064 = vadd.f32 %v5761, %v5762
        %6065 = vadd.xlane.f32.xlu0 %v6064
        %v6066 = vpop.xlane.xlu0 %6065
        %v6067 = vadd.f32 %v5763, %v5764
        %6068 = vadd.xlane.f32.xlu0 %v6067
        %v6069 = vpop.xlane.xlu0 %6068
        %v6070 = vadd.f32 %v5765, %v5766
        %6071 = vadd.xlane.f32.xlu0 %v6070
        %v6072 = vpop.xlane.xlu0 %6071
        %v6073 = vadd.f32 %v5767, %v5768
        %6074 = vadd.xlane.f32.xlu0 %v6073
        %v6075 = vpop.xlane.xlu0 %6074
        %v6076 = vadd.f32 %v5769, %v5770
        %6077 = vadd.xlane.f32.xlu0 %v6076
        %v6078 = vpop.xlane.xlu0 %6077
        %v6079 = vadd.f32 %v5771, %v5772
        %6080 = vadd.xlane.f32.xlu0 %v6079
        %v6081 = vpop.xlane.xlu0 %6080
        %v6082 = vadd.f32 %v5773, %v5774
        %6083 = vadd.xlane.f32.xlu0 %v6082
        %v6084 = vpop.xlane.xlu0 %6083
        %v6085 = vadd.f32 %v5775, %v5776
        %6086 = vadd.xlane.f32.xlu0 %v6085
        %v6087 = vpop.xlane.xlu0 %6086
        %v6088 = vadd.f32 %v5777, %v5778
        %6089 = vadd.xlane.f32.xlu0 %v6088
        %v6090 = vpop.xlane.xlu0 %6089
        %v6091 = vadd.f32 %v5779, %v5780
        %6092 = vadd.xlane.f32.xlu0 %v6091
        %v6093 = vpop.xlane.xlu0 %6092
        %v6094 = vadd.f32 %v5781, %v5782
        %6095 = vadd.xlane.f32.xlu0 %v6094
        %v6096 = vpop.xlane.xlu0 %6095
        %v6097 = vadd.f32 %v5783, %v5784
        %6098 = vadd.xlane.f32.xlu0 %v6097
        %v6099 = vpop.xlane.xlu0 %6098
        %v6100 = vadd.f32 %v5785, %v5786
        %6101 = vadd.xlane.f32.xlu0 %v6100
        %v6102 = vpop.xlane.xlu0 %6101
        %v6103 = vadd.f32 %v5787, %v5788
        %6104 = vadd.xlane.f32.xlu0 %v6103
        %v6105 = vpop.xlane.xlu0 %6104
        %v6106 = vadd.f32 %v5789, %v5790
        %6107 = vadd.xlane.f32.xlu0 %v6106
        %v6108 = vpop.xlane.xlu0 %6107
        %v6109 = vadd.f32 %v5791, %v5792
        %6110 = vadd.xlane.f32.xlu0 %v6109
        %v6111 = vpop.xlane.xlu0 %6110
        %v6112 = vadd.f32 %v5793, %v5794
        %6113 = vadd.xlane.f32.xlu0 %v6112
        %v6114 = vpop.xlane.xlu0 %6113
        %v6115 = vadd.f32 %v5795, %v5796
        %6116 = vadd.xlane.f32.xlu0 %v6115
        %v6117 = vpop.xlane.xlu0 %6116
        %v6118 = vadd.f32 %v5797, %v5798
        %6119 = vadd.xlane.f32.xlu0 %v6118
        %v6120 = vpop.xlane.xlu0 %6119
        %v6121 = vadd.f32 %v5799, %v5800
        %6122 = vadd.xlane.f32.xlu0 %v6121
        %v6123 = vpop.xlane.xlu0 %6122
        %v6124 = vadd.f32 %v5801, %v5802
        %6125 = vadd.xlane.f32.xlu0 %v6124
        %v6126 = vpop.xlane.xlu0 %6125
        %v6127 = vadd.f32 %v5803, %v5804
        %6128 = vadd.xlane.f32.xlu0 %v6127
        %v6129 = vpop.xlane.xlu0 %6128
        %v6130 = vadd.f32 %v5805, %v5806
        %6131 = vadd.xlane.f32.xlu0 %v6130
        %v6132 = vpop.xlane.xlu0 %6131
        %v6133 = vadd.f32 %v5807, %v5808
        %6134 = vadd.xlane.f32.xlu0 %v6133
        %v6135 = vpop.xlane.xlu0 %6134
        %v6136 = vadd.f32 %v5809, %v5810
        %6137 = vadd.xlane.f32.xlu0 %v6136
        %v6138 = vpop.xlane.xlu0 %6137
        %v6139 = vadd.f32 %v5811, %v5812
        %6140 = vadd.xlane.f32.xlu0 %v6139
        %v6141 = vpop.xlane.xlu0 %6140
        %v6142 = vadd.f32 %v5813, %v5814
        %6143 = vadd.xlane.f32.xlu0 %v6142
        %v6144 = vpop.xlane.xlu0 %6143
        %v6145 = vadd.f32 %v5815, %v5816
        %6146 = vadd.xlane.f32.xlu0 %v6145
        %v6147 = vpop.xlane.xlu0 %6146
        %v6148 = vadd.f32 %v5817, %v5818
        %6149 = vadd.xlane.f32.xlu0 %v6148
        %v6150 = vpop.xlane.xlu0 %6149
        %v6151 = vadd.f32 %v5819, %v5820
        %6152 = vadd.xlane.f32.xlu0 %v6151
        %v6153 = vpop.xlane.xlu0 %6152
        %v6154 = vadd.f32 %v5821, %v5822
        %6155 = vadd.xlane.f32.xlu0 %v6154
        %v6156 = vpop.xlane.xlu0 %6155
        %v6157 = vadd.f32 %v5823, %v5824
        %6158 = vadd.xlane.f32.xlu0 %v6157
        %v6159 = vpop.xlane.xlu0 %6158
        %v6160 = vadd.f32 %v5825, %v5826
        %6161 = vadd.xlane.f32.xlu0 %v6160
        %v6162 = vpop.xlane.xlu0 %6161
        %v6163 = vadd.f32 %v5827, %v5828
        %6164 = vadd.xlane.f32.xlu0 %v6163
        %v6165 = vpop.xlane.xlu0 %6164
        %v6166 = vadd.f32 %v5829, %v5830
        %6167 = vadd.xlane.f32.xlu0 %v6166
        %v6168 = vpop.xlane.xlu0 %6167
        %v6169 = vadd.f32 %v5831, %v5832
        %6170 = vadd.xlane.f32.xlu0 %v6169
        %v6171 = vpop.xlane.xlu0 %6170
        %v6172 = vadd.f32 %v5833, %v5834
        %6173 = vadd.xlane.f32.xlu0 %v6172
        %v6174 = vpop.xlane.xlu0 %6173
        %v6175 = vadd.f32 %v5835, %v5836
        %6176 = vadd.xlane.f32.xlu0 %v6175
        %v6177 = vpop.xlane.xlu0 %6176
        %v6178 = vadd.f32 %v5837, %v5838
        %6179 = vadd.xlane.f32.xlu0 %v6178
        %v6180 = vpop.xlane.xlu0 %6179
        %v6181 = vadd.f32 %v5839, %v5840
        %6182 = vadd.xlane.f32.xlu0 %v6181
        %v6183 = vpop.xlane.xlu0 %6182
        %v6184 = vadd.f32 %v5841, %v5842
        %6185 = vadd.xlane.f32.xlu0 %v6184
        %v6186 = vpop.xlane.xlu0 %6185
        %v6187 = vadd.f32 %v5843, %v5844
        %6188 = vadd.xlane.f32.xlu0 %v6187
        %v6189 = vpop.xlane.xlu0 %6188
        %v6190 = vadd.f32 %v5845, %v5846
        %6191 = vadd.xlane.f32.xlu0 %v6190
        %v6192 = vpop.xlane.xlu0 %6191
        %v6193 = vadd.f32 %v5847, %v5848
        %6194 = vadd.xlane.f32.xlu0 %v6193
        %v6195 = vpop.xlane.xlu0 %6194
        %v6196 = vadd.f32 %v5849, %v5850
        %6197 = vadd.xlane.f32.xlu0 %v6196
        %v6198 = vpop.xlane.xlu0 %6197
        %v6199 = vadd.f32 %v5851, %v5852
        %6200 = vadd.xlane.f32.xlu0 %v6199
        %v6201 = vpop.xlane.xlu0 %6200
        %v6202 = vadd.f32 %v5853, %v5854
        %6203 = vadd.xlane.f32.xlu0 %v6202
        %v6204 = vpop.xlane.xlu0 %6203
        %v6205 = vadd.f32 %v5855, %v5856
        %6206 = vadd.xlane.f32.xlu0 %v6205
        %v6207 = vpop.xlane.xlu0 %6206
        %v6208 = vadd.f32 %v5857, %v5858
        %6209 = vadd.xlane.f32.xlu0 %v6208
        %v6210 = vpop.xlane.xlu0 %6209
        %v6211 = vadd.f32 %v5859, %v5860
        %6212 = vadd.xlane.f32.xlu0 %v6211
        %v6213 = vpop.xlane.xlu0 %6212
        %v6214 = vadd.f32 %v5861, %v5862
        %6215 = vadd.xlane.f32.xlu0 %v6214
        %v6216 = vpop.xlane.xlu0 %6215
        %v6217 = vadd.f32 %v5863, %v5864
        %6218 = vadd.xlane.f32.xlu0 %v6217
        %v6219 = vpop.xlane.xlu0 %6218
        %v6220 = vadd.f32 %v5865, %v5866
        %6221 = vadd.xlane.f32.xlu0 %v6220
        %v6222 = vpop.xlane.xlu0 %6221
        %v6223 = vadd.f32 %v5867, %v5868
        %6224 = vadd.xlane.f32.xlu0 %v6223
        %v6225 = vpop.xlane.xlu0 %6224
        %v6226 = vadd.f32 %v5869, %v5870
        %6227 = vadd.xlane.f32.xlu0 %v6226
        %v6228 = vpop.xlane.xlu0 %6227
        %v6229 = vadd.f32 %v5871, %v5872
        %6230 = vadd.xlane.f32.xlu0 %v6229
        %v6231 = vpop.xlane.xlu0 %6230
        %v6232 = vadd.f32 %v5873, %v5874
        %6233 = vadd.xlane.f32.xlu0 %v6232
        %v6234 = vpop.xlane.xlu0 %6233
        %v6235 = vadd.f32 %v5875, %v5876
        %6236 = vadd.xlane.f32.xlu0 %v6235
        %v6237 = vpop.xlane.xlu0 %6236
        %v6238 = vadd.f32 %v5877, %v5878
        %6239 = vadd.xlane.f32.xlu0 %v6238
        %v6240 = vpop.xlane.xlu0 %6239
        %v6241 = vadd.f32 %v5879, %v5880
        %6242 = vadd.xlane.f32.xlu0 %v6241
        %v6243 = vpop.xlane.xlu0 %6242
        %v6244 = vadd.f32 %v5881, %v5882
        %6245 = vadd.xlane.f32.xlu0 %v6244
        %v6246 = vpop.xlane.xlu0 %6245
        %v6247 = vadd.f32 %v5883, %v5884
        %6248 = vadd.xlane.f32.xlu0 %v6247
        %v6249 = vpop.xlane.xlu0 %6248
        %v6250 = vadd.f32 %v5885, %v5886
        %6251 = vadd.xlane.f32.xlu0 %v6250
        %v6252 = vpop.xlane.xlu0 %6251
        %v6253 = vadd.f32 %v5887, %v5888
        %6254 = vadd.xlane.f32.xlu0 %v6253
        %v6255 = vpop.xlane.xlu0 %6254
        %v6256 = vadd.f32 %v5889, %v5890
        %6257 = vadd.xlane.f32.xlu0 %v6256
        %v6258 = vpop.xlane.xlu0 %6257
        %v6259 = vadd.f32 %v5891, %v5892
        %6260 = vadd.xlane.f32.xlu0 %v6259
        %v6261 = vpop.xlane.xlu0 %6260
        %v6262 = vadd.f32 %v5893, %v5894
        %6263 = vadd.xlane.f32.xlu0 %v6262
        %v6264 = vpop.xlane.xlu0 %6263
        %v6265 = vadd.f32 %v5895, %v5896
        %6266 = vadd.xlane.f32.xlu0 %v6265
        %v6267 = vpop.xlane.xlu0 %6266
        %v6268 = vadd.f32 %v5897, %v5898
        %6269 = vadd.xlane.f32.xlu0 %v6268
        %v6270 = vpop.xlane.xlu0 %6269
        %v6271 = vadd.f32 %v5899, %v5900
        %6272 = vadd.xlane.f32.xlu0 %v6271
        %v6273 = vpop.xlane.xlu0 %6272
        %v6274 = vadd.f32 %v5901, %v5902
        %6275 = vadd.xlane.f32.xlu0 %v6274
        %v6276 = vpop.xlane.xlu0 %6275
        %v6277 = vadd.f32 %v5903, %v5904
        %6278 = vadd.xlane.f32.xlu0 %v6277
        %v6279 = vpop.xlane.xlu0 %6278
        %v6280 = vadd.f32 %v5905, %v5906
        %6281 = vadd.xlane.f32.xlu0 %v6280
        %v6282 = vpop.xlane.xlu0 %6281
        %v6283 = vadd.f32 %v5907, %v5908
        %6284 = vadd.xlane.f32.xlu0 %v6283
        %v6285 = vpop.xlane.xlu0 %6284
        %v6286 = vadd.f32 %v5909, %v5910
        %6287 = vadd.xlane.f32.xlu0 %v6286
        %v6288 = vpop.xlane.xlu0 %6287
        %v6289 = vadd.f32 %v5911, %v5912
        %6290 = vadd.xlane.f32.xlu0 %v6289
        %v6291 = vpop.xlane.xlu0 %6290
        %v6292 = vadd.f32 %v5913, %v5914
        %6293 = vadd.xlane.f32.xlu0 %v6292
        %v6294 = vpop.xlane.xlu0 %6293
        %v6295 = vadd.f32 %v5915, %v5916
        %6296 = vadd.xlane.f32.xlu0 %v6295
        %v6297 = vpop.xlane.xlu0 %6296
        %v6298 = vadd.f32 %v5917, %v5918
        %6299 = vadd.xlane.f32.xlu0 %v6298
        %v6300 = vpop.xlane.xlu0 %6299
        %v6301 = vadd.f32 %v5919, %v5920
        %6302 = vadd.xlane.f32.xlu0 %v6301
        %v6303 = vpop.xlane.xlu0 %6302
        %v6304 = vadd.f32 %v5921, %v5922
        %6305 = vadd.xlane.f32.xlu0 %v6304
        %v6306 = vpop.xlane.xlu0 %6305
        %v6307 = vadd.f32 %v5539, %v5925
        %v6308 = vadd.f32 %v5540, %v5928
        %v6309 = vadd.f32 %v5541, %v5931
        %v6310 = vadd.f32 %v5542, %v5934
        %v6311 = vadd.f32 %v5543, %v5937
        %v6312 = vadd.f32 %v5544, %v5940
        %v6313 = vadd.f32 %v5545, %v5943
        %v6314 = vadd.f32 %v5546, %v5946
        %v6315 = vadd.f32 %v5547, %v5949
        %v6316 = vadd.f32 %v5548, %v5952
        %v6317 = vadd.f32 %v5549, %v5955
        %v6318 = vadd.f32 %v5550, %v5958
        %v6319 = vadd.f32 %v5551, %v5961
        %v6320 = vadd.f32 %v5552, %v5964
        %v6321 = vadd.f32 %v5553, %v5967
        %v6322 = vadd.f32 %v5554, %v5970
        %v6323 = vadd.f32 %v5555, %v5973
        %v6324 = vadd.f32 %v5556, %v5976
        %v6325 = vadd.f32 %v5557, %v5979
        %v6326 = vadd.f32 %v5558, %v5982
        %v6327 = vadd.f32 %v5559, %v5985
        %v6328 = vadd.f32 %v5560, %v5988
        %v6329 = vadd.f32 %v5561, %v5991
        %v6330 = vadd.f32 %v5562, %v5994
        %v6331 = vadd.f32 %v5563, %v5997
        %v6332 = vadd.f32 %v5564, %v6000
        %v6333 = vadd.f32 %v5565, %v6003
        %v6334 = vadd.f32 %v5566, %v6006
        %v6335 = vadd.f32 %v5567, %v6009
        %v6336 = vadd.f32 %v5568, %v6012
        %v6337 = vadd.f32 %v5569, %v6015
        %v6338 = vadd.f32 %v5570, %v6018
        %v6339 = vadd.f32 %v5571, %v6021
        %v6340 = vadd.f32 %v5572, %v6024
        %v6341 = vadd.f32 %v5573, %v6027
        %v6342 = vadd.f32 %v5574, %v6030
        %v6343 = vadd.f32 %v5575, %v6033
        %v6344 = vadd.f32 %v5576, %v6036
        %v6345 = vadd.f32 %v5577, %v6039
        %v6346 = vadd.f32 %v5578, %v6042
        %v6347 = vadd.f32 %v5579, %v6045
        %v6348 = vadd.f32 %v5580, %v6048
        %v6349 = vadd.f32 %v5581, %v6051
        %v6350 = vadd.f32 %v5582, %v6054
        %v6351 = vadd.f32 %v5583, %v6057
        %v6352 = vadd.f32 %v5584, %v6060
        %v6353 = vadd.f32 %v5585, %v6063
        %v6354 = vadd.f32 %v5586, %v6066
        %v6355 = vadd.f32 %v5587, %v6069
        %v6356 = vadd.f32 %v5588, %v6072
        %v6357 = vadd.f32 %v5589, %v6075
        %v6358 = vadd.f32 %v5590, %v6078
        %v6359 = vadd.f32 %v5591, %v6081
        %v6360 = vadd.f32 %v5592, %v6084
        %v6361 = vadd.f32 %v5593, %v6087
        %v6362 = vadd.f32 %v5594, %v6090
        %v6363 = vadd.f32 %v5595, %v6093
        %v6364 = vadd.f32 %v5596, %v6096
        %v6365 = vadd.f32 %v5597, %v6099
        %v6366 = vadd.f32 %v5598, %v6102
        %v6367 = vadd.f32 %v5599, %v6105
        %v6368 = vadd.f32 %v5600, %v6108
        %v6369 = vadd.f32 %v5601, %v6111
        %v6370 = vadd.f32 %v5602, %v6114
        %v6371 = vadd.f32 %v5603, %v6117
        %v6372 = vadd.f32 %v5604, %v6120
        %v6373 = vadd.f32 %v5605, %v6123
        %v6374 = vadd.f32 %v5606, %v6126
        %v6375 = vadd.f32 %v5607, %v6129
        %v6376 = vadd.f32 %v5608, %v6132
        %v6377 = vadd.f32 %v5609, %v6135
        %v6378 = vadd.f32 %v5610, %v6138
        %v6379 = vadd.f32 %v5611, %v6141
        %v6380 = vadd.f32 %v5612, %v6144
        %v6381 = vadd.f32 %v5613, %v6147
        %v6382 = vadd.f32 %v5614, %v6150
        %v6383 = vadd.f32 %v5615, %v6153
        %v6384 = vadd.f32 %v5616, %v6156
        %v6385 = vadd.f32 %v5617, %v6159
        %v6386 = vadd.f32 %v5618, %v6162
        %v6387 = vadd.f32 %v5619, %v6165
        %v6388 = vadd.f32 %v5620, %v6168
        %v6389 = vadd.f32 %v5621, %v6171
        %v6390 = vadd.f32 %v5622, %v6174
        %v6391 = vadd.f32 %v5623, %v6177
        %v6392 = vadd.f32 %v5624, %v6180
        %v6393 = vadd.f32 %v5625, %v6183
        %v6394 = vadd.f32 %v5626, %v6186
        %v6395 = vadd.f32 %v5627, %v6189
        %v6396 = vadd.f32 %v5628, %v6192
        %v6397 = vadd.f32 %v5629, %v6195
        %v6398 = vadd.f32 %v5630, %v6198
        %v6399 = vadd.f32 %v5631, %v6201
        %v6400 = vadd.f32 %v5632, %v6204
        %v6401 = vadd.f32 %v5633, %v6207
        %v6402 = vadd.f32 %v5634, %v6210
        %v6403 = vadd.f32 %v5635, %v6213
        %v6404 = vadd.f32 %v5636, %v6216
        %v6405 = vadd.f32 %v5637, %v6219
        %v6406 = vadd.f32 %v5638, %v6222
        %v6407 = vadd.f32 %v5639, %v6225
        %v6408 = vadd.f32 %v5640, %v6228
        %v6409 = vadd.f32 %v5641, %v6231
        %v6410 = vadd.f32 %v5642, %v6234
        %v6411 = vadd.f32 %v5643, %v6237
        %v6412 = vadd.f32 %v5644, %v6240
        %v6413 = vadd.f32 %v5645, %v6243
        %v6414 = vadd.f32 %v5646, %v6246
        %v6415 = vadd.f32 %v5647, %v6249
        %v6416 = vadd.f32 %v5648, %v6252
        %v6417 = vadd.f32 %v5649, %v6255
        %v6418 = vadd.f32 %v5650, %v6258
        %v6419 = vadd.f32 %v5651, %v6261
        %v6420 = vadd.f32 %v5652, %v6264
        %v6421 = vadd.f32 %v5653, %v6267
        %v6422 = vadd.f32 %v5654, %v6270
        %v6423 = vadd.f32 %v5655, %v6273
        %v6424 = vadd.f32 %v5656, %v6276
        %v6425 = vadd.f32 %v5657, %v6279
        %v6426 = vadd.f32 %v5658, %v6282
        %v6427 = vadd.f32 %v5659, %v6285
        %v6428 = vadd.f32 %v5660, %v6288
        %v6429 = vadd.f32 %v5661, %v6291
        %v6430 = vadd.f32 %v5662, %v6294
        %v6431 = vadd.f32 %v5663, %v6297
        %v6432 = vadd.f32 %v5664, %v6300
        %v6433 = vadd.f32 %v5665, %v6303
        %v6434 = vadd.f32 %v5666, %v6306
        %vm6435 = vcmask 7168
        %6436 = vst.msk [vmem:[#allocation3] sm:$0xff] %vm6435, %v6307
        %6437 = vst.msk [vmem:[#allocation3 + $0x8] sm:$0xff] %vm6435, %v6308
        %6438 = vst.msk [vmem:[#allocation3 + $0x10] sm:$0xff] %vm6435, %v6309
        %6439 = vst.msk [vmem:[#allocation3 + $0x18] sm:$0xff] %vm6435, %v6310
        %6440 = vst.msk [vmem:[#allocation3 + $0x20] sm:$0xff] %vm6435, %v6311
        %6441 = vst.msk [vmem:[#allocation3 + $0x28] sm:$0xff] %vm6435, %v6312
        %6442 = vst.msk [vmem:[#allocation3 + $0x30] sm:$0xff] %vm6435, %v6313
        %6443 = vst.msk [vmem:[#allocation3 + $0x38] sm:$0xff] %vm6435, %v6314
        %6444 = vst.msk [vmem:[#allocation3 + $0x40] sm:$0xff] %vm6435, %v6315
        %6445 = vst.msk [vmem:[#allocation3 + $0x48] sm:$0xff] %vm6435, %v6316
        %6446 = vst.msk [vmem:[#allocation3 + $0x50] sm:$0xff] %vm6435, %v6317
        %6447 = vst.msk [vmem:[#allocation3 + $0x58] sm:$0xff] %vm6435, %v6318
        %6448 = vst.msk [vmem:[#allocation3 + $0x60] sm:$0xff] %vm6435, %v6319
        %6449 = vst.msk [vmem:[#allocation3 + $0x68] sm:$0xff] %vm6435, %v6320
        %6450 = vst.msk [vmem:[#allocation3 + $0x70] sm:$0xff] %vm6435, %v6321
        %6451 = vst.msk [vmem:[#allocation3 + $0x78] sm:$0xff] %vm6435, %v6322
        %6452 = vst.msk [vmem:[#allocation3 + $0x80] sm:$0xff] %vm6435, %v6323
        %6453 = vst.msk [vmem:[#allocation3 + $0x88] sm:$0xff] %vm6435, %v6324
        %6454 = vst.msk [vmem:[#allocation3 + $0x90] sm:$0xff] %vm6435, %v6325
        %6455 = vst.msk [vmem:[#allocation3 + $0x98] sm:$0xff] %vm6435, %v6326
        %6456 = vst.msk [vmem:[#allocation3 + $0xa0] sm:$0xff] %vm6435, %v6327
        %6457 = vst.msk [vmem:[#allocation3 + $0xa8] sm:$0xff] %vm6435, %v6328
        %6458 = vst.msk [vmem:[#allocation3 + $0xb0] sm:$0xff] %vm6435, %v6329
        %6459 = vst.msk [vmem:[#allocation3 + $0xb8] sm:$0xff] %vm6435, %v6330
        %6460 = vst.msk [vmem:[#allocation3 + $0xc0] sm:$0xff] %vm6435, %v6331
        %6461 = vst.msk [vmem:[#allocation3 + $0xc8] sm:$0xff] %vm6435, %v6332
        %6462 = vst.msk [vmem:[#allocation3 + $0xd0] sm:$0xff] %vm6435, %v6333
        %6463 = vst.msk [vmem:[#allocation3 + $0xd8] sm:$0xff] %vm6435, %v6334
        %6464 = vst.msk [vmem:[#allocation3 + $0xe0] sm:$0xff] %vm6435, %v6335
        %6465 = vst.msk [vmem:[#allocation3 + $0xe8] sm:$0xff] %vm6435, %v6336
        %6466 = vst.msk [vmem:[#allocation3 + $0xf0] sm:$0xff] %vm6435, %v6337
        %6467 = vst.msk [vmem:[#allocation3 + $0xf8] sm:$0xff] %vm6435, %v6338
        %6468 = vst.msk [vmem:[#allocation3 + $0x100] sm:$0xff] %vm6435, %v6339
        %6469 = vst.msk [vmem:[#allocation3 + $0x108] sm:$0xff] %vm6435, %v6340
        %6470 = vst.msk [vmem:[#allocation3 + $0x110] sm:$0xff] %vm6435, %v6341
        %6471 = vst.msk [vmem:[#allocation3 + $0x118] sm:$0xff] %vm6435, %v6342
        %6472 = vst.msk [vmem:[#allocation3 + $0x120] sm:$0xff] %vm6435, %v6343
        %6473 = vst.msk [vmem:[#allocation3 + $0x128] sm:$0xff] %vm6435, %v6344
        %6474 = vst.msk [vmem:[#allocation3 + $0x130] sm:$0xff] %vm6435, %v6345
        %6475 = vst.msk [vmem:[#allocation3 + $0x138] sm:$0xff] %vm6435, %v6346
        %6476 = vst.msk [vmem:[#allocation3 + $0x140] sm:$0xff] %vm6435, %v6347
        %6477 = vst.msk [vmem:[#allocation3 + $0x148] sm:$0xff] %vm6435, %v6348
        %6478 = vst.msk [vmem:[#allocation3 + $0x150] sm:$0xff] %vm6435, %v6349
        %6479 = vst.msk [vmem:[#allocation3 + $0x158] sm:$0xff] %vm6435, %v6350
        %6480 = vst.msk [vmem:[#allocation3 + $0x160] sm:$0xff] %vm6435, %v6351
        %6481 = vst.msk [vmem:[#allocation3 + $0x168] sm:$0xff] %vm6435, %v6352
        %6482 = vst.msk [vmem:[#allocation3 + $0x170] sm:$0xff] %vm6435, %v6353
        %6483 = vst.msk [vmem:[#allocation3 + $0x178] sm:$0xff] %vm6435, %v6354
        %6484 = vst.msk [vmem:[#allocation3 + $0x180] sm:$0xff] %vm6435, %v6355
        %6485 = vst.msk [vmem:[#allocation3 + $0x188] sm:$0xff] %vm6435, %v6356
        %6486 = vst.msk [vmem:[#allocation3 + $0x190] sm:$0xff] %vm6435, %v6357
        %6487 = vst.msk [vmem:[#allocation3 + $0x198] sm:$0xff] %vm6435, %v6358
        %6488 = vst.msk [vmem:[#allocation3 + $0x1a0] sm:$0xff] %vm6435, %v6359
        %6489 = vst.msk [vmem:[#allocation3 + $0x1a8] sm:$0xff] %vm6435, %v6360
        %6490 = vst.msk [vmem:[#allocation3 + $0x1b0] sm:$0xff] %vm6435, %v6361
        %6491 = vst.msk [vmem:[#allocation3 + $0x1b8] sm:$0xff] %vm6435, %v6362
        %6492 = vst.msk [vmem:[#allocation3 + $0x1c0] sm:$0xff] %vm6435, %v6363
        %6493 = vst.msk [vmem:[#allocation3 + $0x1c8] sm:$0xff] %vm6435, %v6364
        %6494 = vst.msk [vmem:[#allocation3 + $0x1d0] sm:$0xff] %vm6435, %v6365
        %6495 = vst.msk [vmem:[#allocation3 + $0x1d8] sm:$0xff] %vm6435, %v6366
        %6496 = vst.msk [vmem:[#allocation3 + $0x1e0] sm:$0xff] %vm6435, %v6367
        %6497 = vst.msk [vmem:[#allocation3 + $0x1e8] sm:$0xff] %vm6435, %v6368
        %6498 = vst.msk [vmem:[#allocation3 + $0x1f0] sm:$0xff] %vm6435, %v6369
        %6499 = vst.msk [vmem:[#allocation3 + $0x1f8] sm:$0xff] %vm6435, %v6370
        %6500 = vst.msk [vmem:[#allocation3 + $0x200] sm:$0xff] %vm6435, %v6371
        %6501 = vst.msk [vmem:[#allocation3 + $0x208] sm:$0xff] %vm6435, %v6372
        %6502 = vst.msk [vmem:[#allocation3 + $0x210] sm:$0xff] %vm6435, %v6373
        %6503 = vst.msk [vmem:[#allocation3 + $0x218] sm:$0xff] %vm6435, %v6374
        %6504 = vst.msk [vmem:[#allocation3 + $0x220] sm:$0xff] %vm6435, %v6375
        %6505 = vst.msk [vmem:[#allocation3 + $0x228] sm:$0xff] %vm6435, %v6376
        %6506 = vst.msk [vmem:[#allocation3 + $0x230] sm:$0xff] %vm6435, %v6377
        %6507 = vst.msk [vmem:[#allocation3 + $0x238] sm:$0xff] %vm6435, %v6378
        %6508 = vst.msk [vmem:[#allocation3 + $0x240] sm:$0xff] %vm6435, %v6379
        %6509 = vst.msk [vmem:[#allocation3 + $0x248] sm:$0xff] %vm6435, %v6380
        %6510 = vst.msk [vmem:[#allocation3 + $0x250] sm:$0xff] %vm6435, %v6381
        %6511 = vst.msk [vmem:[#allocation3 + $0x258] sm:$0xff] %vm6435, %v6382
        %6512 = vst.msk [vmem:[#allocation3 + $0x260] sm:$0xff] %vm6435, %v6383
        %6513 = vst.msk [vmem:[#allocation3 + $0x268] sm:$0xff] %vm6435, %v6384
        %6514 = vst.msk [vmem:[#allocation3 + $0x270] sm:$0xff] %vm6435, %v6385
        %6515 = vst.msk [vmem:[#allocation3 + $0x278] sm:$0xff] %vm6435, %v6386
        %6516 = vst.msk [vmem:[#allocation3 + $0x280] sm:$0xff] %vm6435, %v6387
        %6517 = vst.msk [vmem:[#allocation3 + $0x288] sm:$0xff] %vm6435, %v6388
        %6518 = vst.msk [vmem:[#allocation3 + $0x290] sm:$0xff] %vm6435, %v6389
        %6519 = vst.msk [vmem:[#allocation3 + $0x298] sm:$0xff] %vm6435, %v6390
        %6520 = vst.msk [vmem:[#allocation3 + $0x2a0] sm:$0xff] %vm6435, %v6391
        %6521 = vst.msk [vmem:[#allocation3 + $0x2a8] sm:$0xff] %vm6435, %v6392
        %6522 = vst.msk [vmem:[#allocation3 + $0x2b0] sm:$0xff] %vm6435, %v6393
        %6523 = vst.msk [vmem:[#allocation3 + $0x2b8] sm:$0xff] %vm6435, %v6394
        %6524 = vst.msk [vmem:[#allocation3 + $0x2c0] sm:$0xff] %vm6435, %v6395
        %6525 = vst.msk [vmem:[#allocation3 + $0x2c8] sm:$0xff] %vm6435, %v6396
        %6526 = vst.msk [vmem:[#allocation3 + $0x2d0] sm:$0xff] %vm6435, %v6397
        %6527 = vst.msk [vmem:[#allocation3 + $0x2d8] sm:$0xff] %vm6435, %v6398
        %6528 = vst.msk [vmem:[#allocation3 + $0x2e0] sm:$0xff] %vm6435, %v6399
        %6529 = vst.msk [vmem:[#allocation3 + $0x2e8] sm:$0xff] %vm6435, %v6400
        %6530 = vst.msk [vmem:[#allocation3 + $0x2f0] sm:$0xff] %vm6435, %v6401
        %6531 = vst.msk [vmem:[#allocation3 + $0x2f8] sm:$0xff] %vm6435, %v6402
        %6532 = vst.msk [vmem:[#allocation3 + $0x300] sm:$0xff] %vm6435, %v6403
        %6533 = vst.msk [vmem:[#allocation3 + $0x308] sm:$0xff] %vm6435, %v6404
        %6534 = vst.msk [vmem:[#allocation3 + $0x310] sm:$0xff] %vm6435, %v6405
        %6535 = vst.msk [vmem:[#allocation3 + $0x318] sm:$0xff] %vm6435, %v6406
        %6536 = vst.msk [vmem:[#allocation3 + $0x320] sm:$0xff] %vm6435, %v6407
        %6537 = vst.msk [vmem:[#allocation3 + $0x328] sm:$0xff] %vm6435, %v6408
        %6538 = vst.msk [vmem:[#allocation3 + $0x330] sm:$0xff] %vm6435, %v6409
        %6539 = vst.msk [vmem:[#allocation3 + $0x338] sm:$0xff] %vm6435, %v6410
        %6540 = vst.msk [vmem:[#allocation3 + $0x340] sm:$0xff] %vm6435, %v6411
        %6541 = vst.msk [vmem:[#allocation3 + $0x348] sm:$0xff] %vm6435, %v6412
        %6542 = vst.msk [vmem:[#allocation3 + $0x350] sm:$0xff] %vm6435, %v6413
        %6543 = vst.msk [vmem:[#allocation3 + $0x358] sm:$0xff] %vm6435, %v6414
        %6544 = vst.msk [vmem:[#allocation3 + $0x360] sm:$0xff] %vm6435, %v6415
        %6545 = vst.msk [vmem:[#allocation3 + $0x368] sm:$0xff] %vm6435, %v6416
        %6546 = vst.msk [vmem:[#allocation3 + $0x370] sm:$0xff] %vm6435, %v6417
        %6547 = vst.msk [vmem:[#allocation3 + $0x378] sm:$0xff] %vm6435, %v6418
        %6548 = vst.msk [vmem:[#allocation3 + $0x380] sm:$0xff] %vm6435, %v6419
        %6549 = vst.msk [vmem:[#allocation3 + $0x388] sm:$0xff] %vm6435, %v6420
        %6550 = vst.msk [vmem:[#allocation3 + $0x390] sm:$0xff] %vm6435, %v6421
        %6551 = vst.msk [vmem:[#allocation3 + $0x398] sm:$0xff] %vm6435, %v6422
        %6552 = vst.msk [vmem:[#allocation3 + $0x3a0] sm:$0xff] %vm6435, %v6423
        %6553 = vst.msk [vmem:[#allocation3 + $0x3a8] sm:$0xff] %vm6435, %v6424
        %6554 = vst.msk [vmem:[#allocation3 + $0x3b0] sm:$0xff] %vm6435, %v6425
        %6555 = vst.msk [vmem:[#allocation3 + $0x3b8] sm:$0xff] %vm6435, %v6426
        %6556 = vst.msk [vmem:[#allocation3 + $0x3c0] sm:$0xff] %vm6435, %v6427
        %6557 = vst.msk [vmem:[#allocation3 + $0x3c8] sm:$0xff] %vm6435, %v6428
        %6558 = vst.msk [vmem:[#allocation3 + $0x3d0] sm:$0xff] %vm6435, %v6429
        %6559 = vst.msk [vmem:[#allocation3 + $0x3d8] sm:$0xff] %vm6435, %v6430
        %6560 = vst.msk [vmem:[#allocation3 + $0x3e0] sm:$0xff] %vm6435, %v6431
        %6561 = vst.msk [vmem:[#allocation3 + $0x3e8] sm:$0xff] %vm6435, %v6432
        %6562 = vst.msk [vmem:[#allocation3 + $0x3f0] sm:$0xff] %vm6435, %v6433
        %6563 = vst.msk [vmem:[#allocation3 + $0x3f8] sm:$0xff] %vm6435, %v6434
        %v6596 = vunpack.c.l.b16 %v926
        %v6597 = vunpack.c.l.b16 %v927
        %v6598 = vunpack.c.l.b16 %v928
        %v6599 = vunpack.c.l.b16 %v929
        %v6600 = vunpack.c.l.b16 %v930
        %v6601 = vunpack.c.l.b16 %v931
        %v6602 = vunpack.c.l.b16 %v932
        %v6603 = vunpack.c.l.b16 %v933
        %v6604 = vunpack.c.l.b16 %v934
        %v6605 = vunpack.c.l.b16 %v935
        %v6606 = vunpack.c.l.b16 %v936
        %v6607 = vunpack.c.l.b16 %v937
        %v6608 = vunpack.c.l.b16 %v938
        %v6609 = vunpack.c.l.b16 %v939
        %v6610 = vunpack.c.l.b16 %v940
        %v6611 = vunpack.c.l.b16 %v941
        %v6612 = vunpack.c.l.b16 %v942
        %v6613 = vunpack.c.l.b16 %v943
        %v6614 = vunpack.c.l.b16 %v944
        %v6615 = vunpack.c.l.b16 %v945
        %v6616 = vunpack.c.l.b16 %v946
        %v6617 = vunpack.c.l.b16 %v947
        %v6618 = vunpack.c.l.b16 %v948
        %v6619 = vunpack.c.l.b16 %v949
        %v6620 = vunpack.c.l.b16 %v950
        %v6621 = vunpack.c.l.b16 %v951
        %v6622 = vunpack.c.l.b16 %v952
        %v6623 = vunpack.c.l.b16 %v953
        %v6624 = vunpack.c.l.b16 %v954
        %v6625 = vunpack.c.l.b16 %v955
        %v6626 = vunpack.c.l.b16 %v956
        %v6627 = vunpack.c.l.b16 %v957
        %v6628 = vpack.c.b16 %v6597, %v6596
        %v6629 = vpack.c.b16 %v6599, %v6598
        %v6630 = vpack.c.b16 %v6601, %v6600
        %v6631 = vpack.c.b16 %v6603, %v6602
        %v6632 = vpack.c.b16 %v6605, %v6604
        %v6633 = vpack.c.b16 %v6607, %v6606
        %v6634 = vpack.c.b16 %v6609, %v6608
        %v6635 = vpack.c.b16 %v6611, %v6610
        %v6636 = vpack.c.b16 %v6613, %v6612
        %v6637 = vpack.c.b16 %v6615, %v6614
        %v6638 = vpack.c.b16 %v6617, %v6616
        %v6639 = vpack.c.b16 %v6619, %v6618
        %v6640 = vpack.c.b16 %v6621, %v6620
        %v6641 = vpack.c.b16 %v6623, %v6622
        %v6642 = vpack.c.b16 %v6625, %v6624
        %v6643 = vpack.c.b16 %v6627, %v6626
        %6660 = vmatprep.subr.bf16.mxu0 0
        %6661 = vmatpush1.bf16.msra.mxu0 %v6628
        %6662 = vmatprep.subr.bf16.mxu0 0
        %6663 = vmatpush1.bf16.msra.mxu0 %v6629
        %6664 = vmatprep.subr.bf16.mxu0 0
        %6665 = vmatpush1.bf16.msra.mxu0 %v6630
        %6666 = vmatprep.subr.bf16.mxu0 0
        %6667 = vmatpush1.bf16.msra.mxu0 %v6631
        %6668 = vmatprep.subr.bf16.mxu0 0
        %6669 = vmatpush1.bf16.msra.mxu0 %v6632
        %6670 = vmatprep.subr.bf16.mxu0 0
        %6671 = vmatpush1.bf16.msra.mxu0 %v6633
        %6672 = vmatprep.subr.bf16.mxu0 0
        %6673 = vmatpush1.bf16.msra.mxu0 %v6634
        %6674 = vmatprep.subr.bf16.mxu0 0
        %6675 = vmatpush1.bf16.msra.mxu0 %v6635
        %6676 = vmatprep.subr.bf16.mxu0 0
        %6677 = vmatpush1.bf16.msra.mxu0 %v6636
        %6678 = vmatprep.subr.bf16.mxu0 0
        %6679 = vmatpush1.bf16.msra.mxu0 %v6637
        %6680 = vmatprep.subr.bf16.mxu0 0
        %6681 = vmatpush1.bf16.msra.mxu0 %v6638
        %6682 = vmatprep.subr.bf16.mxu0 0
        %6683 = vmatpush1.bf16.msra.mxu0 %v6639
        %6684 = vmatprep.subr.bf16.mxu0 0
        %6685 = vmatpush1.bf16.msra.mxu0 %v6640
        %6686 = vmatprep.subr.bf16.mxu0 0
        %6687 = vmatpush1.bf16.msra.mxu0 %v6641
        %6688 = vmatprep.subr.bf16.mxu0 0
        %6689 = vmatpush1.bf16.msra.mxu0 %v6642
        %6690 = vmatprep.subr.bf16.mxu0 0
        %6691 = vmatpush1.bf16.msra.mxu0 %v6643
        %6692 = vmatprep.mubr.bf16.mxu0 %v5284
        %6693 = vmatmul.mubr.bf16.gmra.mrb[0].mxu0 %v5283
        %v6694 = vpop.f32.mrb[0].mxu0
        %v6695 = vadd.f32 0.0, %v6694
        %v6696 = vpop.f32.mrb[0].mxu0
        %v6697 = vpop.f32.mrb[0].mxu0
        %v6698 = vadd.f32 0.0, %v6697
        %v6699 = vpop.f32.mrb[0].mxu0
        %6700 = vmatprep.mubr.bf16.mxu0 %v5286
        %6701 = vmatmul.mubr.bf16.gmra.mrb[0].mxu0 %v5285
        %v6702 = vpop.f32.mrb[0].mxu0
        %v6703 = vadd.f32 0.0, %v6702
        %v6704 = vpop.f32.mrb[0].mxu0
        %v6705 = vpop.f32.mrb[0].mxu0
        %v6706 = vadd.f32 0.0, %v6705
        %v6707 = vpop.f32.mrb[0].mxu0
        %6708 = vmatprep.mubr.bf16.mxu0 %v5288
        %6709 = vmatmul.mubr.bf16.gmra.mrb[0].mxu0 %v5287
        %v6710 = vpop.f32.mrb[0].mxu0
        %v6711 = vadd.f32 0.0, %v6710
        %v6712 = vpop.f32.mrb[0].mxu0
        %v6713 = vpop.f32.mrb[0].mxu0
        %v6714 = vadd.f32 0.0, %v6713
        %v6715 = vpop.f32.mrb[0].mxu0
        %6716 = vmatprep.mubr.bf16.mxu0 %v5290
        %6717 = vmatmul.mubr.bf16.gmra.mrb[0].mxu0 %v5289
        %v6718 = vpop.f32.mrb[0].mxu0
        %v6719 = vadd.f32 0.0, %v6718
        %v6720 = vpop.f32.mrb[0].mxu0
        %v6721 = vpop.f32.mrb[0].mxu0
        %v6722 = vadd.f32 0.0, %v6721
        %v6723 = vpop.f32.mrb[0].mxu0
        %6724 = vmatprep.mubr.bf16.mxu0 %v5292
        %6725 = vmatmul.mubr.bf16.gmra.mrb[0].mxu0 %v5291
        %v6726 = vpop.f32.mrb[0].mxu0
        %v6727 = vadd.f32 0.0, %v6726
        %v6728 = vpop.f32.mrb[0].mxu0
        %v6729 = vpop.f32.mrb[0].mxu0
        %v6730 = vadd.f32 0.0, %v6729
        %v6731 = vpop.f32.mrb[0].mxu0
        %6732 = vmatprep.mubr.bf16.mxu0 %v5294
        %6733 = vmatmul.mubr.bf16.gmra.mrb[0].mxu0 %v5293
        %v6734 = vpop.f32.mrb[0].mxu0
        %v6735 = vadd.f32 0.0, %v6734
        %v6736 = vpop.f32.mrb[0].mxu0
        %v6737 = vpop.f32.mrb[0].mxu0
        %v6738 = vadd.f32 0.0, %v6737
        %v6739 = vpop.f32.mrb[0].mxu0
        %6740 = vmatprep.mubr.bf16.mxu0 %v5296
        %6741 = vmatmul.mubr.bf16.gmra.mrb[0].mxu0 %v5295
        %v6742 = vpop.f32.mrb[0].mxu0
        %v6743 = vadd.f32 0.0, %v6742
        %v6744 = vpop.f32.mrb[0].mxu0
        %v6745 = vpop.f32.mrb[0].mxu0
        %v6746 = vadd.f32 0.0, %v6745
        %v6747 = vpop.f32.mrb[0].mxu0
        %6748 = vmatprep.mubr.bf16.mxu0 %v5298
        %6749 = vmatmul.mubr.bf16.gmra.mrb[0].mxu0 %v5297
        %v6750 = vpop.f32.mrb[0].mxu0
        %v6751 = vadd.f32 0.0, %v6750
        %v6752 = vpop.f32.mrb[0].mxu0
        %v6753 = vpop.f32.mrb[0].mxu0
        %v6754 = vadd.f32 0.0, %v6753
        %v6755 = vpop.f32.mrb[0].mxu0
        %6756 = vmatprep.mubr.bf16.mxu0 %v5300
        %6757 = vmatmul.mubr.bf16.gmra.mrb[0].mxu0 %v5299
        %v6758 = vpop.f32.mrb[0].mxu0
        %v6759 = vadd.f32 0.0, %v6758
        %v6760 = vpop.f32.mrb[0].mxu0
        %v6761 = vpop.f32.mrb[0].mxu0
        %v6762 = vadd.f32 0.0, %v6761
        %v6763 = vpop.f32.mrb[0].mxu0
        %6764 = vmatprep.mubr.bf16.mxu0 %v5302
        %6765 = vmatmul.mubr.bf16.gmra.mrb[0].mxu0 %v5301
        %v6766 = vpop.f32.mrb[0].mxu0
        %v6767 = vadd.f32 0.0, %v6766
        %v6768 = vpop.f32.mrb[0].mxu0
        %v6769 = vpop.f32.mrb[0].mxu0
        %v6770 = vadd.f32 0.0, %v6769
        %v6771 = vpop.f32.mrb[0].mxu0
        %6772 = vmatprep.mubr.bf16.mxu0 %v5304
        %6773 = vmatmul.mubr.bf16.gmra.mrb[0].mxu0 %v5303
        %v6774 = vpop.f32.mrb[0].mxu0
        %v6775 = vadd.f32 0.0, %v6774
        %v6776 = vpop.f32.mrb[0].mxu0
        %v6777 = vpop.f32.mrb[0].mxu0
        %v6778 = vadd.f32 0.0, %v6777
        %v6779 = vpop.f32.mrb[0].mxu0
        %6780 = vmatprep.mubr.bf16.mxu0 %v5306
        %6781 = vmatmul.mubr.bf16.gmra.mrb[0].mxu0 %v5305
        %v6782 = vpop.f32.mrb[0].mxu0
        %v6783 = vadd.f32 0.0, %v6782
        %v6784 = vpop.f32.mrb[0].mxu0
        %v6785 = vpop.f32.mrb[0].mxu0
        %v6786 = vadd.f32 0.0, %v6785
        %v6787 = vpop.f32.mrb[0].mxu0
        %6788 = vmatprep.mubr.bf16.mxu0 %v5308
        %6789 = vmatmul.mubr.bf16.gmra.mrb[0].mxu0 %v5307
        %v6790 = vpop.f32.mrb[0].mxu0
        %v6791 = vadd.f32 0.0, %v6790
        %v6792 = vpop.f32.mrb[0].mxu0
        %v6793 = vpop.f32.mrb[0].mxu0
        %v6794 = vadd.f32 0.0, %v6793
        %v6795 = vpop.f32.mrb[0].mxu0
        %6796 = vmatprep.mubr.bf16.mxu0 %v5310
        %6797 = vmatmul.mubr.bf16.gmra.mrb[0].mxu0 %v5309
        %v6798 = vpop.f32.mrb[0].mxu0
        %v6799 = vadd.f32 0.0, %v6798
        %v6800 = vpop.f32.mrb[0].mxu0
        %v6801 = vpop.f32.mrb[0].mxu0
        %v6802 = vadd.f32 0.0, %v6801
        %v6803 = vpop.f32.mrb[0].mxu0
        %6804 = vmatprep.mubr.bf16.mxu0 %v5312
        %6805 = vmatmul.mubr.bf16.gmra.mrb[0].mxu0 %v5311
        %v6806 = vpop.f32.mrb[0].mxu0
        %v6807 = vadd.f32 0.0, %v6806
        %v6808 = vpop.f32.mrb[0].mxu0
        %v6809 = vpop.f32.mrb[0].mxu0
        %v6810 = vadd.f32 0.0, %v6809
        %v6811 = vpop.f32.mrb[0].mxu0
        %6812 = vmatprep.mubr.bf16.mxu0 %v5314
        %6813 = vmatmul.mubr.bf16.gmra.mrb[0].mxu0 %v5313
        %v6814 = vpop.f32.mrb[0].mxu0
        %v6815 = vadd.f32 0.0, %v6814
        %v6816 = vpop.f32.mrb[0].mxu0
        %v6817 = vpop.f32.mrb[0].mxu0
        %v6818 = vadd.f32 0.0, %v6817
        %v6819 = vpop.f32.mrb[0].mxu0
        %6820 = vdwg.mxu0
        %v6853 = vunpack.c.l.b16 %v958
        %v6854 = vunpack.c.l.b16 %v959
        %v6855 = vunpack.c.l.b16 %v960
        %v6856 = vunpack.c.l.b16 %v961
        %v6857 = vunpack.c.l.b16 %v962
        %v6858 = vunpack.c.l.b16 %v963
        %v6859 = vunpack.c.l.b16 %v964
        %v6860 = vunpack.c.l.b16 %v965
        %v6861 = vunpack.c.l.b16 %v966
        %v6862 = vunpack.c.l.b16 %v967
        %v6863 = vunpack.c.l.b16 %v968
        %v6864 = vunpack.c.l.b16 %v969
        %v6865 = vunpack.c.l.b16 %v970
        %v6866 = vunpack.c.l.b16 %v971
        %v6867 = vunpack.c.l.b16 %v972
        %v6868 = vunpack.c.l.b16 %v973
        %v6869 = vunpack.c.l.b16 %v974
        %v6870 = vunpack.c.l.b16 %v975
        %v6871 = vunpack.c.l.b16 %v976
        %v6872 = vunpack.c.l.b16 %v977
        %v6873 = vunpack.c.l.b16 %v978
        %v6874 = vunpack.c.l.b16 %v979
        %v6875 = vunpack.c.l.b16 %v980
        %v6876 = vunpack.c.l.b16 %v981
        %v6877 = vunpack.c.l.b16 %v982
        %v6878 = vunpack.c.l.b16 %v983
        %v6879 = vunpack.c.l.b16 %v984
        %v6880 = vunpack.c.l.b16 %v985
        %v6881 = vunpack.c.l.b16 %v986
        %v6882 = vunpack.c.l.b16 %v987
        %v6883 = vunpack.c.l.b16 %v988
        %v6884 = vunpack.c.l.b16 %v989
        %v6885 = vpack.c.b16 %v6854, %v6853
        %v6886 = vpack.c.b16 %v6856, %v6855
        %v6887 = vpack.c.b16 %v6858, %v6857
        %v6888 = vpack.c.b16 %v6860, %v6859
        %v6889 = vpack.c.b16 %v6862, %v6861
        %v6890 = vpack.c.b16 %v6864, %v6863
        %v6891 = vpack.c.b16 %v6866, %v6865
        %v6892 = vpack.c.b16 %v6868, %v6867
        %v6893 = vpack.c.b16 %v6870, %v6869
        %v6894 = vpack.c.b16 %v6872, %v6871
        %v6895 = vpack.c.b16 %v6874, %v6873
        %v6896 = vpack.c.b16 %v6876, %v6875
        %v6897 = vpack.c.b16 %v6878, %v6877
        %v6898 = vpack.c.b16 %v6880, %v6879
        %v6899 = vpack.c.b16 %v6882, %v6881
        %v6900 = vpack.c.b16 %v6884, %v6883
        %6917 = vmatprep.subr.bf16.mxu0 0
        %6918 = vmatpush1.bf16.msra.mxu0 %v6885
        %6919 = vmatprep.subr.bf16.mxu0 0
        %6920 = vmatpush1.bf16.msra.mxu0 %v6886
        %6921 = vmatprep.subr.bf16.mxu0 0
        %6922 = vmatpush1.bf16.msra.mxu0 %v6887
        %6923 = vmatprep.subr.bf16.mxu0 0
        %6924 = vmatpush1.bf16.msra.mxu0 %v6888
        %6925 = vmatprep.subr.bf16.mxu0 0
        %6926 = vmatpush1.bf16.msra.mxu0 %v6889
        %6927 = vmatprep.subr.bf16.mxu0 0
        %6928 = vmatpush1.bf16.msra.mxu0 %v6890
        %6929 = vmatprep.subr.bf16.mxu0 0
        %6930 = vmatpush1.bf16.msra.mxu0 %v6891
        %6931 = vmatprep.subr.bf16.mxu0 0
        %6932 = vmatpush1.bf16.msra.mxu0 %v6892
        %6933 = vmatprep.subr.bf16.mxu0 0
        %6934 = vmatpush1.bf16.msra.mxu0 %v6893
        %6935 = vmatprep.subr.bf16.mxu0 0
        %6936 = vmatpush1.bf16.msra.mxu0 %v6894
        %6937 = vmatprep.subr.bf16.mxu0 0
        %6938 = vmatpush1.bf16.msra.mxu0 %v6895
        %6939 = vmatprep.subr.bf16.mxu0 0
        %6940 = vmatpush1.bf16.msra.mxu0 %v6896
        %6941 = vmatprep.subr.bf16.mxu0 0
        %6942 = vmatpush1.bf16.msra.mxu0 %v6897
        %6943 = vmatprep.subr.bf16.mxu0 0
        %6944 = vmatpush1.bf16.msra.mxu0 %v6898
        %6945 = vmatprep.subr.bf16.mxu0 0
        %6946 = vmatpush1.bf16.msra.mxu0 %v6899
        %6947 = vmatprep.subr.bf16.mxu0 0
        %6948 = vmatpush1.bf16.msra.mxu0 %v6900
        %6949 = vmatprep.mubr.bf16.mxu0 %v5316
        %6950 = vmatmul.mubr.bf16.gmra.mrb[0].mxu0 %v5315
        %v6951 = vpop.f32.mrb[0].mxu0
        %v6952 = vadd.f32 0.0, %v6951
        %v6953 = vpop.f32.mrb[0].mxu0
        %v6954 = vpop.f32.mrb[0].mxu0
        %v6955 = vadd.f32 0.0, %v6954
        %v6956 = vpop.f32.mrb[0].mxu0
        %6957 = vmatprep.mubr.bf16.mxu0 %v5318
        %6958 = vmatmul.mubr.bf16.gmra.mrb[0].mxu0 %v5317
        %v6959 = vpop.f32.mrb[0].mxu0
        %v6960 = vadd.f32 0.0, %v6959
        %v6961 = vpop.f32.mrb[0].mxu0
        %v6962 = vpop.f32.mrb[0].mxu0
        %v6963 = vadd.f32 0.0, %v6962
        %v6964 = vpop.f32.mrb[0].mxu0
        %6965 = vmatprep.mubr.bf16.mxu0 %v5320
        %6966 = vmatmul.mubr.bf16.gmra.mrb[0].mxu0 %v5319
        %v6967 = vpop.f32.mrb[0].mxu0
        %v6968 = vadd.f32 0.0, %v6967
        %v6969 = vpop.f32.mrb[0].mxu0
        %v6970 = vpop.f32.mrb[0].mxu0
        %v6971 = vadd.f32 0.0, %v6970
        %v6972 = vpop.f32.mrb[0].mxu0
        %6973 = vmatprep.mubr.bf16.mxu0 %v5322
        %6974 = vmatmul.mubr.bf16.gmra.mrb[0].mxu0 %v5321
        %v6975 = vpop.f32.mrb[0].mxu0
        %v6976 = vadd.f32 0.0, %v6975
        %v6977 = vpop.f32.mrb[0].mxu0
        %v6978 = vpop.f32.mrb[0].mxu0
        %v6979 = vadd.f32 0.0, %v6978
        %v6980 = vpop.f32.mrb[0].mxu0
        %6981 = vmatprep.mubr.bf16.mxu0 %v5324
        %6982 = vmatmul.mubr.bf16.gmra.mrb[0].mxu0 %v5323
        %v6983 = vpop.f32.mrb[0].mxu0
        %v6984 = vadd.f32 0.0, %v6983
        %v6985 = vpop.f32.mrb[0].mxu0
        %v6986 = vpop.f32.mrb[0].mxu0
        %v6987 = vadd.f32 0.0, %v6986
        %v6988 = vpop.f32.mrb[0].mxu0
        %6989 = vmatprep.mubr.bf16.mxu0 %v5326
        %6990 = vmatmul.mubr.bf16.gmra.mrb[0].mxu0 %v5325
        %v6991 = vpop.f32.mrb[0].mxu0
        %v6992 = vadd.f32 0.0, %v6991
        %v6993 = vpop.f32.mrb[0].mxu0
        %v6994 = vpop.f32.mrb[0].mxu0
        %v6995 = vadd.f32 0.0, %v6994
        %v6996 = vpop.f32.mrb[0].mxu0
        %6997 = vmatprep.mubr.bf16.mxu0 %v5328
        %6998 = vmatmul.mubr.bf16.gmra.mrb[0].mxu0 %v5327
        %v6999 = vpop.f32.mrb[0].mxu0
        %v7000 = vadd.f32 0.0, %v6999
        %v7001 = vpop.f32.mrb[0].mxu0
        %v7002 = vpop.f32.mrb[0].mxu0
        %v7003 = vadd.f32 0.0, %v7002
        %v7004 = vpop.f32.mrb[0].mxu0
        %7005 = vmatprep.mubr.bf16.mxu0 %v5330
        %7006 = vmatmul.mubr.bf16.gmra.mrb[0].mxu0 %v5329
        %v7007 = vpop.f32.mrb[0].mxu0
        %v7008 = vadd.f32 0.0, %v7007
        %v7009 = vpop.f32.mrb[0].mxu0
        %v7010 = vpop.f32.mrb[0].mxu0
        %v7011 = vadd.f32 0.0, %v7010
        %v7012 = vpop.f32.mrb[0].mxu0
        %7013 = vmatprep.mubr.bf16.mxu0 %v5332
        %7014 = vmatmul.mubr.bf16.gmra.mrb[0].mxu0 %v5331
        %v7015 = vpop.f32.mrb[0].mxu0
        %v7016 = vadd.f32 0.0, %v7015
        %v7017 = vpop.f32.mrb[0].mxu0
        %v7018 = vpop.f32.mrb[0].mxu0
        %v7019 = vadd.f32 0.0, %v7018
        %v7020 = vpop.f32.mrb[0].mxu0
        %7021 = vmatprep.mubr.bf16.mxu0 %v5334
        %7022 = vmatmul.mubr.bf16.gmra.mrb[0].mxu0 %v5333
        %v7023 = vpop.f32.mrb[0].mxu0
        %v7024 = vadd.f32 0.0, %v7023
        %v7025 = vpop.f32.mrb[0].mxu0
        %v7026 = vpop.f32.mrb[0].mxu0
        %v7027 = vadd.f32 0.0, %v7026
        %v7028 = vpop.f32.mrb[0].mxu0
        %7029 = vmatprep.mubr.bf16.mxu0 %v5336
        %7030 = vmatmul.mubr.bf16.gmra.mrb[0].mxu0 %v5335
        %v7031 = vpop.f32.mrb[0].mxu0
        %v7032 = vadd.f32 0.0, %v7031
        %v7033 = vpop.f32.mrb[0].mxu0
        %v7034 = vpop.f32.mrb[0].mxu0
        %v7035 = vadd.f32 0.0, %v7034
        %v7036 = vpop.f32.mrb[0].mxu0
        %7037 = vmatprep.mubr.bf16.mxu0 %v5338
        %7038 = vmatmul.mubr.bf16.gmra.mrb[0].mxu0 %v5337
        %v7039 = vpop.f32.mrb[0].mxu0
        %v7040 = vadd.f32 0.0, %v7039
        %v7041 = vpop.f32.mrb[0].mxu0
        %v7042 = vpop.f32.mrb[0].mxu0
        %v7043 = vadd.f32 0.0, %v7042
        %v7044 = vpop.f32.mrb[0].mxu0
        %7045 = vmatprep.mubr.bf16.mxu0 %v5340
        %7046 = vmatmul.mubr.bf16.gmra.mrb[0].mxu0 %v5339
        %v7047 = vpop.f32.mrb[0].mxu0
        %v7048 = vadd.f32 0.0, %v7047
        %v7049 = vpop.f32.mrb[0].mxu0
        %v7050 = vpop.f32.mrb[0].mxu0
        %v7051 = vadd.f32 0.0, %v7050
        %v7052 = vpop.f32.mrb[0].mxu0
        %7053 = vmatprep.mubr.bf16.mxu0 %v5342
        %7054 = vmatmul.mubr.bf16.gmra.mrb[0].mxu0 %v5341
        %v7055 = vpop.f32.mrb[0].mxu0
        %v7056 = vadd.f32 0.0, %v7055
        %v7057 = vpop.f32.mrb[0].mxu0
        %v7058 = vpop.f32.mrb[0].mxu0
        %v7059 = vadd.f32 0.0, %v7058
        %v7060 = vpop.f32.mrb[0].mxu0
        %7061 = vmatprep.mubr.bf16.mxu0 %v5344
        %7062 = vmatmul.mubr.bf16.gmra.mrb[0].mxu0 %v5343
        %v7063 = vpop.f32.mrb[0].mxu0
        %v7064 = vadd.f32 0.0, %v7063
        %v7065 = vpop.f32.mrb[0].mxu0
        %v7066 = vpop.f32.mrb[0].mxu0
        %v7067 = vadd.f32 0.0, %v7066
        %v7068 = vpop.f32.mrb[0].mxu0
        %7069 = vmatprep.mubr.bf16.mxu0 %v5346
        %7070 = vmatmul.mubr.bf16.gmra.mrb[0].mxu0 %v5345
        %v7071 = vpop.f32.mrb[0].mxu0
        %v7072 = vadd.f32 0.0, %v7071
        %v7073 = vpop.f32.mrb[0].mxu0
        %v7074 = vpop.f32.mrb[0].mxu0
        %v7075 = vadd.f32 0.0, %v7074
        %v7076 = vpop.f32.mrb[0].mxu0
        %7077 = vdwg.mxu0
        %v7110 = vunpack.c.l.b16 %v990
        %v7111 = vunpack.c.l.b16 %v991
        %v7112 = vunpack.c.l.b16 %v992
        %v7113 = vunpack.c.l.b16 %v993
        %v7114 = vunpack.c.l.b16 %v994
        %v7115 = vunpack.c.l.b16 %v995
        %v7116 = vunpack.c.l.b16 %v996
        %v7117 = vunpack.c.l.b16 %v997
        %v7118 = vunpack.c.l.b16 %v998
        %v7119 = vunpack.c.l.b16 %v999
        %v7120 = vunpack.c.l.b16 %v1000
        %v7121 = vunpack.c.l.b16 %v1001
        %v7122 = vunpack.c.l.b16 %v1002
        %v7123 = vunpack.c.l.b16 %v1003
        %v7124 = vunpack.c.l.b16 %v1004
        %v7125 = vunpack.c.l.b16 %v1005
        %v7126 = vunpack.c.l.b16 %v1006
        %v7127 = vunpack.c.l.b16 %v1007
        %v7128 = vunpack.c.l.b16 %v1008
        %v7129 = vunpack.c.l.b16 %v1009
        %v7130 = vunpack.c.l.b16 %v1010
        %v7131 = vunpack.c.l.b16 %v1011
        %v7132 = vunpack.c.l.b16 %v1012
        %v7133 = vunpack.c.l.b16 %v1013
        %v7134 = vunpack.c.l.b16 %v1014
        %v7135 = vunpack.c.l.b16 %v1015
        %v7136 = vunpack.c.l.b16 %v1016
        %v7137 = vunpack.c.l.b16 %v1017
        %v7138 = vunpack.c.l.b16 %v1018
        %v7139 = vunpack.c.l.b16 %v1019
        %v7140 = vunpack.c.l.b16 %v1020
        %v7141 = vunpack.c.l.b16 %v1021
        %v7142 = vpack.c.b16 %v7111, %v7110
        %v7143 = vpack.c.b16 %v7113, %v7112
        %v7144 = vpack.c.b16 %v7115, %v7114
        %v7145 = vpack.c.b16 %v7117, %v7116
        %v7146 = vpack.c.b16 %v7119, %v7118
        %v7147 = vpack.c.b16 %v7121, %v7120
        %v7148 = vpack.c.b16 %v7123, %v7122
        %v7149 = vpack.c.b16 %v7125, %v7124
        %v7150 = vpack.c.b16 %v7127, %v7126
        %v7151 = vpack.c.b16 %v7129, %v7128
        %v7152 = vpack.c.b16 %v7131, %v7130
        %v7153 = vpack.c.b16 %v7133, %v7132
        %v7154 = vpack.c.b16 %v7135, %v7134
        %v7155 = vpack.c.b16 %v7137, %v7136
        %v7156 = vpack.c.b16 %v7139, %v7138
        %v7157 = vpack.c.b16 %v7141, %v7140
        %7174 = vmatprep.subr.bf16.mxu0 0
        %7175 = vmatpush1.bf16.msra.mxu0 %v7142
        %7176 = vmatprep.subr.bf16.mxu0 0
        %7177 = vmatpush1.bf16.msra.mxu0 %v7143
        %7178 = vmatprep.subr.bf16.mxu0 0
        %7179 = vmatpush1.bf16.msra.mxu0 %v7144
        %7180 = vmatprep.subr.bf16.mxu0 0
        %7181 = vmatpush1.bf16.msra.mxu0 %v7145
        %7182 = vmatprep.subr.bf16.mxu0 0
        %7183 = vmatpush1.bf16.msra.mxu0 %v7146
        %7184 = vmatprep.subr.bf16.mxu0 0
        %7185 = vmatpush1.bf16.msra.mxu0 %v7147
        %7186 = vmatprep.subr.bf16.mxu0 0
        %7187 = vmatpush1.bf16.msra.mxu0 %v7148
        %7188 = vmatprep.subr.bf16.mxu0 0
        %7189 = vmatpush1.bf16.msra.mxu0 %v7149
        %7190 = vmatprep.subr.bf16.mxu0 0
        %7191 = vmatpush1.bf16.msra.mxu0 %v7150
        %7192 = vmatprep.subr.bf16.mxu0 0
        %7193 = vmatpush1.bf16.msra.mxu0 %v7151
        %7194 = vmatprep.subr.bf16.mxu0 0
        %7195 = vmatpush1.bf16.msra.mxu0 %v7152
        %7196 = vmatprep.subr.bf16.mxu0 0
        %7197 = vmatpush1.bf16.msra.mxu0 %v7153
        %7198 = vmatprep.subr.bf16.mxu0 0
        %7199 = vmatpush1.bf16.msra.mxu0 %v7154
        %7200 = vmatprep.subr.bf16.mxu0 0
        %7201 = vmatpush1.bf16.msra.mxu0 %v7155
        %7202 = vmatprep.subr.bf16.mxu0 0
        %7203 = vmatpush1.bf16.msra.mxu0 %v7156
        %7204 = vmatprep.subr.bf16.mxu0 0
        %7205 = vmatpush1.bf16.msra.mxu0 %v7157
        %7206 = vmatprep.mubr.bf16.mxu0 %v5348
        %7207 = vmatmul.mubr.bf16.gmra.mrb[0].mxu0 %v5347
        %v7208 = vpop.f32.mrb[0].mxu0
        %v7209 = vadd.f32 0.0, %v7208
        %v7210 = vpop.f32.mrb[0].mxu0
        %v7211 = vpop.f32.mrb[0].mxu0
        %v7212 = vadd.f32 0.0, %v7211
        %v7213 = vpop.f32.mrb[0].mxu0
        %7214 = vmatprep.mubr.bf16.mxu0 %v5350
        %7215 = vmatmul.mubr.bf16.gmra.mrb[0].mxu0 %v5349
        %v7216 = vpop.f32.mrb[0].mxu0
        %v7217 = vadd.f32 0.0, %v7216
        %v7218 = vpop.f32.mrb[0].mxu0
        %v7219 = vpop.f32.mrb[0].mxu0
        %v7220 = vadd.f32 0.0, %v7219
        %v7221 = vpop.f32.mrb[0].mxu0
        %7222 = vmatprep.mubr.bf16.mxu0 %v5352
        %7223 = vmatmul.mubr.bf16.gmra.mrb[0].mxu0 %v5351
        %v7224 = vpop.f32.mrb[0].mxu0
        %v7225 = vadd.f32 0.0, %v7224
        %v7226 = vpop.f32.mrb[0].mxu0
        %v7227 = vpop.f32.mrb[0].mxu0
        %v7228 = vadd.f32 0.0, %v7227
        %v7229 = vpop.f32.mrb[0].mxu0
        %7230 = vmatprep.mubr.bf16.mxu0 %v5354
        %7231 = vmatmul.mubr.bf16.gmra.mrb[0].mxu0 %v5353
        %v7232 = vpop.f32.mrb[0].mxu0
        %v7233 = vadd.f32 0.0, %v7232
        %v7234 = vpop.f32.mrb[0].mxu0
        %v7235 = vpop.f32.mrb[0].mxu0
        %v7236 = vadd.f32 0.0, %v7235
        %v7237 = vpop.f32.mrb[0].mxu0
        %7238 = vmatprep.mubr.bf16.mxu0 %v5356
        %7239 = vmatmul.mubr.bf16.gmra.mrb[0].mxu0 %v5355
        %v7240 = vpop.f32.mrb[0].mxu0
        %v7241 = vadd.f32 0.0, %v7240
        %v7242 = vpop.f32.mrb[0].mxu0
        %v7243 = vpop.f32.mrb[0].mxu0
        %v7244 = vadd.f32 0.0, %v7243
        %v7245 = vpop.f32.mrb[0].mxu0
        %7246 = vmatprep.mubr.bf16.mxu0 %v5358
        %7247 = vmatmul.mubr.bf16.gmra.mrb[0].mxu0 %v5357
        %v7248 = vpop.f32.mrb[0].mxu0
        %v7249 = vadd.f32 0.0, %v7248
        %v7250 = vpop.f32.mrb[0].mxu0
        %v7251 = vpop.f32.mrb[0].mxu0
        %v7252 = vadd.f32 0.0, %v7251
        %v7253 = vpop.f32.mrb[0].mxu0
        %7254 = vmatprep.mubr.bf16.mxu0 %v5360
        %7255 = vmatmul.mubr.bf16.gmra.mrb[0].mxu0 %v5359
        %v7256 = vpop.f32.mrb[0].mxu0
        %v7257 = vadd.f32 0.0, %v7256
        %v7258 = vpop.f32.mrb[0].mxu0
        %v7259 = vpop.f32.mrb[0].mxu0
        %v7260 = vadd.f32 0.0, %v7259
        %v7261 = vpop.f32.mrb[0].mxu0
        %7262 = vmatprep.mubr.bf16.mxu0 %v5362
        %7263 = vmatmul.mubr.bf16.gmra.mrb[0].mxu0 %v5361
        %v7264 = vpop.f32.mrb[0].mxu0
        %v7265 = vadd.f32 0.0, %v7264
        %v7266 = vpop.f32.mrb[0].mxu0
        %v7267 = vpop.f32.mrb[0].mxu0
        %v7268 = vadd.f32 0.0, %v7267
        %v7269 = vpop.f32.mrb[0].mxu0
        %7270 = vmatprep.mubr.bf16.mxu0 %v5364
        %7271 = vmatmul.mubr.bf16.gmra.mrb[0].mxu0 %v5363
        %v7272 = vpop.f32.mrb[0].mxu0
        %v7273 = vadd.f32 0.0, %v7272
        %v7274 = vpop.f32.mrb[0].mxu0
        %v7275 = vpop.f32.mrb[0].mxu0
        %v7276 = vadd.f32 0.0, %v7275
        %v7277 = vpop.f32.mrb[0].mxu0
        %7278 = vmatprep.mubr.bf16.mxu0 %v5366
        %7279 = vmatmul.mubr.bf16.gmra.mrb[0].mxu0 %v5365
        %v7280 = vpop.f32.mrb[0].mxu0
        %v7281 = vadd.f32 0.0, %v7280
        %v7282 = vpop.f32.mrb[0].mxu0
        %v7283 = vpop.f32.mrb[0].mxu0
        %v7284 = vadd.f32 0.0, %v7283
        %v7285 = vpop.f32.mrb[0].mxu0
        %7286 = vmatprep.mubr.bf16.mxu0 %v5368
        %7287 = vmatmul.mubr.bf16.gmra.mrb[0].mxu0 %v5367
        %v7288 = vpop.f32.mrb[0].mxu0
        %v7289 = vadd.f32 0.0, %v7288
        %v7290 = vpop.f32.mrb[0].mxu0
        %v7291 = vpop.f32.mrb[0].mxu0
        %v7292 = vadd.f32 0.0, %v7291
        %v7293 = vpop.f32.mrb[0].mxu0
        %7294 = vmatprep.mubr.bf16.mxu0 %v5370
        %7295 = vmatmul.mubr.bf16.gmra.mrb[0].mxu0 %v5369
        %v7296 = vpop.f32.mrb[0].mxu0
        %v7297 = vadd.f32 0.0, %v7296
        %v7298 = vpop.f32.mrb[0].mxu0
        %v7299 = vpop.f32.mrb[0].mxu0
        %v7300 = vadd.f32 0.0, %v7299
        %v7301 = vpop.f32.mrb[0].mxu0
        %7302 = vmatprep.mubr.bf16.mxu0 %v5372
        %7303 = vmatmul.mubr.bf16.gmra.mrb[0].mxu0 %v5371
        %v7304 = vpop.f32.mrb[0].mxu0
        %v7305 = vadd.f32 0.0, %v7304
        %v7306 = vpop.f32.mrb[0].mxu0
        %v7307 = vpop.f32.mrb[0].mxu0
        %v7308 = vadd.f32 0.0, %v7307
        %v7309 = vpop.f32.mrb[0].mxu0
        %7310 = vmatprep.mubr.bf16.mxu0 %v5374
        %7311 = vmatmul.mubr.bf16.gmra.mrb[0].mxu0 %v5373
        %v7312 = vpop.f32.mrb[0].mxu0
        %v7313 = vadd.f32 0.0, %v7312
        %v7314 = vpop.f32.mrb[0].mxu0
        %v7315 = vpop.f32.mrb[0].mxu0
        %v7316 = vadd.f32 0.0, %v7315
        %v7317 = vpop.f32.mrb[0].mxu0
        %7318 = vmatprep.mubr.bf16.mxu0 %v5376
        %7319 = vmatmul.mubr.bf16.gmra.mrb[0].mxu0 %v5375
        %v7320 = vpop.f32.mrb[0].mxu0
        %v7321 = vadd.f32 0.0, %v7320
        %v7322 = vpop.f32.mrb[0].mxu0
        %v7323 = vpop.f32.mrb[0].mxu0
        %v7324 = vadd.f32 0.0, %v7323
        %v7325 = vpop.f32.mrb[0].mxu0
        %7326 = vmatprep.mubr.bf16.mxu0 %v5378
        %7327 = vmatmul.mubr.bf16.gmra.mrb[0].mxu0 %v5377
        %v7328 = vpop.f32.mrb[0].mxu0
        %v7329 = vadd.f32 0.0, %v7328
        %v7330 = vpop.f32.mrb[0].mxu0
        %v7331 = vpop.f32.mrb[0].mxu0
        %v7332 = vadd.f32 0.0, %v7331
        %v7333 = vpop.f32.mrb[0].mxu0
        %7334 = vdwg.mxu0
        %v7367 = vunpack.c.l.b16 %v1022
        %v7368 = vunpack.c.l.b16 %v1023
        %v7369 = vunpack.c.l.b16 %v1024
        %v7370 = vunpack.c.l.b16 %v1025
        %v7371 = vunpack.c.l.b16 %v1026
        %v7372 = vunpack.c.l.b16 %v1027
        %v7373 = vunpack.c.l.b16 %v1028
        %v7374 = vunpack.c.l.b16 %v1029
        %v7375 = vunpack.c.l.b16 %v1030
        %v7376 = vunpack.c.l.b16 %v1031
        %v7377 = vunpack.c.l.b16 %v1032
        %v7378 = vunpack.c.l.b16 %v1033
        %v7379 = vunpack.c.l.b16 %v1034
        %v7380 = vunpack.c.l.b16 %v1035
        %v7381 = vunpack.c.l.b16 %v1036
        %v7382 = vunpack.c.l.b16 %v1037
        %v7383 = vunpack.c.l.b16 %v1038
        %v7384 = vunpack.c.l.b16 %v1039
        %v7385 = vunpack.c.l.b16 %v1040
        %v7386 = vunpack.c.l.b16 %v1041
        %v7387 = vunpack.c.l.b16 %v1042
        %v7388 = vunpack.c.l.b16 %v1043
        %v7389 = vunpack.c.l.b16 %v1044
        %v7390 = vunpack.c.l.b16 %v1045
        %v7391 = vunpack.c.l.b16 %v1046
        %v7392 = vunpack.c.l.b16 %v1047
        %v7393 = vunpack.c.l.b16 %v1048
        %v7394 = vunpack.c.l.b16 %v1049
        %v7395 = vunpack.c.l.b16 %v1050
        %v7396 = vunpack.c.l.b16 %v1051
        %v7397 = vunpack.c.l.b16 %v1052
        %v7398 = vunpack.c.l.b16 %v1053
        %v7399 = vpack.c.b16 %v7368, %v7367
        %v7400 = vpack.c.b16 %v7370, %v7369
        %v7401 = vpack.c.b16 %v7372, %v7371
        %v7402 = vpack.c.b16 %v7374, %v7373
        %v7403 = vpack.c.b16 %v7376, %v7375
        %v7404 = vpack.c.b16 %v7378, %v7377
        %v7405 = vpack.c.b16 %v7380, %v7379
        %v7406 = vpack.c.b16 %v7382, %v7381
        %v7407 = vpack.c.b16 %v7384, %v7383
        %v7408 = vpack.c.b16 %v7386, %v7385
        %v7409 = vpack.c.b16 %v7388, %v7387
        %v7410 = vpack.c.b16 %v7390, %v7389
        %v7411 = vpack.c.b16 %v7392, %v7391
        %v7412 = vpack.c.b16 %v7394, %v7393
        %v7413 = vpack.c.b16 %v7396, %v7395
        %v7414 = vpack.c.b16 %v7398, %v7397
        %7431 = vmatprep.subr.bf16.mxu0 0
        %7432 = vmatpush1.bf16.msra.mxu0 %v7399
        %7433 = vmatprep.subr.bf16.mxu0 0
        %7434 = vmatpush1.bf16.msra.mxu0 %v7400
        %7435 = vmatprep.subr.bf16.mxu0 0
        %7436 = vmatpush1.bf16.msra.mxu0 %v7401
        %7437 = vmatprep.subr.bf16.mxu0 0
        %7438 = vmatpush1.bf16.msra.mxu0 %v7402
        %7439 = vmatprep.subr.bf16.mxu0 0
        %7440 = vmatpush1.bf16.msra.mxu0 %v7403
        %7441 = vmatprep.subr.bf16.mxu0 0
        %7442 = vmatpush1.bf16.msra.mxu0 %v7404
        %7443 = vmatprep.subr.bf16.mxu0 0
        %7444 = vmatpush1.bf16.msra.mxu0 %v7405
        %7445 = vmatprep.subr.bf16.mxu0 0
        %7446 = vmatpush1.bf16.msra.mxu0 %v7406
        %7447 = vmatprep.subr.bf16.mxu0 0
        %7448 = vmatpush1.bf16.msra.mxu0 %v7407
        %7449 = vmatprep.subr.bf16.mxu0 0
        %7450 = vmatpush1.bf16.msra.mxu0 %v7408
        %7451 = vmatprep.subr.bf16.mxu0 0
        %7452 = vmatpush1.bf16.msra.mxu0 %v7409
        %7453 = vmatprep.subr.bf16.mxu0 0
        %7454 = vmatpush1.bf16.msra.mxu0 %v7410
        %7455 = vmatprep.subr.bf16.mxu0 0
        %7456 = vmatpush1.bf16.msra.mxu0 %v7411
        %7457 = vmatprep.subr.bf16.mxu0 0
        %7458 = vmatpush1.bf16.msra.mxu0 %v7412
        %7459 = vmatprep.subr.bf16.mxu0 0
        %7460 = vmatpush1.bf16.msra.mxu0 %v7413
        %7461 = vmatprep.subr.bf16.mxu0 0
        %7462 = vmatpush1.bf16.msra.mxu0 %v7414
        %7463 = vmatprep.mubr.bf16.mxu0 %v5380
        %7464 = vmatmul.mubr.bf16.gmra.mrb[0].mxu0 %v5379
        %v7465 = vpop.f32.mrb[0].mxu0
        %v7466 = vadd.f32 0.0, %v7465
        %v7467 = vpop.f32.mrb[0].mxu0
        %v7468 = vpop.f32.mrb[0].mxu0
        %v7469 = vadd.f32 0.0, %v7468
        %v7470 = vpop.f32.mrb[0].mxu0
        %7471 = vmatprep.mubr.bf16.mxu0 %v5382
        %7472 = vmatmul.mubr.bf16.gmra.mrb[0].mxu0 %v5381
        %v7473 = vpop.f32.mrb[0].mxu0
        %v7474 = vadd.f32 0.0, %v7473
        %v7475 = vpop.f32.mrb[0].mxu0
        %v7476 = vpop.f32.mrb[0].mxu0
        %v7477 = vadd.f32 0.0, %v7476
        %v7478 = vpop.f32.mrb[0].mxu0
        %7479 = vmatprep.mubr.bf16.mxu0 %v5384
        %7480 = vmatmul.mubr.bf16.gmra.mrb[0].mxu0 %v5383
        %v7481 = vpop.f32.mrb[0].mxu0
        %v7482 = vadd.f32 0.0, %v7481
        %v7483 = vpop.f32.mrb[0].mxu0
        %v7484 = vpop.f32.mrb[0].mxu0
        %v7485 = vadd.f32 0.0, %v7484
        %v7486 = vpop.f32.mrb[0].mxu0
        %7487 = vmatprep.mubr.bf16.mxu0 %v5386
        %7488 = vmatmul.mubr.bf16.gmra.mrb[0].mxu0 %v5385
        %v7489 = vpop.f32.mrb[0].mxu0
        %v7490 = vadd.f32 0.0, %v7489
        %v7491 = vpop.f32.mrb[0].mxu0
        %v7492 = vpop.f32.mrb[0].mxu0
        %v7493 = vadd.f32 0.0, %v7492
        %v7494 = vpop.f32.mrb[0].mxu0
        %7495 = vmatprep.mubr.bf16.mxu0 %v5388
        %7496 = vmatmul.mubr.bf16.gmra.mrb[0].mxu0 %v5387
        %v7497 = vpop.f32.mrb[0].mxu0
        %v7498 = vadd.f32 0.0, %v7497
        %v7499 = vpop.f32.mrb[0].mxu0
        %v7500 = vpop.f32.mrb[0].mxu0
        %v7501 = vadd.f32 0.0, %v7500
        %v7502 = vpop.f32.mrb[0].mxu0
        %7503 = vmatprep.mubr.bf16.mxu0 %v5390
        %7504 = vmatmul.mubr.bf16.gmra.mrb[0].mxu0 %v5389
        %v7505 = vpop.f32.mrb[0].mxu0
        %v7506 = vadd.f32 0.0, %v7505
        %v7507 = vpop.f32.mrb[0].mxu0
        %v7508 = vpop.f32.mrb[0].mxu0
        %v7509 = vadd.f32 0.0, %v7508
        %v7510 = vpop.f32.mrb[0].mxu0
        %7511 = vmatprep.mubr.bf16.mxu0 %v5392
        %7512 = vmatmul.mubr.bf16.gmra.mrb[0].mxu0 %v5391
        %v7513 = vpop.f32.mrb[0].mxu0
        %v7514 = vadd.f32 0.0, %v7513
        %v7515 = vpop.f32.mrb[0].mxu0
        %v7516 = vpop.f32.mrb[0].mxu0
        %v7517 = vadd.f32 0.0, %v7516
        %v7518 = vpop.f32.mrb[0].mxu0
        %7519 = vmatprep.mubr.bf16.mxu0 %v5394
        %7520 = vmatmul.mubr.bf16.gmra.mrb[0].mxu0 %v5393
        %v7521 = vpop.f32.mrb[0].mxu0
        %v7522 = vadd.f32 0.0, %v7521
        %v7523 = vpop.f32.mrb[0].mxu0
        %v7524 = vpop.f32.mrb[0].mxu0
        %v7525 = vadd.f32 0.0, %v7524
        %v7526 = vpop.f32.mrb[0].mxu0
        %7527 = vmatprep.mubr.bf16.mxu0 %v5396
        %7528 = vmatmul.mubr.bf16.gmra.mrb[0].mxu0 %v5395
        %v7529 = vpop.f32.mrb[0].mxu0
        %v7530 = vadd.f32 0.0, %v7529
        %v7531 = vpop.f32.mrb[0].mxu0
        %v7532 = vpop.f32.mrb[0].mxu0
        %v7533 = vadd.f32 0.0, %v7532
        %v7534 = vpop.f32.mrb[0].mxu0
        %7535 = vmatprep.mubr.bf16.mxu0 %v5398
        %7536 = vmatmul.mubr.bf16.gmra.mrb[0].mxu0 %v5397
        %v7537 = vpop.f32.mrb[0].mxu0
        %v7538 = vadd.f32 0.0, %v7537
        %v7539 = vpop.f32.mrb[0].mxu0
        %v7540 = vpop.f32.mrb[0].mxu0
        %v7541 = vadd.f32 0.0, %v7540
        %v7542 = vpop.f32.mrb[0].mxu0
        %7543 = vmatprep.mubr.bf16.mxu0 %v5400
        %7544 = vmatmul.mubr.bf16.gmra.mrb[0].mxu0 %v5399
        %v7545 = vpop.f32.mrb[0].mxu0
        %v7546 = vadd.f32 0.0, %v7545
        %v7547 = vpop.f32.mrb[0].mxu0
        %v7548 = vpop.f32.mrb[0].mxu0
        %v7549 = vadd.f32 0.0, %v7548
        %v7550 = vpop.f32.mrb[0].mxu0
        %7551 = vmatprep.mubr.bf16.mxu0 %v5402
        %7552 = vmatmul.mubr.bf16.gmra.mrb[0].mxu0 %v5401
        %v7553 = vpop.f32.mrb[0].mxu0
        %v7554 = vadd.f32 0.0, %v7553
        %v7555 = vpop.f32.mrb[0].mxu0
        %v7556 = vpop.f32.mrb[0].mxu0
        %v7557 = vadd.f32 0.0, %v7556
        %v7558 = vpop.f32.mrb[0].mxu0
        %7559 = vmatprep.mubr.bf16.mxu0 %v5404
        %7560 = vmatmul.mubr.bf16.gmra.mrb[0].mxu0 %v5403
        %v7561 = vpop.f32.mrb[0].mxu0
        %v7562 = vadd.f32 0.0, %v7561
        %v7563 = vpop.f32.mrb[0].mxu0
        %v7564 = vpop.f32.mrb[0].mxu0
        %v7565 = vadd.f32 0.0, %v7564
        %v7566 = vpop.f32.mrb[0].mxu0
        %7567 = vmatprep.mubr.bf16.mxu0 %v5406
        %7568 = vmatmul.mubr.bf16.gmra.mrb[0].mxu0 %v5405
        %v7569 = vpop.f32.mrb[0].mxu0
        %v7570 = vadd.f32 0.0, %v7569
        %v7571 = vpop.f32.mrb[0].mxu0
        %v7572 = vpop.f32.mrb[0].mxu0
        %v7573 = vadd.f32 0.0, %v7572
        %v7574 = vpop.f32.mrb[0].mxu0
        %7575 = vmatprep.mubr.bf16.mxu0 %v5408
        %7576 = vmatmul.mubr.bf16.gmra.mrb[0].mxu0 %v5407
        %v7577 = vpop.f32.mrb[0].mxu0
        %v7578 = vadd.f32 0.0, %v7577
        %v7579 = vpop.f32.mrb[0].mxu0
        %v7580 = vpop.f32.mrb[0].mxu0
        %v7581 = vadd.f32 0.0, %v7580
        %v7582 = vpop.f32.mrb[0].mxu0
        %7583 = vmatprep.mubr.bf16.mxu0 %v5410
        %7584 = vmatmul.mubr.bf16.gmra.mrb[0].mxu0 %v5409
        %v7585 = vpop.f32.mrb[0].mxu0
        %v7586 = vadd.f32 0.0, %v7585
        %v7587 = vpop.f32.mrb[0].mxu0
        %v7588 = vpop.f32.mrb[0].mxu0
        %v7589 = vadd.f32 0.0, %v7588
        %v7590 = vpop.f32.mrb[0].mxu0
        %7591 = vdwg.mxu0
        %v7592 = vld [vmem:[#allocation4] sm:$0xff]
        %v7593 = vld [vmem:[#allocation4 + $0x8] sm:$0xff]
        %v7594 = vld [vmem:[#allocation4 + $0x10] sm:$0xff]
        %v7595 = vld [vmem:[#allocation4 + $0x18] sm:$0xff]
        %v7596 = vld [vmem:[#allocation4 + $0x20] sm:$0xff]
        %v7597 = vld [vmem:[#allocation4 + $0x28] sm:$0xff]
        %v7598 = vld [vmem:[#allocation4 + $0x30] sm:$0xff]
        %v7599 = vld [vmem:[#allocation4 + $0x38] sm:$0xff]
        %v7600 = vld [vmem:[#allocation4 + $0x40] sm:$0xff]
        %v7601 = vld [vmem:[#allocation4 + $0x48] sm:$0xff]
        %v7602 = vld [vmem:[#allocation4 + $0x50] sm:$0xff]
        %v7603 = vld [vmem:[#allocation4 + $0x58] sm:$0xff]
        %v7604 = vld [vmem:[#allocation4 + $0x60] sm:$0xff]
        %v7605 = vld [vmem:[#allocation4 + $0x68] sm:$0xff]
        %v7606 = vld [vmem:[#allocation4 + $0x70] sm:$0xff]
        %v7607 = vld [vmem:[#allocation4 + $0x78] sm:$0xff]
        %v7608 = vld [vmem:[#allocation4 + $0x80] sm:$0xff]
        %v7609 = vld [vmem:[#allocation4 + $0x88] sm:$0xff]
        %v7610 = vld [vmem:[#allocation4 + $0x90] sm:$0xff]
        %v7611 = vld [vmem:[#allocation4 + $0x98] sm:$0xff]
        %v7612 = vld [vmem:[#allocation4 + $0xa0] sm:$0xff]
        %v7613 = vld [vmem:[#allocation4 + $0xa8] sm:$0xff]
        %v7614 = vld [vmem:[#allocation4 + $0xb0] sm:$0xff]
        %v7615 = vld [vmem:[#allocation4 + $0xb8] sm:$0xff]
        %v7616 = vld [vmem:[#allocation4 + $0xc0] sm:$0xff]
        %v7617 = vld [vmem:[#allocation4 + $0xc8] sm:$0xff]
        %v7618 = vld [vmem:[#allocation4 + $0xd0] sm:$0xff]
        %v7619 = vld [vmem:[#allocation4 + $0xd8] sm:$0xff]
        %v7620 = vld [vmem:[#allocation4 + $0xe0] sm:$0xff]
        %v7621 = vld [vmem:[#allocation4 + $0xe8] sm:$0xff]
        %v7622 = vld [vmem:[#allocation4 + $0xf0] sm:$0xff]
        %v7623 = vld [vmem:[#allocation4 + $0xf8] sm:$0xff]
        %v7624 = vld [vmem:[#allocation4 + $0x100] sm:$0xff]
        %v7625 = vld [vmem:[#allocation4 + $0x108] sm:$0xff]
        %v7626 = vld [vmem:[#allocation4 + $0x110] sm:$0xff]
        %v7627 = vld [vmem:[#allocation4 + $0x118] sm:$0xff]
        %v7628 = vld [vmem:[#allocation4 + $0x120] sm:$0xff]
        %v7629 = vld [vmem:[#allocation4 + $0x128] sm:$0xff]
        %v7630 = vld [vmem:[#allocation4 + $0x130] sm:$0xff]
        %v7631 = vld [vmem:[#allocation4 + $0x138] sm:$0xff]
        %v7632 = vld [vmem:[#allocation4 + $0x140] sm:$0xff]
        %v7633 = vld [vmem:[#allocation4 + $0x148] sm:$0xff]
        %v7634 = vld [vmem:[#allocation4 + $0x150] sm:$0xff]
        %v7635 = vld [vmem:[#allocation4 + $0x158] sm:$0xff]
        %v7636 = vld [vmem:[#allocation4 + $0x160] sm:$0xff]
        %v7637 = vld [vmem:[#allocation4 + $0x168] sm:$0xff]
        %v7638 = vld [vmem:[#allocation4 + $0x170] sm:$0xff]
        %v7639 = vld [vmem:[#allocation4 + $0x178] sm:$0xff]
        %v7640 = vld [vmem:[#allocation4 + $0x180] sm:$0xff]
        %v7641 = vld [vmem:[#allocation4 + $0x188] sm:$0xff]
        %v7642 = vld [vmem:[#allocation4 + $0x190] sm:$0xff]
        %v7643 = vld [vmem:[#allocation4 + $0x198] sm:$0xff]
        %v7644 = vld [vmem:[#allocation4 + $0x1a0] sm:$0xff]
        %v7645 = vld [vmem:[#allocation4 + $0x1a8] sm:$0xff]
        %v7646 = vld [vmem:[#allocation4 + $0x1b0] sm:$0xff]
        %v7647 = vld [vmem:[#allocation4 + $0x1b8] sm:$0xff]
        %v7648 = vld [vmem:[#allocation4 + $0x1c0] sm:$0xff]
        %v7649 = vld [vmem:[#allocation4 + $0x1c8] sm:$0xff]
        %v7650 = vld [vmem:[#allocation4 + $0x1d0] sm:$0xff]
        %v7651 = vld [vmem:[#allocation4 + $0x1d8] sm:$0xff]
        %v7652 = vld [vmem:[#allocation4 + $0x1e0] sm:$0xff]
        %v7653 = vld [vmem:[#allocation4 + $0x1e8] sm:$0xff]
        %v7654 = vld [vmem:[#allocation4 + $0x1f0] sm:$0xff]
        %v7655 = vld [vmem:[#allocation4 + $0x1f8] sm:$0xff]
        %v7656 = vld [vmem:[#allocation4 + $0x200] sm:$0xff]
        %v7657 = vld [vmem:[#allocation4 + $0x208] sm:$0xff]
        %v7658 = vld [vmem:[#allocation4 + $0x210] sm:$0xff]
        %v7659 = vld [vmem:[#allocation4 + $0x218] sm:$0xff]
        %v7660 = vld [vmem:[#allocation4 + $0x220] sm:$0xff]
        %v7661 = vld [vmem:[#allocation4 + $0x228] sm:$0xff]
        %v7662 = vld [vmem:[#allocation4 + $0x230] sm:$0xff]
        %v7663 = vld [vmem:[#allocation4 + $0x238] sm:$0xff]
        %v7664 = vld [vmem:[#allocation4 + $0x240] sm:$0xff]
        %v7665 = vld [vmem:[#allocation4 + $0x248] sm:$0xff]
        %v7666 = vld [vmem:[#allocation4 + $0x250] sm:$0xff]
        %v7667 = vld [vmem:[#allocation4 + $0x258] sm:$0xff]
        %v7668 = vld [vmem:[#allocation4 + $0x260] sm:$0xff]
        %v7669 = vld [vmem:[#allocation4 + $0x268] sm:$0xff]
        %v7670 = vld [vmem:[#allocation4 + $0x270] sm:$0xff]
        %v7671 = vld [vmem:[#allocation4 + $0x278] sm:$0xff]
        %v7672 = vld [vmem:[#allocation4 + $0x280] sm:$0xff]
        %v7673 = vld [vmem:[#allocation4 + $0x288] sm:$0xff]
        %v7674 = vld [vmem:[#allocation4 + $0x290] sm:$0xff]
        %v7675 = vld [vmem:[#allocation4 + $0x298] sm:$0xff]
        %v7676 = vld [vmem:[#allocation4 + $0x2a0] sm:$0xff]
        %v7677 = vld [vmem:[#allocation4 + $0x2a8] sm:$0xff]
        %v7678 = vld [vmem:[#allocation4 + $0x2b0] sm:$0xff]
        %v7679 = vld [vmem:[#allocation4 + $0x2b8] sm:$0xff]
        %v7680 = vld [vmem:[#allocation4 + $0x2c0] sm:$0xff]
        %v7681 = vld [vmem:[#allocation4 + $0x2c8] sm:$0xff]
        %v7682 = vld [vmem:[#allocation4 + $0x2d0] sm:$0xff]
        %v7683 = vld [vmem:[#allocation4 + $0x2d8] sm:$0xff]
        %v7684 = vld [vmem:[#allocation4 + $0x2e0] sm:$0xff]
        %v7685 = vld [vmem:[#allocation4 + $0x2e8] sm:$0xff]
        %v7686 = vld [vmem:[#allocation4 + $0x2f0] sm:$0xff]
        %v7687 = vld [vmem:[#allocation4 + $0x2f8] sm:$0xff]
        %v7688 = vld [vmem:[#allocation4 + $0x300] sm:$0xff]
        %v7689 = vld [vmem:[#allocation4 + $0x308] sm:$0xff]
        %v7690 = vld [vmem:[#allocation4 + $0x310] sm:$0xff]
        %v7691 = vld [vmem:[#allocation4 + $0x318] sm:$0xff]
        %v7692 = vld [vmem:[#allocation4 + $0x320] sm:$0xff]
        %v7693 = vld [vmem:[#allocation4 + $0x328] sm:$0xff]
        %v7694 = vld [vmem:[#allocation4 + $0x330] sm:$0xff]
        %v7695 = vld [vmem:[#allocation4 + $0x338] sm:$0xff]
        %v7696 = vld [vmem:[#allocation4 + $0x340] sm:$0xff]
        %v7697 = vld [vmem:[#allocation4 + $0x348] sm:$0xff]
        %v7698 = vld [vmem:[#allocation4 + $0x350] sm:$0xff]
        %v7699 = vld [vmem:[#allocation4 + $0x358] sm:$0xff]
        %v7700 = vld [vmem:[#allocation4 + $0x360] sm:$0xff]
        %v7701 = vld [vmem:[#allocation4 + $0x368] sm:$0xff]
        %v7702 = vld [vmem:[#allocation4 + $0x370] sm:$0xff]
        %v7703 = vld [vmem:[#allocation4 + $0x378] sm:$0xff]
        %v7704 = vld [vmem:[#allocation4 + $0x380] sm:$0xff]
        %v7705 = vld [vmem:[#allocation4 + $0x388] sm:$0xff]
        %v7706 = vld [vmem:[#allocation4 + $0x390] sm:$0xff]
        %v7707 = vld [vmem:[#allocation4 + $0x398] sm:$0xff]
        %v7708 = vld [vmem:[#allocation4 + $0x3a0] sm:$0xff]
        %v7709 = vld [vmem:[#allocation4 + $0x3a8] sm:$0xff]
        %v7710 = vld [vmem:[#allocation4 + $0x3b0] sm:$0xff]
        %v7711 = vld [vmem:[#allocation4 + $0x3b8] sm:$0xff]
        %v7712 = vld [vmem:[#allocation4 + $0x3c0] sm:$0xff]
        %v7713 = vld [vmem:[#allocation4 + $0x3c8] sm:$0xff]
        %v7714 = vld [vmem:[#allocation4 + $0x3d0] sm:$0xff]
        %v7715 = vld [vmem:[#allocation4 + $0x3d8] sm:$0xff]
        %v7716 = vld [vmem:[#allocation4 + $0x3e0] sm:$0xff]
        %v7717 = vld [vmem:[#allocation4 + $0x3e8] sm:$0xff]
        %v7718 = vld [vmem:[#allocation4 + $0x3f0] sm:$0xff]
        %v7719 = vld [vmem:[#allocation4 + $0x3f8] sm:$0xff]
        %7721 = vset.pattern.permute.xlu0 0
        %7722 = vperm.xlu0 %7721, %v3620
        %v7723 = vpop.permute.xlu0 %7722
        %7726 = vset.pattern.permute.xlu0 0
        %7727 = vperm.xlu0 %7726, %v3622
        %v7728 = vpop.permute.xlu0 %7727
        %7731 = vset.pattern.permute.xlu0 0
        %7732 = vperm.xlu0 %7731, %v3624
        %v7733 = vpop.permute.xlu0 %7732
        %7736 = vset.pattern.permute.xlu0 0
        %7737 = vperm.xlu0 %7736, %v3626
        %v7738 = vpop.permute.xlu0 %7737
        %7741 = vset.pattern.permute.xlu0 0
        %7742 = vperm.xlu0 %7741, %v3628
        %v7743 = vpop.permute.xlu0 %7742
        %7746 = vset.pattern.permute.xlu0 0
        %7747 = vperm.xlu0 %7746, %v3630
        %v7748 = vpop.permute.xlu0 %7747
        %7751 = vset.pattern.permute.xlu0 0
        %7752 = vperm.xlu0 %7751, %v3632
        %v7753 = vpop.permute.xlu0 %7752
        %7756 = vset.pattern.permute.xlu0 0
        %7757 = vperm.xlu0 %7756, %v3634
        %v7758 = vpop.permute.xlu0 %7757
        %7761 = vset.pattern.permute.xlu0 0
        %7762 = vperm.xlu0 %7761, %v3636
        %v7763 = vpop.permute.xlu0 %7762
        %7766 = vset.pattern.permute.xlu0 0
        %7767 = vperm.xlu0 %7766, %v3638
        %v7768 = vpop.permute.xlu0 %7767
        %7771 = vset.pattern.permute.xlu0 0
        %7772 = vperm.xlu0 %7771, %v3640
        %v7773 = vpop.permute.xlu0 %7772
        %7776 = vset.pattern.permute.xlu0 0
        %7777 = vperm.xlu0 %7776, %v3642
        %v7778 = vpop.permute.xlu0 %7777
        %7781 = vset.pattern.permute.xlu0 0
        %7782 = vperm.xlu0 %7781, %v3644
        %v7783 = vpop.permute.xlu0 %7782
        %7786 = vset.pattern.permute.xlu0 0
        %7787 = vperm.xlu0 %7786, %v3646
        %v7788 = vpop.permute.xlu0 %7787
        %7791 = vset.pattern.permute.xlu0 0
        %7792 = vperm.xlu0 %7791, %v3648
        %v7793 = vpop.permute.xlu0 %7792
        %7796 = vset.pattern.permute.xlu0 0
        %7797 = vperm.xlu0 %7796, %v3650
        %v7798 = vpop.permute.xlu0 %7797
        %7801 = vset.pattern.permute.xlu0 0
        %7802 = vperm.xlu0 %7801, %v3652
        %v7803 = vpop.permute.xlu0 %7802
        %7806 = vset.pattern.permute.xlu0 0
        %7807 = vperm.xlu0 %7806, %v3654
        %v7808 = vpop.permute.xlu0 %7807
        %7811 = vset.pattern.permute.xlu0 0
        %7812 = vperm.xlu0 %7811, %v3656
        %v7813 = vpop.permute.xlu0 %7812
        %7816 = vset.pattern.permute.xlu0 0
        %7817 = vperm.xlu0 %7816, %v3658
        %v7818 = vpop.permute.xlu0 %7817
        %7821 = vset.pattern.permute.xlu0 0
        %7822 = vperm.xlu0 %7821, %v3660
        %v7823 = vpop.permute.xlu0 %7822
        %7826 = vset.pattern.permute.xlu0 0
        %7827 = vperm.xlu0 %7826, %v3662
        %v7828 = vpop.permute.xlu0 %7827
        %7831 = vset.pattern.permute.xlu0 0
        %7832 = vperm.xlu0 %7831, %v3664
        %v7833 = vpop.permute.xlu0 %7832
        %7836 = vset.pattern.permute.xlu0 0
        %7837 = vperm.xlu0 %7836, %v3666
        %v7838 = vpop.permute.xlu0 %7837
        %7841 = vset.pattern.permute.xlu0 0
        %7842 = vperm.xlu0 %7841, %v3668
        %v7843 = vpop.permute.xlu0 %7842
        %7846 = vset.pattern.permute.xlu0 0
        %7847 = vperm.xlu0 %7846, %v3670
        %v7848 = vpop.permute.xlu0 %7847
        %7851 = vset.pattern.permute.xlu0 0
        %7852 = vperm.xlu0 %7851, %v3672
        %v7853 = vpop.permute.xlu0 %7852
        %7856 = vset.pattern.permute.xlu0 0
        %7857 = vperm.xlu0 %7856, %v3674
        %v7858 = vpop.permute.xlu0 %7857
        %7861 = vset.pattern.permute.xlu0 0
        %7862 = vperm.xlu0 %7861, %v3676
        %v7863 = vpop.permute.xlu0 %7862
        %7866 = vset.pattern.permute.xlu0 0
        %7867 = vperm.xlu0 %7866, %v3678
        %v7868 = vpop.permute.xlu0 %7867
        %7871 = vset.pattern.permute.xlu0 0
        %7872 = vperm.xlu0 %7871, %v3680
        %v7873 = vpop.permute.xlu0 %7872
        %7876 = vset.pattern.permute.xlu0 0
        %7877 = vperm.xlu0 %7876, %v3682
        %v7878 = vpop.permute.xlu0 %7877
        %7881 = vset.pattern.permute.xlu0 0
        %7882 = vperm.xlu0 %7881, %v3684
        %v7883 = vpop.permute.xlu0 %7882
        %7886 = vset.pattern.permute.xlu0 0
        %7887 = vperm.xlu0 %7886, %v3686
        %v7888 = vpop.permute.xlu0 %7887
        %7891 = vset.pattern.permute.xlu0 0
        %7892 = vperm.xlu0 %7891, %v3688
        %v7893 = vpop.permute.xlu0 %7892
        %7896 = vset.pattern.permute.xlu0 0
        %7897 = vperm.xlu0 %7896, %v3690
        %v7898 = vpop.permute.xlu0 %7897
        %7901 = vset.pattern.permute.xlu0 0
        %7902 = vperm.xlu0 %7901, %v3692
        %v7903 = vpop.permute.xlu0 %7902
        %7906 = vset.pattern.permute.xlu0 0
        %7907 = vperm.xlu0 %7906, %v3694
        %v7908 = vpop.permute.xlu0 %7907
        %7911 = vset.pattern.permute.xlu0 0
        %7912 = vperm.xlu0 %7911, %v3696
        %v7913 = vpop.permute.xlu0 %7912
        %7916 = vset.pattern.permute.xlu0 0
        %7917 = vperm.xlu0 %7916, %v3698
        %v7918 = vpop.permute.xlu0 %7917
        %7921 = vset.pattern.permute.xlu0 0
        %7922 = vperm.xlu0 %7921, %v3700
        %v7923 = vpop.permute.xlu0 %7922
        %7926 = vset.pattern.permute.xlu0 0
        %7927 = vperm.xlu0 %7926, %v3702
        %v7928 = vpop.permute.xlu0 %7927
        %7931 = vset.pattern.permute.xlu0 0
        %7932 = vperm.xlu0 %7931, %v3704
        %v7933 = vpop.permute.xlu0 %7932
        %7936 = vset.pattern.permute.xlu0 0
        %7937 = vperm.xlu0 %7936, %v3706
        %v7938 = vpop.permute.xlu0 %7937
        %7941 = vset.pattern.permute.xlu0 0
        %7942 = vperm.xlu0 %7941, %v3708
        %v7943 = vpop.permute.xlu0 %7942
        %7946 = vset.pattern.permute.xlu0 0
        %7947 = vperm.xlu0 %7946, %v3710
        %v7948 = vpop.permute.xlu0 %7947
        %7951 = vset.pattern.permute.xlu0 0
        %7952 = vperm.xlu0 %7951, %v3712
        %v7953 = vpop.permute.xlu0 %7952
        %7956 = vset.pattern.permute.xlu0 0
        %7957 = vperm.xlu0 %7956, %v3714
        %v7958 = vpop.permute.xlu0 %7957
        %7961 = vset.pattern.permute.xlu0 0
        %7962 = vperm.xlu0 %7961, %v3716
        %v7963 = vpop.permute.xlu0 %7962
        %7966 = vset.pattern.permute.xlu0 0
        %7967 = vperm.xlu0 %7966, %v3718
        %v7968 = vpop.permute.xlu0 %7967
        %7971 = vset.pattern.permute.xlu0 0
        %7972 = vperm.xlu0 %7971, %v3720
        %v7973 = vpop.permute.xlu0 %7972
        %7976 = vset.pattern.permute.xlu0 0
        %7977 = vperm.xlu0 %7976, %v3722
        %v7978 = vpop.permute.xlu0 %7977
        %7981 = vset.pattern.permute.xlu0 0
        %7982 = vperm.xlu0 %7981, %v3724
        %v7983 = vpop.permute.xlu0 %7982
        %7986 = vset.pattern.permute.xlu0 0
        %7987 = vperm.xlu0 %7986, %v3726
        %v7988 = vpop.permute.xlu0 %7987
        %7991 = vset.pattern.permute.xlu0 0
        %7992 = vperm.xlu0 %7991, %v3728
        %v7993 = vpop.permute.xlu0 %7992
        %7996 = vset.pattern.permute.xlu0 0
        %7997 = vperm.xlu0 %7996, %v3730
        %v7998 = vpop.permute.xlu0 %7997
        %8001 = vset.pattern.permute.xlu0 0
        %8002 = vperm.xlu0 %8001, %v3732
        %v8003 = vpop.permute.xlu0 %8002
        %8006 = vset.pattern.permute.xlu0 0
        %8007 = vperm.xlu0 %8006, %v3734
        %v8008 = vpop.permute.xlu0 %8007
        %8011 = vset.pattern.permute.xlu0 0
        %8012 = vperm.xlu0 %8011, %v3736
        %v8013 = vpop.permute.xlu0 %8012
        %8016 = vset.pattern.permute.xlu0 0
        %8017 = vperm.xlu0 %8016, %v3738
        %v8018 = vpop.permute.xlu0 %8017
        %8021 = vset.pattern.permute.xlu0 0
        %8022 = vperm.xlu0 %8021, %v3740
        %v8023 = vpop.permute.xlu0 %8022
        %8026 = vset.pattern.permute.xlu0 0
        %8027 = vperm.xlu0 %8026, %v3742
        %v8028 = vpop.permute.xlu0 %8027
        %8031 = vset.pattern.permute.xlu0 0
        %8032 = vperm.xlu0 %8031, %v3744
        %v8033 = vpop.permute.xlu0 %8032
        %8036 = vset.pattern.permute.xlu0 0
        %8037 = vperm.xlu0 %8036, %v3746
        %v8038 = vpop.permute.xlu0 %8037
        %8041 = vset.pattern.permute.xlu0 0
        %8042 = vperm.xlu0 %8041, %v3748
        %v8043 = vpop.permute.xlu0 %8042
        %8046 = vset.pattern.permute.xlu0 0
        %8047 = vperm.xlu0 %8046, %v3750
        %v8048 = vpop.permute.xlu0 %8047
        %8051 = vset.pattern.permute.xlu0 0
        %8052 = vperm.xlu0 %8051, %v3752
        %v8053 = vpop.permute.xlu0 %8052
        %8056 = vset.pattern.permute.xlu0 0
        %8057 = vperm.xlu0 %8056, %v3754
        %v8058 = vpop.permute.xlu0 %8057
        %8061 = vset.pattern.permute.xlu0 0
        %8062 = vperm.xlu0 %8061, %v3756
        %v8063 = vpop.permute.xlu0 %8062
        %8066 = vset.pattern.permute.xlu0 0
        %8067 = vperm.xlu0 %8066, %v3758
        %v8068 = vpop.permute.xlu0 %8067
        %8071 = vset.pattern.permute.xlu0 0
        %8072 = vperm.xlu0 %8071, %v3760
        %v8073 = vpop.permute.xlu0 %8072
        %8076 = vset.pattern.permute.xlu0 0
        %8077 = vperm.xlu0 %8076, %v3762
        %v8078 = vpop.permute.xlu0 %8077
        %8081 = vset.pattern.permute.xlu0 0
        %8082 = vperm.xlu0 %8081, %v3764
        %v8083 = vpop.permute.xlu0 %8082
        %8086 = vset.pattern.permute.xlu0 0
        %8087 = vperm.xlu0 %8086, %v3766
        %v8088 = vpop.permute.xlu0 %8087
        %8091 = vset.pattern.permute.xlu0 0
        %8092 = vperm.xlu0 %8091, %v3768
        %v8093 = vpop.permute.xlu0 %8092
        %8096 = vset.pattern.permute.xlu0 0
        %8097 = vperm.xlu0 %8096, %v3770
        %v8098 = vpop.permute.xlu0 %8097
        %8101 = vset.pattern.permute.xlu0 0
        %8102 = vperm.xlu0 %8101, %v3772
        %v8103 = vpop.permute.xlu0 %8102
        %8106 = vset.pattern.permute.xlu0 0
        %8107 = vperm.xlu0 %8106, %v3774
        %v8108 = vpop.permute.xlu0 %8107
        %8111 = vset.pattern.permute.xlu0 0
        %8112 = vperm.xlu0 %8111, %v3776
        %v8113 = vpop.permute.xlu0 %8112
        %8116 = vset.pattern.permute.xlu0 0
        %8117 = vperm.xlu0 %8116, %v3778
        %v8118 = vpop.permute.xlu0 %8117
        %8121 = vset.pattern.permute.xlu0 0
        %8122 = vperm.xlu0 %8121, %v3780
        %v8123 = vpop.permute.xlu0 %8122
        %8126 = vset.pattern.permute.xlu0 0
        %8127 = vperm.xlu0 %8126, %v3782
        %v8128 = vpop.permute.xlu0 %8127
        %8131 = vset.pattern.permute.xlu0 0
        %8132 = vperm.xlu0 %8131, %v3784
        %v8133 = vpop.permute.xlu0 %8132
        %8136 = vset.pattern.permute.xlu0 0
        %8137 = vperm.xlu0 %8136, %v3786
        %v8138 = vpop.permute.xlu0 %8137
        %8141 = vset.pattern.permute.xlu0 0
        %8142 = vperm.xlu0 %8141, %v3788
        %v8143 = vpop.permute.xlu0 %8142
        %8146 = vset.pattern.permute.xlu0 0
        %8147 = vperm.xlu0 %8146, %v3790
        %v8148 = vpop.permute.xlu0 %8147
        %8151 = vset.pattern.permute.xlu0 0
        %8152 = vperm.xlu0 %8151, %v3792
        %v8153 = vpop.permute.xlu0 %8152
        %8156 = vset.pattern.permute.xlu0 0
        %8157 = vperm.xlu0 %8156, %v3794
        %v8158 = vpop.permute.xlu0 %8157
        %8161 = vset.pattern.permute.xlu0 0
        %8162 = vperm.xlu0 %8161, %v3796
        %v8163 = vpop.permute.xlu0 %8162
        %8166 = vset.pattern.permute.xlu0 0
        %8167 = vperm.xlu0 %8166, %v3798
        %v8168 = vpop.permute.xlu0 %8167
        %8171 = vset.pattern.permute.xlu0 0
        %8172 = vperm.xlu0 %8171, %v3800
        %v8173 = vpop.permute.xlu0 %8172
        %8176 = vset.pattern.permute.xlu0 0
        %8177 = vperm.xlu0 %8176, %v3802
        %v8178 = vpop.permute.xlu0 %8177
        %8181 = vset.pattern.permute.xlu0 0
        %8182 = vperm.xlu0 %8181, %v3804
        %v8183 = vpop.permute.xlu0 %8182
        %8186 = vset.pattern.permute.xlu0 0
        %8187 = vperm.xlu0 %8186, %v3806
        %v8188 = vpop.permute.xlu0 %8187
        %8191 = vset.pattern.permute.xlu0 0
        %8192 = vperm.xlu0 %8191, %v3808
        %v8193 = vpop.permute.xlu0 %8192
        %8196 = vset.pattern.permute.xlu0 0
        %8197 = vperm.xlu0 %8196, %v3810
        %v8198 = vpop.permute.xlu0 %8197
        %8201 = vset.pattern.permute.xlu0 0
        %8202 = vperm.xlu0 %8201, %v3812
        %v8203 = vpop.permute.xlu0 %8202
        %8206 = vset.pattern.permute.xlu0 0
        %8207 = vperm.xlu0 %8206, %v3814
        %v8208 = vpop.permute.xlu0 %8207
        %8211 = vset.pattern.permute.xlu0 0
        %8212 = vperm.xlu0 %8211, %v3816
        %v8213 = vpop.permute.xlu0 %8212
        %8216 = vset.pattern.permute.xlu0 0
        %8217 = vperm.xlu0 %8216, %v3818
        %v8218 = vpop.permute.xlu0 %8217
        %8221 = vset.pattern.permute.xlu0 0
        %8222 = vperm.xlu0 %8221, %v3820
        %v8223 = vpop.permute.xlu0 %8222
        %8226 = vset.pattern.permute.xlu0 0
        %8227 = vperm.xlu0 %8226, %v3822
        %v8228 = vpop.permute.xlu0 %8227
        %8231 = vset.pattern.permute.xlu0 0
        %8232 = vperm.xlu0 %8231, %v3824
        %v8233 = vpop.permute.xlu0 %8232
        %8236 = vset.pattern.permute.xlu0 0
        %8237 = vperm.xlu0 %8236, %v3826
        %v8238 = vpop.permute.xlu0 %8237
        %8241 = vset.pattern.permute.xlu0 0
        %8242 = vperm.xlu0 %8241, %v3828
        %v8243 = vpop.permute.xlu0 %8242
        %8246 = vset.pattern.permute.xlu0 0
        %8247 = vperm.xlu0 %8246, %v3830
        %v8248 = vpop.permute.xlu0 %8247
        %8251 = vset.pattern.permute.xlu0 0
        %8252 = vperm.xlu0 %8251, %v3832
        %v8253 = vpop.permute.xlu0 %8252
        %8256 = vset.pattern.permute.xlu0 0
        %8257 = vperm.xlu0 %8256, %v3834
        %v8258 = vpop.permute.xlu0 %8257
        %8261 = vset.pattern.permute.xlu0 0
        %8262 = vperm.xlu0 %8261, %v3836
        %v8263 = vpop.permute.xlu0 %8262
        %8266 = vset.pattern.permute.xlu0 0
        %8267 = vperm.xlu0 %8266, %v3838
        %v8268 = vpop.permute.xlu0 %8267
        %8271 = vset.pattern.permute.xlu0 0
        %8272 = vperm.xlu0 %8271, %v3840
        %v8273 = vpop.permute.xlu0 %8272
        %8276 = vset.pattern.permute.xlu0 0
        %8277 = vperm.xlu0 %8276, %v3842
        %v8278 = vpop.permute.xlu0 %8277
        %8281 = vset.pattern.permute.xlu0 0
        %8282 = vperm.xlu0 %8281, %v3844
        %v8283 = vpop.permute.xlu0 %8282
        %8286 = vset.pattern.permute.xlu0 0
        %8287 = vperm.xlu0 %8286, %v3846
        %v8288 = vpop.permute.xlu0 %8287
        %8291 = vset.pattern.permute.xlu0 0
        %8292 = vperm.xlu0 %8291, %v3848
        %v8293 = vpop.permute.xlu0 %8292
        %8296 = vset.pattern.permute.xlu0 0
        %8297 = vperm.xlu0 %8296, %v3850
        %v8298 = vpop.permute.xlu0 %8297
        %8301 = vset.pattern.permute.xlu0 0
        %8302 = vperm.xlu0 %8301, %v3852
        %v8303 = vpop.permute.xlu0 %8302
        %8306 = vset.pattern.permute.xlu0 0
        %8307 = vperm.xlu0 %8306, %v3854
        %v8308 = vpop.permute.xlu0 %8307
        %8311 = vset.pattern.permute.xlu0 0
        %8312 = vperm.xlu0 %8311, %v3856
        %v8313 = vpop.permute.xlu0 %8312
        %8316 = vset.pattern.permute.xlu0 0
        %8317 = vperm.xlu0 %8316, %v3858
        %v8318 = vpop.permute.xlu0 %8317
        %8321 = vset.pattern.permute.xlu0 0
        %8322 = vperm.xlu0 %8321, %v3860
        %v8323 = vpop.permute.xlu0 %8322
        %8326 = vset.pattern.permute.xlu0 0
        %8327 = vperm.xlu0 %8326, %v3862
        %v8328 = vpop.permute.xlu0 %8327
        %8331 = vset.pattern.permute.xlu0 0
        %8332 = vperm.xlu0 %8331, %v3864
        %v8333 = vpop.permute.xlu0 %8332
        %8336 = vset.pattern.permute.xlu0 0
        %8337 = vperm.xlu0 %8336, %v3866
        %v8338 = vpop.permute.xlu0 %8337
        %8341 = vset.pattern.permute.xlu0 0
        %8342 = vperm.xlu0 %8341, %v3868
        %v8343 = vpop.permute.xlu0 %8342
        %8346 = vset.pattern.permute.xlu0 0
        %8347 = vperm.xlu0 %8346, %v3870
        %v8348 = vpop.permute.xlu0 %8347
        %8351 = vset.pattern.permute.xlu0 0
        %8352 = vperm.xlu0 %8351, %v3872
        %v8353 = vpop.permute.xlu0 %8352
        %8356 = vset.pattern.permute.xlu0 0
        %8357 = vperm.xlu0 %8356, %v3874
        %v8358 = vpop.permute.xlu0 %8357
        %v8360 = vmul.f32 %v7723, %v7592
        %v8361 = vmul.f32 %v7728, %v7593
        %v8362 = vmul.f32 %v7733, %v7594
        %v8363 = vmul.f32 %v7738, %v7595
        %v8364 = vmul.f32 %v7743, %v7596
        %v8365 = vmul.f32 %v7748, %v7597
        %v8366 = vmul.f32 %v7753, %v7598
        %v8367 = vmul.f32 %v7758, %v7599
        %v8368 = vmul.f32 %v7763, %v7600
        %v8369 = vmul.f32 %v7768, %v7601
        %v8370 = vmul.f32 %v7773, %v7602
        %v8371 = vmul.f32 %v7778, %v7603
        %v8372 = vmul.f32 %v7783, %v7604
        %v8373 = vmul.f32 %v7788, %v7605
        %v8374 = vmul.f32 %v7793, %v7606
        %v8375 = vmul.f32 %v7798, %v7607
        %v8376 = vmul.f32 %v7803, %v7608
        %v8377 = vmul.f32 %v7808, %v7609
        %v8378 = vmul.f32 %v7813, %v7610
        %v8379 = vmul.f32 %v7818, %v7611
        %v8380 = vmul.f32 %v7823, %v7612
        %v8381 = vmul.f32 %v7828, %v7613
        %v8382 = vmul.f32 %v7833, %v7614
        %v8383 = vmul.f32 %v7838, %v7615
        %v8384 = vmul.f32 %v7843, %v7616
        %v8385 = vmul.f32 %v7848, %v7617
        %v8386 = vmul.f32 %v7853, %v7618
        %v8387 = vmul.f32 %v7858, %v7619
        %v8388 = vmul.f32 %v7863, %v7620
        %v8389 = vmul.f32 %v7868, %v7621
        %v8390 = vmul.f32 %v7873, %v7622
        %v8391 = vmul.f32 %v7878, %v7623
        %v8392 = vmul.f32 %v7883, %v7624
        %v8393 = vmul.f32 %v7888, %v7625
        %v8394 = vmul.f32 %v7893, %v7626
        %v8395 = vmul.f32 %v7898, %v7627
        %v8396 = vmul.f32 %v7903, %v7628
        %v8397 = vmul.f32 %v7908, %v7629
        %v8398 = vmul.f32 %v7913, %v7630
        %v8399 = vmul.f32 %v7918, %v7631
        %v8400 = vmul.f32 %v7923, %v7632
        %v8401 = vmul.f32 %v7928, %v7633
        %v8402 = vmul.f32 %v7933, %v7634
        %v8403 = vmul.f32 %v7938, %v7635
        %v8404 = vmul.f32 %v7943, %v7636
        %v8405 = vmul.f32 %v7948, %v7637
        %v8406 = vmul.f32 %v7953, %v7638
        %v8407 = vmul.f32 %v7958, %v7639
        %v8408 = vmul.f32 %v7963, %v7640
        %v8409 = vmul.f32 %v7968, %v7641
        %v8410 = vmul.f32 %v7973, %v7642
        %v8411 = vmul.f32 %v7978, %v7643
        %v8412 = vmul.f32 %v7983, %v7644
        %v8413 = vmul.f32 %v7988, %v7645
        %v8414 = vmul.f32 %v7993, %v7646
        %v8415 = vmul.f32 %v7998, %v7647
        %v8416 = vmul.f32 %v8003, %v7648
        %v8417 = vmul.f32 %v8008, %v7649
        %v8418 = vmul.f32 %v8013, %v7650
        %v8419 = vmul.f32 %v8018, %v7651
        %v8420 = vmul.f32 %v8023, %v7652
        %v8421 = vmul.f32 %v8028, %v7653
        %v8422 = vmul.f32 %v8033, %v7654
        %v8423 = vmul.f32 %v8038, %v7655
        %v8424 = vmul.f32 %v8043, %v7656
        %v8425 = vmul.f32 %v8048, %v7657
        %v8426 = vmul.f32 %v8053, %v7658
        %v8427 = vmul.f32 %v8058, %v7659
        %v8428 = vmul.f32 %v8063, %v7660
        %v8429 = vmul.f32 %v8068, %v7661
        %v8430 = vmul.f32 %v8073, %v7662
        %v8431 = vmul.f32 %v8078, %v7663
        %v8432 = vmul.f32 %v8083, %v7664
        %v8433 = vmul.f32 %v8088, %v7665
        %v8434 = vmul.f32 %v8093, %v7666
        %v8435 = vmul.f32 %v8098, %v7667
        %v8436 = vmul.f32 %v8103, %v7668
        %v8437 = vmul.f32 %v8108, %v7669
        %v8438 = vmul.f32 %v8113, %v7670
        %v8439 = vmul.f32 %v8118, %v7671
        %v8440 = vmul.f32 %v8123, %v7672
        %v8441 = vmul.f32 %v8128, %v7673
        %v8442 = vmul.f32 %v8133, %v7674
        %v8443 = vmul.f32 %v8138, %v7675
        %v8444 = vmul.f32 %v8143, %v7676
        %v8445 = vmul.f32 %v8148, %v7677
        %v8446 = vmul.f32 %v8153, %v7678
        %v8447 = vmul.f32 %v8158, %v7679
        %v8448 = vmul.f32 %v8163, %v7680
        %v8449 = vmul.f32 %v8168, %v7681
        %v8450 = vmul.f32 %v8173, %v7682
        %v8451 = vmul.f32 %v8178, %v7683
        %v8452 = vmul.f32 %v8183, %v7684
        %v8453 = vmul.f32 %v8188, %v7685
        %v8454 = vmul.f32 %v8193, %v7686
        %v8455 = vmul.f32 %v8198, %v7687
        %v8456 = vmul.f32 %v8203, %v7688
        %v8457 = vmul.f32 %v8208, %v7689
        %v8458 = vmul.f32 %v8213, %v7690
        %v8459 = vmul.f32 %v8218, %v7691
        %v8460 = vmul.f32 %v8223, %v7692
        %v8461 = vmul.f32 %v8228, %v7693
        %v8462 = vmul.f32 %v8233, %v7694
        %v8463 = vmul.f32 %v8238, %v7695
        %v8464 = vmul.f32 %v8243, %v7696
        %v8465 = vmul.f32 %v8248, %v7697
        %v8466 = vmul.f32 %v8253, %v7698
        %v8467 = vmul.f32 %v8258, %v7699
        %v8468 = vmul.f32 %v8263, %v7700
        %v8469 = vmul.f32 %v8268, %v7701
        %v8470 = vmul.f32 %v8273, %v7702
        %v8471 = vmul.f32 %v8278, %v7703
        %v8472 = vmul.f32 %v8283, %v7704
        %v8473 = vmul.f32 %v8288, %v7705
        %v8474 = vmul.f32 %v8293, %v7706
        %v8475 = vmul.f32 %v8298, %v7707
        %v8476 = vmul.f32 %v8303, %v7708
        %v8477 = vmul.f32 %v8308, %v7709
        %v8478 = vmul.f32 %v8313, %v7710
        %v8479 = vmul.f32 %v8318, %v7711
        %v8480 = vmul.f32 %v8323, %v7712
        %v8481 = vmul.f32 %v8328, %v7713
        %v8482 = vmul.f32 %v8333, %v7714
        %v8483 = vmul.f32 %v8338, %v7715
        %v8484 = vmul.f32 %v8343, %v7716
        %v8485 = vmul.f32 %v8348, %v7717
        %v8486 = vmul.f32 %v8353, %v7718
        %v8487 = vmul.f32 %v8358, %v7719
        %v8488 = vadd.f32 %v8360, %v6695
        %v8489 = vadd.f32 %v8361, %v6698
        %v8490 = vadd.f32 %v8362, %v6703
        %v8491 = vadd.f32 %v8363, %v6706
        %v8492 = vadd.f32 %v8364, %v6711
        %v8493 = vadd.f32 %v8365, %v6714
        %v8494 = vadd.f32 %v8366, %v6719
        %v8495 = vadd.f32 %v8367, %v6722
        %v8496 = vadd.f32 %v8368, %v6727
        %v8497 = vadd.f32 %v8369, %v6730
        %v8498 = vadd.f32 %v8370, %v6735
        %v8499 = vadd.f32 %v8371, %v6738
        %v8500 = vadd.f32 %v8372, %v6743
        %v8501 = vadd.f32 %v8373, %v6746
        %v8502 = vadd.f32 %v8374, %v6751
        %v8503 = vadd.f32 %v8375, %v6754
        %v8504 = vadd.f32 %v8376, %v6759
        %v8505 = vadd.f32 %v8377, %v6762
        %v8506 = vadd.f32 %v8378, %v6767
        %v8507 = vadd.f32 %v8379, %v6770
        %v8508 = vadd.f32 %v8380, %v6775
        %v8509 = vadd.f32 %v8381, %v6778
        %v8510 = vadd.f32 %v8382, %v6783
        %v8511 = vadd.f32 %v8383, %v6786
        %v8512 = vadd.f32 %v8384, %v6791
        %v8513 = vadd.f32 %v8385, %v6794
        %v8514 = vadd.f32 %v8386, %v6799
        %v8515 = vadd.f32 %v8387, %v6802
        %v8516 = vadd.f32 %v8388, %v6807
        %v8517 = vadd.f32 %v8389, %v6810
        %v8518 = vadd.f32 %v8390, %v6815
        %v8519 = vadd.f32 %v8391, %v6818
        %v8520 = vadd.f32 %v8392, %v6952
        %v8521 = vadd.f32 %v8393, %v6955
        %v8522 = vadd.f32 %v8394, %v6960
        %v8523 = vadd.f32 %v8395, %v6963
        %v8524 = vadd.f32 %v8396, %v6968
        %v8525 = vadd.f32 %v8397, %v6971
        %v8526 = vadd.f32 %v8398, %v6976
        %v8527 = vadd.f32 %v8399, %v6979
        %v8528 = vadd.f32 %v8400, %v6984
        %v8529 = vadd.f32 %v8401, %v6987
        %v8530 = vadd.f32 %v8402, %v6992
        %v8531 = vadd.f32 %v8403, %v6995
        %v8532 = vadd.f32 %v8404, %v7000
        %v8533 = vadd.f32 %v8405, %v7003
        %v8534 = vadd.f32 %v8406, %v7008
        %v8535 = vadd.f32 %v8407, %v7011
        %v8536 = vadd.f32 %v8408, %v7016
        %v8537 = vadd.f32 %v8409, %v7019
        %v8538 = vadd.f32 %v8410, %v7024
        %v8539 = vadd.f32 %v8411, %v7027
        %v8540 = vadd.f32 %v8412, %v7032
        %v8541 = vadd.f32 %v8413, %v7035
        %v8542 = vadd.f32 %v8414, %v7040
        %v8543 = vadd.f32 %v8415, %v7043
        %v8544 = vadd.f32 %v8416, %v7048
        %v8545 = vadd.f32 %v8417, %v7051
        %v8546 = vadd.f32 %v8418, %v7056
        %v8547 = vadd.f32 %v8419, %v7059
        %v8548 = vadd.f32 %v8420, %v7064
        %v8549 = vadd.f32 %v8421, %v7067
        %v8550 = vadd.f32 %v8422, %v7072
        %v8551 = vadd.f32 %v8423, %v7075
        %v8552 = vadd.f32 %v8424, %v7209
        %v8553 = vadd.f32 %v8425, %v7212
        %v8554 = vadd.f32 %v8426, %v7217
        %v8555 = vadd.f32 %v8427, %v7220
        %v8556 = vadd.f32 %v8428, %v7225
        %v8557 = vadd.f32 %v8429, %v7228
        %v8558 = vadd.f32 %v8430, %v7233
        %v8559 = vadd.f32 %v8431, %v7236
        %v8560 = vadd.f32 %v8432, %v7241
        %v8561 = vadd.f32 %v8433, %v7244
        %v8562 = vadd.f32 %v8434, %v7249
        %v8563 = vadd.f32 %v8435, %v7252
        %v8564 = vadd.f32 %v8436, %v7257
        %v8565 = vadd.f32 %v8437, %v7260
        %v8566 = vadd.f32 %v8438, %v7265
        %v8567 = vadd.f32 %v8439, %v7268
        %v8568 = vadd.f32 %v8440, %v7273
        %v8569 = vadd.f32 %v8441, %v7276
        %v8570 = vadd.f32 %v8442, %v7281
        %v8571 = vadd.f32 %v8443, %v7284
        %v8572 = vadd.f32 %v8444, %v7289
        %v8573 = vadd.f32 %v8445, %v7292
        %v8574 = vadd.f32 %v8446, %v7297
        %v8575 = vadd.f32 %v8447, %v7300
        %v8576 = vadd.f32 %v8448, %v7305
        %v8577 = vadd.f32 %v8449, %v7308
        %v8578 = vadd.f32 %v8450, %v7313
        %v8579 = vadd.f32 %v8451, %v7316
        %v8580 = vadd.f32 %v8452, %v7321
        %v8581 = vadd.f32 %v8453, %v7324
        %v8582 = vadd.f32 %v8454, %v7329
        %v8583 = vadd.f32 %v8455, %v7332
        %v8584 = vadd.f32 %v8456, %v7466
        %v8585 = vadd.f32 %v8457, %v7469
        %v8586 = vadd.f32 %v8458, %v7474
        %v8587 = vadd.f32 %v8459, %v7477
        %v8588 = vadd.f32 %v8460, %v7482
        %v8589 = vadd.f32 %v8461, %v7485
        %v8590 = vadd.f32 %v8462, %v7490
        %v8591 = vadd.f32 %v8463, %v7493
        %v8592 = vadd.f32 %v8464, %v7498
        %v8593 = vadd.f32 %v8465, %v7501
        %v8594 = vadd.f32 %v8466, %v7506
        %v8595 = vadd.f32 %v8467, %v7509
        %v8596 = vadd.f32 %v8468, %v7514
        %v8597 = vadd.f32 %v8469, %v7517
        %v8598 = vadd.f32 %v8470, %v7522
        %v8599 = vadd.f32 %v8471, %v7525
        %v8600 = vadd.f32 %v8472, %v7530
        %v8601 = vadd.f32 %v8473, %v7533
        %v8602 = vadd.f32 %v8474, %v7538
        %v8603 = vadd.f32 %v8475, %v7541
        %v8604 = vadd.f32 %v8476, %v7546
        %v8605 = vadd.f32 %v8477, %v7549
        %v8606 = vadd.f32 %v8478, %v7554
        %v8607 = vadd.f32 %v8479, %v7557
        %v8608 = vadd.f32 %v8480, %v7562
        %v8609 = vadd.f32 %v8481, %v7565
        %v8610 = vadd.f32 %v8482, %v7570
        %v8611 = vadd.f32 %v8483, %v7573
        %v8612 = vadd.f32 %v8484, %v7578
        %v8613 = vadd.f32 %v8485, %v7581
        %v8614 = vadd.f32 %v8486, %v7586
        %v8615 = vadd.f32 %v8487, %v7589
        %8616 = vst.msk [vmem:[#allocation4] sm:$0xff] %vm1214, %v8488
        %8617 = vst.msk [vmem:[#allocation4 + $0x8] sm:$0xff] %vm1214, %v8489
        %8618 = vst.msk [vmem:[#allocation4 + $0x10] sm:$0xff] %vm1214, %v8490
        %8619 = vst.msk [vmem:[#allocation4 + $0x18] sm:$0xff] %vm1214, %v8491
        %8620 = vst.msk [vmem:[#allocation4 + $0x20] sm:$0xff] %vm1214, %v8492
        %8621 = vst.msk [vmem:[#allocation4 + $0x28] sm:$0xff] %vm1214, %v8493
        %8622 = vst.msk [vmem:[#allocation4 + $0x30] sm:$0xff] %vm1214, %v8494
        %8623 = vst.msk [vmem:[#allocation4 + $0x38] sm:$0xff] %vm1214, %v8495
        %8624 = vst.msk [vmem:[#allocation4 + $0x40] sm:$0xff] %vm1214, %v8496
        %8625 = vst.msk [vmem:[#allocation4 + $0x48] sm:$0xff] %vm1214, %v8497
        %8626 = vst.msk [vmem:[#allocation4 + $0x50] sm:$0xff] %vm1214, %v8498
        %8627 = vst.msk [vmem:[#allocation4 + $0x58] sm:$0xff] %vm1214, %v8499
        %8628 = vst.msk [vmem:[#allocation4 + $0x60] sm:$0xff] %vm1214, %v8500
        %8629 = vst.msk [vmem:[#allocation4 + $0x68] sm:$0xff] %vm1214, %v8501
        %8630 = vst.msk [vmem:[#allocation4 + $0x70] sm:$0xff] %vm1214, %v8502
        %8631 = vst.msk [vmem:[#allocation4 + $0x78] sm:$0xff] %vm1214, %v8503
        %8632 = vst.msk [vmem:[#allocation4 + $0x80] sm:$0xff] %vm1214, %v8504
        %8633 = vst.msk [vmem:[#allocation4 + $0x88] sm:$0xff] %vm1214, %v8505
        %8634 = vst.msk [vmem:[#allocation4 + $0x90] sm:$0xff] %vm1214, %v8506
        %8635 = vst.msk [vmem:[#allocation4 + $0x98] sm:$0xff] %vm1214, %v8507
        %8636 = vst.msk [vmem:[#allocation4 + $0xa0] sm:$0xff] %vm1214, %v8508
        %8637 = vst.msk [vmem:[#allocation4 + $0xa8] sm:$0xff] %vm1214, %v8509
        %8638 = vst.msk [vmem:[#allocation4 + $0xb0] sm:$0xff] %vm1214, %v8510
        %8639 = vst.msk [vmem:[#allocation4 + $0xb8] sm:$0xff] %vm1214, %v8511
        %8640 = vst.msk [vmem:[#allocation4 + $0xc0] sm:$0xff] %vm1214, %v8512
        %8641 = vst.msk [vmem:[#allocation4 + $0xc8] sm:$0xff] %vm1214, %v8513
        %8642 = vst.msk [vmem:[#allocation4 + $0xd0] sm:$0xff] %vm1214, %v8514
        %8643 = vst.msk [vmem:[#allocation4 + $0xd8] sm:$0xff] %vm1214, %v8515
        %8644 = vst.msk [vmem:[#allocation4 + $0xe0] sm:$0xff] %vm1214, %v8516
        %8645 = vst.msk [vmem:[#allocation4 + $0xe8] sm:$0xff] %vm1214, %v8517
        %8646 = vst.msk [vmem:[#allocation4 + $0xf0] sm:$0xff] %vm1214, %v8518
        %8647 = vst.msk [vmem:[#allocation4 + $0xf8] sm:$0xff] %vm1214, %v8519
        %8648 = vst.msk [vmem:[#allocation4 + $0x100] sm:$0xff] %vm1214, %v8520
        %8649 = vst.msk [vmem:[#allocation4 + $0x108] sm:$0xff] %vm1214, %v8521
        %8650 = vst.msk [vmem:[#allocation4 + $0x110] sm:$0xff] %vm1214, %v8522
        %8651 = vst.msk [vmem:[#allocation4 + $0x118] sm:$0xff] %vm1214, %v8523
        %8652 = vst.msk [vmem:[#allocation4 + $0x120] sm:$0xff] %vm1214, %v8524
        %8653 = vst.msk [vmem:[#allocation4 + $0x128] sm:$0xff] %vm1214, %v8525
        %8654 = vst.msk [vmem:[#allocation4 + $0x130] sm:$0xff] %vm1214, %v8526
        %8655 = vst.msk [vmem:[#allocation4 + $0x138] sm:$0xff] %vm1214, %v8527
        %8656 = vst.msk [vmem:[#allocation4 + $0x140] sm:$0xff] %vm1214, %v8528
        %8657 = vst.msk [vmem:[#allocation4 + $0x148] sm:$0xff] %vm1214, %v8529
        %8658 = vst.msk [vmem:[#allocation4 + $0x150] sm:$0xff] %vm1214, %v8530
        %8659 = vst.msk [vmem:[#allocation4 + $0x158] sm:$0xff] %vm1214, %v8531
        %8660 = vst.msk [vmem:[#allocation4 + $0x160] sm:$0xff] %vm1214, %v8532
        %8661 = vst.msk [vmem:[#allocation4 + $0x168] sm:$0xff] %vm1214, %v8533
        %8662 = vst.msk [vmem:[#allocation4 + $0x170] sm:$0xff] %vm1214, %v8534
        %8663 = vst.msk [vmem:[#allocation4 + $0x178] sm:$0xff] %vm1214, %v8535
        %8664 = vst.msk [vmem:[#allocation4 + $0x180] sm:$0xff] %vm1214, %v8536
        %8665 = vst.msk [vmem:[#allocation4 + $0x188] sm:$0xff] %vm1214, %v8537
        %8666 = vst.msk [vmem:[#allocation4 + $0x190] sm:$0xff] %vm1214, %v8538
        %8667 = vst.msk [vmem:[#allocation4 + $0x198] sm:$0xff] %vm1214, %v8539
        %8668 = vst.msk [vmem:[#allocation4 + $0x1a0] sm:$0xff] %vm1214, %v8540
        %8669 = vst.msk [vmem:[#allocation4 + $0x1a8] sm:$0xff] %vm1214, %v8541
        %8670 = vst.msk [vmem:[#allocation4 + $0x1b0] sm:$0xff] %vm1214, %v8542
        %8671 = vst.msk [vmem:[#allocation4 + $0x1b8] sm:$0xff] %vm1214, %v8543
        %8672 = vst.msk [vmem:[#allocation4 + $0x1c0] sm:$0xff] %vm1214, %v8544
        %8673 = vst.msk [vmem:[#allocation4 + $0x1c8] sm:$0xff] %vm1214, %v8545
        %8674 = vst.msk [vmem:[#allocation4 + $0x1d0] sm:$0xff] %vm1214, %v8546
        %8675 = vst.msk [vmem:[#allocation4 + $0x1d8] sm:$0xff] %vm1214, %v8547
        %8676 = vst.msk [vmem:[#allocation4 + $0x1e0] sm:$0xff] %vm1214, %v8548
        %8677 = vst.msk [vmem:[#allocation4 + $0x1e8] sm:$0xff] %vm1214, %v8549
        %8678 = vst.msk [vmem:[#allocation4 + $0x1f0] sm:$0xff] %vm1214, %v8550
        %8679 = vst.msk [vmem:[#allocation4 + $0x1f8] sm:$0xff] %vm1214, %v8551
        %8680 = vst.msk [vmem:[#allocation4 + $0x200] sm:$0xff] %vm1214, %v8552
        %8681 = vst.msk [vmem:[#allocation4 + $0x208] sm:$0xff] %vm1214, %v8553
        %8682 = vst.msk [vmem:[#allocation4 + $0x210] sm:$0xff] %vm1214, %v8554
        %8683 = vst.msk [vmem:[#allocation4 + $0x218] sm:$0xff] %vm1214, %v8555
        %8684 = vst.msk [vmem:[#allocation4 + $0x220] sm:$0xff] %vm1214, %v8556
        %8685 = vst.msk [vmem:[#allocation4 + $0x228] sm:$0xff] %vm1214, %v8557
        %8686 = vst.msk [vmem:[#allocation4 + $0x230] sm:$0xff] %vm1214, %v8558
        %8687 = vst.msk [vmem:[#allocation4 + $0x238] sm:$0xff] %vm1214, %v8559
        %8688 = vst.msk [vmem:[#allocation4 + $0x240] sm:$0xff] %vm1214, %v8560
        %8689 = vst.msk [vmem:[#allocation4 + $0x248] sm:$0xff] %vm1214, %v8561
        %8690 = vst.msk [vmem:[#allocation4 + $0x250] sm:$0xff] %vm1214, %v8562
        %8691 = vst.msk [vmem:[#allocation4 + $0x258] sm:$0xff] %vm1214, %v8563
        %8692 = vst.msk [vmem:[#allocation4 + $0x260] sm:$0xff] %vm1214, %v8564
        %8693 = vst.msk [vmem:[#allocation4 + $0x268] sm:$0xff] %vm1214, %v8565
        %8694 = vst.msk [vmem:[#allocation4 + $0x270] sm:$0xff] %vm1214, %v8566
        %8695 = vst.msk [vmem:[#allocation4 + $0x278] sm:$0xff] %vm1214, %v8567
        %8696 = vst.msk [vmem:[#allocation4 + $0x280] sm:$0xff] %vm1214, %v8568
        %8697 = vst.msk [vmem:[#allocation4 + $0x288] sm:$0xff] %vm1214, %v8569
        %8698 = vst.msk [vmem:[#allocation4 + $0x290] sm:$0xff] %vm1214, %v8570
        %8699 = vst.msk [vmem:[#allocation4 + $0x298] sm:$0xff] %vm1214, %v8571
        %8700 = vst.msk [vmem:[#allocation4 + $0x2a0] sm:$0xff] %vm1214, %v8572
        %8701 = vst.msk [vmem:[#allocation4 + $0x2a8] sm:$0xff] %vm1214, %v8573
        %8702 = vst.msk [vmem:[#allocation4 + $0x2b0] sm:$0xff] %vm1214, %v8574
        %8703 = vst.msk [vmem:[#allocation4 + $0x2b8] sm:$0xff] %vm1214, %v8575
        %8704 = vst.msk [vmem:[#allocation4 + $0x2c0] sm:$0xff] %vm1214, %v8576
        %8705 = vst.msk [vmem:[#allocation4 + $0x2c8] sm:$0xff] %vm1214, %v8577
        %8706 = vst.msk [vmem:[#allocation4 + $0x2d0] sm:$0xff] %vm1214, %v8578
        %8707 = vst.msk [vmem:[#allocation4 + $0x2d8] sm:$0xff] %vm1214, %v8579
        %8708 = vst.msk [vmem:[#allocation4 + $0x2e0] sm:$0xff] %vm1214, %v8580
        %8709 = vst.msk [vmem:[#allocation4 + $0x2e8] sm:$0xff] %vm1214, %v8581
        %8710 = vst.msk [vmem:[#allocation4 + $0x2f0] sm:$0xff] %vm1214, %v8582
        %8711 = vst.msk [vmem:[#allocation4 + $0x2f8] sm:$0xff] %vm1214, %v8583
        %8712 = vst.msk [vmem:[#allocation4 + $0x300] sm:$0xff] %vm1214, %v8584
        %8713 = vst.msk [vmem:[#allocation4 + $0x308] sm:$0xff] %vm1214, %v8585
        %8714 = vst.msk [vmem:[#allocation4 + $0x310] sm:$0xff] %vm1214, %v8586
        %8715 = vst.msk [vmem:[#allocation4 + $0x318] sm:$0xff] %vm1214, %v8587
        %8716 = vst.msk [vmem:[#allocation4 + $0x320] sm:$0xff] %vm1214, %v8588
        %8717 = vst.msk [vmem:[#allocation4 + $0x328] sm:$0xff] %vm1214, %v8589
        %8718 = vst.msk [vmem:[#allocation4 + $0x330] sm:$0xff] %vm1214, %v8590
        %8719 = vst.msk [vmem:[#allocation4 + $0x338] sm:$0xff] %vm1214, %v8591
        %8720 = vst.msk [vmem:[#allocation4 + $0x340] sm:$0xff] %vm1214, %v8592
        %8721 = vst.msk [vmem:[#allocation4 + $0x348] sm:$0xff] %vm1214, %v8593
        %8722 = vst.msk [vmem:[#allocation4 + $0x350] sm:$0xff] %vm1214, %v8594
        %8723 = vst.msk [vmem:[#allocation4 + $0x358] sm:$0xff] %vm1214, %v8595
        %8724 = vst.msk [vmem:[#allocation4 + $0x360] sm:$0xff] %vm1214, %v8596
        %8725 = vst.msk [vmem:[#allocation4 + $0x368] sm:$0xff] %vm1214, %v8597
        %8726 = vst.msk [vmem:[#allocation4 + $0x370] sm:$0xff] %vm1214, %v8598
        %8727 = vst.msk [vmem:[#allocation4 + $0x378] sm:$0xff] %vm1214, %v8599
        %8728 = vst.msk [vmem:[#allocation4 + $0x380] sm:$0xff] %vm1214, %v8600
        %8729 = vst.msk [vmem:[#allocation4 + $0x388] sm:$0xff] %vm1214, %v8601
        %8730 = vst.msk [vmem:[#allocation4 + $0x390] sm:$0xff] %vm1214, %v8602
        %8731 = vst.msk [vmem:[#allocation4 + $0x398] sm:$0xff] %vm1214, %v8603
        %8732 = vst.msk [vmem:[#allocation4 + $0x3a0] sm:$0xff] %vm1214, %v8604
        %8733 = vst.msk [vmem:[#allocation4 + $0x3a8] sm:$0xff] %vm1214, %v8605
        %8734 = vst.msk [vmem:[#allocation4 + $0x3b0] sm:$0xff] %vm1214, %v8606
        %8735 = vst.msk [vmem:[#allocation4 + $0x3b8] sm:$0xff] %vm1214, %v8607
        %8736 = vst.msk [vmem:[#allocation4 + $0x3c0] sm:$0xff] %vm1214, %v8608
        %8737 = vst.msk [vmem:[#allocation4 + $0x3c8] sm:$0xff] %vm1214, %v8609
        %8738 = vst.msk [vmem:[#allocation4 + $0x3d0] sm:$0xff] %vm1214, %v8610
        %8739 = vst.msk [vmem:[#allocation4 + $0x3d8] sm:$0xff] %vm1214, %v8611
        %8740 = vst.msk [vmem:[#allocation4 + $0x3e0] sm:$0xff] %vm1214, %v8612
        %8741 = vst.msk [vmem:[#allocation4 + $0x3e8] sm:$0xff] %vm1214, %v8613
        %8742 = vst.msk [vmem:[#allocation4 + $0x3f0] sm:$0xff] %vm1214, %v8614
        %8743 = vst.msk [vmem:[#allocation4 + $0x3f8] sm:$0xff] %vm1214, %v8615
        %8744 = vst.msk [vmem:[#allocation2] sm:$0xff] %vm6435, %v3363
        %8745 = vst.msk [vmem:[#allocation2 + $0x8] sm:$0xff] %vm6435, %v3364
        %8746 = vst.msk [vmem:[#allocation2 + $0x10] sm:$0xff] %vm6435, %v3365
        %8747 = vst.msk [vmem:[#allocation2 + $0x18] sm:$0xff] %vm6435, %v3366
        %8748 = vst.msk [vmem:[#allocation2 + $0x20] sm:$0xff] %vm6435, %v3367
        %8749 = vst.msk [vmem:[#allocation2 + $0x28] sm:$0xff] %vm6435, %v3368
        %8750 = vst.msk [vmem:[#allocation2 + $0x30] sm:$0xff] %vm6435, %v3369
        %8751 = vst.msk [vmem:[#allocation2 + $0x38] sm:$0xff] %vm6435, %v3370
        %8752 = vst.msk [vmem:[#allocation2 + $0x40] sm:$0xff] %vm6435, %v3371
        %8753 = vst.msk [vmem:[#allocation2 + $0x48] sm:$0xff] %vm6435, %v3372
        %8754 = vst.msk [vmem:[#allocation2 + $0x50] sm:$0xff] %vm6435, %v3373
        %8755 = vst.msk [vmem:[#allocation2 + $0x58] sm:$0xff] %vm6435, %v3374
        %8756 = vst.msk [vmem:[#allocation2 + $0x60] sm:$0xff] %vm6435, %v3375
        %8757 = vst.msk [vmem:[#allocation2 + $0x68] sm:$0xff] %vm6435, %v3376
        %8758 = vst.msk [vmem:[#allocation2 + $0x70] sm:$0xff] %vm6435, %v3377
        %8759 = vst.msk [vmem:[#allocation2 + $0x78] sm:$0xff] %vm6435, %v3378
        %8760 = vst.msk [vmem:[#allocation2 + $0x80] sm:$0xff] %vm6435, %v3379
        %8761 = vst.msk [vmem:[#allocation2 + $0x88] sm:$0xff] %vm6435, %v3380
        %8762 = vst.msk [vmem:[#allocation2 + $0x90] sm:$0xff] %vm6435, %v3381
        %8763 = vst.msk [vmem:[#allocation2 + $0x98] sm:$0xff] %vm6435, %v3382
        %8764 = vst.msk [vmem:[#allocation2 + $0xa0] sm:$0xff] %vm6435, %v3383
        %8765 = vst.msk [vmem:[#allocation2 + $0xa8] sm:$0xff] %vm6435, %v3384
        %8766 = vst.msk [vmem:[#allocation2 + $0xb0] sm:$0xff] %vm6435, %v3385
        %8767 = vst.msk [vmem:[#allocation2 + $0xb8] sm:$0xff] %vm6435, %v3386
        %8768 = vst.msk [vmem:[#allocation2 + $0xc0] sm:$0xff] %vm6435, %v3387
        %8769 = vst.msk [vmem:[#allocation2 + $0xc8] sm:$0xff] %vm6435, %v3388
        %8770 = vst.msk [vmem:[#allocation2 + $0xd0] sm:$0xff] %vm6435, %v3389
        %8771 = vst.msk [vmem:[#allocation2 + $0xd8] sm:$0xff] %vm6435, %v3390
        %8772 = vst.msk [vmem:[#allocation2 + $0xe0] sm:$0xff] %vm6435, %v3391
        %8773 = vst.msk [vmem:[#allocation2 + $0xe8] sm:$0xff] %vm6435, %v3392
        %8774 = vst.msk [vmem:[#allocation2 + $0xf0] sm:$0xff] %vm6435, %v3393
        %8775 = vst.msk [vmem:[#allocation2 + $0xf8] sm:$0xff] %vm6435, %v3394
        %8776 = vst.msk [vmem:[#allocation2 + $0x100] sm:$0xff] %vm6435, %v3395
        %8777 = vst.msk [vmem:[#allocation2 + $0x108] sm:$0xff] %vm6435, %v3396
        %8778 = vst.msk [vmem:[#allocation2 + $0x110] sm:$0xff] %vm6435, %v3397
        %8779 = vst.msk [vmem:[#allocation2 + $0x118] sm:$0xff] %vm6435, %v3398
        %8780 = vst.msk [vmem:[#allocation2 + $0x120] sm:$0xff] %vm6435, %v3399
        %8781 = vst.msk [vmem:[#allocation2 + $0x128] sm:$0xff] %vm6435, %v3400
        %8782 = vst.msk [vmem:[#allocation2 + $0x130] sm:$0xff] %vm6435, %v3401
        %8783 = vst.msk [vmem:[#allocation2 + $0x138] sm:$0xff] %vm6435, %v3402
        %8784 = vst.msk [vmem:[#allocation2 + $0x140] sm:$0xff] %vm6435, %v3403
        %8785 = vst.msk [vmem:[#allocation2 + $0x148] sm:$0xff] %vm6435, %v3404
        %8786 = vst.msk [vmem:[#allocation2 + $0x150] sm:$0xff] %vm6435, %v3405
        %8787 = vst.msk [vmem:[#allocation2 + $0x158] sm:$0xff] %vm6435, %v3406
        %8788 = vst.msk [vmem:[#allocation2 + $0x160] sm:$0xff] %vm6435, %v3407
        %8789 = vst.msk [vmem:[#allocation2 + $0x168] sm:$0xff] %vm6435, %v3408
        %8790 = vst.msk [vmem:[#allocation2 + $0x170] sm:$0xff] %vm6435, %v3409
        %8791 = vst.msk [vmem:[#allocation2 + $0x178] sm:$0xff] %vm6435, %v3410
        %8792 = vst.msk [vmem:[#allocation2 + $0x180] sm:$0xff] %vm6435, %v3411
        %8793 = vst.msk [vmem:[#allocation2 + $0x188] sm:$0xff] %vm6435, %v3412
        %8794 = vst.msk [vmem:[#allocation2 + $0x190] sm:$0xff] %vm6435, %v3413
        %8795 = vst.msk [vmem:[#allocation2 + $0x198] sm:$0xff] %vm6435, %v3414
        %8796 = vst.msk [vmem:[#allocation2 + $0x1a0] sm:$0xff] %vm6435, %v3415
        %8797 = vst.msk [vmem:[#allocation2 + $0x1a8] sm:$0xff] %vm6435, %v3416
        %8798 = vst.msk [vmem:[#allocation2 + $0x1b0] sm:$0xff] %vm6435, %v3417
        %8799 = vst.msk [vmem:[#allocation2 + $0x1b8] sm:$0xff] %vm6435, %v3418
        %8800 = vst.msk [vmem:[#allocation2 + $0x1c0] sm:$0xff] %vm6435, %v3419
        %8801 = vst.msk [vmem:[#allocation2 + $0x1c8] sm:$0xff] %vm6435, %v3420
        %8802 = vst.msk [vmem:[#allocation2 + $0x1d0] sm:$0xff] %vm6435, %v3421
        %8803 = vst.msk [vmem:[#allocation2 + $0x1d8] sm:$0xff] %vm6435, %v3422
        %8804 = vst.msk [vmem:[#allocation2 + $0x1e0] sm:$0xff] %vm6435, %v3423
        %8805 = vst.msk [vmem:[#allocation2 + $0x1e8] sm:$0xff] %vm6435, %v3424
        %8806 = vst.msk [vmem:[#allocation2 + $0x1f0] sm:$0xff] %vm6435, %v3425
        %8807 = vst.msk [vmem:[#allocation2 + $0x1f8] sm:$0xff] %vm6435, %v3426
        %8808 = vst.msk [vmem:[#allocation2 + $0x200] sm:$0xff] %vm6435, %v3427
        %8809 = vst.msk [vmem:[#allocation2 + $0x208] sm:$0xff] %vm6435, %v3428
        %8810 = vst.msk [vmem:[#allocation2 + $0x210] sm:$0xff] %vm6435, %v3429
        %8811 = vst.msk [vmem:[#allocation2 + $0x218] sm:$0xff] %vm6435, %v3430
        %8812 = vst.msk [vmem:[#allocation2 + $0x220] sm:$0xff] %vm6435, %v3431
        %8813 = vst.msk [vmem:[#allocation2 + $0x228] sm:$0xff] %vm6435, %v3432
        %8814 = vst.msk [vmem:[#allocation2 + $0x230] sm:$0xff] %vm6435, %v3433
        %8815 = vst.msk [vmem:[#allocation2 + $0x238] sm:$0xff] %vm6435, %v3434
        %8816 = vst.msk [vmem:[#allocation2 + $0x240] sm:$0xff] %vm6435, %v3435
        %8817 = vst.msk [vmem:[#allocation2 + $0x248] sm:$0xff] %vm6435, %v3436
        %8818 = vst.msk [vmem:[#allocation2 + $0x250] sm:$0xff] %vm6435, %v3437
        %8819 = vst.msk [vmem:[#allocation2 + $0x258] sm:$0xff] %vm6435, %v3438
        %8820 = vst.msk [vmem:[#allocation2 + $0x260] sm:$0xff] %vm6435, %v3439
        %8821 = vst.msk [vmem:[#allocation2 + $0x268] sm:$0xff] %vm6435, %v3440
        %8822 = vst.msk [vmem:[#allocation2 + $0x270] sm:$0xff] %vm6435, %v3441
        %8823 = vst.msk [vmem:[#allocation2 + $0x278] sm:$0xff] %vm6435, %v3442
        %8824 = vst.msk [vmem:[#allocation2 + $0x280] sm:$0xff] %vm6435, %v3443
        %8825 = vst.msk [vmem:[#allocation2 + $0x288] sm:$0xff] %vm6435, %v3444
        %8826 = vst.msk [vmem:[#allocation2 + $0x290] sm:$0xff] %vm6435, %v3445
        %8827 = vst.msk [vmem:[#allocation2 + $0x298] sm:$0xff] %vm6435, %v3446
        %8828 = vst.msk [vmem:[#allocation2 + $0x2a0] sm:$0xff] %vm6435, %v3447
        %8829 = vst.msk [vmem:[#allocation2 + $0x2a8] sm:$0xff] %vm6435, %v3448
        %8830 = vst.msk [vmem:[#allocation2 + $0x2b0] sm:$0xff] %vm6435, %v3449
        %8831 = vst.msk [vmem:[#allocation2 + $0x2b8] sm:$0xff] %vm6435, %v3450
        %8832 = vst.msk [vmem:[#allocation2 + $0x2c0] sm:$0xff] %vm6435, %v3451
        %8833 = vst.msk [vmem:[#allocation2 + $0x2c8] sm:$0xff] %vm6435, %v3452
        %8834 = vst.msk [vmem:[#allocation2 + $0x2d0] sm:$0xff] %vm6435, %v3453
        %8835 = vst.msk [vmem:[#allocation2 + $0x2d8] sm:$0xff] %vm6435, %v3454
        %8836 = vst.msk [vmem:[#allocation2 + $0x2e0] sm:$0xff] %vm6435, %v3455
        %8837 = vst.msk [vmem:[#allocation2 + $0x2e8] sm:$0xff] %vm6435, %v3456
        %8838 = vst.msk [vmem:[#allocation2 + $0x2f0] sm:$0xff] %vm6435, %v3457
        %8839 = vst.msk [vmem:[#allocation2 + $0x2f8] sm:$0xff] %vm6435, %v3458
        %8840 = vst.msk [vmem:[#allocation2 + $0x300] sm:$0xff] %vm6435, %v3459
        %8841 = vst.msk [vmem:[#allocation2 + $0x308] sm:$0xff] %vm6435, %v3460
        %8842 = vst.msk [vmem:[#allocation2 + $0x310] sm:$0xff] %vm6435, %v3461
        %8843 = vst.msk [vmem:[#allocation2 + $0x318] sm:$0xff] %vm6435, %v3462
        %8844 = vst.msk [vmem:[#allocation2 + $0x320] sm:$0xff] %vm6435, %v3463
        %8845 = vst.msk [vmem:[#allocation2 + $0x328] sm:$0xff] %vm6435, %v3464
        %8846 = vst.msk [vmem:[#allocation2 + $0x330] sm:$0xff] %vm6435, %v3465
        %8847 = vst.msk [vmem:[#allocation2 + $0x338] sm:$0xff] %vm6435, %v3466
        %8848 = vst.msk [vmem:[#allocation2 + $0x340] sm:$0xff] %vm6435, %v3467
        %8849 = vst.msk [vmem:[#allocation2 + $0x348] sm:$0xff] %vm6435, %v3468
        %8850 = vst.msk [vmem:[#allocation2 + $0x350] sm:$0xff] %vm6435, %v3469
        %8851 = vst.msk [vmem:[#allocation2 + $0x358] sm:$0xff] %vm6435, %v3470
        %8852 = vst.msk [vmem:[#allocation2 + $0x360] sm:$0xff] %vm6435, %v3471
        %8853 = vst.msk [vmem:[#allocation2 + $0x368] sm:$0xff] %vm6435, %v3472
        %8854 = vst.msk [vmem:[#allocation2 + $0x370] sm:$0xff] %vm6435, %v3473
        %8855 = vst.msk [vmem:[#allocation2 + $0x378] sm:$0xff] %vm6435, %v3474
        %8856 = vst.msk [vmem:[#allocation2 + $0x380] sm:$0xff] %vm6435, %v3475
        %8857 = vst.msk [vmem:[#allocation2 + $0x388] sm:$0xff] %vm6435, %v3476
        %8858 = vst.msk [vmem:[#allocation2 + $0x390] sm:$0xff] %vm6435, %v3477
        %8859 = vst.msk [vmem:[#allocation2 + $0x398] sm:$0xff] %vm6435, %v3478
        %8860 = vst.msk [vmem:[#allocation2 + $0x3a0] sm:$0xff] %vm6435, %v3479
        %8861 = vst.msk [vmem:[#allocation2 + $0x3a8] sm:$0xff] %vm6435, %v3480
        %8862 = vst.msk [vmem:[#allocation2 + $0x3b0] sm:$0xff] %vm6435, %v3481
        %8863 = vst.msk [vmem:[#allocation2 + $0x3b8] sm:$0xff] %vm6435, %v3482
        %8864 = vst.msk [vmem:[#allocation2 + $0x3c0] sm:$0xff] %vm6435, %v3483
        %8865 = vst.msk [vmem:[#allocation2 + $0x3c8] sm:$0xff] %vm6435, %v3484
        %8866 = vst.msk [vmem:[#allocation2 + $0x3d0] sm:$0xff] %vm6435, %v3485
        %8867 = vst.msk [vmem:[#allocation2 + $0x3d8] sm:$0xff] %vm6435, %v3486
        %8868 = vst.msk [vmem:[#allocation2 + $0x3e0] sm:$0xff] %vm6435, %v3487
        %8869 = vst.msk [vmem:[#allocation2 + $0x3e8] sm:$0xff] %vm6435, %v3488
        %8870 = vst.msk [vmem:[#allocation2 + $0x3f0] sm:$0xff] %vm6435, %v3489
        %8871 = vst.msk [vmem:[#allocation2 + $0x3f8] sm:$0xff] %vm6435, %v3490
        // Predicated region
        $region37: #{tpu_custom_call.1} parent=31 // pred_check
          %p8872 = pneg %p280
        $region38: #{tpu_custom_call.1} parent=31 // pred_check_branch
          %8874 = sbr.rel (%p8872) target = $region40
        $region39: #{tpu_custom_call.1} parent=31 // pred_region
          %v8875 = vld [vmem:[#allocation3] sm:$0xff]
          %v8876 = vld [vmem:[#allocation3 + $0x8] sm:$0xff]
          %v8877 = vld [vmem:[#allocation3 + $0x10] sm:$0xff]
          %v8878 = vld [vmem:[#allocation3 + $0x18] sm:$0xff]
          %v8879 = vld [vmem:[#allocation3 + $0x20] sm:$0xff]
          %v8880 = vld [vmem:[#allocation3 + $0x28] sm:$0xff]
          %v8881 = vld [vmem:[#allocation3 + $0x30] sm:$0xff]
          %v8882 = vld [vmem:[#allocation3 + $0x38] sm:$0xff]
          %v8883 = vld [vmem:[#allocation3 + $0x40] sm:$0xff]
          %v8884 = vld [vmem:[#allocation3 + $0x48] sm:$0xff]
          %v8885 = vld [vmem:[#allocation3 + $0x50] sm:$0xff]
          %v8886 = vld [vmem:[#allocation3 + $0x58] sm:$0xff]
          %v8887 = vld [vmem:[#allocation3 + $0x60] sm:$0xff]
          %v8888 = vld [vmem:[#allocation3 + $0x68] sm:$0xff]
          %v8889 = vld [vmem:[#allocation3 + $0x70] sm:$0xff]
          %v8890 = vld [vmem:[#allocation3 + $0x78] sm:$0xff]
          %v8891 = vld [vmem:[#allocation3 + $0x80] sm:$0xff]
          %v8892 = vld [vmem:[#allocation3 + $0x88] sm:$0xff]
          %v8893 = vld [vmem:[#allocation3 + $0x90] sm:$0xff]
          %v8894 = vld [vmem:[#allocation3 + $0x98] sm:$0xff]
          %v8895 = vld [vmem:[#allocation3 + $0xa0] sm:$0xff]
          %v8896 = vld [vmem:[#allocation3 + $0xa8] sm:$0xff]
          %v8897 = vld [vmem:[#allocation3 + $0xb0] sm:$0xff]
          %v8898 = vld [vmem:[#allocation3 + $0xb8] sm:$0xff]
          %v8899 = vld [vmem:[#allocation3 + $0xc0] sm:$0xff]
          %v8900 = vld [vmem:[#allocation3 + $0xc8] sm:$0xff]
          %v8901 = vld [vmem:[#allocation3 + $0xd0] sm:$0xff]
          %v8902 = vld [vmem:[#allocation3 + $0xd8] sm:$0xff]
          %v8903 = vld [vmem:[#allocation3 + $0xe0] sm:$0xff]
          %v8904 = vld [vmem:[#allocation3 + $0xe8] sm:$0xff]
          %v8905 = vld [vmem:[#allocation3 + $0xf0] sm:$0xff]
          %v8906 = vld [vmem:[#allocation3 + $0xf8] sm:$0xff]
          %v8907 = vld [vmem:[#allocation3 + $0x100] sm:$0xff]
          %v8908 = vld [vmem:[#allocation3 + $0x108] sm:$0xff]
          %v8909 = vld [vmem:[#allocation3 + $0x110] sm:$0xff]
          %v8910 = vld [vmem:[#allocation3 + $0x118] sm:$0xff]
          %v8911 = vld [vmem:[#allocation3 + $0x120] sm:$0xff]
          %v8912 = vld [vmem:[#allocation3 + $0x128] sm:$0xff]
          %v8913 = vld [vmem:[#allocation3 + $0x130] sm:$0xff]
          %v8914 = vld [vmem:[#allocation3 + $0x138] sm:$0xff]
          %v8915 = vld [vmem:[#allocation3 + $0x140] sm:$0xff]
          %v8916 = vld [vmem:[#allocation3 + $0x148] sm:$0xff]
          %v8917 = vld [vmem:[#allocation3 + $0x150] sm:$0xff]
          %v8918 = vld [vmem:[#allocation3 + $0x158] sm:$0xff]
          %v8919 = vld [vmem:[#allocation3 + $0x160] sm:$0xff]
          %v8920 = vld [vmem:[#allocation3 + $0x168] sm:$0xff]
          %v8921 = vld [vmem:[#allocation3 + $0x170] sm:$0xff]
          %v8922 = vld [vmem:[#allocation3 + $0x178] sm:$0xff]
          %v8923 = vld [vmem:[#allocation3 + $0x180] sm:$0xff]
          %v8924 = vld [vmem:[#allocation3 + $0x188] sm:$0xff]
          %v8925 = vld [vmem:[#allocation3 + $0x190] sm:$0xff]
          %v8926 = vld [vmem:[#allocation3 + $0x198] sm:$0xff]
          %v8927 = vld [vmem:[#allocation3 + $0x1a0] sm:$0xff]
          %v8928 = vld [vmem:[#allocation3 + $0x1a8] sm:$0xff]
          %v8929 = vld [vmem:[#allocation3 + $0x1b0] sm:$0xff]
          %v8930 = vld [vmem:[#allocation3 + $0x1b8] sm:$0xff]
          %v8931 = vld [vmem:[#allocation3 + $0x1c0] sm:$0xff]
          %v8932 = vld [vmem:[#allocation3 + $0x1c8] sm:$0xff]
          %v8933 = vld [vmem:[#allocation3 + $0x1d0] sm:$0xff]
          %v8934 = vld [vmem:[#allocation3 + $0x1d8] sm:$0xff]
          %v8935 = vld [vmem:[#allocation3 + $0x1e0] sm:$0xff]
          %v8936 = vld [vmem:[#allocation3 + $0x1e8] sm:$0xff]
          %v8937 = vld [vmem:[#allocation3 + $0x1f0] sm:$0xff]
          %v8938 = vld [vmem:[#allocation3 + $0x1f8] sm:$0xff]
          %v8939 = vld [vmem:[#allocation3 + $0x200] sm:$0xff]
          %v8940 = vld [vmem:[#allocation3 + $0x208] sm:$0xff]
          %v8941 = vld [vmem:[#allocation3 + $0x210] sm:$0xff]
          %v8942 = vld [vmem:[#allocation3 + $0x218] sm:$0xff]
          %v8943 = vld [vmem:[#allocation3 + $0x220] sm:$0xff]
          %v8944 = vld [vmem:[#allocation3 + $0x228] sm:$0xff]
          %v8945 = vld [vmem:[#allocation3 + $0x230] sm:$0xff]
          %v8946 = vld [vmem:[#allocation3 + $0x238] sm:$0xff]
          %v8947 = vld [vmem:[#allocation3 + $0x240] sm:$0xff]
          %v8948 = vld [vmem:[#allocation3 + $0x248] sm:$0xff]
          %v8949 = vld [vmem:[#allocation3 + $0x250] sm:$0xff]
          %v8950 = vld [vmem:[#allocation3 + $0x258] sm:$0xff]
          %v8951 = vld [vmem:[#allocation3 + $0x260] sm:$0xff]
          %v8952 = vld [vmem:[#allocation3 + $0x268] sm:$0xff]
          %v8953 = vld [vmem:[#allocation3 + $0x270] sm:$0xff]
          %v8954 = vld [vmem:[#allocation3 + $0x278] sm:$0xff]
          %v8955 = vld [vmem:[#allocation3 + $0x280] sm:$0xff]
          %v8956 = vld [vmem:[#allocation3 + $0x288] sm:$0xff]
          %v8957 = vld [vmem:[#allocation3 + $0x290] sm:$0xff]
          %v8958 = vld [vmem:[#allocation3 + $0x298] sm:$0xff]
          %v8959 = vld [vmem:[#allocation3 + $0x2a0] sm:$0xff]
          %v8960 = vld [vmem:[#allocation3 + $0x2a8] sm:$0xff]
          %v8961 = vld [vmem:[#allocation3 + $0x2b0] sm:$0xff]
          %v8962 = vld [vmem:[#allocation3 + $0x2b8] sm:$0xff]
          %v8963 = vld [vmem:[#allocation3 + $0x2c0] sm:$0xff]
          %v8964 = vld [vmem:[#allocation3 + $0x2c8] sm:$0xff]
          %v8965 = vld [vmem:[#allocation3 + $0x2d0] sm:$0xff]
          %v8966 = vld [vmem:[#allocation3 + $0x2d8] sm:$0xff]
          %v8967 = vld [vmem:[#allocation3 + $0x2e0] sm:$0xff]
          %v8968 = vld [vmem:[#allocation3 + $0x2e8] sm:$0xff]
          %v8969 = vld [vmem:[#allocation3 + $0x2f0] sm:$0xff]
          %v8970 = vld [vmem:[#allocation3 + $0x2f8] sm:$0xff]
          %v8971 = vld [vmem:[#allocation3 + $0x300] sm:$0xff]
          %v8972 = vld [vmem:[#allocation3 + $0x308] sm:$0xff]
          %v8973 = vld [vmem:[#allocation3 + $0x310] sm:$0xff]
          %v8974 = vld [vmem:[#allocation3 + $0x318] sm:$0xff]
          %v8975 = vld [vmem:[#allocation3 + $0x320] sm:$0xff]
          %v8976 = vld [vmem:[#allocation3 + $0x328] sm:$0xff]
          %v8977 = vld [vmem:[#allocation3 + $0x330] sm:$0xff]
          %v8978 = vld [vmem:[#allocation3 + $0x338] sm:$0xff]
          %v8979 = vld [vmem:[#allocation3 + $0x340] sm:$0xff]
          %v8980 = vld [vmem:[#allocation3 + $0x348] sm:$0xff]
          %v8981 = vld [vmem:[#allocation3 + $0x350] sm:$0xff]
          %v8982 = vld [vmem:[#allocation3 + $0x358] sm:$0xff]
          %v8983 = vld [vmem:[#allocation3 + $0x360] sm:$0xff]
          %v8984 = vld [vmem:[#allocation3 + $0x368] sm:$0xff]
          %v8985 = vld [vmem:[#allocation3 + $0x370] sm:$0xff]
          %v8986 = vld [vmem:[#allocation3 + $0x378] sm:$0xff]
          %v8987 = vld [vmem:[#allocation3 + $0x380] sm:$0xff]
          %v8988 = vld [vmem:[#allocation3 + $0x388] sm:$0xff]
          %v8989 = vld [vmem:[#allocation3 + $0x390] sm:$0xff]
          %v8990 = vld [vmem:[#allocation3 + $0x398] sm:$0xff]
          %v8991 = vld [vmem:[#allocation3 + $0x3a0] sm:$0xff]
          %v8992 = vld [vmem:[#allocation3 + $0x3a8] sm:$0xff]
          %v8993 = vld [vmem:[#allocation3 + $0x3b0] sm:$0xff]
          %v8994 = vld [vmem:[#allocation3 + $0x3b8] sm:$0xff]
          %v8995 = vld [vmem:[#allocation3 + $0x3c0] sm:$0xff]
          %v8996 = vld [vmem:[#allocation3 + $0x3c8] sm:$0xff]
          %v8997 = vld [vmem:[#allocation3 + $0x3d0] sm:$0xff]
          %v8998 = vld [vmem:[#allocation3 + $0x3d8] sm:$0xff]
          %v8999 = vld [vmem:[#allocation3 + $0x3e0] sm:$0xff]
          %v9000 = vld [vmem:[#allocation3 + $0x3e8] sm:$0xff]
          %v9001 = vld [vmem:[#allocation3 + $0x3f0] sm:$0xff]
          %v9002 = vld [vmem:[#allocation3 + $0x3f8] sm:$0xff]
          %v9003 = vrcp.pop %v8875
          %v9004 = vrcp.pop %v8876
          %v9005 = vrcp.pop %v8877
          %v9006 = vrcp.pop %v8878
          %v9007 = vrcp.pop %v8879
          %v9008 = vrcp.pop %v8880
          %v9009 = vrcp.pop %v8881
          %v9010 = vrcp.pop %v8882
          %v9011 = vrcp.pop %v8883
          %v9012 = vrcp.pop %v8884
          %v9013 = vrcp.pop %v8885
          %v9014 = vrcp.pop %v8886
          %v9015 = vrcp.pop %v8887
          %v9016 = vrcp.pop %v8888
          %v9017 = vrcp.pop %v8889
          %v9018 = vrcp.pop %v8890
          %v9019 = vrcp.pop %v8891
          %v9020 = vrcp.pop %v8892
          %v9021 = vrcp.pop %v8893
          %v9022 = vrcp.pop %v8894
          %v9023 = vrcp.pop %v8895
          %v9024 = vrcp.pop %v8896
          %v9025 = vrcp.pop %v8897
          %v9026 = vrcp.pop %v8898
          %v9027 = vrcp.pop %v8899
          %v9028 = vrcp.pop %v8900
          %v9029 = vrcp.pop %v8901
          %v9030 = vrcp.pop %v8902
          %v9031 = vrcp.pop %v8903
          %v9032 = vrcp.pop %v8904
          %v9033 = vrcp.pop %v8905
          %v9034 = vrcp.pop %v8906
          %v9035 = vrcp.pop %v8907
          %v9036 = vrcp.pop %v8908
          %v9037 = vrcp.pop %v8909
          %v9038 = vrcp.pop %v8910
          %v9039 = vrcp.pop %v8911
          %v9040 = vrcp.pop %v8912
          %v9041 = vrcp.pop %v8913
          %v9042 = vrcp.pop %v8914
          %v9043 = vrcp.pop %v8915
          %v9044 = vrcp.pop %v8916
          %v9045 = vrcp.pop %v8917
          %v9046 = vrcp.pop %v8918
          %v9047 = vrcp.pop %v8919
          %v9048 = vrcp.pop %v8920
          %v9049 = vrcp.pop %v8921
          %v9050 = vrcp.pop %v8922
          %v9051 = vrcp.pop %v8923
          %v9052 = vrcp.pop %v8924
          %v9053 = vrcp.pop %v8925
          %v9054 = vrcp.pop %v8926
          %v9055 = vrcp.pop %v8927
          %v9056 = vrcp.pop %v8928
          %v9057 = vrcp.pop %v8929
          %v9058 = vrcp.pop %v8930
          %v9059 = vrcp.pop %v8931
          %v9060 = vrcp.pop %v8932
          %v9061 = vrcp.pop %v8933
          %v9062 = vrcp.pop %v8934
          %v9063 = vrcp.pop %v8935
          %v9064 = vrcp.pop %v8936
          %v9065 = vrcp.pop %v8937
          %v9066 = vrcp.pop %v8938
          %v9067 = vrcp.pop %v8939
          %v9068 = vrcp.pop %v8940
          %v9069 = vrcp.pop %v8941
          %v9070 = vrcp.pop %v8942
          %v9071 = vrcp.pop %v8943
          %v9072 = vrcp.pop %v8944
          %v9073 = vrcp.pop %v8945
          %v9074 = vrcp.pop %v8946
          %v9075 = vrcp.pop %v8947
          %v9076 = vrcp.pop %v8948
          %v9077 = vrcp.pop %v8949
          %v9078 = vrcp.pop %v8950
          %v9079 = vrcp.pop %v8951
          %v9080 = vrcp.pop %v8952
          %v9081 = vrcp.pop %v8953
          %v9082 = vrcp.pop %v8954
          %v9083 = vrcp.pop %v8955
          %v9084 = vrcp.pop %v8956
          %v9085 = vrcp.pop %v8957
          %v9086 = vrcp.pop %v8958
          %v9087 = vrcp.pop %v8959
          %v9088 = vrcp.pop %v8960
          %v9089 = vrcp.pop %v8961
          %v9090 = vrcp.pop %v8962
          %v9091 = vrcp.pop %v8963
          %v9092 = vrcp.pop %v8964
          %v9093 = vrcp.pop %v8965
          %v9094 = vrcp.pop %v8966
          %v9095 = vrcp.pop %v8967
          %v9096 = vrcp.pop %v8968
          %v9097 = vrcp.pop %v8969
          %v9098 = vrcp.pop %v8970
          %v9099 = vrcp.pop %v8971
          %v9100 = vrcp.pop %v8972
          %v9101 = vrcp.pop %v8973
          %v9102 = vrcp.pop %v8974
          %v9103 = vrcp.pop %v8975
          %v9104 = vrcp.pop %v8976
          %v9105 = vrcp.pop %v8977
          %v9106 = vrcp.pop %v8978
          %v9107 = vrcp.pop %v8979
          %v9108 = vrcp.pop %v8980
          %v9109 = vrcp.pop %v8981
          %v9110 = vrcp.pop %v8982
          %v9111 = vrcp.pop %v8983
          %v9112 = vrcp.pop %v8984
          %v9113 = vrcp.pop %v8985
          %v9114 = vrcp.pop %v8986
          %v9115 = vrcp.pop %v8987
          %v9116 = vrcp.pop %v8988
          %v9117 = vrcp.pop %v8989
          %v9118 = vrcp.pop %v8990
          %v9119 = vrcp.pop %v8991
          %v9120 = vrcp.pop %v8992
          %v9121 = vrcp.pop %v8993
          %v9122 = vrcp.pop %v8994
          %v9123 = vrcp.pop %v8995
          %v9124 = vrcp.pop %v8996
          %v9125 = vrcp.pop %v8997
          %v9126 = vrcp.pop %v8998
          %v9127 = vrcp.pop %v8999
          %v9128 = vrcp.pop %v9000
          %v9129 = vrcp.pop %v9001
          %v9130 = vrcp.pop %v9002
          %v9131 = vld [vmem:[#allocation4] sm:$0xff]
          %v9132 = vld [vmem:[#allocation4 + $0x8] sm:$0xff]
          %v9133 = vld [vmem:[#allocation4 + $0x10] sm:$0xff]
          %v9134 = vld [vmem:[#allocation4 + $0x18] sm:$0xff]
          %v9135 = vld [vmem:[#allocation4 + $0x20] sm:$0xff]
          %v9136 = vld [vmem:[#allocation4 + $0x28] sm:$0xff]
          %v9137 = vld [vmem:[#allocation4 + $0x30] sm:$0xff]
          %v9138 = vld [vmem:[#allocation4 + $0x38] sm:$0xff]
          %v9139 = vld [vmem:[#allocation4 + $0x40] sm:$0xff]
          %v9140 = vld [vmem:[#allocation4 + $0x48] sm:$0xff]
          %v9141 = vld [vmem:[#allocation4 + $0x50] sm:$0xff]
          %v9142 = vld [vmem:[#allocation4 + $0x58] sm:$0xff]
          %v9143 = vld [vmem:[#allocation4 + $0x60] sm:$0xff]
          %v9144 = vld [vmem:[#allocation4 + $0x68] sm:$0xff]
          %v9145 = vld [vmem:[#allocation4 + $0x70] sm:$0xff]
          %v9146 = vld [vmem:[#allocation4 + $0x78] sm:$0xff]
          %v9147 = vld [vmem:[#allocation4 + $0x80] sm:$0xff]
          %v9148 = vld [vmem:[#allocation4 + $0x88] sm:$0xff]
          %v9149 = vld [vmem:[#allocation4 + $0x90] sm:$0xff]
          %v9150 = vld [vmem:[#allocation4 + $0x98] sm:$0xff]
          %v9151 = vld [vmem:[#allocation4 + $0xa0] sm:$0xff]
          %v9152 = vld [vmem:[#allocation4 + $0xa8] sm:$0xff]
          %v9153 = vld [vmem:[#allocation4 + $0xb0] sm:$0xff]
          %v9154 = vld [vmem:[#allocation4 + $0xb8] sm:$0xff]
          %v9155 = vld [vmem:[#allocation4 + $0xc0] sm:$0xff]
          %v9156 = vld [vmem:[#allocation4 + $0xc8] sm:$0xff]
          %v9157 = vld [vmem:[#allocation4 + $0xd0] sm:$0xff]
          %v9158 = vld [vmem:[#allocation4 + $0xd8] sm:$0xff]
          %v9159 = vld [vmem:[#allocation4 + $0xe0] sm:$0xff]
          %v9160 = vld [vmem:[#allocation4 + $0xe8] sm:$0xff]
          %v9161 = vld [vmem:[#allocation4 + $0xf0] sm:$0xff]
          %v9162 = vld [vmem:[#allocation4 + $0xf8] sm:$0xff]
          %v9163 = vld [vmem:[#allocation4 + $0x100] sm:$0xff]
          %v9164 = vld [vmem:[#allocation4 + $0x108] sm:$0xff]
          %v9165 = vld [vmem:[#allocation4 + $0x110] sm:$0xff]
          %v9166 = vld [vmem:[#allocation4 + $0x118] sm:$0xff]
          %v9167 = vld [vmem:[#allocation4 + $0x120] sm:$0xff]
          %v9168 = vld [vmem:[#allocation4 + $0x128] sm:$0xff]
          %v9169 = vld [vmem:[#allocation4 + $0x130] sm:$0xff]
          %v9170 = vld [vmem:[#allocation4 + $0x138] sm:$0xff]
          %v9171 = vld [vmem:[#allocation4 + $0x140] sm:$0xff]
          %v9172 = vld [vmem:[#allocation4 + $0x148] sm:$0xff]
          %v9173 = vld [vmem:[#allocation4 + $0x150] sm:$0xff]
          %v9174 = vld [vmem:[#allocation4 + $0x158] sm:$0xff]
          %v9175 = vld [vmem:[#allocation4 + $0x160] sm:$0xff]
          %v9176 = vld [vmem:[#allocation4 + $0x168] sm:$0xff]
          %v9177 = vld [vmem:[#allocation4 + $0x170] sm:$0xff]
          %v9178 = vld [vmem:[#allocation4 + $0x178] sm:$0xff]
          %v9179 = vld [vmem:[#allocation4 + $0x180] sm:$0xff]
          %v9180 = vld [vmem:[#allocation4 + $0x188] sm:$0xff]
          %v9181 = vld [vmem:[#allocation4 + $0x190] sm:$0xff]
          %v9182 = vld [vmem:[#allocation4 + $0x198] sm:$0xff]
          %v9183 = vld [vmem:[#allocation4 + $0x1a0] sm:$0xff]
          %v9184 = vld [vmem:[#allocation4 + $0x1a8] sm:$0xff]
          %v9185 = vld [vmem:[#allocation4 + $0x1b0] sm:$0xff]
          %v9186 = vld [vmem:[#allocation4 + $0x1b8] sm:$0xff]
          %v9187 = vld [vmem:[#allocation4 + $0x1c0] sm:$0xff]
          %v9188 = vld [vmem:[#allocation4 + $0x1c8] sm:$0xff]
          %v9189 = vld [vmem:[#allocation4 + $0x1d0] sm:$0xff]
          %v9190 = vld [vmem:[#allocation4 + $0x1d8] sm:$0xff]
          %v9191 = vld [vmem:[#allocation4 + $0x1e0] sm:$0xff]
          %v9192 = vld [vmem:[#allocation4 + $0x1e8] sm:$0xff]
          %v9193 = vld [vmem:[#allocation4 + $0x1f0] sm:$0xff]
          %v9194 = vld [vmem:[#allocation4 + $0x1f8] sm:$0xff]
          %v9195 = vld [vmem:[#allocation4 + $0x200] sm:$0xff]
          %v9196 = vld [vmem:[#allocation4 + $0x208] sm:$0xff]
          %v9197 = vld [vmem:[#allocation4 + $0x210] sm:$0xff]
          %v9198 = vld [vmem:[#allocation4 + $0x218] sm:$0xff]
          %v9199 = vld [vmem:[#allocation4 + $0x220] sm:$0xff]
          %v9200 = vld [vmem:[#allocation4 + $0x228] sm:$0xff]
          %v9201 = vld [vmem:[#allocation4 + $0x230] sm:$0xff]
          %v9202 = vld [vmem:[#allocation4 + $0x238] sm:$0xff]
          %v9203 = vld [vmem:[#allocation4 + $0x240] sm:$0xff]
          %v9204 = vld [vmem:[#allocation4 + $0x248] sm:$0xff]
          %v9205 = vld [vmem:[#allocation4 + $0x250] sm:$0xff]
          %v9206 = vld [vmem:[#allocation4 + $0x258] sm:$0xff]
          %v9207 = vld [vmem:[#allocation4 + $0x260] sm:$0xff]
          %v9208 = vld [vmem:[#allocation4 + $0x268] sm:$0xff]
          %v9209 = vld [vmem:[#allocation4 + $0x270] sm:$0xff]
          %v9210 = vld [vmem:[#allocation4 + $0x278] sm:$0xff]
          %v9211 = vld [vmem:[#allocation4 + $0x280] sm:$0xff]
          %v9212 = vld [vmem:[#allocation4 + $0x288] sm:$0xff]
          %v9213 = vld [vmem:[#allocation4 + $0x290] sm:$0xff]
          %v9214 = vld [vmem:[#allocation4 + $0x298] sm:$0xff]
          %v9215 = vld [vmem:[#allocation4 + $0x2a0] sm:$0xff]
          %v9216 = vld [vmem:[#allocation4 + $0x2a8] sm:$0xff]
          %v9217 = vld [vmem:[#allocation4 + $0x2b0] sm:$0xff]
          %v9218 = vld [vmem:[#allocation4 + $0x2b8] sm:$0xff]
          %v9219 = vld [vmem:[#allocation4 + $0x2c0] sm:$0xff]
          %v9220 = vld [vmem:[#allocation4 + $0x2c8] sm:$0xff]
          %v9221 = vld [vmem:[#allocation4 + $0x2d0] sm:$0xff]
          %v9222 = vld [vmem:[#allocation4 + $0x2d8] sm:$0xff]
          %v9223 = vld [vmem:[#allocation4 + $0x2e0] sm:$0xff]
          %v9224 = vld [vmem:[#allocation4 + $0x2e8] sm:$0xff]
          %v9225 = vld [vmem:[#allocation4 + $0x2f0] sm:$0xff]
          %v9226 = vld [vmem:[#allocation4 + $0x2f8] sm:$0xff]
          %v9227 = vld [vmem:[#allocation4 + $0x300] sm:$0xff]
          %v9228 = vld [vmem:[#allocation4 + $0x308] sm:$0xff]
          %v9229 = vld [vmem:[#allocation4 + $0x310] sm:$0xff]
          %v9230 = vld [vmem:[#allocation4 + $0x318] sm:$0xff]
          %v9231 = vld [vmem:[#allocation4 + $0x320] sm:$0xff]
          %v9232 = vld [vmem:[#allocation4 + $0x328] sm:$0xff]
          %v9233 = vld [vmem:[#allocation4 + $0x330] sm:$0xff]
          %v9234 = vld [vmem:[#allocation4 + $0x338] sm:$0xff]
          %v9235 = vld [vmem:[#allocation4 + $0x340] sm:$0xff]
          %v9236 = vld [vmem:[#allocation4 + $0x348] sm:$0xff]
          %v9237 = vld [vmem:[#allocation4 + $0x350] sm:$0xff]
          %v9238 = vld [vmem:[#allocation4 + $0x358] sm:$0xff]
          %v9239 = vld [vmem:[#allocation4 + $0x360] sm:$0xff]
          %v9240 = vld [vmem:[#allocation4 + $0x368] sm:$0xff]
          %v9241 = vld [vmem:[#allocation4 + $0x370] sm:$0xff]
          %v9242 = vld [vmem:[#allocation4 + $0x378] sm:$0xff]
          %v9243 = vld [vmem:[#allocation4 + $0x380] sm:$0xff]
          %v9244 = vld [vmem:[#allocation4 + $0x388] sm:$0xff]
          %v9245 = vld [vmem:[#allocation4 + $0x390] sm:$0xff]
          %v9246 = vld [vmem:[#allocation4 + $0x398] sm:$0xff]
          %v9247 = vld [vmem:[#allocation4 + $0x3a0] sm:$0xff]
          %v9248 = vld [vmem:[#allocation4 + $0x3a8] sm:$0xff]
          %v9249 = vld [vmem:[#allocation4 + $0x3b0] sm:$0xff]
          %v9250 = vld [vmem:[#allocation4 + $0x3b8] sm:$0xff]
          %v9251 = vld [vmem:[#allocation4 + $0x3c0] sm:$0xff]
          %v9252 = vld [vmem:[#allocation4 + $0x3c8] sm:$0xff]
          %v9253 = vld [vmem:[#allocation4 + $0x3d0] sm:$0xff]
          %v9254 = vld [vmem:[#allocation4 + $0x3d8] sm:$0xff]
          %v9255 = vld [vmem:[#allocation4 + $0x3e0] sm:$0xff]
          %v9256 = vld [vmem:[#allocation4 + $0x3e8] sm:$0xff]
          %v9257 = vld [vmem:[#allocation4 + $0x3f0] sm:$0xff]
          %v9258 = vld [vmem:[#allocation4 + $0x3f8] sm:$0xff]
          %9260 = vset.pattern.permute.xlu0 0
          %9261 = vperm.xlu0 %9260, %v9003
          %v9262 = vpop.permute.xlu0 %9261
          %9265 = vset.pattern.permute.xlu0 0
          %9266 = vperm.xlu0 %9265, %v9004
          %v9267 = vpop.permute.xlu0 %9266
          %9270 = vset.pattern.permute.xlu0 0
          %9271 = vperm.xlu0 %9270, %v9005
          %v9272 = vpop.permute.xlu0 %9271
          %9275 = vset.pattern.permute.xlu0 0
          %9276 = vperm.xlu0 %9275, %v9006
          %v9277 = vpop.permute.xlu0 %9276
          %9280 = vset.pattern.permute.xlu0 0
          %9281 = vperm.xlu0 %9280, %v9007
          %v9282 = vpop.permute.xlu0 %9281
          %9285 = vset.pattern.permute.xlu0 0
          %9286 = vperm.xlu0 %9285, %v9008
          %v9287 = vpop.permute.xlu0 %9286
          %9290 = vset.pattern.permute.xlu0 0
          %9291 = vperm.xlu0 %9290, %v9009
          %v9292 = vpop.permute.xlu0 %9291
          %9295 = vset.pattern.permute.xlu0 0
          %9296 = vperm.xlu0 %9295, %v9010
          %v9297 = vpop.permute.xlu0 %9296
          %9300 = vset.pattern.permute.xlu0 0
          %9301 = vperm.xlu0 %9300, %v9011
          %v9302 = vpop.permute.xlu0 %9301
          %9305 = vset.pattern.permute.xlu0 0
          %9306 = vperm.xlu0 %9305, %v9012
          %v9307 = vpop.permute.xlu0 %9306
          %9310 = vset.pattern.permute.xlu0 0
          %9311 = vperm.xlu0 %9310, %v9013
          %v9312 = vpop.permute.xlu0 %9311
          %9315 = vset.pattern.permute.xlu0 0
          %9316 = vperm.xlu0 %9315, %v9014
          %v9317 = vpop.permute.xlu0 %9316
          %9320 = vset.pattern.permute.xlu0 0
          %9321 = vperm.xlu0 %9320, %v9015
          %v9322 = vpop.permute.xlu0 %9321
          %9325 = vset.pattern.permute.xlu0 0
          %9326 = vperm.xlu0 %9325, %v9016
          %v9327 = vpop.permute.xlu0 %9326
          %9330 = vset.pattern.permute.xlu0 0
          %9331 = vperm.xlu0 %9330, %v9017
          %v9332 = vpop.permute.xlu0 %9331
          %9335 = vset.pattern.permute.xlu0 0
          %9336 = vperm.xlu0 %9335, %v9018
          %v9337 = vpop.permute.xlu0 %9336
          %9340 = vset.pattern.permute.xlu0 0
          %9341 = vperm.xlu0 %9340, %v9019
          %v9342 = vpop.permute.xlu0 %9341
          %9345 = vset.pattern.permute.xlu0 0
          %9346 = vperm.xlu0 %9345, %v9020
          %v9347 = vpop.permute.xlu0 %9346
          %9350 = vset.pattern.permute.xlu0 0
          %9351 = vperm.xlu0 %9350, %v9021
          %v9352 = vpop.permute.xlu0 %9351
          %9355 = vset.pattern.permute.xlu0 0
          %9356 = vperm.xlu0 %9355, %v9022
          %v9357 = vpop.permute.xlu0 %9356
          %9360 = vset.pattern.permute.xlu0 0
          %9361 = vperm.xlu0 %9360, %v9023
          %v9362 = vpop.permute.xlu0 %9361
          %9365 = vset.pattern.permute.xlu0 0
          %9366 = vperm.xlu0 %9365, %v9024
          %v9367 = vpop.permute.xlu0 %9366
          %9370 = vset.pattern.permute.xlu0 0
          %9371 = vperm.xlu0 %9370, %v9025
          %v9372 = vpop.permute.xlu0 %9371
          %9375 = vset.pattern.permute.xlu0 0
          %9376 = vperm.xlu0 %9375, %v9026
          %v9377 = vpop.permute.xlu0 %9376
          %9380 = vset.pattern.permute.xlu0 0
          %9381 = vperm.xlu0 %9380, %v9027
          %v9382 = vpop.permute.xlu0 %9381
          %9385 = vset.pattern.permute.xlu0 0
          %9386 = vperm.xlu0 %9385, %v9028
          %v9387 = vpop.permute.xlu0 %9386
          %9390 = vset.pattern.permute.xlu0 0
          %9391 = vperm.xlu0 %9390, %v9029
          %v9392 = vpop.permute.xlu0 %9391
          %9395 = vset.pattern.permute.xlu0 0
          %9396 = vperm.xlu0 %9395, %v9030
          %v9397 = vpop.permute.xlu0 %9396
          %9400 = vset.pattern.permute.xlu0 0
          %9401 = vperm.xlu0 %9400, %v9031
          %v9402 = vpop.permute.xlu0 %9401
          %9405 = vset.pattern.permute.xlu0 0
          %9406 = vperm.xlu0 %9405, %v9032
          %v9407 = vpop.permute.xlu0 %9406
          %9410 = vset.pattern.permute.xlu0 0
          %9411 = vperm.xlu0 %9410, %v9033
          %v9412 = vpop.permute.xlu0 %9411
          %9415 = vset.pattern.permute.xlu0 0
          %9416 = vperm.xlu0 %9415, %v9034
          %v9417 = vpop.permute.xlu0 %9416
          %9420 = vset.pattern.permute.xlu0 0
          %9421 = vperm.xlu0 %9420, %v9035
          %v9422 = vpop.permute.xlu0 %9421
          %9425 = vset.pattern.permute.xlu0 0
          %9426 = vperm.xlu0 %9425, %v9036
          %v9427 = vpop.permute.xlu0 %9426
          %9430 = vset.pattern.permute.xlu0 0
          %9431 = vperm.xlu0 %9430, %v9037
          %v9432 = vpop.permute.xlu0 %9431
          %9435 = vset.pattern.permute.xlu0 0
          %9436 = vperm.xlu0 %9435, %v9038
          %v9437 = vpop.permute.xlu0 %9436
          %9440 = vset.pattern.permute.xlu0 0
          %9441 = vperm.xlu0 %9440, %v9039
          %v9442 = vpop.permute.xlu0 %9441
          %9445 = vset.pattern.permute.xlu0 0
          %9446 = vperm.xlu0 %9445, %v9040
          %v9447 = vpop.permute.xlu0 %9446
          %9450 = vset.pattern.permute.xlu0 0
          %9451 = vperm.xlu0 %9450, %v9041
          %v9452 = vpop.permute.xlu0 %9451
          %9455 = vset.pattern.permute.xlu0 0
          %9456 = vperm.xlu0 %9455, %v9042
          %v9457 = vpop.permute.xlu0 %9456
          %9460 = vset.pattern.permute.xlu0 0
          %9461 = vperm.xlu0 %9460, %v9043
          %v9462 = vpop.permute.xlu0 %9461
          %9465 = vset.pattern.permute.xlu0 0
          %9466 = vperm.xlu0 %9465, %v9044
          %v9467 = vpop.permute.xlu0 %9466
          %9470 = vset.pattern.permute.xlu0 0
          %9471 = vperm.xlu0 %9470, %v9045
          %v9472 = vpop.permute.xlu0 %9471
          %9475 = vset.pattern.permute.xlu0 0
          %9476 = vperm.xlu0 %9475, %v9046
          %v9477 = vpop.permute.xlu0 %9476
          %9480 = vset.pattern.permute.xlu0 0
          %9481 = vperm.xlu0 %9480, %v9047
          %v9482 = vpop.permute.xlu0 %9481
          %9485 = vset.pattern.permute.xlu0 0
          %9486 = vperm.xlu0 %9485, %v9048
          %v9487 = vpop.permute.xlu0 %9486
          %9490 = vset.pattern.permute.xlu0 0
          %9491 = vperm.xlu0 %9490, %v9049
          %v9492 = vpop.permute.xlu0 %9491
          %9495 = vset.pattern.permute.xlu0 0
          %9496 = vperm.xlu0 %9495, %v9050
          %v9497 = vpop.permute.xlu0 %9496
          %9500 = vset.pattern.permute.xlu0 0
          %9501 = vperm.xlu0 %9500, %v9051
          %v9502 = vpop.permute.xlu0 %9501
          %9505 = vset.pattern.permute.xlu0 0
          %9506 = vperm.xlu0 %9505, %v9052
          %v9507 = vpop.permute.xlu0 %9506
          %9510 = vset.pattern.permute.xlu0 0
          %9511 = vperm.xlu0 %9510, %v9053
          %v9512 = vpop.permute.xlu0 %9511
          %9515 = vset.pattern.permute.xlu0 0
          %9516 = vperm.xlu0 %9515, %v9054
          %v9517 = vpop.permute.xlu0 %9516
          %9520 = vset.pattern.permute.xlu0 0
          %9521 = vperm.xlu0 %9520, %v9055
          %v9522 = vpop.permute.xlu0 %9521
          %9525 = vset.pattern.permute.xlu0 0
          %9526 = vperm.xlu0 %9525, %v9056
          %v9527 = vpop.permute.xlu0 %9526
          %9530 = vset.pattern.permute.xlu0 0
          %9531 = vperm.xlu0 %9530, %v9057
          %v9532 = vpop.permute.xlu0 %9531
          %9535 = vset.pattern.permute.xlu0 0
          %9536 = vperm.xlu0 %9535, %v9058
          %v9537 = vpop.permute.xlu0 %9536
          %9540 = vset.pattern.permute.xlu0 0
          %9541 = vperm.xlu0 %9540, %v9059
          %v9542 = vpop.permute.xlu0 %9541
          %9545 = vset.pattern.permute.xlu0 0
          %9546 = vperm.xlu0 %9545, %v9060
          %v9547 = vpop.permute.xlu0 %9546
          %9550 = vset.pattern.permute.xlu0 0
          %9551 = vperm.xlu0 %9550, %v9061
          %v9552 = vpop.permute.xlu0 %9551
          %9555 = vset.pattern.permute.xlu0 0
          %9556 = vperm.xlu0 %9555, %v9062
          %v9557 = vpop.permute.xlu0 %9556
          %9560 = vset.pattern.permute.xlu0 0
          %9561 = vperm.xlu0 %9560, %v9063
          %v9562 = vpop.permute.xlu0 %9561
          %9565 = vset.pattern.permute.xlu0 0
          %9566 = vperm.xlu0 %9565, %v9064
          %v9567 = vpop.permute.xlu0 %9566
          %9570 = vset.pattern.permute.xlu0 0
          %9571 = vperm.xlu0 %9570, %v9065
          %v9572 = vpop.permute.xlu0 %9571
          %9575 = vset.pattern.permute.xlu0 0
          %9576 = vperm.xlu0 %9575, %v9066
          %v9577 = vpop.permute.xlu0 %9576
          %9580 = vset.pattern.permute.xlu0 0
          %9581 = vperm.xlu0 %9580, %v9067
          %v9582 = vpop.permute.xlu0 %9581
          %9585 = vset.pattern.permute.xlu0 0
          %9586 = vperm.xlu0 %9585, %v9068
          %v9587 = vpop.permute.xlu0 %9586
          %9590 = vset.pattern.permute.xlu0 0
          %9591 = vperm.xlu0 %9590, %v9069
          %v9592 = vpop.permute.xlu0 %9591
          %9595 = vset.pattern.permute.xlu0 0
          %9596 = vperm.xlu0 %9595, %v9070
          %v9597 = vpop.permute.xlu0 %9596
          %9600 = vset.pattern.permute.xlu0 0
          %9601 = vperm.xlu0 %9600, %v9071
          %v9602 = vpop.permute.xlu0 %9601
          %9605 = vset.pattern.permute.xlu0 0
          %9606 = vperm.xlu0 %9605, %v9072
          %v9607 = vpop.permute.xlu0 %9606
          %9610 = vset.pattern.permute.xlu0 0
          %9611 = vperm.xlu0 %9610, %v9073
          %v9612 = vpop.permute.xlu0 %9611
          %9615 = vset.pattern.permute.xlu0 0
          %9616 = vperm.xlu0 %9615, %v9074
          %v9617 = vpop.permute.xlu0 %9616
          %9620 = vset.pattern.permute.xlu0 0
          %9621 = vperm.xlu0 %9620, %v9075
          %v9622 = vpop.permute.xlu0 %9621
          %9625 = vset.pattern.permute.xlu0 0
          %9626 = vperm.xlu0 %9625, %v9076
          %v9627 = vpop.permute.xlu0 %9626
          %9630 = vset.pattern.permute.xlu0 0
          %9631 = vperm.xlu0 %9630, %v9077
          %v9632 = vpop.permute.xlu0 %9631
          %9635 = vset.pattern.permute.xlu0 0
          %9636 = vperm.xlu0 %9635, %v9078
          %v9637 = vpop.permute.xlu0 %9636
          %9640 = vset.pattern.permute.xlu0 0
          %9641 = vperm.xlu0 %9640, %v9079
          %v9642 = vpop.permute.xlu0 %9641
          %9645 = vset.pattern.permute.xlu0 0
          %9646 = vperm.xlu0 %9645, %v9080
          %v9647 = vpop.permute.xlu0 %9646
          %9650 = vset.pattern.permute.xlu0 0
          %9651 = vperm.xlu0 %9650, %v9081
          %v9652 = vpop.permute.xlu0 %9651
          %9655 = vset.pattern.permute.xlu0 0
          %9656 = vperm.xlu0 %9655, %v9082
          %v9657 = vpop.permute.xlu0 %9656
          %9660 = vset.pattern.permute.xlu0 0
          %9661 = vperm.xlu0 %9660, %v9083
          %v9662 = vpop.permute.xlu0 %9661
          %9665 = vset.pattern.permute.xlu0 0
          %9666 = vperm.xlu0 %9665, %v9084
          %v9667 = vpop.permute.xlu0 %9666
          %9670 = vset.pattern.permute.xlu0 0
          %9671 = vperm.xlu0 %9670, %v9085
          %v9672 = vpop.permute.xlu0 %9671
          %9675 = vset.pattern.permute.xlu0 0
          %9676 = vperm.xlu0 %9675, %v9086
          %v9677 = vpop.permute.xlu0 %9676
          %9680 = vset.pattern.permute.xlu0 0
          %9681 = vperm.xlu0 %9680, %v9087
          %v9682 = vpop.permute.xlu0 %9681
          %9685 = vset.pattern.permute.xlu0 0
          %9686 = vperm.xlu0 %9685, %v9088
          %v9687 = vpop.permute.xlu0 %9686
          %9690 = vset.pattern.permute.xlu0 0
          %9691 = vperm.xlu0 %9690, %v9089
          %v9692 = vpop.permute.xlu0 %9691
          %9695 = vset.pattern.permute.xlu0 0
          %9696 = vperm.xlu0 %9695, %v9090
          %v9697 = vpop.permute.xlu0 %9696
          %9700 = vset.pattern.permute.xlu0 0
          %9701 = vperm.xlu0 %9700, %v9091
          %v9702 = vpop.permute.xlu0 %9701
          %9705 = vset.pattern.permute.xlu0 0
          %9706 = vperm.xlu0 %9705, %v9092
          %v9707 = vpop.permute.xlu0 %9706
          %9710 = vset.pattern.permute.xlu0 0
          %9711 = vperm.xlu0 %9710, %v9093
          %v9712 = vpop.permute.xlu0 %9711
          %9715 = vset.pattern.permute.xlu0 0
          %9716 = vperm.xlu0 %9715, %v9094
          %v9717 = vpop.permute.xlu0 %9716
          %9720 = vset.pattern.permute.xlu0 0
          %9721 = vperm.xlu0 %9720, %v9095
          %v9722 = vpop.permute.xlu0 %9721
          %9725 = vset.pattern.permute.xlu0 0
          %9726 = vperm.xlu0 %9725, %v9096
          %v9727 = vpop.permute.xlu0 %9726
          %9730 = vset.pattern.permute.xlu0 0
          %9731 = vperm.xlu0 %9730, %v9097
          %v9732 = vpop.permute.xlu0 %9731
          %9735 = vset.pattern.permute.xlu0 0
          %9736 = vperm.xlu0 %9735, %v9098
          %v9737 = vpop.permute.xlu0 %9736
          %9740 = vset.pattern.permute.xlu0 0
          %9741 = vperm.xlu0 %9740, %v9099
          %v9742 = vpop.permute.xlu0 %9741
          %9745 = vset.pattern.permute.xlu0 0
          %9746 = vperm.xlu0 %9745, %v9100
          %v9747 = vpop.permute.xlu0 %9746
          %9750 = vset.pattern.permute.xlu0 0
          %9751 = vperm.xlu0 %9750, %v9101
          %v9752 = vpop.permute.xlu0 %9751
          %9755 = vset.pattern.permute.xlu0 0
          %9756 = vperm.xlu0 %9755, %v9102
          %v9757 = vpop.permute.xlu0 %9756
          %9760 = vset.pattern.permute.xlu0 0
          %9761 = vperm.xlu0 %9760, %v9103
          %v9762 = vpop.permute.xlu0 %9761
          %9765 = vset.pattern.permute.xlu0 0
          %9766 = vperm.xlu0 %9765, %v9104
          %v9767 = vpop.permute.xlu0 %9766
          %9770 = vset.pattern.permute.xlu0 0
          %9771 = vperm.xlu0 %9770, %v9105
          %v9772 = vpop.permute.xlu0 %9771
          %9775 = vset.pattern.permute.xlu0 0
          %9776 = vperm.xlu0 %9775, %v9106
          %v9777 = vpop.permute.xlu0 %9776
          %9780 = vset.pattern.permute.xlu0 0
          %9781 = vperm.xlu0 %9780, %v9107
          %v9782 = vpop.permute.xlu0 %9781
          %9785 = vset.pattern.permute.xlu0 0
          %9786 = vperm.xlu0 %9785, %v9108
          %v9787 = vpop.permute.xlu0 %9786
          %9790 = vset.pattern.permute.xlu0 0
          %9791 = vperm.xlu0 %9790, %v9109
          %v9792 = vpop.permute.xlu0 %9791
          %9795 = vset.pattern.permute.xlu0 0
          %9796 = vperm.xlu0 %9795, %v9110
          %v9797 = vpop.permute.xlu0 %9796
          %9800 = vset.pattern.permute.xlu0 0
          %9801 = vperm.xlu0 %9800, %v9111
          %v9802 = vpop.permute.xlu0 %9801
          %9805 = vset.pattern.permute.xlu0 0
          %9806 = vperm.xlu0 %9805, %v9112
          %v9807 = vpop.permute.xlu0 %9806
          %9810 = vset.pattern.permute.xlu0 0
          %9811 = vperm.xlu0 %9810, %v9113
          %v9812 = vpop.permute.xlu0 %9811
          %9815 = vset.pattern.permute.xlu0 0
          %9816 = vperm.xlu0 %9815, %v9114
          %v9817 = vpop.permute.xlu0 %9816
          %9820 = vset.pattern.permute.xlu0 0
          %9821 = vperm.xlu0 %9820, %v9115
          %v9822 = vpop.permute.xlu0 %9821
          %9825 = vset.pattern.permute.xlu0 0
          %9826 = vperm.xlu0 %9825, %v9116
          %v9827 = vpop.permute.xlu0 %9826
          %9830 = vset.pattern.permute.xlu0 0
          %9831 = vperm.xlu0 %9830, %v9117
          %v9832 = vpop.permute.xlu0 %9831
          %9835 = vset.pattern.permute.xlu0 0
          %9836 = vperm.xlu0 %9835, %v9118
          %v9837 = vpop.permute.xlu0 %9836
          %9840 = vset.pattern.permute.xlu0 0
          %9841 = vperm.xlu0 %9840, %v9119
          %v9842 = vpop.permute.xlu0 %9841
          %9845 = vset.pattern.permute.xlu0 0
          %9846 = vperm.xlu0 %9845, %v9120
          %v9847 = vpop.permute.xlu0 %9846
          %9850 = vset.pattern.permute.xlu0 0
          %9851 = vperm.xlu0 %9850, %v9121
          %v9852 = vpop.permute.xlu0 %9851
          %9855 = vset.pattern.permute.xlu0 0
          %9856 = vperm.xlu0 %9855, %v9122
          %v9857 = vpop.permute.xlu0 %9856
          %9860 = vset.pattern.permute.xlu0 0
          %9861 = vperm.xlu0 %9860, %v9123
          %v9862 = vpop.permute.xlu0 %9861
          %9865 = vset.pattern.permute.xlu0 0
          %9866 = vperm.xlu0 %9865, %v9124
          %v9867 = vpop.permute.xlu0 %9866
          %9870 = vset.pattern.permute.xlu0 0
          %9871 = vperm.xlu0 %9870, %v9125
          %v9872 = vpop.permute.xlu0 %9871
          %9875 = vset.pattern.permute.xlu0 0
          %9876 = vperm.xlu0 %9875, %v9126
          %v9877 = vpop.permute.xlu0 %9876
          %9880 = vset.pattern.permute.xlu0 0
          %9881 = vperm.xlu0 %9880, %v9127
          %v9882 = vpop.permute.xlu0 %9881
          %9885 = vset.pattern.permute.xlu0 0
          %9886 = vperm.xlu0 %9885, %v9128
          %v9887 = vpop.permute.xlu0 %9886
          %9890 = vset.pattern.permute.xlu0 0
          %9891 = vperm.xlu0 %9890, %v9129
          %v9892 = vpop.permute.xlu0 %9891
          %9895 = vset.pattern.permute.xlu0 0
          %9896 = vperm.xlu0 %9895, %v9130
          %v9897 = vpop.permute.xlu0 %9896
          %v9899 = vmul.f32 %v9131, %v9262
          %v9900 = vmul.f32 %v9132, %v9267
          %v9901 = vmul.f32 %v9133, %v9272
          %v9902 = vmul.f32 %v9134, %v9277
          %v9903 = vmul.f32 %v9135, %v9282
          %v9904 = vmul.f32 %v9136, %v9287
          %v9905 = vmul.f32 %v9137, %v9292
          %v9906 = vmul.f32 %v9138, %v9297
          %v9907 = vmul.f32 %v9139, %v9302
          %v9908 = vmul.f32 %v9140, %v9307
          %v9909 = vmul.f32 %v9141, %v9312
          %v9910 = vmul.f32 %v9142, %v9317
          %v9911 = vmul.f32 %v9143, %v9322
          %v9912 = vmul.f32 %v9144, %v9327
          %v9913 = vmul.f32 %v9145, %v9332
          %v9914 = vmul.f32 %v9146, %v9337
          %v9915 = vmul.f32 %v9147, %v9342
          %v9916 = vmul.f32 %v9148, %v9347
          %v9917 = vmul.f32 %v9149, %v9352
          %v9918 = vmul.f32 %v9150, %v9357
          %v9919 = vmul.f32 %v9151, %v9362
          %v9920 = vmul.f32 %v9152, %v9367
          %v9921 = vmul.f32 %v9153, %v9372
          %v9922 = vmul.f32 %v9154, %v9377
          %v9923 = vmul.f32 %v9155, %v9382
          %v9924 = vmul.f32 %v9156, %v9387
          %v9925 = vmul.f32 %v9157, %v9392
          %v9926 = vmul.f32 %v9158, %v9397
          %v9927 = vmul.f32 %v9159, %v9402
          %v9928 = vmul.f32 %v9160, %v9407
          %v9929 = vmul.f32 %v9161, %v9412
          %v9930 = vmul.f32 %v9162, %v9417
          %v9931 = vmul.f32 %v9163, %v9422
          %v9932 = vmul.f32 %v9164, %v9427
          %v9933 = vmul.f32 %v9165, %v9432
          %v9934 = vmul.f32 %v9166, %v9437
          %v9935 = vmul.f32 %v9167, %v9442
          %v9936 = vmul.f32 %v9168, %v9447
          %v9937 = vmul.f32 %v9169, %v9452
          %v9938 = vmul.f32 %v9170, %v9457
          %v9939 = vmul.f32 %v9171, %v9462
          %v9940 = vmul.f32 %v9172, %v9467
          %v9941 = vmul.f32 %v9173, %v9472
          %v9942 = vmul.f32 %v9174, %v9477
          %v9943 = vmul.f32 %v9175, %v9482
          %v9944 = vmul.f32 %v9176, %v9487
          %v9945 = vmul.f32 %v9177, %v9492
          %v9946 = vmul.f32 %v9178, %v9497
          %v9947 = vmul.f32 %v9179, %v9502
          %v9948 = vmul.f32 %v9180, %v9507
          %v9949 = vmul.f32 %v9181, %v9512
          %v9950 = vmul.f32 %v9182, %v9517
          %v9951 = vmul.f32 %v9183, %v9522
          %v9952 = vmul.f32 %v9184, %v9527
          %v9953 = vmul.f32 %v9185, %v9532
          %v9954 = vmul.f32 %v9186, %v9537
          %v9955 = vmul.f32 %v9187, %v9542
          %v9956 = vmul.f32 %v9188, %v9547
          %v9957 = vmul.f32 %v9189, %v9552
          %v9958 = vmul.f32 %v9190, %v9557
          %v9959 = vmul.f32 %v9191, %v9562
          %v9960 = vmul.f32 %v9192, %v9567
          %v9961 = vmul.f32 %v9193, %v9572
          %v9962 = vmul.f32 %v9194, %v9577
          %v9963 = vmul.f32 %v9195, %v9582
          %v9964 = vmul.f32 %v9196, %v9587
          %v9965 = vmul.f32 %v9197, %v9592
          %v9966 = vmul.f32 %v9198, %v9597
          %v9967 = vmul.f32 %v9199, %v9602
          %v9968 = vmul.f32 %v9200, %v9607
          %v9969 = vmul.f32 %v9201, %v9612
          %v9970 = vmul.f32 %v9202, %v9617
          %v9971 = vmul.f32 %v9203, %v9622
          %v9972 = vmul.f32 %v9204, %v9627
          %v9973 = vmul.f32 %v9205, %v9632
          %v9974 = vmul.f32 %v9206, %v9637
          %v9975 = vmul.f32 %v9207, %v9642
          %v9976 = vmul.f32 %v9208, %v9647
          %v9977 = vmul.f32 %v9209, %v9652
          %v9978 = vmul.f32 %v9210, %v9657
          %v9979 = vmul.f32 %v9211, %v9662
          %v9980 = vmul.f32 %v9212, %v9667
          %v9981 = vmul.f32 %v9213, %v9672
          %v9982 = vmul.f32 %v9214, %v9677
          %v9983 = vmul.f32 %v9215, %v9682
          %v9984 = vmul.f32 %v9216, %v9687
          %v9985 = vmul.f32 %v9217, %v9692
          %v9986 = vmul.f32 %v9218, %v9697
          %v9987 = vmul.f32 %v9219, %v9702
          %v9988 = vmul.f32 %v9220, %v9707
          %v9989 = vmul.f32 %v9221, %v9712
          %v9990 = vmul.f32 %v9222, %v9717
          %v9991 = vmul.f32 %v9223, %v9722
          %v9992 = vmul.f32 %v9224, %v9727
          %v9993 = vmul.f32 %v9225, %v9732
          %v9994 = vmul.f32 %v9226, %v9737
          %v9995 = vmul.f32 %v9227, %v9742
          %v9996 = vmul.f32 %v9228, %v9747
          %v9997 = vmul.f32 %v9229, %v9752
          %v9998 = vmul.f32 %v9230, %v9757
          %v9999 = vmul.f32 %v9231, %v9762
          %v10000 = vmul.f32 %v9232, %v9767
          %v10001 = vmul.f32 %v9233, %v9772
          %v10002 = vmul.f32 %v9234, %v9777
          %v10003 = vmul.f32 %v9235, %v9782
          %v10004 = vmul.f32 %v9236, %v9787
          %v10005 = vmul.f32 %v9237, %v9792
          %v10006 = vmul.f32 %v9238, %v9797
          %v10007 = vmul.f32 %v9239, %v9802
          %v10008 = vmul.f32 %v9240, %v9807
          %v10009 = vmul.f32 %v9241, %v9812
          %v10010 = vmul.f32 %v9242, %v9817
          %v10011 = vmul.f32 %v9243, %v9822
          %v10012 = vmul.f32 %v9244, %v9827
          %v10013 = vmul.f32 %v9245, %v9832
          %v10014 = vmul.f32 %v9246, %v9837
          %v10015 = vmul.f32 %v9247, %v9842
          %v10016 = vmul.f32 %v9248, %v9847
          %v10017 = vmul.f32 %v9249, %v9852
          %v10018 = vmul.f32 %v9250, %v9857
          %v10019 = vmul.f32 %v9251, %v9862
          %v10020 = vmul.f32 %v9252, %v9867
          %v10021 = vmul.f32 %v9253, %v9872
          %v10022 = vmul.f32 %v9254, %v9877
          %v10023 = vmul.f32 %v9255, %v9882
          %v10024 = vmul.f32 %v9256, %v9887
          %v10025 = vmul.f32 %v9257, %v9892
          %v10026 = vmul.f32 %v9258, %v9897
          %10059 = vrot.lane.b32.xlu0 %v9931, 32
          %v10060 = vpop.permute.xlu0 %10059
          %10061 = vrot.lane.b32.xlu0 %v9932, 32
          %v10062 = vpop.permute.xlu0 %10061
          %10063 = vrot.lane.b32.xlu0 %v9933, 32
          %v10064 = vpop.permute.xlu0 %10063
          %10065 = vrot.lane.b32.xlu0 %v9934, 32
          %v10066 = vpop.permute.xlu0 %10065
          %10067 = vrot.lane.b32.xlu0 %v9935, 32
          %v10068 = vpop.permute.xlu0 %10067
          %10069 = vrot.lane.b32.xlu0 %v9936, 32
          %v10070 = vpop.permute.xlu0 %10069
          %10071 = vrot.lane.b32.xlu0 %v9937, 32
          %v10072 = vpop.permute.xlu0 %10071
          %10073 = vrot.lane.b32.xlu0 %v9938, 32
          %v10074 = vpop.permute.xlu0 %10073
          %10075 = vrot.lane.b32.xlu0 %v9939, 32
          %v10076 = vpop.permute.xlu0 %10075
          %10077 = vrot.lane.b32.xlu0 %v9940, 32
          %v10078 = vpop.permute.xlu0 %10077
          %10079 = vrot.lane.b32.xlu0 %v9941, 32
          %v10080 = vpop.permute.xlu0 %10079
          %10081 = vrot.lane.b32.xlu0 %v9942, 32
          %v10082 = vpop.permute.xlu0 %10081
          %10083 = vrot.lane.b32.xlu0 %v9943, 32
          %v10084 = vpop.permute.xlu0 %10083
          %10085 = vrot.lane.b32.xlu0 %v9944, 32
          %v10086 = vpop.permute.xlu0 %10085
          %10087 = vrot.lane.b32.xlu0 %v9945, 32
          %v10088 = vpop.permute.xlu0 %10087
          %10089 = vrot.lane.b32.xlu0 %v9946, 32
          %v10090 = vpop.permute.xlu0 %10089
          %10091 = vrot.lane.b32.xlu0 %v9947, 32
          %v10092 = vpop.permute.xlu0 %10091
          %10093 = vrot.lane.b32.xlu0 %v9948, 32
          %v10094 = vpop.permute.xlu0 %10093
          %10095 = vrot.lane.b32.xlu0 %v9949, 32
          %v10096 = vpop.permute.xlu0 %10095
          %10097 = vrot.lane.b32.xlu0 %v9950, 32
          %v10098 = vpop.permute.xlu0 %10097
          %10099 = vrot.lane.b32.xlu0 %v9951, 32
          %v10100 = vpop.permute.xlu0 %10099
          %10101 = vrot.lane.b32.xlu0 %v9952, 32
          %v10102 = vpop.permute.xlu0 %10101
          %10103 = vrot.lane.b32.xlu0 %v9953, 32
          %v10104 = vpop.permute.xlu0 %10103
          %10105 = vrot.lane.b32.xlu0 %v9954, 32
          %v10106 = vpop.permute.xlu0 %10105
          %10107 = vrot.lane.b32.xlu0 %v9955, 32
          %v10108 = vpop.permute.xlu0 %10107
          %10109 = vrot.lane.b32.xlu0 %v9956, 32
          %v10110 = vpop.permute.xlu0 %10109
          %10111 = vrot.lane.b32.xlu0 %v9957, 32
          %v10112 = vpop.permute.xlu0 %10111
          %10113 = vrot.lane.b32.xlu0 %v9958, 32
          %v10114 = vpop.permute.xlu0 %10113
          %10115 = vrot.lane.b32.xlu0 %v9959, 32
          %v10116 = vpop.permute.xlu0 %10115
          %10117 = vrot.lane.b32.xlu0 %v9960, 32
          %v10118 = vpop.permute.xlu0 %10117
          %10119 = vrot.lane.b32.xlu0 %v9961, 32
          %v10120 = vpop.permute.xlu0 %10119
          %10121 = vrot.lane.b32.xlu0 %v9962, 32
          %v10122 = vpop.permute.xlu0 %10121
          %10187 = vrot.lane.b32.xlu0 %v9963, 64
          %v10188 = vpop.permute.xlu0 %10187
          %10189 = vrot.lane.b32.xlu0 %v9964, 64
          %v10190 = vpop.permute.xlu0 %10189
          %10191 = vrot.lane.b32.xlu0 %v9965, 64
          %v10192 = vpop.permute.xlu0 %10191
          %10193 = vrot.lane.b32.xlu0 %v9966, 64
          %v10194 = vpop.permute.xlu0 %10193
          %10195 = vrot.lane.b32.xlu0 %v9967, 64
          %v10196 = vpop.permute.xlu0 %10195
          %10197 = vrot.lane.b32.xlu0 %v9968, 64
          %v10198 = vpop.permute.xlu0 %10197
          %10199 = vrot.lane.b32.xlu0 %v9969, 64
          %v10200 = vpop.permute.xlu0 %10199
          %10201 = vrot.lane.b32.xlu0 %v9970, 64
          %v10202 = vpop.permute.xlu0 %10201
          %10203 = vrot.lane.b32.xlu0 %v9971, 64
          %v10204 = vpop.permute.xlu0 %10203
          %10205 = vrot.lane.b32.xlu0 %v9972, 64
          %v10206 = vpop.permute.xlu0 %10205
          %10207 = vrot.lane.b32.xlu0 %v9973, 64
          %v10208 = vpop.permute.xlu0 %10207
          %10209 = vrot.lane.b32.xlu0 %v9974, 64
          %v10210 = vpop.permute.xlu0 %10209
          %10211 = vrot.lane.b32.xlu0 %v9975, 64
          %v10212 = vpop.permute.xlu0 %10211
          %10213 = vrot.lane.b32.xlu0 %v9976, 64
          %v10214 = vpop.permute.xlu0 %10213
          %10215 = vrot.lane.b32.xlu0 %v9977, 64
          %v10216 = vpop.permute.xlu0 %10215
          %10217 = vrot.lane.b32.xlu0 %v9978, 64
          %v10218 = vpop.permute.xlu0 %10217
          %10219 = vrot.lane.b32.xlu0 %v9979, 64
          %v10220 = vpop.permute.xlu0 %10219
          %10221 = vrot.lane.b32.xlu0 %v9980, 64
          %v10222 = vpop.permute.xlu0 %10221
          %10223 = vrot.lane.b32.xlu0 %v9981, 64
          %v10224 = vpop.permute.xlu0 %10223
          %10225 = vrot.lane.b32.xlu0 %v9982, 64
          %v10226 = vpop.permute.xlu0 %10225
          %10227 = vrot.lane.b32.xlu0 %v9983, 64
          %v10228 = vpop.permute.xlu0 %10227
          %10229 = vrot.lane.b32.xlu0 %v9984, 64
          %v10230 = vpop.permute.xlu0 %10229
          %10231 = vrot.lane.b32.xlu0 %v9985, 64
          %v10232 = vpop.permute.xlu0 %10231
          %10233 = vrot.lane.b32.xlu0 %v9986, 64
          %v10234 = vpop.permute.xlu0 %10233
          %10235 = vrot.lane.b32.xlu0 %v9987, 64
          %v10236 = vpop.permute.xlu0 %10235
          %10237 = vrot.lane.b32.xlu0 %v9988, 64
          %v10238 = vpop.permute.xlu0 %10237
          %10239 = vrot.lane.b32.xlu0 %v9989, 64
          %v10240 = vpop.permute.xlu0 %10239
          %10241 = vrot.lane.b32.xlu0 %v9990, 64
          %v10242 = vpop.permute.xlu0 %10241
          %10243 = vrot.lane.b32.xlu0 %v9991, 64
          %v10244 = vpop.permute.xlu0 %10243
          %10245 = vrot.lane.b32.xlu0 %v9992, 64
          %v10246 = vpop.permute.xlu0 %10245
          %10247 = vrot.lane.b32.xlu0 %v9993, 64
          %v10248 = vpop.permute.xlu0 %10247
          %10249 = vrot.lane.b32.xlu0 %v9994, 64
          %v10250 = vpop.permute.xlu0 %10249
          %10315 = vrot.lane.b32.xlu0 %v9995, 96
          %v10316 = vpop.permute.xlu0 %10315
          %10317 = vrot.lane.b32.xlu0 %v9996, 96
          %v10318 = vpop.permute.xlu0 %10317
          %10319 = vrot.lane.b32.xlu0 %v9997, 96
          %v10320 = vpop.permute.xlu0 %10319
          %10321 = vrot.lane.b32.xlu0 %v9998, 96
          %v10322 = vpop.permute.xlu0 %10321
          %10323 = vrot.lane.b32.xlu0 %v9999, 96
          %v10324 = vpop.permute.xlu0 %10323
          %10325 = vrot.lane.b32.xlu0 %v10000, 96
          %v10326 = vpop.permute.xlu0 %10325
          %10327 = vrot.lane.b32.xlu0 %v10001, 96
          %v10328 = vpop.permute.xlu0 %10327
          %10329 = vrot.lane.b32.xlu0 %v10002, 96
          %v10330 = vpop.permute.xlu0 %10329
          %10331 = vrot.lane.b32.xlu0 %v10003, 96
          %v10332 = vpop.permute.xlu0 %10331
          %10333 = vrot.lane.b32.xlu0 %v10004, 96
          %v10334 = vpop.permute.xlu0 %10333
          %10335 = vrot.lane.b32.xlu0 %v10005, 96
          %v10336 = vpop.permute.xlu0 %10335
          %10337 = vrot.lane.b32.xlu0 %v10006, 96
          %v10338 = vpop.permute.xlu0 %10337
          %10339 = vrot.lane.b32.xlu0 %v10007, 96
          %v10340 = vpop.permute.xlu0 %10339
          %10341 = vrot.lane.b32.xlu0 %v10008, 96
          %v10342 = vpop.permute.xlu0 %10341
          %10343 = vrot.lane.b32.xlu0 %v10009, 96
          %v10344 = vpop.permute.xlu0 %10343
          %10345 = vrot.lane.b32.xlu0 %v10010, 96
          %v10346 = vpop.permute.xlu0 %10345
          %10347 = vrot.lane.b32.xlu0 %v10011, 96
          %v10348 = vpop.permute.xlu0 %10347
          %10349 = vrot.lane.b32.xlu0 %v10012, 96
          %v10350 = vpop.permute.xlu0 %10349
          %10351 = vrot.lane.b32.xlu0 %v10013, 96
          %v10352 = vpop.permute.xlu0 %10351
          %10353 = vrot.lane.b32.xlu0 %v10014, 96
          %v10354 = vpop.permute.xlu0 %10353
          %10355 = vrot.lane.b32.xlu0 %v10015, 96
          %v10356 = vpop.permute.xlu0 %10355
          %10357 = vrot.lane.b32.xlu0 %v10016, 96
          %v10358 = vpop.permute.xlu0 %10357
          %10359 = vrot.lane.b32.xlu0 %v10017, 96
          %v10360 = vpop.permute.xlu0 %10359
          %10361 = vrot.lane.b32.xlu0 %v10018, 96
          %v10362 = vpop.permute.xlu0 %10361
          %10363 = vrot.lane.b32.xlu0 %v10019, 96
          %v10364 = vpop.permute.xlu0 %10363
          %10365 = vrot.lane.b32.xlu0 %v10020, 96
          %v10366 = vpop.permute.xlu0 %10365
          %10367 = vrot.lane.b32.xlu0 %v10021, 96
          %v10368 = vpop.permute.xlu0 %10367
          %10369 = vrot.lane.b32.xlu0 %v10022, 96
          %v10370 = vpop.permute.xlu0 %10369
          %10371 = vrot.lane.b32.xlu0 %v10023, 96
          %v10372 = vpop.permute.xlu0 %10371
          %10373 = vrot.lane.b32.xlu0 %v10024, 96
          %v10374 = vpop.permute.xlu0 %10373
          %10375 = vrot.lane.b32.xlu0 %v10025, 96
          %v10376 = vpop.permute.xlu0 %10375
          %10377 = vrot.lane.b32.xlu0 %v10026, 96
          %v10378 = vpop.permute.xlu0 %10377
          %v10411 = vsel %vm1214, %v9899, %v10060
          %v10412 = vsel %vm1214, %v9900, %v10062
          %v10413 = vsel %vm1214, %v9901, %v10064
          %v10414 = vsel %vm1214, %v9902, %v10066
          %v10415 = vsel %vm1214, %v9903, %v10068
          %v10416 = vsel %vm1214, %v9904, %v10070
          %v10417 = vsel %vm1214, %v9905, %v10072
          %v10418 = vsel %vm1214, %v9906, %v10074
          %v10419 = vsel %vm1214, %v9907, %v10076
          %v10420 = vsel %vm1214, %v9908, %v10078
          %v10421 = vsel %vm1214, %v9909, %v10080
          %v10422 = vsel %vm1214, %v9910, %v10082
          %v10423 = vsel %vm1214, %v9911, %v10084
          %v10424 = vsel %vm1214, %v9912, %v10086
          %v10425 = vsel %vm1214, %v9913, %v10088
          %v10426 = vsel %vm1214, %v9914, %v10090
          %v10427 = vsel %vm1214, %v9915, %v10092
          %v10428 = vsel %vm1214, %v9916, %v10094
          %v10429 = vsel %vm1214, %v9917, %v10096
          %v10430 = vsel %vm1214, %v9918, %v10098
          %v10431 = vsel %vm1214, %v9919, %v10100
          %v10432 = vsel %vm1214, %v9920, %v10102
          %v10433 = vsel %vm1214, %v9921, %v10104
          %v10434 = vsel %vm1214, %v9922, %v10106
          %v10435 = vsel %vm1214, %v9923, %v10108
          %v10436 = vsel %vm1214, %v9924, %v10110
          %v10437 = vsel %vm1214, %v9925, %v10112
          %v10438 = vsel %vm1214, %v9926, %v10114
          %v10439 = vsel %vm1214, %v9927, %v10116
          %v10440 = vsel %vm1214, %v9928, %v10118
          %v10441 = vsel %vm1214, %v9929, %v10120
          %v10442 = vsel %vm1214, %v9930, %v10122
          %vm10443 = vcmask 523264
          %v10444 = vsel %vm10443, %v10411, %v10188
          %v10445 = vsel %vm10443, %v10412, %v10190
          %v10446 = vsel %vm10443, %v10413, %v10192
          %v10447 = vsel %vm10443, %v10414, %v10194
          %v10448 = vsel %vm10443, %v10415, %v10196
          %v10449 = vsel %vm10443, %v10416, %v10198
          %v10450 = vsel %vm10443, %v10417, %v10200
          %v10451 = vsel %vm10443, %v10418, %v10202
          %v10452 = vsel %vm10443, %v10419, %v10204
          %v10453 = vsel %vm10443, %v10420, %v10206
          %v10454 = vsel %vm10443, %v10421, %v10208
          %v10455 = vsel %vm10443, %v10422, %v10210
          %v10456 = vsel %vm10443, %v10423, %v10212
          %v10457 = vsel %vm10443, %v10424, %v10214
          %v10458 = vsel %vm10443, %v10425, %v10216
          %v10459 = vsel %vm10443, %v10426, %v10218
          %v10460 = vsel %vm10443, %v10427, %v10220
          %v10461 = vsel %vm10443, %v10428, %v10222
          %v10462 = vsel %vm10443, %v10429, %v10224
          %v10463 = vsel %vm10443, %v10430, %v10226
          %v10464 = vsel %vm10443, %v10431, %v10228
          %v10465 = vsel %vm10443, %v10432, %v10230
          %v10466 = vsel %vm10443, %v10433, %v10232
          %v10467 = vsel %vm10443, %v10434, %v10234
          %v10468 = vsel %vm10443, %v10435, %v10236
          %v10469 = vsel %vm10443, %v10436, %v10238
          %v10470 = vsel %vm10443, %v10437, %v10240
          %v10471 = vsel %vm10443, %v10438, %v10242
          %v10472 = vsel %vm10443, %v10439, %v10244
          %v10473 = vsel %vm10443, %v10440, %v10246
          %v10474 = vsel %vm10443, %v10441, %v10248
          %v10475 = vsel %vm10443, %v10442, %v10250
          %vm10476 = vcmask 785408
          %v10477 = vsel %vm10476, %v10444, %v10316
          %v10478 = vsel %vm10476, %v10445, %v10318
          %v10479 = vsel %vm10476, %v10446, %v10320
          %v10480 = vsel %vm10476, %v10447, %v10322
          %v10481 = vsel %vm10476, %v10448, %v10324
          %v10482 = vsel %vm10476, %v10449, %v10326
          %v10483 = vsel %vm10476, %v10450, %v10328
          %v10484 = vsel %vm10476, %v10451, %v10330
          %v10485 = vsel %vm10476, %v10452, %v10332
          %v10486 = vsel %vm10476, %v10453, %v10334
          %v10487 = vsel %vm10476, %v10454, %v10336
          %v10488 = vsel %vm10476, %v10455, %v10338
          %v10489 = vsel %vm10476, %v10456, %v10340
          %v10490 = vsel %vm10476, %v10457, %v10342
          %v10491 = vsel %vm10476, %v10458, %v10344
          %v10492 = vsel %vm10476, %v10459, %v10346
          %v10493 = vsel %vm10476, %v10460, %v10348
          %v10494 = vsel %vm10476, %v10461, %v10350
          %v10495 = vsel %vm10476, %v10462, %v10352
          %v10496 = vsel %vm10476, %v10463, %v10354
          %v10497 = vsel %vm10476, %v10464, %v10356
          %v10498 = vsel %vm10476, %v10465, %v10358
          %v10499 = vsel %vm10476, %v10466, %v10360
          %v10500 = vsel %vm10476, %v10467, %v10362
          %v10501 = vsel %vm10476, %v10468, %v10364
          %v10502 = vsel %vm10476, %v10469, %v10366
          %v10503 = vsel %vm10476, %v10470, %v10368
          %v10504 = vsel %vm10476, %v10471, %v10370
          %v10505 = vsel %vm10476, %v10472, %v10372
          %v10506 = vsel %vm10476, %v10473, %v10374
          %v10507 = vsel %vm10476, %v10474, %v10376
          %v10508 = vsel %vm10476, %v10475, %v10378
          %10509 = vst [vmem:[%s247] sm:$0xff] %v10477
          %10510 = vst [vmem:[%s247 + $0x8] sm:$0xff] %v10478
          %10511 = vst [vmem:[%s247 + $0x10] sm:$0xff] %v10479
          %10512 = vst [vmem:[%s247 + $0x18] sm:$0xff] %v10480
          %10513 = vst [vmem:[%s247 + $0x20] sm:$0xff] %v10481
          %10514 = vst [vmem:[%s247 + $0x28] sm:$0xff] %v10482
          %10515 = vst [vmem:[%s247 + $0x30] sm:$0xff] %v10483
          %10516 = vst [vmem:[%s247 + $0x38] sm:$0xff] %v10484
          %10517 = vst [vmem:[%s247 + $0x40] sm:$0xff] %v10485
          %10518 = vst [vmem:[%s247 + $0x48] sm:$0xff] %v10486
          %10519 = vst [vmem:[%s247 + $0x50] sm:$0xff] %v10487
          %10520 = vst [vmem:[%s247 + $0x58] sm:$0xff] %v10488
          %10521 = vst [vmem:[%s247 + $0x60] sm:$0xff] %v10489
          %10522 = vst [vmem:[%s247 + $0x68] sm:$0xff] %v10490
          %10523 = vst [vmem:[%s247 + $0x70] sm:$0xff] %v10491
          %10524 = vst [vmem:[%s247 + $0x78] sm:$0xff] %v10492
          %10525 = vst [vmem:[%s247 + $0x80] sm:$0xff] %v10493
          %10526 = vst [vmem:[%s247 + $0x88] sm:$0xff] %v10494
          %10527 = vst [vmem:[%s247 + $0x90] sm:$0xff] %v10495
          %10528 = vst [vmem:[%s247 + $0x98] sm:$0xff] %v10496
          %10529 = vst [vmem:[%s247 + $0xa0] sm:$0xff] %v10497
          %10530 = vst [vmem:[%s247 + $0xa8] sm:$0xff] %v10498
          %10531 = vst [vmem:[%s247 + $0xb0] sm:$0xff] %v10499
          %10532 = vst [vmem:[%s247 + $0xb8] sm:$0xff] %v10500
          %10533 = vst [vmem:[%s247 + $0xc0] sm:$0xff] %v10501
          %10534 = vst [vmem:[%s247 + $0xc8] sm:$0xff] %v10502
          %10535 = vst [vmem:[%s247 + $0xd0] sm:$0xff] %v10503
          %10536 = vst [vmem:[%s247 + $0xd8] sm:$0xff] %v10504
          %10537 = vst [vmem:[%s247 + $0xe0] sm:$0xff] %v10505
          %10538 = vst [vmem:[%s247 + $0xe8] sm:$0xff] %v10506
          %10539 = vst [vmem:[%s247 + $0xf0] sm:$0xff] %v10507
          %10540 = vst [vmem:[%s247 + $0xf8] sm:$0xff] %v10508
        $region40: #{tpu_custom_call.1} parent=31 // pred_fallthru
          _
        %s10541 = sand.u32 %s130, 1
        %s10542 = scalar_lea.sflag [#allocation6], %s10541
        %s10543 = sand.u32 %s130, 1
        %s10544 = smul.addr %s10543, 256
        %s10545 = scalar_lea.vmem [#allocation5], %s10544
        // Predicated region
        $region41: #{tpu_custom_call.1} parent=31 // pred_check
          %p10546 = pneg %p140
        $region42: #{tpu_custom_call.1} parent=31 // pred_check_branch
          %10548 = sbr.rel (%p10546) target = $region44
        $region43: #{tpu_custom_call.1} parent=31 // pred_region
          %s10549 = smul.u32 32, %s23
          %s10551 = ssub.s32 4096, 4096
          %10552 = vsyncadd %s10542, %s10551
          %s10553 = smul.addr %s22, 32
          %s10554 = sadd.s32 %s10549, %s10553
          %s10555 = smul.addr %s10554, 128
          %s10556 = scalar_lea.hbm %s3, %s10555
          %s10557 = sshll.u32 %s10545, 4
          %s10558 = int_to_ptr.vmem [resolvable:$true] %s10557
          %10563 = dma.vmem_to_hbm [thread:$0]  %s10558, 4096, %s10556, %s10542, 128, 128, 8
        $region44: #{tpu_custom_call.1} parent=31 // pred_fallthru
          _
      $region32: #{tpu_custom_call.1} parent=5 // pred_fallthru
        _
      %p10564 = scmp.le.s32.totalorder 2, %s12
      // Predicated region
      $region45: #{tpu_custom_call.1} parent=5 // pred_check
        %p10565 = pneg %p10564
      $region46: #{tpu_custom_call.1} parent=5 // pred_check_branch
        %10567 = sbr.rel (%p10565) target = $region48
      $region47: #{tpu_custom_call.1} parent=5 // pred_region
        %s10568 = ssub.s32 %s12, 2
        // Predicated region
        $region49: #{tpu_custom_call.1} parent=47 // pred_check
          %p10569 = pneg %p146
        $region50: #{tpu_custom_call.1} parent=47 // pred_check_branch
          %10571 = sbr.rel (%p10569) target = $region52
        $region51: #{tpu_custom_call.1} parent=47 // pred_region
          %s10572 = sand.u32 %s131, 1
          %s10573 = scalar_lea.sflag [#allocation6], %s10572
          %s10574 = sand.u32 %s131, 1
          %s10575 = smul.addr %s10574, 256
          %s10576 = scalar_lea.vmem [#allocation5], %s10575
          %10577 = dma.done %s10573, 4096
        $region52: #{tpu_custom_call.1} parent=47 // pred_fallthru
          _
      $region48: #{tpu_custom_call.1} parent=5 // pred_fallthru
        _
    $region6: #{tpu_custom_call.1} parent=1 // loop_footer
      %s16 = sadd.s32 1, %s12
    $region7: #{tpu_custom_call.1} parent=1 // loop_footer_branch
      %11 = sbr.rel target = $region3
    $region8: #{tpu_custom_call.1} parent=1 // loop_exit
      _
    %10578 = vsyncpa [#allocation6], 1
    %s10579 = scalar_lea.sflag [#allocation6], 1
    %10580 = vsyncpa %s10579, 1

</llo_original>
